<compile_context>
chip_gen: v5e
topology: v5e:2x2
jax: 0.10.0
libtpu: 0.0.40
codegen_flags: <defaults>
</compile_context>

<pallas_src>
import math
import collections

import jax
import jax.numpy as jnp
from jax.experimental import pallas as pl
from jax.experimental.pallas import tpu as pltpu

BlockArgs = collections.namedtuple(
    "BlockArgs",
    ["num_repeat", "kernel_size", "stride", "expand_ratio",
     "input_filters", "output_filters", "se_ratio", "id_skip"])

GlobalParams = collections.namedtuple(
    "GlobalParams",
    ["width_coefficient", "depth_coefficient", "image_size", "dropout_rate",
     "num_classes", "batch_norm_momentum", "batch_norm_epsilon",
     "drop_connect_rate", "depth_divisor", "min_depth", "include_top"])

LANE = 128
ACT_DTYPE = jnp.bfloat16
VMEM_LIMIT = 64 * 1024 * 1024


# ----------------------------- config helpers (same math as the PyTorch module) ----

def round_filters(filters, gp):
    multiplier = gp.width_coefficient
    if not multiplier:
        return filters
    divisor = gp.depth_divisor
    min_depth = gp.min_depth
    filters *= multiplier
    min_depth = min_depth or divisor
    new_filters = max(min_depth, int(filters + divisor / 2) // divisor * divisor)
    if new_filters < 0.9 * filters:
        new_filters += divisor
    return int(new_filters)


def round_repeats(repeats, gp):
    multiplier = gp.depth_coefficient
    if not multiplier:
        return repeats
    return int(math.ceil(multiplier * repeats))


def pad_to_lane(c):
    return ((c + LANE - 1) // LANE) * LANE


def _pick_tm(hw, cap=1024):
    """Largest row-tile <= cap that divides H*W; prefer multiples of 16 (bf16 sublanes)."""
    if hw <= cap:
        return hw
    for step in (16, 8):
        for t in range(cap - cap % step, step - 1, -step):
            if hw % t == 0:
                return t
    # TODO(synk): cdiv grid + in-kernel tail masking for awkward H*W with no 8-mult divisor.
    return hw


def _pick_row_tile(h, w, c, halo, acc_budget_bytes=6 << 20, max_rows=64):
    """Largest row tile dividing H (multiple of the halo granularity) whose f32 accumulator
    fits the budget -> keeps the depthwise working set a few MiB even on v7x (64 MiB VMEM)."""
    cap = max(halo, min(max_rows, acc_budget_bytes // max(w * c * 4, 1)))
    if h <= cap and (halo <= 1 or h % halo == 0):
        return h
    for d in range(min(cap, h), max(halo, 1) - 1, -1):
        if h % d == 0 and d % max(halo, 1) == 0:
            return d
    # TODO(synk): cdiv grid + in-kernel tail masking for awkward H.
    return h


def _row_matmul(row, w):
    """(1,K)x(K,N) GEMV; broadcast to 8 sublanes so the MXU tile is well-formed."""
    m = jnp.broadcast_to(row.astype(w.dtype), (8, row.shape[-1]))
    return jnp.dot(m, w, preferred_element_type=jnp.float32)[0:1]


# ----------------------------- Pallas kernels --------------------------------------

def _pointwise_kernel(activation, has_gate, has_res):
    """1x1 conv (MXU matmul) with BN scale pre-folded into weights; fused bias, optional
    bf16 SE gate on the input, SiLU, residual."""
    def kernel(*refs):
        x_ref, w_ref, b_ref = refs[:3]
        rest = list(refs[3:])
        g_ref = rest.pop(0) if has_gate else None
        r_ref = rest.pop(0) if has_res else None
        o_ref = rest.pop(0)

        x = x_ref[0]                                          # (TM, Cin) bf16
        if has_gate:
            x = x * g_ref[0]                                  # bf16 gate, no up/down-cast
        y = jnp.dot(x, w_ref[...], preferred_element_type=jnp.float32)
        y = y + b_ref[...]                                    # folded-BN bias (f32 epilogue)
        if activation:
            y = y * jax.nn.sigmoid(y)                         # SiLU
        if has_res:
            y = y + r_ref[0].astype(jnp.float32)
        o_ref[0] = y.astype(o_ref.dtype)
    return kernel


def pointwise_conv_bn(x_nhwc, w, bias, *, activation, residual=None, gate=None):
    """Pointwise conv over channels as a tiled matmul on MXU. x: (N,H,W,Cin) bf16."""
    N, H, W, Cin = x_nhwc.shape
    Cout = w.shape[1]
    HW = H * W
    TM = _pick_tm(HW)
    xf = x_nhwc.reshape(N, HW, Cin)

    args = [xf, w, bias]
    in_specs = [
        pl.BlockSpec((1, TM, Cin), lambda n, t: (n, t, 0)),
        # TODO(synk): pipeline_mode=pl.Buffered(1) on the constant-index weight/bias blocks
        #             once single-buffering of constant operands is confirmed supported.
        pl.BlockSpec((Cin, Cout), lambda n, t: (0, 0)),
        pl.BlockSpec((1, Cout), lambda n, t: (0, 0)),
    ]
    if gate is not None:
        args.append(gate)                                     # (N, 1, Cin) bf16
        in_specs.append(pl.BlockSpec((1, 1, Cin), lambda n, t: (n, 0, 0)))
    if residual is not None:
        args.append(residual.reshape(N, HW, Cout))
        in_specs.append(pl.BlockSpec((1, TM, Cout), lambda n, t: (n, t, 0)))

    out = pl.pallas_call(
        _pointwise_kernel(activation, gate is not None, residual is not None),
        out_shape=jax.ShapeDtypeStruct((N, HW, Cout), x_nhwc.dtype),
        grid=(N, HW // TM),
        in_specs=in_specs,
        out_specs=pl.BlockSpec((1, TM, Cout), lambda n, t: (n, t, 0)),
        compiler_params=pltpu.CompilerParams(
            dimension_semantics=("parallel", "parallel"),
            vmem_limit_bytes=VMEM_LIMIT),
    )(*args)
    return out.reshape(N, H, W, Cout)


def depthwise_conv_bn_silu(x_nhwc, dw_w, dw_bias, se, *, kernel_size, stride):
    """Row-tiled depthwise KxK conv (TF-SAME, stride 1), BN folded into taps, SiLU, fused SE.

    Grid = (N, H // TH).  The SAME padding halo is assembled in a VMEM scratch from two tiny
    halo-row BlockSpecs (no wrapper jnp.pad / no padded HBM copy).  One bf16 shifted view is
    sliced per tap (never K simultaneous copies).  If `se` is given, the global average pool
    accumulates across row tiles and the excite FCs + sigmoid run in the last tile, emitting a
    (N,1,C) bf16 gate consumed by the projection pointwise kernel.
    """
    assert stride == 1, "stride-1 depthwise only"
    # TODO(synk): stride-2 depthwise (stage transitions in full EfficientNet configs) needs
    #             strided sublane reads; not required for the configured blocks here.
    N, H, W, C = x_nhwc.shape
    K = kernel_size
    assert K % 2 == 1 and K >= 3
    halo = (K - 1) // 2
    if halo > 1:
        assert H % halo == 0
    TH = _pick_row_tile(H, W, C, halo)
    n_t = H // TH
    tb = TH // halo                                   # halo-block granularity along H
    last_halo_blk = max(H // halo - 1, 0)
    inv_hw = 1.0 / float(H * W)
    has_se = se is not None

    def kernel(*refs):
        if has_se:
            (x_ref, top_ref, bot_ref, w_ref, b_ref,
             w1_ref, b1_ref, w2_ref, b2_ref,
             y_ref, g_ref, pad_ref, pool_ref) = refs
        else:
            (x_ref, top_ref, bot_ref, w_ref, b_ref, y_ref, pad_ref) = refs
        t = pl.program_id(1)
        nt = pl.num_programs(1)

        # Assemble the SAME-padded row tile in VMEM (no padded activation copy in HBM).
        pad_ref[...] = jnp.zeros((TH + 2 * halo, W + 2 * halo, C), pad_ref.dtype)
        pad_ref[halo:halo + TH, halo:halo + W, :] = x_ref[0]

        @pl.when(t > 0)
        def _():
            pad_ref[0:halo, halo:halo + W, :] = top_ref[0]

        @pl.when(t < nt - 1)
        def _():
            pad_ref[halo + TH:halo + TH + halo, halo:halo + W, :] = bot_ref[0]

        # K*K-tap MAC: bf16 multiplies (BN scale folded into taps), f32 accumulation,
        # one shifted view live at a time.
        w = w_ref[...]                                          # (K*K, C) bf16
        acc = jnp.zeros((TH, W, C), jnp.float32)
        for kh in range(K):
            for kw in range(K):
                xs = pad_ref[kh:kh + TH, kw:kw + W, :]          # bf16 slice
                tap = w[kh * K + kw:kh * K + kw + 1, :]         # (1, C)
                acc = acc + (xs * tap).astype(jnp.float32)

        y = acc + b_ref[...]                                    # folded-BN bias
        y = y * jax.nn.sigmoid(y)                               # SiLU
        y_ref[0] = y.astype(y_ref.dtype)

        if has_se:
            @pl.when(t == 0)
            def _():
                pool_ref[...] = jnp.zeros_like(pool_ref)
            ps = jnp.sum(y, axis=0)                              # (W, C)
            pool_ref[...] += jnp.sum(ps, axis=0, keepdims=True)  # (1, C)

            @pl.when(t == nt - 1)
            def _():
                pooled = pool_ref[...] * inv_hw                  # (1, C) f32
                z = _row_matmul(pooled, w1_ref[...]) + b1_ref[...]
                z = z * jax.nn.sigmoid(z)                        # SiLU
                g = _row_matmul(z, w2_ref[...]) + b2_ref[...]
                g_ref[0] = jax.nn.sigmoid(g).astype(g_ref.dtype)

    in_specs = [
        pl.BlockSpec((1, TH, W, C), lambda n, t: (n, t, 0, 0)),
        pl.BlockSpec((1, halo, W, C),
                     lambda n, t: (n, jnp.maximum(t * tb - 1, 0), 0, 0)),
        pl.BlockSpec((1, halo, W, C),
                     lambda n, t: (n, jnp.minimum((t + 1) * tb, last_halo_blk), 0, 0)),
        pl.BlockSpec((K * K, C), lambda n, t: (0, 0)),
        pl.BlockSpec((1, C), lambda n, t: (0, 0)),
    ]
    args = [x_nhwc, x_nhwc, x_nhwc, dw_w, dw_bias]
    scratch = [pltpu.VMEM((TH + 2 * halo, W + 2 * halo, C), x_nhwc.dtype)]

    if has_se:
        Csq = se["w1"].shape[1]
        args += [se["w1"], se["b1"], se["w2"], se["b2"]]
        in_specs += [
            pl.BlockSpec((C, Csq), lambda n, t: (0, 0)),
            pl.BlockSpec((1, Csq), lambda n, t: (0, 0)),
            pl.BlockSpec((Csq, C), lambda n, t: (0, 0)),
            pl.BlockSpec((1, C), lambda n, t: (0, 0)),
        ]
        out_shape = (jax.ShapeDtypeStruct((N, H, W, C), x_nhwc.dtype),
                     jax.ShapeDtypeStruct((N, 1, C), ACT_DTYPE))
        out_specs = (pl.BlockSpec((1, TH, W, C), lambda n, t: (n, t, 0, 0)),
                     pl.BlockSpec((1, 1, C), lambda n, t: (n, 0, 0)))
        scratch += [pltpu.VMEM((1, C), jnp.float32)]
    else:
        out_shape = jax.ShapeDtypeStruct((N, H, W, C), x_nhwc.dtype)
        out_specs = pl.BlockSpec((1, TH, W, C), lambda n, t: (n, t, 0, 0))

    res = pl.pallas_call(
        kernel,
        out_shape=out_shape,
        grid=(N, n_t),
        in_specs=in_specs,
        out_specs=out_specs,
        scratch_shapes=scratch,
        compiler_params=pltpu.CompilerParams(
            dimension_semantics=("parallel", "arbitrary"),
            vmem_limit_bytes=VMEM_LIMIT),
    )(*args)
    if has_se:
        return res
    return res, None


def _head_kernel(include_top, inv_hw):
    def kernel(*refs):
        if include_top:
            x_ref, w_ref, b_ref, fw_ref, fb_ref, out_ref, acc_ref = refs
        else:
            x_ref, w_ref, b_ref, out_ref, acc_ref = refs
        t = pl.program_id(1)

        @pl.when(t == 0)
        def _():
            acc_ref[...] = jnp.zeros_like(acc_ref)

        y = jnp.dot(x_ref[0], w_ref[...], preferred_element_type=jnp.float32)
        y = y + b_ref[...]                                     # folded-BN bias
        y = y * jax.nn.sigmoid(y)                              # SiLU
        acc_ref[...] += jnp.sum(y, axis=0, keepdims=True)      # partial global avg-pool

        @pl.when(t == pl.num_programs(1) - 1)
        def _():
            pooled = acc_ref[...] * inv_hw                     # (1, Chead)
            if include_top:
                # dropout is identity in eval mode; final Linear fused here.
                logits = _row_matmul(pooled, fw_ref[...]) + fb_ref[...]
                out_ref[0] = logits.astype(out_ref.dtype)
            else:
                out_ref[0] = pooled.astype(out_ref.dtype)
    return kernel


def head_conv_pool_fc(x_nhwc, w, bias, fc_w=None, fc_b=None, *, include_top):
    """Head 1x1 conv + BN + SiLU + global avg-pool (+ Linear) fused: the wide head activation
    never touches HBM.  FC output channels are padded to 128 for a lane-dense store."""
    N, H, W, Cin = x_nhwc.shape
    Chead = w.shape[1]
    HW = H * W
    TM = _pick_tm(HW)
    inv_hw = 1.0 / float(HW)
    xf = x_nhwc.reshape(N, HW, Cin)

    args = [xf, w, bias]
    in_specs = [
        pl.BlockSpec((1, TM, Cin), lambda n, t: (n, t, 0)),
        pl.BlockSpec((Cin, Chead), lambda n, t: (0, 0)),
        pl.BlockSpec((1, Chead), lambda n, t: (0, 0)),
    ]
    if include_top:
        ncp = fc_w.shape[1]
        args += [fc_w, fc_b]
        in_specs += [pl.BlockSpec((Chead, ncp), lambda n, t: (0, 0)),
                     pl.BlockSpec((1, ncp), lambda n, t: (0, 0))]
        out_shape = jax.ShapeDtypeStruct((N, 1, ncp), jnp.float32)
        out_spec = pl.BlockSpec((1, 1, ncp), lambda n, t: (n, 0, 0))
    else:
        out_shape = jax.ShapeDtypeStruct((N, 1, Chead), jnp.float32)
        out_spec = pl.BlockSpec((1, 1, Chead), lambda n, t: (n, 0, 0))

    return pl.pallas_call(
        _head_kernel(include_top, inv_hw),
        out_shape=out_shape,
        grid=(N, HW // TM),
        in_specs=in_specs,
        out_specs=out_spec,
        scratch_shapes=[pltpu.VMEM((1, Chead), jnp.float32)],
        compiler_params=pltpu.CompilerParams(
            dimension_semantics=("parallel", "arbitrary"),
            vmem_limit_bytes=VMEM_LIMIT),
    )(*args)


def stem_conv_bn_silu(x_nhwc, w_flat, bias):
    """3x3 stride-2 SAME stem conv: bf16 im2col in JAX glue, matmul+bias+SiLU in Pallas."""
    # TODO(synk): fold the im2col into the kernel (strided in-kernel reads) so the 9x-expanded
    #             patch tensor never hits HBM; small absolute cost (stem only, Cin=3).
    N, H, W, Cin = x_nhwc.shape
    K, stride = 3, 2
    Ho, Wo = math.ceil(H / stride), math.ceil(W / stride)
    pad_h = max((Ho - 1) * stride + K - H, 0)
    pad_w = max((Wo - 1) * stride + K - W, 0)
    xp = jnp.pad(x_nhwc, ((0, 0), (pad_h // 2, pad_h - pad_h // 2),
                          (pad_w // 2, pad_w - pad_w // 2), (0, 0)))
    patches = []
    for kh in range(K):
        for kw in range(K):
            patches.append(xp[:, kh:kh + stride * (Ho - 1) + 1:stride,
                               kw:kw + stride * (Wo - 1) + 1:stride, :])
    pat = jnp.concatenate(patches, axis=-1).astype(ACT_DTYPE)   # (N, Ho, Wo, K*K*Cin)
    return pointwise_conv_bn(pat, w_flat, bias, activation=True)


# ----------------------------- parameter construction ------------------------------

def build_model(key, blocks_args, gp):
    keys = iter(jax.random.split(key, 512))

    def bn_params(c):
        k1, k2, k3, k4 = jax.random.split(next(keys), 4)
        gamma = 1.0 + 0.1 * jax.random.normal(k1, (c,), jnp.float32)
        beta = 0.1 * jax.random.normal(k2, (c,), jnp.float32)
        mean = 0.1 * jax.random.normal(k3, (c,), jnp.float32)
        var = 1.0 + 0.1 * jnp.abs(jax.random.normal(k4, (c,), jnp.float32))
        scale = gamma / jnp.sqrt(var + gp.batch_norm_epsilon)
        bias = beta - mean * scale
        return scale, bias

    def folded_conv(cin, cout, cin_p, cout_p):
        """Conv weight with BN scale folded in (zero-padded lanes stay exactly zero)."""
        w = jax.random.normal(next(keys), (cin, cout), jnp.float32) * math.sqrt(2.0 / cin)
        scale, bias = bn_params(cout)
        w = w * scale[None, :]
        w = jnp.pad(w, ((0, cin_p - cin), (0, cout_p - cout)))
        bias = jnp.pad(bias, (0, cout_p - cout)).reshape(1, cout_p)
        return w.astype(ACT_DTYPE), bias

    def plain_conv(cin, cout, cin_p, cout_p):
        w = jax.random.normal(next(keys), (cin, cout), jnp.float32) * math.sqrt(2.0 / cin)
        w = jnp.pad(w, ((0, cin_p - cin), (0, cout_p - cout)))
        return w.astype(ACT_DTYPE)

    params = {}

    stem_out = round_filters(32, gp)
    stem_out_p = pad_to_lane(stem_out)
    sw, sb = folded_conv(3 * 3 * 3, stem_out, 3 * 3 * 3, stem_out_p)
    params["stem"] = dict(w=sw, bias=sb)

    block_params, block_cfgs = [], []
    last_out, last_out_p = stem_out, stem_out_p
    for block_args in blocks_args:
        block_args = block_args._replace(
            input_filters=round_filters(block_args.input_filters, gp),
            output_filters=round_filters(block_args.output_filters, gp),
            num_repeat=round_repeats(block_args.num_repeat, gp))
        n_rep = block_args.num_repeat
        reps = [block_args]
        if n_rep > 1:
            block_args = block_args._replace(input_filters=block_args.output_filters, stride=1)
        reps += [block_args] * (n_rep - 1)
        for ba in reps:
            cin, cout = ba.input_filters, ba.output_filters
            cin_p, cout_p = pad_to_lane(cin), pad_to_lane(cout)
            expand = ba.expand_ratio != 1
            cexp = cin * ba.expand_ratio
            cexp_p = pad_to_lane(cexp)
            has_se = ba.se_ratio is not None and 0 < ba.se_ratio <= 1
            skip = ba.id_skip and ba.stride == 1 and cin == cout
            K = ba.kernel_size
            p = {}
            if expand:
                p["expand_w"], p["expand_bias"] = folded_conv(cin, cexp, cin_p, cexp_p)
            dw = jax.random.normal(next(keys), (K * K, cexp), jnp.float32) * math.sqrt(2.0 / (K * K))
            dw_scale, dw_bias = bn_params(cexp)
            dw = dw * dw_scale[None, :]                           # BN scale folded into taps
            p["dw_w"] = jnp.pad(dw, ((0, 0), (0, cexp_p - cexp))).astype(ACT_DTYPE)
            p["dw_bias"] = jnp.pad(dw_bias, (0, cexp_p - cexp)).reshape(1, cexp_p)
            if has_se:
                csq = max(1, int(cin * ba.se_ratio))
                csq_p = pad_to_lane(csq)
                p["se_w1"] = plain_conv(cexp, csq, cexp_p, csq_p)          # bf16 SE weights
                b1 = 0.01 * jax.random.normal(next(keys), (csq,), jnp.float32)
                p["se_b1"] = jnp.pad(b1, (0, csq_p - csq)).reshape(1, csq_p)
                p["se_w2"] = plain_conv(csq, cexp, csq_p, cexp_p)
                b2 = 0.01 * jax.random.normal(next(keys), (cexp,), jnp.float32)
                p["se_b2"] = jnp.pad(b2, (0, cexp_p - cexp)).reshape(1, cexp_p)
            p["proj_w"], p["proj_bias"] = folded_conv(cexp, cout, cexp_p, cout_p)
            block_params.append(p)
            block_cfgs.append(dict(expand=expand, has_se=has_se, skip=skip,
                                   stride=ba.stride, kernel_size=K))
            last_out, last_out_p = cout, cout_p
    params["blocks"] = block_params

    head_out = round_filters(1280, gp)
    head_out_p = pad_to_lane(head_out)
    hw_, hb_ = folded_conv(last_out, head_out, last_out_p, head_out_p)
    params["head"] = dict(w=hw_, bias=hb_, out_channels=head_out)

    nc = gp.num_classes
    nc_p = pad_to_lane(nc)
    fc_w = 0.05 * jax.random.normal(next(keys), (head_out, nc), jnp.float32)
    fc_w = jnp.pad(fc_w, ((0, head_out_p - head_out), (0, nc_p - nc))).astype(ACT_DTYPE)
    fc_b = 0.01 * jax.random.normal(next(keys), (nc,), jnp.float32)
    fc_b = jnp.pad(fc_b, (0, nc_p - nc)).reshape(1, nc_p)
    params["fc"] = dict(w=fc_w, b=fc_b)
    return params, block_cfgs


# ----------------------------- forward ----------------------------------------------

def efficientnet_forward(x_nchw, params, block_cfgs, gp):
    x = jnp.transpose(x_nchw, (0, 2, 3, 1)).astype(ACT_DTYPE)    # NCHW -> NHWC, bf16 activations
    st = params["stem"]
    x = stem_conv_bn_silu(x, st["w"], st["bias"])
    for p, cfg in zip(params["blocks"], block_cfgs):
        inputs = x
        if cfg["expand"]:
            x = pointwise_conv_bn(x, p["expand_w"], p["expand_bias"], activation=True)
        se = None
        if cfg["has_se"]:
            se = dict(w1=p["se_w1"], b1=p["se_b1"], w2=p["se_w2"], b2=p["se_b2"])
        x, gate = depthwise_conv_bn_silu(x, p["dw_w"], p["dw_bias"], se,
                                         kernel_size=cfg["kernel_size"], stride=cfg["stride"])
        residual = inputs if cfg["skip"] else None
        # TODO(synk): drop_connect is a training-time stochastic op; identity in eval mode.
        x = pointwise_conv_bn(x, p["proj_w"], p["proj_bias"], activation=False,
                              residual=residual, gate=gate)
    hd = params["head"]
    if gp.include_top:
        logits = head_conv_pool_fc(x, hd["w"], hd["bias"],
                                   params["fc"]["w"], params["fc"]["b"], include_top=True)
        return logits[:, 0, :gp.num_classes]
    pooled = head_conv_pool_fc(x, hd["w"], hd["bias"], include_top=False)
    chead = hd["out_channels"]
    n = x.shape[0]
    return jnp.transpose(pooled[:, :, :chead].reshape(n, 1, 1, chead), (0, 3, 1, 2))


# ----------------------------- main --------------------------------------------------

if __name__ == "__main__":
    gp = GlobalParams(width_coefficient=0.5, depth_coefficient=None, image_size=16,
                      dropout_rate=0.2, num_classes=10, batch_norm_momentum=0.99,
                      batch_norm_epsilon=1e-3, drop_connect_rate=0.2,
                      depth_divisor=8, min_depth=None, include_top=True)
    blocks_args = [
        BlockArgs(num_repeat=1, kernel_size=3, stride=1, expand_ratio=1,
                  input_filters=32, output_filters=16, se_ratio=0.25, id_skip=True),
        BlockArgs(num_repeat=2, kernel_size=3, stride=1, expand_ratio=6,
                  input_filters=16, output_filters=24, se_ratio=0.25, id_skip=True),
    ]

    key = jax.random.PRNGKey(0)
    kp, kx = jax.random.split(key)
    params, block_cfgs = build_model(kp, blocks_args, gp)

    x = jax.random.normal(kx, (2, 3, 16, 16), jnp.float32)   # NCHW, like the PyTorch module

    fwd = jax.jit(lambda inp: efficientnet_forward(inp, params, block_cfgs, gp))
    out = fwd(x)
    jax.block_until_ready(out)
    assert out.shape == (2, gp.num_classes), out.shape
    assert bool(jnp.all(jnp.isfinite(out)))
    print("KERNEL_OK")
</pallas_src>

<mosaic_0001>
module attributes {stable_mosaic.version = 11 : i64} {
  func.func @kernel(%arg0: i32, %arg1: i32, %arg2: memref<1x64x27xbf16, #tpu.memory_space<vmem>>, %arg3: memref<27x128xbf16, #tpu.memory_space<vmem>>, %arg4: memref<1x128xf32, #tpu.memory_space<vmem>>, %arg5: memref<1x64x128xbf16, #tpu.memory_space<vmem>>) attributes {dimension_semantics = [#tpu.dimension_semantics<parallel>, #tpu.dimension_semantics<parallel>], iteration_bounds = array<i64: 2, 1>, scalar_prefetch = 0 : i64, scratch_operands = 0 : i64, tpu.core_type = #tpu.core_type<tc>, window_params = [{transform_indices = @transform_0, window_bounds = array<i64: 1, 64, 27>}, {pipeline_mode = #tpu.pipeline_mode<synchronous>, transform_indices = @transform_1, window_bounds = array<i64: 27, 128>}, {pipeline_mode = #tpu.pipeline_mode<synchronous>, transform_indices = @transform_2, window_bounds = array<i64: 1, 128>}, {transform_indices = @transform_3, window_bounds = array<i64: 1, 64, 128>}]} {
    %c0 = arith.constant 0 : index
    %c0_0 = arith.constant 0 : index
    %c0_1 = arith.constant 0 : index
    %0 = vector.load %arg2[%c0, %c0_0, %c0_1] : memref<1x64x27xbf16, #tpu.memory_space<vmem>>, vector<1x64x27xbf16>
    %1 = vector.shape_cast %0 : vector<1x64x27xbf16> to vector<64x27xbf16>
    %c0_2 = arith.constant 0 : index
    %c0_3 = arith.constant 0 : index
    %2 = vector.load %arg3[%c0_2, %c0_3] : memref<27x128xbf16, #tpu.memory_space<vmem>>, vector<27x128xbf16>
    %cst = arith.constant dense<0.000000e+00> : vector<64x128xf32>
    %3 = tpu.matmul %1, %2, %cst {dimension_numbers = #tpu.dot_dimension_numbers<[1], [0], [0], [1], [0, 0, 1, 1], [], []>} : vector<64x27xbf16>, vector<27x128xbf16>, vector<64x128xf32> -> vector<64x128xf32>
    %c0_4 = arith.constant 0 : index
    %c0_5 = arith.constant 0 : index
    %4 = vector.load %arg4[%c0_4, %c0_5] : memref<1x128xf32, #tpu.memory_space<vmem>>, vector<1x128xf32>
    %5 = vector.broadcast %4 : vector<1x128xf32> to vector<64x128xf32>
    %6 = arith.addf %3, %5 : vector<64x128xf32>
    %7 = arith.negf %6 : vector<64x128xf32>
    %8 = math.exp %7 : vector<64x128xf32>
    %cst_6 = arith.constant 1.000000e+00 : f32
    %9 = vector.broadcast %cst_6 : f32 to vector<64x128xf32>
    %10 = arith.addf %9, %8 : vector<64x128xf32>
    %11 = arith.divf %9, %10 : vector<64x128xf32>
    %12 = arith.mulf %6, %11 : vector<64x128xf32>
    %13 = arith.truncf %12 : vector<64x128xf32> to vector<64x128xbf16>
    %c0_7 = arith.constant 0 : index
    %c0_8 = arith.constant 0 : index
    %c0_9 = arith.constant 0 : index
    %14 = vector.load %arg5[%c0_7, %c0_8, %c0_9] : memref<1x64x128xbf16, #tpu.memory_space<vmem>>, vector<1x64x128xbf16>
    %15 = vector.shape_cast %14 : vector<1x64x128xbf16> to vector<64x128xbf16>
    %16 = vector.shape_cast %13 : vector<64x128xbf16> to vector<1x64x128xbf16>
    tpu.vector_store %arg5[%c0_7, %c0_8, %c0_9], %16 {strides = array<i32>} : memref<1x64x128xbf16, #tpu.memory_space<vmem>>, vector<1x64x128xbf16>,
    return
  }
  func.func @transform_0(%arg0: i32, %arg1: i32) -> (i32, i32, i32) {
    %c0_i32 = arith.constant 0 : i32
    %c0_i32_0 = arith.constant 0 : i32
    return %arg0, %arg1, %c0_i32 : i32, i32, i32
  }
  func.func @transform_1(%arg0: i32, %arg1: i32) -> (i32, i32) {
    %c0_i32 = arith.constant 0 : i32
    %c0_i32_0 = arith.constant 0 : i32
    %c0_i32_1 = arith.constant 0 : i32
    return %c0_i32, %c0_i32_0 : i32, i32
  }
  func.func @transform_2(%arg0: i32, %arg1: i32) -> (i32, i32) {
    %c0_i32 = arith.constant 0 : i32
    %c0_i32_0 = arith.constant 0 : i32
    %c0_i32_1 = arith.constant 0 : i32
    return %c0_i32, %c0_i32_0 : i32, i32
  }
  func.func @transform_3(%arg0: i32, %arg1: i32) -> (i32, i32, i32) {
    %c0_i32 = arith.constant 0 : i32
    %c0_i32_0 = arith.constant 0 : i32
    return %arg0, %arg1, %c0_i32 : i32, i32, i32
  }
}

module attributes {stable_mosaic.version = 11 : i64} {
  func.func @kernel(%arg0: i32, %arg1: i32, %arg2: memref<1x8x8x128xbf16, #tpu.memory_space<vmem>>, %arg3: memref<1x1x8x128xbf16, #tpu.memory_space<vmem>>, %arg4: memref<1x1x8x128xbf16, #tpu.memory_space<vmem>>, %arg5: memref<9x128xbf16, #tpu.memory_space<vmem>>, %arg6: memref<1x128xf32, #tpu.memory_space<vmem>>, %arg7: memref<128x128xbf16, #tpu.memory_space<vmem>>, %arg8: memref<1x128xf32, #tpu.memory_space<vmem>>, %arg9: memref<128x128xbf16, #tpu.memory_space<vmem>>, %arg10: memref<1x128xf32, #tpu.memory_space<vmem>>, %arg11: memref<1x8x8x128xbf16, #tpu.memory_space<vmem>>, %arg12: memref<1x1x128xbf16, #tpu.memory_space<vmem>>, %arg13: memref<10x10x128xbf16, #tpu.memory_space<vmem>>, %arg14: memref<1x128xf32, #tpu.memory_space<vmem>>) attributes {dimension_semantics = [#tpu.dimension_semantics<parallel>, #tpu.dimension_semantics<arbitrary>], iteration_bounds = array<i64: 2, 1>, scalar_prefetch = 0 : i64, scratch_operands = 2 : i64, tpu.core_type = #tpu.core_type<tc>, window_params = [{transform_indices = @transform_0, window_bounds = array<i64: 1, 8, 8, 128>}, {transform_indices = @transform_1, window_bounds = array<i64: 1, 1, 8, 128>}, {transform_indices = @transform_2, window_bounds = array<i64: 1, 1, 8, 128>}, {pipeline_mode = #tpu.pipeline_mode<synchronous>, transform_indices = @transform_3, window_bounds = array<i64: 9, 128>}, {pipeline_mode = #tpu.pipeline_mode<synchronous>, transform_indices = @transform_4, window_bounds = array<i64: 1, 128>}, {pipeline_mode = #tpu.pipeline_mode<synchronous>, transform_indices = @transform_5, window_bounds = array<i64: 128, 128>}, {pipeline_mode = #tpu.pipeline_mode<synchronous>, transform_indices = @transform_6, window_bounds = array<i64: 1, 128>}, {pipeline_mode = #tpu.pipeline_mode<synchronous>, transform_indices = @transform_7, window_bounds = array<i64: 128, 128>}, {pipeline_mode = #tpu.pipeline_mode<synchronous>, transform_indices = @transform_8, window_bounds = array<i64: 1, 128>}, {transform_indices = @transform_9, window_bounds = array<i64: 1, 8, 8, 128>}, {transform_indices = @transform_10, window_bounds = array<i64: 1, 1, 128>}]} {
    %cst = arith.constant 0.000000e+00 : bf16
    %0 = vector.broadcast %cst : bf16 to vector<10x10x128xbf16>
    %c0 = arith.constant 0 : index
    %c0_0 = arith.constant 0 : index
    %c0_1 = arith.constant 0 : index
    %1 = vector.load %arg13[%c0, %c0_0, %c0_1] : memref<10x10x128xbf16, #tpu.memory_space<vmem>>, vector<10x10x128xbf16>
    tpu.vector_store %arg13[%c0, %c0_0, %c0_1], %0 {strides = array<i32>} : memref<10x10x128xbf16, #tpu.memory_space<vmem>>, vector<10x10x128xbf16>,
    %c0_2 = arith.constant 0 : index
    %c0_3 = arith.constant 0 : index
    %c0_4 = arith.constant 0 : index
    %c0_5 = arith.constant 0 : index
    %2 = vector.load %arg2[%c0_2, %c0_3, %c0_4, %c0_5] : memref<1x8x8x128xbf16, #tpu.memory_space<vmem>>, vector<1x8x8x128xbf16>
    %3 = vector.shape_cast %2 : vector<1x8x8x128xbf16> to vector<8x8x128xbf16>
    %c1 = arith.constant 1 : index
    %c1_6 = arith.constant 1 : index
    %c0_7 = arith.constant 0 : index
    %4 = vector.load %arg13[%c1, %c1_6, %c0_7] : memref<10x10x128xbf16, #tpu.memory_space<vmem>>, vector<8x8x128xbf16>
    tpu.vector_store %arg13[%c1, %c1_6, %c0_7], %3 {strides = array<i32>} : memref<10x10x128xbf16, #tpu.memory_space<vmem>>, vector<8x8x128xbf16>,
    %c0_i32 = arith.constant 0 : i32
    %5 = arith.cmpi sgt, %arg1, %c0_i32 : i32
    %6 = arith.extui %5 : i1 to i32
    %c0_i32_8 = arith.constant 0 : i32
    %7 = arith.cmpi ne, %6, %c0_i32_8 : i32
    scf.if %7 {
      %c0_57 = arith.constant 0 : index
      %c0_58 = arith.constant 0 : index
      %c0_59 = arith.constant 0 : index
      %c0_60 = arith.constant 0 : index
      %102 = vector.load %arg3[%c0_57, %c0_58, %c0_59, %c0_60] : memref<1x1x8x128xbf16, #tpu.memory_space<vmem>>, vector<1x1x8x128xbf16>
      %103 = vector.shape_cast %102 : vector<1x1x8x128xbf16> to vector<1x8x128xbf16>
      %c0_61 = arith.constant 0 : index
      %c1_62 = arith.constant 1 : index
      %c0_63 = arith.constant 0 : index
      %104 = vector.load %arg13[%c0_61, %c1_62, %c0_63] : memref<10x10x128xbf16, #tpu.memory_space<vmem>>, vector<1x8x128xbf16>
      tpu.vector_store %arg13[%c0_61, %c1_62, %c0_63], %103 {strides = array<i32>} : memref<10x10x128xbf16, #tpu.memory_space<vmem>>, vector<1x8x128xbf16>,
    } else {
    }
    %c0_i32_9 = arith.constant 0 : i32
    %8 = arith.cmpi slt, %arg1, %c0_i32_9 : i32
    %9 = arith.extui %8 : i1 to i32
    %c0_i32_10 = arith.constant 0 : i32
    %10 = arith.cmpi ne, %9, %c0_i32_10 : i32
    scf.if %10 {
      %c0_57 = arith.constant 0 : index
      %c0_58 = arith.constant 0 : index
      %c0_59 = arith.constant 0 : index
      %c0_60 = arith.constant 0 : index
      %102 = vector.load %arg4[%c0_57, %c0_58, %c0_59, %c0_60] : memref<1x1x8x128xbf16, #tpu.memory_space<vmem>>, vector<1x1x8x128xbf16>
      %103 = vector.shape_cast %102 : vector<1x1x8x128xbf16> to vector<1x8x128xbf16>
      %c9 = arith.constant 9 : index
      %c1_61 = arith.constant 1 : index
      %c0_62 = arith.constant 0 : index
      %104 = vector.load %arg13[%c9, %c1_61, %c0_62] : memref<10x10x128xbf16, #tpu.memory_space<vmem>>, vector<1x8x128xbf16>
      tpu.vector_store %arg13[%c9, %c1_61, %c0_62], %103 {strides = array<i32>} : memref<10x10x128xbf16, #tpu.memory_space<vmem>>, vector<1x8x128xbf16>,
    } else {
    }
    %c0_11 = arith.constant 0 : index
    %c0_12 = arith.constant 0 : index
    %11 = vector.load %arg5[%c0_11, %c0_12] : memref<9x128xbf16, #tpu.memory_space<vmem>>, vector<9x128xbf16>
    %cst_13 = arith.constant 0.000000e+00 : f32
    %12 = vector.broadcast %cst_13 : f32 to vector<8x8x128xf32>
    %c0_14 = arith.constant 0 : index
    %c0_15 = arith.constant 0 : index
    %c0_16 = arith.constant 0 : index
    %13 = vector.load %arg13[%c0_14, %c0_15, %c0_16] : memref<10x10x128xbf16, #tpu.memory_space<vmem>>, vector<8x8x128xbf16>
    %14 = vector.extract_strided_slice %11 {offsets = [0, 0], sizes = [1, 128], strides = [1, 1]} : vector<9x128xbf16> to vector<1x128xbf16>
    %15 = vector.shape_cast %14 : vector<1x128xbf16> to vector<1x1x128xbf16>
    %16 = vector.broadcast %15 : vector<1x1x128xbf16> to vector<8x8x128xbf16>
    %17 = arith.mulf %13, %16 : vector<8x8x128xbf16>
    %18 = arith.extf %17 : vector<8x8x128xbf16> to vector<8x8x128xf32>
    %19 = arith.addf %12, %18 : vector<8x8x128xf32>
    %c0_17 = arith.constant 0 : index
    %c1_18 = arith.constant 1 : index
    %c0_19 = arith.constant 0 : index
    %20 = vector.load %arg13[%c0_17, %c1_18, %c0_19] : memref<10x10x128xbf16, #tpu.memory_space<vmem>>, vector<8x8x128xbf16>
    %21 = vector.extract_strided_slice %11 {offsets = [1, 0], sizes = [1, 128], strides = [1, 1]} : vector<9x128xbf16> to vector<1x128xbf16>
    %22 = vector.shape_cast %21 : vector<1x128xbf16> to vector<1x1x128xbf16>
    %23 = vector.broadcast %22 : vector<1x1x128xbf16> to vector<8x8x128xbf16>
    %24 = arith.mulf %20, %23 : vector<8x8x128xbf16>
    %25 = arith.extf %24 : vector<8x8x128xbf16> to vector<8x8x128xf32>
    %26 = arith.addf %19, %25 : vector<8x8x128xf32>
    %c0_20 = arith.constant 0 : index
    %c2 = arith.constant 2 : index
    %c0_21 = arith.constant 0 : index
    %27 = vector.load %arg13[%c0_20, %c2, %c0_21] : memref<10x10x128xbf16, #tpu.memory_space<vmem>>, vector<8x8x128xbf16>
    %28 = vector.extract_strided_slice %11 {offsets = [2, 0], sizes = [1, 128], strides = [1, 1]} : vector<9x128xbf16> to vector<1x128xbf16>
    %29 = vector.shape_cast %28 : vector<1x128xbf16> to vector<1x1x128xbf16>
    %30 = vector.broadcast %29 : vector<1x1x128xbf16> to vector<8x8x128xbf16>
    %31 = arith.mulf %27, %30 : vector<8x8x128xbf16>
    %32 = arith.extf %31 : vector<8x8x128xbf16> to vector<8x8x128xf32>
    %33 = arith.addf %26, %32 : vector<8x8x128xf32>
    %c1_22 = arith.constant 1 : index
    %c0_23 = arith.constant 0 : index
    %c0_24 = arith.constant 0 : index
    %34 = vector.load %arg13[%c1_22, %c0_23, %c0_24] : memref<10x10x128xbf16, #tpu.memory_space<vmem>>, vector<8x8x128xbf16>
    %35 = vector.extract_strided_slice %11 {offsets = [3, 0], sizes = [1, 128], strides = [1, 1]} : vector<9x128xbf16> to vector<1x128xbf16>
    %36 = vector.shape_cast %35 : vector<1x128xbf16> to vector<1x1x128xbf16>
    %37 = vector.broadcast %36 : vector<1x1x128xbf16> to vector<8x8x128xbf16>
    %38 = arith.mulf %34, %37 : vector<8x8x128xbf16>
    %39 = arith.extf %38 : vector<8x8x128xbf16> to vector<8x8x128xf32>
    %40 = arith.addf %33, %39 : vector<8x8x128xf32>
    %c1_25 = arith.constant 1 : index
    %c1_26 = arith.constant 1 : index
    %c0_27 = arith.constant 0 : index
    %41 = vector.load %arg13[%c1_25, %c1_26, %c0_27] : memref<10x10x128xbf16, #tpu.memory_space<vmem>>, vector<8x8x128xbf16>
    %42 = vector.extract_strided_slice %11 {offsets = [4, 0], sizes = [1, 128], strides = [1, 1]} : vector<9x128xbf16> to vector<1x128xbf16>
    %43 = vector.shape_cast %42 : vector<1x128xbf16> to vector<1x1x128xbf16>
    %44 = vector.broadcast %43 : vector<1x1x128xbf16> to vector<8x8x128xbf16>
    %45 = arith.mulf %41, %44 : vector<8x8x128xbf16>
    %46 = arith.extf %45 : vector<8x8x128xbf16> to vector<8x8x128xf32>
    %47 = arith.addf %40, %46 : vector<8x8x128xf32>
    %c1_28 = arith.constant 1 : index
    %c2_29 = arith.constant 2 : index
    %c0_30 = arith.constant 0 : index
    %48 = vector.load %arg13[%c1_28, %c2_29, %c0_30] : memref<10x10x128xbf16, #tpu.memory_space<vmem>>, vector<8x8x128xbf16>
    %49 = vector.extract_strided_slice %11 {offsets = [5, 0], sizes = [1, 128], strides = [1, 1]} : vector<9x128xbf16> to vector<1x128xbf16>
    %50 = vector.shape_cast %49 : vector<1x128xbf16> to vector<1x1x128xbf16>
    %51 = vector.broadcast %50 : vector<1x1x128xbf16> to vector<8x8x128xbf16>
    %52 = arith.mulf %48, %51 : vector<8x8x128xbf16>
    %53 = arith.extf %52 : vector<8x8x128xbf16> to vector<8x8x128xf32>
    %54 = arith.addf %47, %53 : vector<8x8x128xf32>
    %c2_31 = arith.constant 2 : index
    %c0_32 = arith.constant 0 : index
    %c0_33 = arith.constant 0 : index
    %55 = vector.load %arg13[%c2_31, %c0_32, %c0_33] : memref<10x10x128xbf16, #tpu.memory_space<vmem>>, vector<8x8x128xbf16>
    %56 = vector.extract_strided_slice %11 {offsets = [6, 0], sizes = [1, 128], strides = [1, 1]} : vector<9x128xbf16> to vector<1x128xbf16>
    %57 = vector.shape_cast %56 : vector<1x128xbf16> to vector<1x1x128xbf16>
    %58 = vector.broadcast %57 : vector<1x1x128xbf16> to vector<8x8x128xbf16>
    %59 = arith.mulf %55, %58 : vector<8x8x128xbf16>
    %60 = arith.extf %59 : vector<8x8x128xbf16> to vector<8x8x128xf32>
    %61 = arith.addf %54, %60 : vector<8x8x128xf32>
    %c2_34 = arith.constant 2 : index
    %c1_35 = arith.constant 1 : index
    %c0_36 = arith.constant 0 : index
    %62 = vector.load %arg13[%c2_34, %c1_35, %c0_36] : memref<10x10x128xbf16, #tpu.memory_space<vmem>>, vector<8x8x128xbf16>
    %63 = vector.extract_strided_slice %11 {offsets = [7, 0], sizes = [1, 128], strides = [1, 1]} : vector<9x128xbf16> to vector<1x128xbf16>
    %64 = vector.shape_cast %63 : vector<1x128xbf16> to vector<1x1x128xbf16>
    %65 = vector.broadcast %64 : vector<1x1x128xbf16> to vector<8x8x128xbf16>
    %66 = arith.mulf %62, %65 : vector<8x8x128xbf16>
    %67 = arith.extf %66 : vector<8x8x128xbf16> to vector<8x8x128xf32>
    %68 = arith.addf %61, %67 : vector<8x8x128xf32>
    %c2_37 = arith.constant 2 : index
    %c2_38 = arith.constant 2 : index
    %c0_39 = arith.constant 0 : index
    %69 = vector.load %arg13[%c2_37, %c2_38, %c0_39] : memref<10x10x128xbf16, #tpu.memory_space<vmem>>, vector<8x8x128xbf16>
    %70 = vector.extract_strided_slice %11 {offsets = [8, 0], sizes = [1, 128], strides = [1, 1]} : vector<9x128xbf16> to vector<1x128xbf16>
    %71 = vector.shape_cast %70 : vector<1x128xbf16> to vector<1x1x128xbf16>
    %72 = vector.broadcast %71 : vector<1x1x128xbf16> to vector<8x8x128xbf16>
    %73 = arith.mulf %69, %72 : vector<8x8x128xbf16>
    %74 = arith.extf %73 : vector<8x8x128xbf16> to vector<8x8x128xf32>
    %75 = arith.addf %68, %74 : vector<8x8x128xf32>
    %c0_40 = arith.constant 0 : index
    %c0_41 = arith.constant 0 : index
    %76 = vector.load %arg6[%c0_40, %c0_41] : memref<1x128xf32, #tpu.memory_space<vmem>>, vector<1x128xf32>
    %77 = vector.shape_cast %76 : vector<1x128xf32> to vector<1x1x128xf32>
    %78 = vector.broadcast %77 : vector<1x1x128xf32> to vector<8x8x128xf32>
    %79 = arith.addf %75, %78 : vector<8x8x128xf32>
    %80 = arith.negf %79 : vector<8x8x128xf32>
    %81 = math.exp %80 : vector<8x8x128xf32>
    %cst_42 = arith.constant 1.000000e+00 : f32
    %82 = vector.broadcast %cst_42 : f32 to vector<8x8x128xf32>
    %83 = arith.addf %82, %81 : vector<8x8x128xf32>
    %84 = arith.divf %82, %83 : vector<8x8x128xf32>
    %85 = arith.mulf %79, %84 : vector<8x8x128xf32>
    %86 = arith.truncf %85 : vector<8x8x128xf32> to vector<8x8x128xbf16>
    %c0_43 = arith.constant 0 : index
    %c0_44 = arith.constant 0 : index
    %c0_45 = arith.constant 0 : index
    %c0_46 = arith.constant 0 : index
    %87 = vector.load %arg11[%c0_43, %c0_44, %c0_45, %c0_46] : memref<1x8x8x128xbf16, #tpu.memory_space<vmem>>, vector<1x8x8x128xbf16>
    %88 = vector.shape_cast %87 : vector<1x8x8x128xbf16> to vector<8x8x128xbf16>
    %89 = vector.shape_cast %86 : vector<8x8x128xbf16> to vector<1x8x8x128xbf16>
    tpu.vector_store %arg11[%c0_43, %c0_44, %c0_45, %c0_46], %89 {strides = array<i32>} : memref<1x8x8x128xbf16, #tpu.memory_space<vmem>>, vector<1x8x8x128xbf16>,
    %c0_i32_47 = arith.constant 0 : i32
    %90 = arith.cmpi eq, %arg1, %c0_i32_47 : i32
    %91 = arith.extui %90 : i1 to i32
    %c0_i32_48 = arith.constant 0 : i32
    %92 = arith.cmpi ne, %91, %c0_i32_48 : i32
    scf.if %92 {
      %cst_57 = arith.constant 0.000000e+00 : f32
      %102 = vector.broadcast %cst_57 : f32 to vector<1x128xf32>
      %c0_58 = arith.constant 0 : index
      %c0_59 = arith.constant 0 : index
      %103 = vector.load %arg14[%c0_58, %c0_59] : memref<1x128xf32, #tpu.memory_space<vmem>>, vector<1x128xf32>
      tpu.vector_store %arg14[%c0_58, %c0_59], %102 {strides = array<i32>} : memref<1x128xf32, #tpu.memory_space<vmem>>, vector<1x128xf32>,
    } else {
    }
    %cst_49 = arith.constant dense<0.000000e+00> : vector<8x128xf32>
    %93 = vector.multi_reduction <add>, %85, %cst_49 [0] : vector<8x8x128xf32> to vector<8x128xf32>
    %c0_50 = arith.constant 0 : index
    %c0_51 = arith.constant 0 : index
    %94 = vector.load %arg14[%c0_50, %c0_51] : memref<1x128xf32, #tpu.memory_space<vmem>>, vector<1x128xf32>
    %cst_52 = arith.constant dense<0.000000e+00> : vector<128xf32>
    %95 = vector.multi_reduction <add>, %93, %cst_52 [0] : vector<8x128xf32> to vector<128xf32>
    %96 = vector.shape_cast %95 : vector<128xf32> to vector<1x128xf32>
    %97 = arith.addf %94, %96 : vector<1x128xf32>
    %c0_53 = arith.constant 0 : index
    %c0_54 = arith.constant 0 : index
    %98 = vector.load %arg14[%c0_53, %c0_54] : memref<1x128xf32, #tpu.memory_space<vmem>>, vector<1x128xf32>
    tpu.vector_store %arg14[%c0_53, %c0_54], %97 {strides = array<i32>} : memref<1x128xf32, #tpu.memory_space<vmem>>, vector<1x128xf32>,
    %c0_i32_55 = arith.constant 0 : i32
    %99 = arith.cmpi eq, %arg1, %c0_i32_55 : i32
    %100 = arith.extui %99 : i1 to i32
    %c0_i32_56 = arith.constant 0 : i32
    %101 = arith.cmpi ne, %100, %c0_i32_56 : i32
    scf.if %101 {
      %c0_57 = arith.constant 0 : index
      %c0_58 = arith.constant 0 : index
      %102 = vector.load %arg14[%c0_57, %c0_58] : memref<1x128xf32, #tpu.memory_space<vmem>>, vector<1x128xf32>
      %cst_59 = arith.constant 1.562500e-02 : f32
      %103 = vector.broadcast %cst_59 : f32 to vector<1x128xf32>
      %104 = arith.mulf %102, %103 : vector<1x128xf32>
      %c0_60 = arith.constant 0 : index
      %c0_61 = arith.constant 0 : index
      %105 = vector.load %arg7[%c0_60, %c0_61] : memref<128x128xbf16, #tpu.memory_space<vmem>>, vector<128x128xbf16>
      %106 = arith.truncf %104 : vector<1x128xf32> to vector<1x128xbf16>
      %107 = vector.shape_cast %106 : vector<1x128xbf16> to vector<1x128xbf16>
      %108 = vector.broadcast %107 : vector<1x128xbf16> to vector<8x128xbf16>
      %cst_62 = arith.constant dense<0.000000e+00> : vector<8x128xf32>
      %109 = tpu.matmul %108, %105, %cst_62 {dimension_numbers = #tpu.dot_dimension_numbers<[1], [0], [0], [1], [0, 0, 1, 1], [], []>} : vector<8x128xbf16>, vector<128x128xbf16>, vector<8x128xf32> -> vector<8x128xf32>
      %110 = vector.extract_strided_slice %109 {offsets = [0, 0], sizes = [1, 128], strides = [1, 1]} : vector<8x128xf32> to vector<1x128xf32>
      %c0_63 = arith.constant 0 : index
      %c0_64 = arith.constant 0 : index
      %111 = vector.load %arg8[%c0_63, %c0_64] : memref<1x128xf32, #tpu.memory_space<vmem>>, vector<1x128xf32>
      %112 = arith.addf %110, %111 : vector<1x128xf32>
      %113 = arith.negf %112 : vector<1x128xf32>
      %114 = math.exp %113 : vector<1x128xf32>
      %cst_65 = arith.constant 1.000000e+00 : f32
      %115 = vector.broadcast %cst_65 : f32 to vector<1x128xf32>
      %116 = arith.addf %115, %114 : vector<1x128xf32>
      %117 = arith.divf %115, %116 : vector<1x128xf32>
      %118 = arith.mulf %112, %117 : vector<1x128xf32>
      %c0_66 = arith.constant 0 : index
      %c0_67 = arith.constant 0 : index
      %119 = vector.load %arg9[%c0_66, %c0_67] : memref<128x128xbf16, #tpu.memory_space<vmem>>, vector<128x128xbf16>
      %120 = arith.truncf %118 : vector<1x128xf32> to vector<1x128xbf16>
      %121 = vector.shape_cast %120 : vector<1x128xbf16> to vector<1x128xbf16>
      %122 = vector.broadcast %121 : vector<1x128xbf16> to vector<8x128xbf16>
      %cst_68 = arith.constant dense<0.000000e+00> : vector<8x128xf32>
      %123 = tpu.matmul %122, %119, %cst_68 {dimension_numbers = #tpu.dot_dimension_numbers<[1], [0], [0], [1], [0, 0, 1, 1], [], []>} : vector<8x128xbf16>, vector<128x128xbf16>, vector<8x128xf32> -> vector<8x128xf32>
      %124 = vector.extract_strided_slice %123 {offsets = [0, 0], sizes = [1, 128], strides = [1, 1]} : vector<8x128xf32> to vector<1x128xf32>
      %c0_69 = arith.constant 0 : index
      %c0_70 = arith.constant 0 : index
      %125 = vector.load %arg10[%c0_69, %c0_70] : memref<1x128xf32, #tpu.memory_space<vmem>>, vector<1x128xf32>
      %126 = arith.addf %124, %125 : vector<1x128xf32>
      %127 = arith.negf %126 : vector<1x128xf32>
      %128 = math.exp %127 : vector<1x128xf32>
      %cst_71 = arith.constant 1.000000e+00 : f32
      %129 = vector.broadcast %cst_71 : f32 to vector<1x128xf32>
      %130 = arith.addf %129, %128 : vector<1x128xf32>
      %131 = arith.divf %129, %130 : vector<1x128xf32>
      %132 = arith.truncf %131 : vector<1x128xf32> to vector<1x128xbf16>
      %c0_72 = arith.constant 0 : index
      %c0_73 = arith.constant 0 : index
      %c0_74 = arith.constant 0 : index
      %133 = vector.load %arg12[%c0_72, %c0_73, %c0_74] : memref<1x1x128xbf16, #tpu.memory_space<vmem>>, vector<1x1x128xbf16>
      %134 = vector.shape_cast %133 : vector<1x1x128xbf16> to vector<1x128xbf16>
      %135 = vector.shape_cast %132 : vector<1x128xbf16> to vector<1x1x128xbf16>
      tpu.vector_store %arg12[%c0_72, %c0_73, %c0_74], %135 {strides = array<i32>} : memref<1x1x128xbf16, #tpu.memory_space<vmem>>, vector<1x1x128xbf16>,
    } else {
    }
    return
  }
  func.func @transform_0(%arg0: i32, %arg1: i32) -> (i32, i32, i32, i32) {
    %c0_i32 = arith.constant 0 : i32
    %c0_i32_0 = arith.constant 0 : i32
    %c0_i32_1 = arith.constant 0 : i32
    return %arg0, %arg1, %c0_i32, %c0_i32_0 : i32, i32, i32, i32
  }
  func.func @transform_1(%arg0: i32, %arg1: i32) -> (i32, i32, i32, i32) {
    %c8_i32 = arith.constant 8 : i32
    %0 = arith.muli %arg1, %c8_i32 : i32
    %c1_i32 = arith.constant 1 : i32
    %1 = arith.subi %0, %c1_i32 : i32
    %c0_i32 = arith.constant 0 : i32
    %2 = arith.maxsi %1, %c0_i32 : i32
    %c0_i32_0 = arith.constant 0 : i32
    %c0_i32_1 = arith.constant 0 : i32
    %c0_i32_2 = arith.constant 0 : i32
    return %arg0, %2, %c0_i32_0, %c0_i32_1 : i32, i32, i32, i32
  }
  func.func @transform_2(%arg0: i32, %arg1: i32) -> (i32, i32, i32, i32) {
    %c1_i32 = arith.constant 1 : i32
    %0 = arith.addi %arg1, %c1_i32 : i32
    %c8_i32 = arith.constant 8 : i32
    %1 = arith.muli %0, %c8_i32 : i32
    %c7_i32 = arith.constant 7 : i32
    %2 = arith.minsi %1, %c7_i32 : i32
    %c0_i32 = arith.constant 0 : i32
    %c0_i32_0 = arith.constant 0 : i32
    %c0_i32_1 = arith.constant 0 : i32
    return %arg0, %2, %c0_i32, %c0_i32_0 : i32, i32, i32, i32
  }
  func.func @transform_3(%arg0: i32, %arg1: i32) -> (i32, i32) {
    %c0_i32 = arith.constant 0 : i32
    %c0_i32_0 = arith.constant 0 : i32
    %c0_i32_1 = arith.constant 0 : i32
    return %c0_i32, %c0_i32_0 : i32, i32
  }
  func.func @transform_4(%arg0: i32, %arg1: i32) -> (i32, i32) {
    %c0_i32 = arith.constant 0 : i32
    %c0_i32_0 = arith.constant 0 : i32
    %c0_i32_1 = arith.constant 0 : i32
    return %c0_i32, %c0_i32_0 : i32, i32
  }
  func.func @transform_5(%arg0: i32, %arg1: i32) -> (i32, i32) {
    %c0_i32 = arith.constant 0 : i32
    %c0_i32_0 = arith.constant 0 : i32
    %c0_i32_1 = arith.constant 0 : i32
    return %c0_i32, %c0_i32_0 : i32, i32
  }
  func.func @transform_6(%arg0: i32, %arg1: i32) -> (i32, i32) {
    %c0_i32 = arith.constant 0 : i32
    %c0_i32_0 = arith.constant 0 : i32
    %c0_i32_1 = arith.constant 0 : i32
    return %c0_i32, %c0_i32_0 : i32, i32
  }
  func.func @transform_7(%arg0: i32, %arg1: i32) -> (i32, i32) {
    %c0_i32 = arith.constant 0 : i32
    %c0_i32_0 = arith.constant 0 : i32
    %c0_i32_1 = arith.constant 0 : i32
    return %c0_i32, %c0_i32_0 : i32, i32
  }
  func.func @transform_8(%arg0: i32, %arg1: i32) -> (i32, i32) {
    %c0_i32 = arith.constant 0 : i32
    %c0_i32_0 = arith.constant 0 : i32
    %c0_i32_1 = arith.constant 0 : i32
    return %c0_i32, %c0_i32_0 : i32, i32
  }
  func.func @transform_9(%arg0: i32, %arg1: i32) -> (i32, i32, i32, i32) {
    %c0_i32 = arith.constant 0 : i32
    %c0_i32_0 = arith.constant 0 : i32
    %c0_i32_1 = arith.constant 0 : i32
    return %arg0, %arg1, %c0_i32, %c0_i32_0 : i32, i32, i32, i32
  }
  func.func @transform_10(%arg0: i32, %arg1: i32) -> (i32, i32, i32) {
    %c0_i32 = arith.constant 0 : i32
    %c0_i32_0 = arith.constant 0 : i32
    %c0_i32_1 = arith.constant 0 : i32
    return %arg0, %c0_i32, %c0_i32_0 : i32, i32, i32
  }
}

module attributes {stable_mosaic.version = 11 : i64} {
  func.func @kernel(%arg0: i32, %arg1: i32, %arg2: memref<1x64x128xbf16, #tpu.memory_space<vmem>>, %arg3: memref<128x128xbf16, #tpu.memory_space<vmem>>, %arg4: memref<1x128xf32, #tpu.memory_space<vmem>>, %arg5: memref<1x1x128xbf16, #tpu.memory_space<vmem>>, %arg6: memref<1x64x128xbf16, #tpu.memory_space<vmem>>) attributes {dimension_semantics = [#tpu.dimension_semantics<parallel>, #tpu.dimension_semantics<parallel>], iteration_bounds = array<i64: 2, 1>, scalar_prefetch = 0 : i64, scratch_operands = 0 : i64, tpu.core_type = #tpu.core_type<tc>, window_params = [{transform_indices = @transform_0, window_bounds = array<i64: 1, 64, 128>}, {pipeline_mode = #tpu.pipeline_mode<synchronous>, transform_indices = @transform_1, window_bounds = array<i64: 128, 128>}, {pipeline_mode = #tpu.pipeline_mode<synchronous>, transform_indices = @transform_2, window_bounds = array<i64: 1, 128>}, {transform_indices = @transform_3, window_bounds = array<i64: 1, 1, 128>}, {transform_indices = @transform_4, window_bounds = array<i64: 1, 64, 128>}]} {
    %c0 = arith.constant 0 : index
    %c0_0 = arith.constant 0 : index
    %c0_1 = arith.constant 0 : index
    %0 = vector.load %arg2[%c0, %c0_0, %c0_1] : memref<1x64x128xbf16, #tpu.memory_space<vmem>>, vector<1x64x128xbf16>
    %1 = vector.shape_cast %0 : vector<1x64x128xbf16> to vector<64x128xbf16>
    %c0_2 = arith.constant 0 : index
    %c0_3 = arith.constant 0 : index
    %c0_4 = arith.constant 0 : index
    %2 = vector.load %arg5[%c0_2, %c0_3, %c0_4] : memref<1x1x128xbf16, #tpu.memory_space<vmem>>, vector<1x1x128xbf16>
    %3 = vector.shape_cast %2 : vector<1x1x128xbf16> to vector<1x128xbf16>
    %4 = vector.broadcast %3 : vector<1x128xbf16> to vector<64x128xbf16>
    %5 = arith.mulf %1, %4 : vector<64x128xbf16>
    %c0_5 = arith.constant 0 : index
    %c0_6 = arith.constant 0 : index
    %6 = vector.load %arg3[%c0_5, %c0_6] : memref<128x128xbf16, #tpu.memory_space<vmem>>, vector<128x128xbf16>
    %cst = arith.constant dense<0.000000e+00> : vector<64x128xf32>
    %7 = tpu.matmul %5, %6, %cst {dimension_numbers = #tpu.dot_dimension_numbers<[1], [0], [0], [1], [0, 0, 1, 1], [], []>} : vector<64x128xbf16>, vector<128x128xbf16>, vector<64x128xf32> -> vector<64x128xf32>
    %c0_7 = arith.constant 0 : index
    %c0_8 = arith.constant 0 : index
    %8 = vector.load %arg4[%c0_7, %c0_8] : memref<1x128xf32, #tpu.memory_space<vmem>>, vector<1x128xf32>
    %9 = vector.broadcast %8 : vector<1x128xf32> to vector<64x128xf32>
    %10 = arith.addf %7, %9 : vector<64x128xf32>
    %11 = arith.truncf %10 : vector<64x128xf32> to vector<64x128xbf16>
    %c0_9 = arith.constant 0 : index
    %c0_10 = arith.constant 0 : index
    %c0_11 = arith.constant 0 : index
    %12 = vector.load %arg6[%c0_9, %c0_10, %c0_11] : memref<1x64x128xbf16, #tpu.memory_space<vmem>>, vector<1x64x128xbf16>
    %13 = vector.shape_cast %12 : vector<1x64x128xbf16> to vector<64x128xbf16>
    %14 = vector.shape_cast %11 : vector<64x128xbf16> to vector<1x64x128xbf16>
    tpu.vector_store %arg6[%c0_9, %c0_10, %c0_11], %14 {strides = array<i32>} : memref<1x64x128xbf16, #tpu.memory_space<vmem>>, vector<1x64x128xbf16>,
    return
  }
  func.func @transform_0(%arg0: i32, %arg1: i32) -> (i32, i32, i32) {
    %c0_i32 = arith.constant 0 : i32
    %c0_i32_0 = arith.constant 0 : i32
    return %arg0, %arg1, %c0_i32 : i32, i32, i32
  }
  func.func @transform_1(%arg0: i32, %arg1: i32) -> (i32, i32) {
    %c0_i32 = arith.constant 0 : i32
    %c0_i32_0 = arith.constant 0 : i32
    %c0_i32_1 = arith.constant 0 : i32
    return %c0_i32, %c0_i32_0 : i32, i32
  }
  func.func @transform_2(%arg0: i32, %arg1: i32) -> (i32, i32) {
    %c0_i32 = arith.constant 0 : i32
    %c0_i32_0 = arith.constant 0 : i32
    %c0_i32_1 = arith.constant 0 : i32
    return %c0_i32, %c0_i32_0 : i32, i32
  }
  func.func @transform_3(%arg0: i32, %arg1: i32) -> (i32, i32, i32) {
    %c0_i32 = arith.constant 0 : i32
    %c0_i32_0 = arith.constant 0 : i32
    %c0_i32_1 = arith.constant 0 : i32
    return %arg0, %c0_i32, %c0_i32_0 : i32, i32, i32
  }
  func.func @transform_4(%arg0: i32, %arg1: i32) -> (i32, i32, i32) {
    %c0_i32 = arith.constant 0 : i32
    %c0_i32_0 = arith.constant 0 : i32
    return %arg0, %arg1, %c0_i32 : i32, i32, i32
  }
}

module attributes {stable_mosaic.version = 11 : i64} {
  func.func @kernel(%arg0: i32, %arg1: i32, %arg2: memref<1x64x128xbf16, #tpu.memory_space<vmem>>, %arg3: memref<128x128xbf16, #tpu.memory_space<vmem>>, %arg4: memref<1x128xf32, #tpu.memory_space<vmem>>, %arg5: memref<1x64x128xbf16, #tpu.memory_space<vmem>>) attributes {dimension_semantics = [#tpu.dimension_semantics<parallel>, #tpu.dimension_semantics<parallel>], iteration_bounds = array<i64: 2, 1>, scalar_prefetch = 0 : i64, scratch_operands = 0 : i64, tpu.core_type = #tpu.core_type<tc>, window_params = [{transform_indices = @transform_0, window_bounds = array<i64: 1, 64, 128>}, {pipeline_mode = #tpu.pipeline_mode<synchronous>, transform_indices = @transform_1, window_bounds = array<i64: 128, 128>}, {pipeline_mode = #tpu.pipeline_mode<synchronous>, transform_indices = @transform_2, window_bounds = array<i64: 1, 128>}, {transform_indices = @transform_3, window_bounds = array<i64: 1, 64, 128>}]} {
    %c0 = arith.constant 0 : index
    %c0_0 = arith.constant 0 : index
    %c0_1 = arith.constant 0 : index
    %0 = vector.load %arg2[%c0, %c0_0, %c0_1] : memref<1x64x128xbf16, #tpu.memory_space<vmem>>, vector<1x64x128xbf16>
    %1 = vector.shape_cast %0 : vector<1x64x128xbf16> to vector<64x128xbf16>
    %c0_2 = arith.constant 0 : index
    %c0_3 = arith.constant 0 : index
    %2 = vector.load %arg3[%c0_2, %c0_3] : memref<128x128xbf16, #tpu.memory_space<vmem>>, vector<128x128xbf16>
    %cst = arith.constant dense<0.000000e+00> : vector<64x128xf32>
    %3 = tpu.matmul %1, %2, %cst {dimension_numbers = #tpu.dot_dimension_numbers<[1], [0], [0], [1], [0, 0, 1, 1], [], []>} : vector<64x128xbf16>, vector<128x128xbf16>, vector<64x128xf32> -> vector<64x128xf32>
    %c0_4 = arith.constant 0 : index
    %c0_5 = arith.constant 0 : index
    %4 = vector.load %arg4[%c0_4, %c0_5] : memref<1x128xf32, #tpu.memory_space<vmem>>, vector<1x128xf32>
    %5 = vector.broadcast %4 : vector<1x128xf32> to vector<64x128xf32>
    %6 = arith.addf %3, %5 : vector<64x128xf32>
    %7 = arith.negf %6 : vector<64x128xf32>
    %8 = math.exp %7 : vector<64x128xf32>
    %cst_6 = arith.constant 1.000000e+00 : f32
    %9 = vector.broadcast %cst_6 : f32 to vector<64x128xf32>
    %10 = arith.addf %9, %8 : vector<64x128xf32>
    %11 = arith.divf %9, %10 : vector<64x128xf32>
    %12 = arith.mulf %6, %11 : vector<64x128xf32>
    %13 = arith.truncf %12 : vector<64x128xf32> to vector<64x128xbf16>
    %c0_7 = arith.constant 0 : index
    %c0_8 = arith.constant 0 : index
    %c0_9 = arith.constant 0 : index
    %14 = vector.load %arg5[%c0_7, %c0_8, %c0_9] : memref<1x64x128xbf16, #tpu.memory_space<vmem>>, vector<1x64x128xbf16>
    %15 = vector.shape_cast %14 : vector<1x64x128xbf16> to vector<64x128xbf16>
    %16 = vector.shape_cast %13 : vector<64x128xbf16> to vector<1x64x128xbf16>
    tpu.vector_store %arg5[%c0_7, %c0_8, %c0_9], %16 {strides = array<i32>} : memref<1x64x128xbf16, #tpu.memory_space<vmem>>, vector<1x64x128xbf16>,
    return
  }
  func.func @transform_0(%arg0: i32, %arg1: i32) -> (i32, i32, i32) {
    %c0_i32 = arith.constant 0 : i32
    %c0_i32_0 = arith.constant 0 : i32
    return %arg0, %arg1, %c0_i32 : i32, i32, i32
  }
  func.func @transform_1(%arg0: i32, %arg1: i32) -> (i32, i32) {
    %c0_i32 = arith.constant 0 : i32
    %c0_i32_0 = arith.constant 0 : i32
    %c0_i32_1 = arith.constant 0 : i32
    return %c0_i32, %c0_i32_0 : i32, i32
  }
  func.func @transform_2(%arg0: i32, %arg1: i32) -> (i32, i32) {
    %c0_i32 = arith.constant 0 : i32
    %c0_i32_0 = arith.constant 0 : i32
    %c0_i32_1 = arith.constant 0 : i32
    return %c0_i32, %c0_i32_0 : i32, i32
  }
  func.func @transform_3(%arg0: i32, %arg1: i32) -> (i32, i32, i32) {
    %c0_i32 = arith.constant 0 : i32
    %c0_i32_0 = arith.constant 0 : i32
    return %arg0, %arg1, %c0_i32 : i32, i32, i32
  }
}

module attributes {stable_mosaic.version = 11 : i64} {
  func.func @kernel(%arg0: i32, %arg1: i32, %arg2: memref<1x64x128xbf16, #tpu.memory_space<vmem>>, %arg3: memref<128x128xbf16, #tpu.memory_space<vmem>>, %arg4: memref<1x128xf32, #tpu.memory_space<vmem>>, %arg5: memref<1x1x128xbf16, #tpu.memory_space<vmem>>, %arg6: memref<1x64x128xbf16, #tpu.memory_space<vmem>>, %arg7: memref<1x64x128xbf16, #tpu.memory_space<vmem>>) attributes {dimension_semantics = [#tpu.dimension_semantics<parallel>, #tpu.dimension_semantics<parallel>], iteration_bounds = array<i64: 2, 1>, scalar_prefetch = 0 : i64, scratch_operands = 0 : i64, tpu.core_type = #tpu.core_type<tc>, window_params = [{transform_indices = @transform_0, window_bounds = array<i64: 1, 64, 128>}, {pipeline_mode = #tpu.pipeline_mode<synchronous>, transform_indices = @transform_1, window_bounds = array<i64: 128, 128>}, {pipeline_mode = #tpu.pipeline_mode<synchronous>, transform_indices = @transform_2, window_bounds = array<i64: 1, 128>}, {transform_indices = @transform_3, window_bounds = array<i64: 1, 1, 128>}, {transform_indices = @transform_4, window_bounds = array<i64: 1, 64, 128>}, {transform_indices = @transform_5, window_bounds = array<i64: 1, 64, 128>}]} {
    %c0 = arith.constant 0 : index
    %c0_0 = arith.constant 0 : index
    %c0_1 = arith.constant 0 : index
    %0 = vector.load %arg2[%c0, %c0_0, %c0_1] : memref<1x64x128xbf16, #tpu.memory_space<vmem>>, vector<1x64x128xbf16>
    %1 = vector.shape_cast %0 : vector<1x64x128xbf16> to vector<64x128xbf16>
    %c0_2 = arith.constant 0 : index
    %c0_3 = arith.constant 0 : index
    %c0_4 = arith.constant 0 : index
    %2 = vector.load %arg5[%c0_2, %c0_3, %c0_4] : memref<1x1x128xbf16, #tpu.memory_space<vmem>>, vector<1x1x128xbf16>
    %3 = vector.shape_cast %2 : vector<1x1x128xbf16> to vector<1x128xbf16>
    %4 = vector.broadcast %3 : vector<1x128xbf16> to vector<64x128xbf16>
    %5 = arith.mulf %1, %4 : vector<64x128xbf16>
    %c0_5 = arith.constant 0 : index
    %c0_6 = arith.constant 0 : index
    %6 = vector.load %arg3[%c0_5, %c0_6] : memref<128x128xbf16, #tpu.memory_space<vmem>>, vector<128x128xbf16>
    %cst = arith.constant dense<0.000000e+00> : vector<64x128xf32>
    %7 = tpu.matmul %5, %6, %cst {dimension_numbers = #tpu.dot_dimension_numbers<[1], [0], [0], [1], [0, 0, 1, 1], [], []>} : vector<64x128xbf16>, vector<128x128xbf16>, vector<64x128xf32> -> vector<64x128xf32>
    %c0_7 = arith.constant 0 : index
    %c0_8 = arith.constant 0 : index
    %8 = vector.load %arg4[%c0_7, %c0_8] : memref<1x128xf32, #tpu.memory_space<vmem>>, vector<1x128xf32>
    %9 = vector.broadcast %8 : vector<1x128xf32> to vector<64x128xf32>
    %10 = arith.addf %7, %9 : vector<64x128xf32>
    %c0_9 = arith.constant 0 : index
    %c0_10 = arith.constant 0 : index
    %c0_11 = arith.constant 0 : index
    %11 = vector.load %arg6[%c0_9, %c0_10, %c0_11] : memref<1x64x128xbf16, #tpu.memory_space<vmem>>, vector<1x64x128xbf16>
    %12 = vector.shape_cast %11 : vector<1x64x128xbf16> to vector<64x128xbf16>
    %13 = arith.extf %12 : vector<64x128xbf16> to vector<64x128xf32>
    %14 = arith.addf %10, %13 : vector<64x128xf32>
    %15 = arith.truncf %14 : vector<64x128xf32> to vector<64x128xbf16>
    %c0_12 = arith.constant 0 : index
    %c0_13 = arith.constant 0 : index
    %c0_14 = arith.constant 0 : index
    %16 = vector.load %arg7[%c0_12, %c0_13, %c0_14] : memref<1x64x128xbf16, #tpu.memory_space<vmem>>, vector<1x64x128xbf16>
    %17 = vector.shape_cast %16 : vector<1x64x128xbf16> to vector<64x128xbf16>
    %18 = vector.shape_cast %15 : vector<64x128xbf16> to vector<1x64x128xbf16>
    tpu.vector_store %arg7[%c0_12, %c0_13, %c0_14], %18 {strides = array<i32>} : memref<1x64x128xbf16, #tpu.memory_space<vmem>>, vector<1x64x128xbf16>,
    return
  }
  func.func @transform_0(%arg0: i32, %arg1: i32) -> (i32, i32, i32) {
    %c0_i32 = arith.constant 0 : i32
    %c0_i32_0 = arith.constant 0 : i32
    return %arg0, %arg1, %c0_i32 : i32, i32, i32
  }
  func.func @transform_1(%arg0: i32, %arg1: i32) -> (i32, i32) {
    %c0_i32 = arith.constant 0 : i32
    %c0_i32_0 = arith.constant 0 : i32
    %c0_i32_1 = arith.constant 0 : i32
    return %c0_i32, %c0_i32_0 : i32, i32
  }
  func.func @transform_2(%arg0: i32, %arg1: i32) -> (i32, i32) {
    %c0_i32 = arith.constant 0 : i32
    %c0_i32_0 = arith.constant 0 : i32
    %c0_i32_1 = arith.constant 0 : i32
    return %c0_i32, %c0_i32_0 : i32, i32
  }
  func.func @transform_3(%arg0: i32, %arg1: i32) -> (i32, i32, i32) {
    %c0_i32 = arith.constant 0 : i32
    %c0_i32_0 = arith.constant 0 : i32
    %c0_i32_1 = arith.constant 0 : i32
    return %arg0, %c0_i32, %c0_i32_0 : i32, i32, i32
  }
  func.func @transform_4(%arg0: i32, %arg1: i32) -> (i32, i32, i32) {
    %c0_i32 = arith.constant 0 : i32
    %c0_i32_0 = arith.constant 0 : i32
    return %arg0, %arg1, %c0_i32 : i32, i32, i32
  }
  func.func @transform_5(%arg0: i32, %arg1: i32) -> (i32, i32, i32) {
    %c0_i32 = arith.constant 0 : i32
    %c0_i32_0 = arith.constant 0 : i32
    return %arg0, %arg1, %c0_i32 : i32, i32, i32
  }
}

module attributes {stable_mosaic.version = 11 : i64} {
  func.func @kernel(%arg0: i32, %arg1: i32, %arg2: memref<1x64x128xbf16, #tpu.memory_space<vmem>>, %arg3: memref<128x640xbf16, #tpu.memory_space<vmem>>, %arg4: memref<1x640xf32, #tpu.memory_space<vmem>>, %arg5: memref<640x128xbf16, #tpu.memory_space<vmem>>, %arg6: memref<1x128xf32, #tpu.memory_space<vmem>>, %arg7: memref<1x1x128xf32, #tpu.memory_space<vmem>>, %arg8: memref<1x640xf32, #tpu.memory_space<vmem>>) attributes {dimension_semantics = [#tpu.dimension_semantics<parallel>, #tpu.dimension_semantics<arbitrary>], iteration_bounds = array<i64: 2, 1>, scalar_prefetch = 0 : i64, scratch_operands = 1 : i64, tpu.core_type = #tpu.core_type<tc>, window_params = [{transform_indices = @transform_0, window_bounds = array<i64: 1, 64, 128>}, {pipeline_mode = #tpu.pipeline_mode<synchronous>, transform_indices = @transform_1, window_bounds = array<i64: 128, 640>}, {pipeline_mode = #tpu.pipeline_mode<synchronous>, transform_indices = @transform_2, window_bounds = array<i64: 1, 640>}, {pipeline_mode = #tpu.pipeline_mode<synchronous>, transform_indices = @transform_3, window_bounds = array<i64: 640, 128>}, {pipeline_mode = #tpu.pipeline_mode<synchronous>, transform_indices = @transform_4, window_bounds = array<i64: 1, 128>}, {transform_indices = @transform_5, window_bounds = array<i64: 1, 1, 128>}]} {
    %c0_i32 = arith.constant 0 : i32
    %0 = arith.cmpi eq, %arg1, %c0_i32 : i32
    %1 = arith.extui %0 : i1 to i32
    %c0_i32_0 = arith.constant 0 : i32
    %2 = arith.cmpi ne, %1, %c0_i32_0 : i32
    scf.if %2 {
      %cst_15 = arith.constant 0.000000e+00 : f32
      %24 = vector.broadcast %cst_15 : f32 to vector<1x640xf32>
      %c0_16 = arith.constant 0 : index
      %c0_17 = arith.constant 0 : index
      %25 = vector.load %arg8[%c0_16, %c0_17] : memref<1x640xf32, #tpu.memory_space<vmem>>, vector<1x640xf32>
      tpu.vector_store %arg8[%c0_16, %c0_17], %24 {strides = array<i32>} : memref<1x640xf32, #tpu.memory_space<vmem>>, vector<1x640xf32>,
    } else {
    }
    %c0 = arith.constant 0 : index
    %c0_1 = arith.constant 0 : index
    %c0_2 = arith.constant 0 : index
    %3 = vector.load %arg2[%c0, %c0_1, %c0_2] : memref<1x64x128xbf16, #tpu.memory_space<vmem>>, vector<1x64x128xbf16>
    %4 = vector.shape_cast %3 : vector<1x64x128xbf16> to vector<64x128xbf16>
    %c0_3 = arith.constant 0 : index
    %c0_4 = arith.constant 0 : index
    %5 = vector.load %arg3[%c0_3, %c0_4] : memref<128x640xbf16, #tpu.memory_space<vmem>>, vector<128x640xbf16>
    %cst = arith.constant dense<0.000000e+00> : vector<64x640xf32>
    %6 = tpu.matmul %4, %5, %cst {dimension_numbers = #tpu.dot_dimension_numbers<[1], [0], [0], [1], [0, 0, 1, 1], [], []>} : vector<64x128xbf16>, vector<128x640xbf16>, vector<64x640xf32> -> vector<64x640xf32>
    %c0_5 = arith.constant 0 : index
    %c0_6 = arith.constant 0 : index
    %7 = vector.load %arg4[%c0_5, %c0_6] : memref<1x640xf32, #tpu.memory_space<vmem>>, vector<1x640xf32>
    %8 = vector.broadcast %7 : vector<1x640xf32> to vector<64x640xf32>
    %9 = arith.addf %6, %8 : vector<64x640xf32>
    %10 = arith.negf %9 : vector<64x640xf32>
    %11 = math.exp %10 : vector<64x640xf32>
    %cst_7 = arith.constant 1.000000e+00 : f32
    %12 = vector.broadcast %cst_7 : f32 to vector<64x640xf32>
    %13 = arith.addf %12, %11 : vector<64x640xf32>
    %14 = arith.divf %12, %13 : vector<64x640xf32>
    %15 = arith.mulf %9, %14 : vector<64x640xf32>
    %c0_8 = arith.constant 0 : index
    %c0_9 = arith.constant 0 : index
    %16 = vector.load %arg8[%c0_8, %c0_9] : memref<1x640xf32, #tpu.memory_space<vmem>>, vector<1x640xf32>
    %cst_10 = arith.constant dense<0.000000e+00> : vector<640xf32>
    %17 = vector.multi_reduction <add>, %15, %cst_10 [0] : vector<64x640xf32> to vector<640xf32>
    %18 = vector.shape_cast %17 : vector<640xf32> to vector<1x640xf32>
    %19 = arith.addf %16, %18 : vector<1x640xf32>
    %c0_11 = arith.constant 0 : index
    %c0_12 = arith.constant 0 : index
    %20 = vector.load %arg8[%c0_11, %c0_12] : memref<1x640xf32, #tpu.memory_space<vmem>>, vector<1x640xf32>
    tpu.vector_store %arg8[%c0_11, %c0_12], %19 {strides = array<i32>} : memref<1x640xf32, #tpu.memory_space<vmem>>, vector<1x640xf32>,
    %c0_i32_13 = arith.constant 0 : i32
    %21 = arith.cmpi eq, %arg1, %c0_i32_13 : i32
    %22 = arith.extui %21 : i1 to i32
    %c0_i32_14 = arith.constant 0 : i32
    %23 = arith.cmpi ne, %22, %c0_i32_14 : i32
    scf.if %23 {
      %c0_15 = arith.constant 0 : index
      %c0_16 = arith.constant 0 : index
      %24 = vector.load %arg8[%c0_15, %c0_16] : memref<1x640xf32, #tpu.memory_space<vmem>>, vector<1x640xf32>
      %cst_17 = arith.constant 1.562500e-02 : f32
      %25 = vector.broadcast %cst_17 : f32 to vector<1x640xf32>
      %26 = arith.mulf %24, %25 : vector<1x640xf32>
      %c0_18 = arith.constant 0 : index
      %c0_19 = arith.constant 0 : index
      %27 = vector.load %arg5[%c0_18, %c0_19] : memref<640x128xbf16, #tpu.memory_space<vmem>>, vector<640x128xbf16>
      %28 = arith.truncf %26 : vector<1x640xf32> to vector<1x640xbf16>
      %29 = vector.shape_cast %28 : vector<1x640xbf16> to vector<1x640xbf16>
      %30 = vector.broadcast %29 : vector<1x640xbf16> to vector<8x640xbf16>
      %cst_20 = arith.constant dense<0.000000e+00> : vector<8x128xf32>
      %31 = tpu.matmul %30, %27, %cst_20 {dimension_numbers = #tpu.dot_dimension_numbers<[1], [0], [0], [1], [0, 0, 1, 1], [], []>} : vector<8x640xbf16>, vector<640x128xbf16>, vector<8x128xf32> -> vector<8x128xf32>
      %32 = vector.extract_strided_slice %31 {offsets = [0, 0], sizes = [1, 128], strides = [1, 1]} : vector<8x128xf32> to vector<1x128xf32>
      %c0_21 = arith.constant 0 : index
      %c0_22 = arith.constant 0 : index
      %33 = vector.load %arg6[%c0_21, %c0_22] : memref<1x128xf32, #tpu.memory_space<vmem>>, vector<1x128xf32>
      %34 = arith.addf %32, %33 : vector<1x128xf32>
      %c0_23 = arith.constant 0 : index
      %c0_24 = arith.constant 0 : index
      %c0_25 = arith.constant 0 : index
      %35 = vector.load %arg7[%c0_23, %c0_24, %c0_25] : memref<1x1x128xf32, #tpu.memory_space<vmem>>, vector<1x1x128xf32>
      %36 = vector.shape_cast %35 : vector<1x1x128xf32> to vector<1x128xf32>
      %37 = vector.shape_cast %34 : vector<1x128xf32> to vector<1x1x128xf32>
      tpu.vector_store %arg7[%c0_23, %c0_24, %c0_25], %37 {strides = array<i32>} : memref<1x1x128xf32, #tpu.memory_space<vmem>>, vector<1x1x128xf32>,
    } else {
    }
    return
  }
  func.func @transform_0(%arg0: i32, %arg1: i32) -> (i32, i32, i32) {
    %c0_i32 = arith.constant 0 : i32
    %c0_i32_0 = arith.constant 0 : i32
    return %arg0, %arg1, %c0_i32 : i32, i32, i32
  }
  func.func @transform_1(%arg0: i32, %arg1: i32) -> (i32, i32) {
    %c0_i32 = arith.constant 0 : i32
    %c0_i32_0 = arith.constant 0 : i32
    %c0_i32_1 = arith.constant 0 : i32
    return %c0_i32, %c0_i32_0 : i32, i32
  }
  func.func @transform_2(%arg0: i32, %arg1: i32) -> (i32, i32) {
    %c0_i32 = arith.constant 0 : i32
    %c0_i32_0 = arith.constant 0 : i32
    %c0_i32_1 = arith.constant 0 : i32
    return %c0_i32, %c0_i32_0 : i32, i32
  }
  func.func @transform_3(%arg0: i32, %arg1: i32) -> (i32, i32) {
    %c0_i32 = arith.constant 0 : i32
    %c0_i32_0 = arith.constant 0 : i32
    %c0_i32_1 = arith.constant 0 : i32
    return %c0_i32, %c0_i32_0 : i32, i32
  }
  func.func @transform_4(%arg0: i32, %arg1: i32) -> (i32, i32) {
    %c0_i32 = arith.constant 0 : i32
    %c0_i32_0 = arith.constant 0 : i32
    %c0_i32_1 = arith.constant 0 : i32
    return %c0_i32, %c0_i32_0 : i32, i32
  }
  func.func @transform_5(%arg0: i32, %arg1: i32) -> (i32, i32, i32) {
    %c0_i32 = arith.constant 0 : i32
    %c0_i32_0 = arith.constant 0 : i32
    %c0_i32_1 = arith.constant 0 : i32
    return %arg0, %c0_i32, %c0_i32_0 : i32, i32, i32
  }
}

</mosaic_0001>

<llo_original>
// kernel: _lambda_.12
$region0: #{_lambda_.12}
  #allocation0 [shape = 'u32[]', space=smem, size = 0x4, offset = 0x4, fixed_abs, tag = 'smem constant byte address 0x4 - core index']
  #allocation1 [shape = 'u32[72,128]{1,0:T(1,128)}', space=vmem, size = 0x9000, scoped, tag = 'internal scratch']
  %s0 = inlined_call_operand.vmem [shape: bf16[2,64,128], index: 0, kind: input, shape index: {}]
  %s1 = inlined_call_operand.vmem [shape: bf16[128,128], index: 1, kind: input, shape index: {}]
  %s2 = inlined_call_operand.vmem [shape: f32[1,128], index: 2, kind: input, shape index: {}]
  %s3 = inlined_call_operand.vmem [shape: bf16[2,1,128], index: 3, kind: input, shape index: {}]
  %s4 = inlined_call_operand.vmem [shape: bf16[2,64,128], index: 4, kind: output, shape index: {}]
  %s5 = sld [smem:[#allocation0]]
  $region49: #{_lambda_.12} parent=0
    _
  %s7 = ssub.s32 1, %s5
  %s8 = scalar_select 0, %s7, %s5
  loop: start=0, step=1, limit=4
  $region2: #{_lambda_.12} parent=0 // loop_pre_header
    _
  $region3: #{_lambda_.12} parent=0 // loop_header
    %s10 = sphi 0, %s14
    %p11 = scmp.ge.s32.totalorder %s10, 4
    %s17 = sphi 0, %s29
    %s18 = sphi 0, %s25
    %s19 = sphi 0, %s17
    %s20 = sphi 0, %s18
    %s21 = sphi 0, %s19
    %s22 = sphi 0, %s20
    %s34 = sphi 0, %s36
    %s37 = sphi 0, %s34
    %s38 = sphi 0, %s37
    %s54 = sphi 0, %s38
    %s58 = sphi 0, %s58
    %s60 = sphi 0, %s58
    %s61 = sphi 0, %s60
    %s75 = sphi 0, %s61
    %s79 = sphi 0, %s79
    %s81 = sphi 0, %s79
    %s82 = sphi 0, %s81
    %s96 = sphi 0, %s82
    %s102 = sphi 0, %s104
    %s105 = sphi 0, %s102
    %s106 = sphi 0, %s105
    %s122 = sphi 0, %s106
    %s130 = sphi 0, %s132
    %s133 = sphi 0, %s130
    %s134 = sphi 0, %s133
    %s150 = sphi 0, %s134
  $region4: #{_lambda_.12} parent=0 // loop_header_branch
    %13 = sbr.rel (%p11) target = $region8
  $region5: #{_lambda_.12} parent=0 // loop_body
    %s15 = ssub.s32 %s10, 1
    %s16 = ssub.s32 %s10, 2
    %s23 = sadd.s32 1, %s18
    %p24 = scmp.ge.s32.totalorder %s23, 1
    %s25 = scalar_select %p24, 0, %s23
    %s26 = sadd.s32 1, %s17
    %s27 = scalar_select %p24, %s26, %s17
    %p28 = scmp.ge.s32.totalorder %s27, 2
    %s29 = scalar_select %p28, 0, %s27
    %s30 = ssub.s32 %s17, %s29
    %s31 = ssub.s32 %s18, %s25
    %s32 = sor.u32 %s30, %s31
    %p33 = scmp.eq.s32.totalorder %s32, 0
    %s35 = sadd.s32 %s34, 1
    %s36 = scalar_select %p33, %s34, %s35
    %p39 = pneg %p33
    %p40 = scmp.eq.s32.totalorder %s10, 1
    %p41 = por %p39, %p40
    %p42 = scmp.ne.s32.totalorder %s34, %s37
    %p43 = scmp.eq.s32.totalorder %s10, 0
    %p44 = por %p42, %p43
    %p45 = scmp.ne.s32.totalorder %s34, %s37
    %p46 = scmp.eq.s32.totalorder %s15, 1
    %p47 = por %p45, %p46
    %p48 = scmp.ne.s32.totalorder %s37, %s38
    %p49 = scmp.eq.s32.totalorder %s15, 0
    %p50 = por %p48, %p49
    %p51 = scmp.ne.s32.totalorder %s37, %s38
    %p52 = scmp.eq.s32.totalorder %s16, 1
    %p53 = por %p51, %p52
    %p55 = scmp.ne.s32.totalorder %s38, %s54
    %p56 = scmp.eq.s32.totalorder %s16, 0
    %p57 = por %p55, %p56
    %s59 = sadd.s32 %s58, 1
    %p62 = scmp.eq.s32.totalorder %s10, 1
    %p63 = scmp.ne.s32.totalorder %s58, %s60
    %p64 = scmp.eq.s32.totalorder %s10, 0
    %p65 = por %p63, %p64
    %p66 = scmp.ne.s32.totalorder %s58, %s60
    %p67 = scmp.eq.s32.totalorder %s15, 1
    %p68 = por %p66, %p67
    %p69 = scmp.ne.s32.totalorder %s60, %s61
    %p70 = scmp.eq.s32.totalorder %s15, 0
    %p71 = por %p69, %p70
    %p72 = scmp.ne.s32.totalorder %s60, %s61
    %p73 = scmp.eq.s32.totalorder %s16, 1
    %p74 = por %p72, %p73
    %p76 = scmp.ne.s32.totalorder %s61, %s75
    %p77 = scmp.eq.s32.totalorder %s16, 0
    %p78 = por %p76, %p77
    %s80 = sadd.s32 %s79, 1
    %p83 = scmp.eq.s32.totalorder %s10, 1
    %p84 = scmp.ne.s32.totalorder %s79, %s81
    %p85 = scmp.eq.s32.totalorder %s10, 0
    %p86 = por %p84, %p85
    %p87 = scmp.ne.s32.totalorder %s79, %s81
    %p88 = scmp.eq.s32.totalorder %s15, 1
    %p89 = por %p87, %p88
    %p90 = scmp.ne.s32.totalorder %s81, %s82
    %p91 = scmp.eq.s32.totalorder %s15, 0
    %p92 = por %p90, %p91
    %p93 = scmp.ne.s32.totalorder %s81, %s82
    %p94 = scmp.eq.s32.totalorder %s16, 1
    %p95 = por %p93, %p94
    %p97 = scmp.ne.s32.totalorder %s82, %s96
    %p98 = scmp.eq.s32.totalorder %s16, 0
    %p99 = por %p97, %p98
    %s100 = ssub.s32 %s17, %s29
    %p101 = scmp.eq.s32.totalorder %s100, 0
    %s103 = sadd.s32 %s102, 1
    %s104 = scalar_select %p101, %s102, %s103
    %p107 = pneg %p101
    %p108 = scmp.eq.s32.totalorder %s10, 1
    %p109 = por %p107, %p108
    %p110 = scmp.ne.s32.totalorder %s102, %s105
    %p111 = scmp.eq.s32.totalorder %s10, 0
    %p112 = por %p110, %p111
    %p113 = scmp.ne.s32.totalorder %s102, %s105
    %p114 = scmp.eq.s32.totalorder %s15, 1
    %p115 = por %p113, %p114
    %p116 = scmp.ne.s32.totalorder %s105, %s106
    %p117 = scmp.eq.s32.totalorder %s15, 0
    %p118 = por %p116, %p117
    %p119 = scmp.ne.s32.totalorder %s105, %s106
    %p120 = scmp.eq.s32.totalorder %s16, 1
    %p121 = por %p119, %p120
    %p123 = scmp.ne.s32.totalorder %s106, %s122
    %p124 = scmp.eq.s32.totalorder %s16, 0
    %p125 = por %p123, %p124
    %s126 = ssub.s32 %s17, %s29
    %s127 = ssub.s32 %s18, %s25
    %s128 = sor.u32 %s126, %s127
    %p129 = scmp.eq.s32.totalorder %s128, 0
    %s131 = sadd.s32 %s130, 1
    %s132 = scalar_select %p129, %s130, %s131
    %p135 = pneg %p129
    %p136 = scmp.eq.s32.totalorder %s10, 1
    %p137 = por %p135, %p136
    %p138 = scmp.ne.s32.totalorder %s130, %s133
    %p139 = scmp.eq.s32.totalorder %s10, 0
    %p140 = por %p138, %p139
    %p141 = scmp.ne.s32.totalorder %s130, %s133
    %p142 = scmp.eq.s32.totalorder %s15, 1
    %p143 = por %p141, %p142
    %p144 = scmp.ne.s32.totalorder %s133, %s134
    %p145 = scmp.eq.s32.totalorder %s15, 0
    %p146 = por %p144, %p145
    %p147 = scmp.ne.s32.totalorder %s133, %s134
    %p148 = scmp.eq.s32.totalorder %s16, 1
    %p149 = por %p147, %p148
    %p151 = scmp.ne.s32.totalorder %s134, %s150
    %p152 = scmp.eq.s32.totalorder %s16, 0
    %p153 = por %p151, %p152
    %p154 = scmp.le.s32.totalorder 1, %s10
    %p155 = scmp.lt.s32.totalorder %s10, 3
    %p156 = pnand %p154, %p155
    %p157 = pneg %p156
    // Predicated region
    $region9: #{_lambda_.12} parent=5 // pred_check
      _
    $region10: #{_lambda_.12} parent=5 // pred_check_branch
      %159 = sbr.rel (%p156) target = $region12
    $region11: #{_lambda_.12} parent=5 // pred_region
      %s160 = ssub.s32 %s10, 1
      // Predicated region
      $region13: #{_lambda_.12} parent=11 // pred_check
        %p161 = pneg %p71
      $region14: #{_lambda_.12} parent=11 // pred_check_branch
        %163 = sbr.rel (%p161) target = $region16
      $region15: #{_lambda_.12} parent=11 // pred_region
        _
      $region16: #{_lambda_.12} parent=11 // pred_fallthru
        _
      // Predicated region
      $region17: #{_lambda_.12} parent=11 // pred_check
        %p164 = pneg %p92
      $region18: #{_lambda_.12} parent=11 // pred_check_branch
        %166 = sbr.rel (%p164) target = $region20
      $region19: #{_lambda_.12} parent=11 // pred_region
        _
      $region20: #{_lambda_.12} parent=11 // pred_fallthru
        _
    $region12: #{_lambda_.12} parent=5 // pred_fallthru
      _
    %p167 = scmp.lt.s32.totalorder %s10, 2
    // Predicated region
    $region21: #{_lambda_.12} parent=5 // pred_check
      %p168 = pneg %p167
    $region22: #{_lambda_.12} parent=5 // pred_check_branch
      %170 = sbr.rel (%p168) target = $region24
    $region23: #{_lambda_.12} parent=5 // pred_region
      // Predicated region
      $region25: #{_lambda_.12} parent=23 // pred_check
        %p171 = pneg %p44
      $region26: #{_lambda_.12} parent=23 // pred_check_branch
        %173 = sbr.rel (%p171) target = $region28
      $region27: #{_lambda_.12} parent=23 // pred_region
        %s174 = smul.u32 8, %s18
        %p175 = scmp.lt.s32.totalorder %s17, 1
        %s176 = scalar_select %p175, %s17, 1
        %p177 = scmp.lt.s32.totalorder %s174, 7
        %s178 = scalar_select %p177, %s174, 7
        %s179 = smul.addr %s176, 8
        %s180 = sadd.s32 %s178, %s179
        %s181 = smul.addr %s180, 4
        %s182 = scalar_lea.vmem %s0, %s181
        %s183 = smul.u32 8, %s18
      $region28: #{_lambda_.12} parent=23 // pred_fallthru
        _
      // Predicated region
      $region29: #{_lambda_.12} parent=23 // pred_check
        %p184 = pneg %p112
      $region30: #{_lambda_.12} parent=23 // pred_check_branch
        %186 = sbr.rel (%p184) target = $region32
      $region31: #{_lambda_.12} parent=23 // pred_region
        %p187 = scmp.lt.s32.totalorder %s17, 1
        %s188 = scalar_select %p187, %s17, 1
        %s189 = scalar_lea.vmem %s3, %s188
      $region32: #{_lambda_.12} parent=23 // pred_fallthru
        _
    $region24: #{_lambda_.12} parent=5 // pred_fallthru
      _
    %p190 = scmp.le.s32.totalorder 1, %s10
    %p191 = scmp.lt.s32.totalorder %s10, 3
    %p192 = pnand %p190, %p191
    %p193 = pneg %p192
    // Predicated region
    $region33: #{_lambda_.12} parent=5 // pred_check
      _
    $region34: #{_lambda_.12} parent=5 // pred_check_branch
      %195 = sbr.rel (%p192) target = $region36
    $region35: #{_lambda_.12} parent=5 // pred_region
      %s196 = ssub.s32 %s10, 1
      %s197 = smul.u32 8, %s20
      %p198 = scmp.lt.s32.totalorder %s19, 1
      %s199 = scalar_select %p198, %s19, 1
      %p200 = scmp.lt.s32.totalorder %s197, 7
      %s201 = scalar_select %p200, %s197, 7
      %s202 = smul.addr %s199, 8
      %s203 = sadd.s32 %s201, %s202
      %s204 = smul.addr %s203, 4
      %s205 = scalar_lea.vmem %s0, %s204
      %p206 = pneg %p50
      %p207 = pneg %p47
      %p208 = pneg %p71
      %p209 = pneg %p68
      %p210 = pneg %p92
      %p211 = pneg %p89
      %p212 = scmp.lt.s32.totalorder %s19, 1
      %s213 = scalar_select %p212, %s19, 1
      %s214 = scalar_lea.vmem %s3, %s213
      %p215 = pneg %p118
      %p216 = pneg %p115
      %p217 = pneg %p146
      %p218 = pneg %p143
      %s219 = smul.u32 8, %s20
      %p220 = scmp.lt.s32.totalorder %s19, 1
      %s221 = scalar_select %p220, %s19, 1
      %p222 = scmp.lt.s32.totalorder %s219, 7
      %s223 = scalar_select %p222, %s219, 7
      %s224 = smul.addr %s221, 8
      %s225 = sadd.s32 %s223, %s224
      %s226 = smul.addr %s225, 4
      %s227 = scalar_lea.vmem %s4, %s226
      %s228 = smul.u32 8, %s20
      %p229 = scmp.lt.s32.totalorder %s19, 1
      %s230 = scalar_select %p229, %s19, 1
      %p231 = scmp.lt.s32.totalorder %s228, 7
      %s232 = scalar_select %p231, %s228, 7
      %s233 = smul.addr %s230, 8
      %s234 = sadd.s32 %s232, %s233
      %s235 = smul.addr %s234, 4
      %s236 = scalar_lea.vmem %s0, %s235
      %s237 = smul.u32 8, %s20
      %p238 = scmp.lt.s32.totalorder %s19, 1
      %s239 = scalar_select %p238, %s19, 1
      %s240 = scalar_lea.vmem %s3, %s239
      %s241 = smul.u32 8, %s20
      %p242 = scmp.lt.s32.totalorder %s19, 1
      %s243 = scalar_select %p242, %s19, 1
      %p244 = scmp.lt.s32.totalorder %s241, 7
      %s245 = scalar_select %p244, %s241, 7
      %s246 = smul.addr %s243, 8
      %s247 = sadd.s32 %s245, %s246
      %s248 = smul.addr %s247, 4
      %s249 = scalar_lea.vmem %s4, %s248
      %s250 = smul.u32 8, %s20
      %v251 = vld [vmem:[%s236] sm:$0xf]
      %v252 = vld [vmem:[%s236 + $0x4] sm:$0xf]
      %v253 = vld [vmem:[%s236 + $0x8] sm:$0xf]
      %v254 = vld [vmem:[%s236 + $0xc] sm:$0xf]
      %v255 = vld [vmem:[%s236 + $0x10] sm:$0xf]
      %v256 = vld [vmem:[%s236 + $0x14] sm:$0xf]
      %v257 = vld [vmem:[%s236 + $0x18] sm:$0xf]
      %v258 = vld [vmem:[%s236 + $0x1c] sm:$0xf]
      %v259 = vld [vmem:[%s240] sm:$0x1]
      %v261 = vpack.i.b16 %v259, %v259
      %v263 = vperm.slane %v261, 0
      %v264 = vunpack.c.l.bf16 %v251
      %v265 = vunpack.c.l.bf16 %v252
      %v266 = vunpack.c.l.bf16 %v253
      %v267 = vunpack.c.l.bf16 %v254
      %v268 = vunpack.c.l.bf16 %v255
      %v269 = vunpack.c.l.bf16 %v256
      %v270 = vunpack.c.l.bf16 %v257
      %v271 = vunpack.c.l.bf16 %v258
      %v272 = vunpack.c.l.bf16 %v263
      %v273 = vmul.f32 %v264, %v272
      %v274 = vmul.f32 %v265, %v272
      %v275 = vmul.f32 %v266, %v272
      %v276 = vmul.f32 %v267, %v272
      %v277 = vmul.f32 %v268, %v272
      %v278 = vmul.f32 %v269, %v272
      %v279 = vmul.f32 %v270, %v272
      %v280 = vmul.f32 %v271, %v272
      %v281 = vpack.c.bf16 %v274, %v273
      %v282 = vpack.c.bf16 %v276, %v275
      %v283 = vpack.c.bf16 %v278, %v277
      %v284 = vpack.c.bf16 %v280, %v279
      %v285 = vld [vmem:[%s1] sm:$0xf]
      %v286 = vld [vmem:[%s1 + $0x4] sm:$0xf]
      %v287 = vld [vmem:[%s1 + $0x8] sm:$0xf]
      %v288 = vld [vmem:[%s1 + $0xc] sm:$0xf]
      %v289 = vld [vmem:[%s1 + $0x10] sm:$0xf]
      %v290 = vld [vmem:[%s1 + $0x14] sm:$0xf]
      %v291 = vld [vmem:[%s1 + $0x18] sm:$0xf]
      %v292 = vld [vmem:[%s1 + $0x1c] sm:$0xf]
      %v293 = vld [vmem:[%s1 + $0x20] sm:$0xf]
      %v294 = vld [vmem:[%s1 + $0x24] sm:$0xf]
      %v295 = vld [vmem:[%s1 + $0x28] sm:$0xf]
      %v296 = vld [vmem:[%s1 + $0x2c] sm:$0xf]
      %v297 = vld [vmem:[%s1 + $0x30] sm:$0xf]
      %v298 = vld [vmem:[%s1 + $0x34] sm:$0xf]
      %v299 = vld [vmem:[%s1 + $0x38] sm:$0xf]
      %v300 = vld [vmem:[%s1 + $0x3c] sm:$0xf]
      %v301 = vld [vmem:[%s2] sm:$0x1]
      %v303 = vperm.slane %v301, 0
      %v321 = vunpack.c.l.b16 %v285
      %v322 = vunpack.c.l.b16 %v286
      %v323 = vunpack.c.l.b16 %v287
      %v324 = vunpack.c.l.b16 %v288
      %v325 = vunpack.c.l.b16 %v289
      %v326 = vunpack.c.l.b16 %v290
      %v327 = vunpack.c.l.b16 %v291
      %v328 = vunpack.c.l.b16 %v292
      %v329 = vunpack.c.l.b16 %v293
      %v330 = vunpack.c.l.b16 %v294
      %v331 = vunpack.c.l.b16 %v295
      %v332 = vunpack.c.l.b16 %v296
      %v333 = vunpack.c.l.b16 %v297
      %v334 = vunpack.c.l.b16 %v298
      %v335 = vunpack.c.l.b16 %v299
      %v336 = vunpack.c.l.b16 %v300
      %v337 = vpack.c.b16 %v322, %v321
      %v338 = vpack.c.b16 %v324, %v323
      %v339 = vpack.c.b16 %v326, %v325
      %v340 = vpack.c.b16 %v328, %v327
      %v341 = vpack.c.b16 %v330, %v329
      %v342 = vpack.c.b16 %v332, %v331
      %v343 = vpack.c.b16 %v334, %v333
      %v344 = vpack.c.b16 %v336, %v335
      %353 = vmatpush.bf16.msra.mxu0 %v344
      %354 = vmatpush.bf16.msra.mxu0 %v343
      %355 = vmatpush.bf16.msra.mxu0 %v342
      %356 = vmatpush.bf16.msra.mxu0 %v341
      %357 = vmatpush.bf16.msra.mxu0 %v340
      %358 = vmatpush.bf16.msra.mxu0 %v339
      %359 = vmatpush.bf16.msra.mxu0 %v338
      %360 = vmatpush.bf16.msra.mxu0 %v337
      %361 = vmatmul.bf16.gmra.mxu0 %v281
      %v362 = vpop.f32.mrf.mxu0
      %v363 = vadd.f32 %v303, %v362
      %v364 = vpop.f32.mrf.mxu0
      %v365 = vadd.f32 %v303, %v364
      %366 = vmatmul.bf16.gmra.mxu0 %v282
      %v367 = vpop.f32.mrf.mxu0
      %v368 = vadd.f32 %v303, %v367
      %v369 = vpop.f32.mrf.mxu0
      %v370 = vadd.f32 %v303, %v369
      %371 = vmatmul.bf16.gmra.mxu0 %v283
      %v372 = vpop.f32.mrf.mxu0
      %v373 = vadd.f32 %v303, %v372
      %v374 = vpop.f32.mrf.mxu0
      %v375 = vadd.f32 %v303, %v374
      %376 = vmatmul.bf16.gmra.mxu0 %v284
      %v377 = vpop.f32.mrf.mxu0
      %v378 = vadd.f32 %v303, %v377
      %v379 = vpop.f32.mrf.mxu0
      %v380 = vadd.f32 %v303, %v379
      %381 = vdwg.mxu0
      %v382 = vpack.c.bf16 %v363, %v363
      %v383 = vpack.c.bf16 %v365, %v365
      %v384 = vpack.c.bf16 %v368, %v368
      %v385 = vpack.c.bf16 %v370, %v370
      %v386 = vpack.c.bf16 %v373, %v373
      %v387 = vpack.c.bf16 %v375, %v375
      %v388 = vpack.c.bf16 %v378, %v378
      %v389 = vpack.c.bf16 %v380, %v380
      %390 = vst [vmem:[%s249] sm:$0xf] %v382
      %391 = vst [vmem:[%s249 + $0x4] sm:$0xf] %v383
      %392 = vst [vmem:[%s249 + $0x8] sm:$0xf] %v384
      %393 = vst [vmem:[%s249 + $0xc] sm:$0xf] %v385
      %394 = vst [vmem:[%s249 + $0x10] sm:$0xf] %v386
      %395 = vst [vmem:[%s249 + $0x14] sm:$0xf] %v387
      %396 = vst [vmem:[%s249 + $0x18] sm:$0xf] %v388
      %397 = vst [vmem:[%s249 + $0x1c] sm:$0xf] %v389
      %s398 = smul.u32 8, %s20
      %p399 = scmp.lt.s32.totalorder %s19, 1
      %s400 = scalar_select %p399, %s19, 1
      %p401 = scmp.lt.s32.totalorder %s398, 7
      %s402 = scalar_select %p401, %s398, 7
      %s403 = smul.addr %s400, 8
      %s404 = sadd.s32 %s402, %s403
      %s405 = smul.addr %s404, 4
      %s406 = scalar_lea.vmem %s4, %s405
      // Predicated region
      $region37: #{_lambda_.12} parent=35 // pred_check
        %p407 = pneg %p143
      $region38: #{_lambda_.12} parent=35 // pred_check_branch
        %409 = sbr.rel (%p407) target = $region40
      $region39: #{_lambda_.12} parent=35 // pred_region
        %s410 = smul.u32 8, %s20
      $region40: #{_lambda_.12} parent=35 // pred_fallthru
        _
    $region36: #{_lambda_.12} parent=5 // pred_fallthru
      _
    %p411 = scmp.le.s32.totalorder 2, %s10
    // Predicated region
    $region41: #{_lambda_.12} parent=5 // pred_check
      %p412 = pneg %p411
    $region42: #{_lambda_.12} parent=5 // pred_check_branch
      %414 = sbr.rel (%p412) target = $region44
    $region43: #{_lambda_.12} parent=5 // pred_region
      %s415 = ssub.s32 %s10, 2
      // Predicated region
      $region45: #{_lambda_.12} parent=43 // pred_check
        %p416 = pneg %p149
      $region46: #{_lambda_.12} parent=43 // pred_check_branch
        %418 = sbr.rel (%p416) target = $region48
      $region47: #{_lambda_.12} parent=43 // pred_region
        %s419 = smul.u32 8, %s22
        %p420 = scmp.lt.s32.totalorder %s21, 1
        %s421 = scalar_select %p420, %s21, 1
        %p422 = scmp.lt.s32.totalorder %s419, 7
        %s423 = scalar_select %p422, %s419, 7
        %s424 = smul.addr %s421, 8
        %s425 = sadd.s32 %s423, %s424
        %s426 = smul.addr %s425, 4
        %s427 = scalar_lea.vmem %s4, %s426
      $region48: #{_lambda_.12} parent=43 // pred_fallthru
        _
    $region44: #{_lambda_.12} parent=5 // pred_fallthru
      _
  $region6: #{_lambda_.12} parent=0 // loop_footer
    %s14 = sadd.s32 1, %s10
  $region7: #{_lambda_.12} parent=0 // loop_footer_branch
    %9 = sbr.rel target = $region3
  $region8: #{_lambda_.12} parent=0 // loop_exit
    _

// kernel: _lambda_.10
$region0: #{_lambda_.10}
  #allocation0 [shape = 'u32[]', space=smem, size = 0x4, offset = 0x4, fixed_abs, tag = 'smem constant byte address 0x4 - core index']
  #allocation1 [shape = 'u32[72,128]{1,0:T(1,128)}', space=vmem, size = 0x9000, scoped, tag = 'internal scratch']
  %s0 = inlined_call_operand.vmem [shape: bf16[2,64,27], index: 0, kind: input, shape index: {}]
  %s1 = inlined_call_operand.vmem [shape: bf16[27,128], index: 1, kind: input, shape index: {}]
  %s2 = inlined_call_operand.vmem [shape: f32[1,128], index: 2, kind: input, shape index: {}]
  %s3 = inlined_call_operand.vmem [shape: bf16[2,64,128], index: 3, kind: output, shape index: {}]
  %s4 = sld [smem:[#allocation0]]
  $region45: #{_lambda_.10} parent=0
    _
  %s6 = ssub.s32 1, %s4
  %s7 = scalar_select 0, %s6, %s4
  loop: start=0, step=1, limit=4
  $region2: #{_lambda_.10} parent=0 // loop_pre_header
    _
  $region3: #{_lambda_.10} parent=0 // loop_header
    %s9 = sphi 0, %s13
    %p10 = scmp.ge.s32.totalorder %s9, 4
    %s16 = sphi 0, %s28
    %s17 = sphi 0, %s24
    %s18 = sphi 0, %s16
    %s19 = sphi 0, %s17
    %s20 = sphi 0, %s18
    %s21 = sphi 0, %s19
    %s33 = sphi 0, %s35
    %s36 = sphi 0, %s33
    %s37 = sphi 0, %s36
    %s53 = sphi 0, %s37
    %s57 = sphi 0, %s57
    %s59 = sphi 0, %s57
    %s60 = sphi 0, %s59
    %s74 = sphi 0, %s60
    %s78 = sphi 0, %s78
    %s80 = sphi 0, %s78
    %s81 = sphi 0, %s80
    %s95 = sphi 0, %s81
    %s103 = sphi 0, %s105
    %s106 = sphi 0, %s103
    %s107 = sphi 0, %s106
    %s123 = sphi 0, %s107
  $region4: #{_lambda_.10} parent=0 // loop_header_branch
    %12 = sbr.rel (%p10) target = $region8
  $region5: #{_lambda_.10} parent=0 // loop_body
    %s14 = ssub.s32 %s9, 1
    %s15 = ssub.s32 %s9, 2
    %s22 = sadd.s32 1, %s17
    %p23 = scmp.ge.s32.totalorder %s22, 1
    %s24 = scalar_select %p23, 0, %s22
    %s25 = sadd.s32 1, %s16
    %s26 = scalar_select %p23, %s25, %s16
    %p27 = scmp.ge.s32.totalorder %s26, 2
    %s28 = scalar_select %p27, 0, %s26
    %s29 = ssub.s32 %s16, %s28
    %s30 = ssub.s32 %s17, %s24
    %s31 = sor.u32 %s29, %s30
    %p32 = scmp.eq.s32.totalorder %s31, 0
    %s34 = sadd.s32 %s33, 1
    %s35 = scalar_select %p32, %s33, %s34
    %p38 = pneg %p32
    %p39 = scmp.eq.s32.totalorder %s9, 1
    %p40 = por %p38, %p39
    %p41 = scmp.ne.s32.totalorder %s33, %s36
    %p42 = scmp.eq.s32.totalorder %s9, 0
    %p43 = por %p41, %p42
    %p44 = scmp.ne.s32.totalorder %s33, %s36
    %p45 = scmp.eq.s32.totalorder %s14, 1
    %p46 = por %p44, %p45
    %p47 = scmp.ne.s32.totalorder %s36, %s37
    %p48 = scmp.eq.s32.totalorder %s14, 0
    %p49 = por %p47, %p48
    %p50 = scmp.ne.s32.totalorder %s36, %s37
    %p51 = scmp.eq.s32.totalorder %s15, 1
    %p52 = por %p50, %p51
    %p54 = scmp.ne.s32.totalorder %s37, %s53
    %p55 = scmp.eq.s32.totalorder %s15, 0
    %p56 = por %p54, %p55
    %s58 = sadd.s32 %s57, 1
    %p61 = scmp.eq.s32.totalorder %s9, 1
    %p62 = scmp.ne.s32.totalorder %s57, %s59
    %p63 = scmp.eq.s32.totalorder %s9, 0
    %p64 = por %p62, %p63
    %p65 = scmp.ne.s32.totalorder %s57, %s59
    %p66 = scmp.eq.s32.totalorder %s14, 1
    %p67 = por %p65, %p66
    %p68 = scmp.ne.s32.totalorder %s59, %s60
    %p69 = scmp.eq.s32.totalorder %s14, 0
    %p70 = por %p68, %p69
    %p71 = scmp.ne.s32.totalorder %s59, %s60
    %p72 = scmp.eq.s32.totalorder %s15, 1
    %p73 = por %p71, %p72
    %p75 = scmp.ne.s32.totalorder %s60, %s74
    %p76 = scmp.eq.s32.totalorder %s15, 0
    %p77 = por %p75, %p76
    %s79 = sadd.s32 %s78, 1
    %p82 = scmp.eq.s32.totalorder %s9, 1
    %p83 = scmp.ne.s32.totalorder %s78, %s80
    %p84 = scmp.eq.s32.totalorder %s9, 0
    %p85 = por %p83, %p84
    %p86 = scmp.ne.s32.totalorder %s78, %s80
    %p87 = scmp.eq.s32.totalorder %s14, 1
    %p88 = por %p86, %p87
    %p89 = scmp.ne.s32.totalorder %s80, %s81
    %p90 = scmp.eq.s32.totalorder %s14, 0
    %p91 = por %p89, %p90
    %p92 = scmp.ne.s32.totalorder %s80, %s81
    %p93 = scmp.eq.s32.totalorder %s15, 1
    %p94 = por %p92, %p93
    %p96 = scmp.ne.s32.totalorder %s81, %s95
    %p97 = scmp.eq.s32.totalorder %s15, 0
    %p98 = por %p96, %p97
    %s99 = ssub.s32 %s16, %s28
    %s100 = ssub.s32 %s17, %s24
    %s101 = sor.u32 %s99, %s100
    %p102 = scmp.eq.s32.totalorder %s101, 0
    %s104 = sadd.s32 %s103, 1
    %s105 = scalar_select %p102, %s103, %s104
    %p108 = pneg %p102
    %p109 = scmp.eq.s32.totalorder %s9, 1
    %p110 = por %p108, %p109
    %p111 = scmp.ne.s32.totalorder %s103, %s106
    %p112 = scmp.eq.s32.totalorder %s9, 0
    %p113 = por %p111, %p112
    %p114 = scmp.ne.s32.totalorder %s103, %s106
    %p115 = scmp.eq.s32.totalorder %s14, 1
    %p116 = por %p114, %p115
    %p117 = scmp.ne.s32.totalorder %s106, %s107
    %p118 = scmp.eq.s32.totalorder %s14, 0
    %p119 = por %p117, %p118
    %p120 = scmp.ne.s32.totalorder %s106, %s107
    %p121 = scmp.eq.s32.totalorder %s15, 1
    %p122 = por %p120, %p121
    %p124 = scmp.ne.s32.totalorder %s107, %s123
    %p125 = scmp.eq.s32.totalorder %s15, 0
    %p126 = por %p124, %p125
    %p127 = scmp.le.s32.totalorder 1, %s9
    %p128 = scmp.lt.s32.totalorder %s9, 3
    %p129 = pnand %p127, %p128
    %p130 = pneg %p129
    // Predicated region
    $region9: #{_lambda_.10} parent=5 // pred_check
      _
    $region10: #{_lambda_.10} parent=5 // pred_check_branch
      %132 = sbr.rel (%p129) target = $region12
    $region11: #{_lambda_.10} parent=5 // pred_region
      %s133 = ssub.s32 %s9, 1
      // Predicated region
      $region13: #{_lambda_.10} parent=11 // pred_check
        %p134 = pneg %p70
      $region14: #{_lambda_.10} parent=11 // pred_check_branch
        %136 = sbr.rel (%p134) target = $region16
      $region15: #{_lambda_.10} parent=11 // pred_region
        _
      $region16: #{_lambda_.10} parent=11 // pred_fallthru
        _
      // Predicated region
      $region17: #{_lambda_.10} parent=11 // pred_check
        %p137 = pneg %p91
      $region18: #{_lambda_.10} parent=11 // pred_check_branch
        %139 = sbr.rel (%p137) target = $region20
      $region19: #{_lambda_.10} parent=11 // pred_region
        _
      $region20: #{_lambda_.10} parent=11 // pred_fallthru
        _
    $region12: #{_lambda_.10} parent=5 // pred_fallthru
      _
    %p140 = scmp.lt.s32.totalorder %s9, 2
    // Predicated region
    $region21: #{_lambda_.10} parent=5 // pred_check
      %p141 = pneg %p140
    $region22: #{_lambda_.10} parent=5 // pred_check_branch
      %143 = sbr.rel (%p141) target = $region24
    $region23: #{_lambda_.10} parent=5 // pred_region
      // Predicated region
      $region25: #{_lambda_.10} parent=23 // pred_check
        %p144 = pneg %p43
      $region26: #{_lambda_.10} parent=23 // pred_check_branch
        %146 = sbr.rel (%p144) target = $region28
      $region27: #{_lambda_.10} parent=23 // pred_region
        %s147 = smul.u32 8, %s17
        %p148 = scmp.lt.s32.totalorder %s16, 1
        %s149 = scalar_select %p148, %s16, 1
        %p150 = scmp.lt.s32.totalorder %s147, 7
        %s151 = scalar_select %p150, %s147, 7
        %s152 = smul.addr %s149, 8
        %s153 = sadd.s32 %s151, %s152
        %s154 = smul.addr %s153, 4
        %s155 = scalar_lea.vmem %s0, %s154
        %s156 = smul.u32 8, %s17
      $region28: #{_lambda_.10} parent=23 // pred_fallthru
        _
    $region24: #{_lambda_.10} parent=5 // pred_fallthru
      _
    %p157 = scmp.le.s32.totalorder 1, %s9
    %p158 = scmp.lt.s32.totalorder %s9, 3
    %p159 = pnand %p157, %p158
    %p160 = pneg %p159
    // Predicated region
    $region29: #{_lambda_.10} parent=5 // pred_check
      _
    $region30: #{_lambda_.10} parent=5 // pred_check_branch
      %162 = sbr.rel (%p159) target = $region32
    $region31: #{_lambda_.10} parent=5 // pred_region
      %s163 = ssub.s32 %s9, 1
      %s164 = smul.u32 8, %s19
      %p165 = scmp.lt.s32.totalorder %s18, 1
      %s166 = scalar_select %p165, %s18, 1
      %p167 = scmp.lt.s32.totalorder %s164, 7
      %s168 = scalar_select %p167, %s164, 7
      %s169 = smul.addr %s166, 8
      %s170 = sadd.s32 %s168, %s169
      %s171 = smul.addr %s170, 4
      %s172 = scalar_lea.vmem %s0, %s171
      %p173 = pneg %p49
      %p174 = pneg %p46
      %p175 = pneg %p70
      %p176 = pneg %p67
      %p177 = pneg %p91
      %p178 = pneg %p88
      %p179 = pneg %p119
      %p180 = pneg %p116
      %s181 = smul.u32 8, %s19
      %p182 = scmp.lt.s32.totalorder %s18, 1
      %s183 = scalar_select %p182, %s18, 1
      %p184 = scmp.lt.s32.totalorder %s181, 7
      %s185 = scalar_select %p184, %s181, 7
      %s186 = smul.addr %s183, 8
      %s187 = sadd.s32 %s185, %s186
      %s188 = smul.addr %s187, 4
      %s189 = scalar_lea.vmem %s3, %s188
      %s190 = smul.u32 8, %s19
      %p191 = scmp.lt.s32.totalorder %s18, 1
      %s192 = scalar_select %p191, %s18, 1
      %p193 = scmp.lt.s32.totalorder %s190, 7
      %s194 = scalar_select %p193, %s190, 7
      %s195 = smul.addr %s192, 8
      %s196 = sadd.s32 %s194, %s195
      %s197 = smul.addr %s196, 4
      %s198 = scalar_lea.vmem %s0, %s197
      %s199 = smul.u32 8, %s19
      %s200 = smul.u32 8, %s19
      %p201 = scmp.lt.s32.totalorder %s18, 1
      %s202 = scalar_select %p201, %s18, 1
      %p203 = scmp.lt.s32.totalorder %s200, 7
      %s204 = scalar_select %p203, %s200, 7
      %s205 = smul.addr %s202, 8
      %s206 = sadd.s32 %s204, %s205
      %s207 = smul.addr %s206, 4
      %s208 = scalar_lea.vmem %s3, %s207
      %s209 = smul.u32 8, %s19
      %v211 = vld [vmem:[%s198] sm:$0xf]
      %v212 = vld [vmem:[%s198 + $0x4] sm:$0xf]
      %v213 = vld [vmem:[%s198 + $0x8] sm:$0xf]
      %v214 = vld [vmem:[%s198 + $0xc] sm:$0xf]
      %v215 = vld [vmem:[%s198 + $0x10] sm:$0xf]
      %v216 = vld [vmem:[%s198 + $0x14] sm:$0xf]
      %v217 = vld [vmem:[%s198 + $0x18] sm:$0xf]
      %v218 = vld [vmem:[%s198 + $0x1c] sm:$0xf]
      %v219 = vld [vmem:[%s1] sm:$0xf]
      %v220 = vld [vmem:[%s1 + $0x4] sm:$0xf]
      %v221 = vld [vmem:[%s1 + $0x8] sm:$0xf]
      %v222 = vld [vmem:[%s1 + $0xc] sm:$0x3]
      %v223 = vld [vmem:[%s2] sm:$0x1]
      %v225 = vperm.slane %v223, 0
      %v235 = vunpack.c.l.b16 %v211
      %v236 = vunpack.c.l.b16 %v212
      %v237 = vunpack.c.l.b16 %v213
      %v238 = vunpack.c.l.b16 %v214
      %v239 = vunpack.c.l.b16 %v215
      %v240 = vunpack.c.l.b16 %v216
      %v241 = vunpack.c.l.b16 %v217
      %v242 = vunpack.c.l.b16 %v218
      %v243 = vpack.c.b16 %v236, %v235
      %v244 = vpack.c.b16 %v238, %v237
      %v245 = vpack.c.b16 %v240, %v239
      %v246 = vpack.c.b16 %v242, %v241
      %v251 = vunpack.c.l.b16 %v219
      %v252 = vunpack.c.l.b16 %v220
      %v253 = vunpack.c.l.b16 %v221
      %v254 = vunpack.c.l.b16 %v222
      %v255 = vpack.c.b16 %v252, %v251
      %v256 = vpack.c.b16 %v254, %v253
      %vm258 = vcmask 220160
      %v260 = vsel %vm258, %v243, 0
      %v263 = vsel %vm258, %v244, 0
      %v266 = vsel %vm258, %v245, 0
      %v269 = vsel %vm258, %v246, 0
      %vm271 = vcmask 1044480
      %vm272 = vcmask 1045504
      %v273 = vsel %vm271, 4294967295, 65535
      %v274 = vsel %vm272, %v273, 0
      %v276 = vand.u32 %v256, %v274
      %278 = vmatpush.bf16.msra.mxu0 0
      %279 = vmatpush.bf16.msra.mxu0 0
      %280 = vmatpush.bf16.msra.mxu0 0
      %281 = vmatpush.bf16.msra.mxu0 0
      %282 = vmatpush.bf16.msra.mxu0 0
      %283 = vmatpush.bf16.msra.mxu0 0
      %284 = vmatpush.bf16.msra.mxu0 %v276
      %285 = vmatpush.bf16.msra.mxu0 %v255
      %286 = vmatmul.bf16.gmra.mxu0 %v260
      %v287 = vpop.f32.mrf.mxu0
      %v288 = vadd.f32 %v225, %v287
      %v289 = vpop.f32.mrf.mxu0
      %v290 = vadd.f32 %v225, %v289
      %291 = vmatmul.bf16.gmra.mxu0 %v263
      %v292 = vpop.f32.mrf.mxu0
      %v293 = vadd.f32 %v225, %v292
      %v294 = vpop.f32.mrf.mxu0
      %v295 = vadd.f32 %v225, %v294
      %296 = vmatmul.bf16.gmra.mxu0 %v266
      %v297 = vpop.f32.mrf.mxu0
      %v298 = vadd.f32 %v225, %v297
      %v299 = vpop.f32.mrf.mxu0
      %v300 = vadd.f32 %v225, %v299
      %301 = vmatmul.bf16.gmra.mxu0 %v269
      %v302 = vpop.f32.mrf.mxu0
      %v303 = vadd.f32 %v225, %v302
      %v304 = vpop.f32.mrf.mxu0
      %v305 = vadd.f32 %v225, %v304
      %306 = vdwg.mxu0
      %v307 = vxor.u32 %v288, 2147483648
      %v308 = vxor.u32 %v290, 2147483648
      %v309 = vxor.u32 %v293, 2147483648
      %v310 = vxor.u32 %v295, 2147483648
      %v311 = vxor.u32 %v298, 2147483648
      %v312 = vxor.u32 %v300, 2147483648
      %v313 = vxor.u32 %v303, 2147483648
      %v314 = vxor.u32 %v305, 2147483648
      %v315 = vmul.f32 %v307, 1.442695
      %v316 = vpow.pop %v315
      %v317 = vmul.f32 %v308, 1.442695
      %v318 = vpow.pop %v317
      %v319 = vmul.f32 %v309, 1.442695
      %v320 = vpow.pop %v319
      %v321 = vmul.f32 %v310, 1.442695
      %v322 = vpow.pop %v321
      %v323 = vmul.f32 %v311, 1.442695
      %v324 = vpow.pop %v323
      %v325 = vmul.f32 %v312, 1.442695
      %v326 = vpow.pop %v325
      %v327 = vmul.f32 %v313, 1.442695
      %v328 = vpow.pop %v327
      %v329 = vmul.f32 %v314, 1.442695
      %v330 = vpow.pop %v329
      %v331 = vadd.f32 %v316, 1.0
      %v332 = vadd.f32 %v318, 1.0
      %v333 = vadd.f32 %v320, 1.0
      %v334 = vadd.f32 %v322, 1.0
      %v335 = vadd.f32 %v324, 1.0
      %v336 = vadd.f32 %v326, 1.0
      %v337 = vadd.f32 %v328, 1.0
      %v338 = vadd.f32 %v330, 1.0
      %v339 = vrcp.pop %v331
      %v340 = vmul.f32 %v331, %v339
      %v341 = vsub.f32 1.0, %v340
      %v342 = vmul.f32 %v339, %v341
      %v343 = vadd.f32 %v339, %v342
      %vm344 = vweird.f32 %v331
      %vm345 = vweird.f32 %v339
      %vm346 = vmor %vm344, %vm345
      %v347 = vsel %vm346, %v339, %v343
      %v348 = vand.u32 2147483647, %v331
      %vm349 = vcmp.eq.f32.partialorder %v348, 8.507059e+37
      %v350 = vand.u32 %v331, 2147483648
      %v351 = vor.u32 1.1754944e-38, %v350
      %v352 = vsel %vm349, %v351, %v347
      %v353 = vmul.f32 1.0, %v352
      %v354 = vrcp.pop %v332
      %v355 = vmul.f32 %v332, %v354
      %v356 = vsub.f32 1.0, %v355
      %v357 = vmul.f32 %v354, %v356
      %v358 = vadd.f32 %v354, %v357
      %vm359 = vweird.f32 %v332
      %vm360 = vweird.f32 %v354
      %vm361 = vmor %vm359, %vm360
      %v362 = vsel %vm361, %v354, %v358
      %v363 = vand.u32 2147483647, %v332
      %vm364 = vcmp.eq.f32.partialorder %v363, 8.507059e+37
      %v365 = vand.u32 %v332, 2147483648
      %v366 = vor.u32 1.1754944e-38, %v365
      %v367 = vsel %vm364, %v366, %v362
      %v368 = vmul.f32 1.0, %v367
      %v369 = vrcp.pop %v333
      %v370 = vmul.f32 %v333, %v369
      %v371 = vsub.f32 1.0, %v370
      %v372 = vmul.f32 %v369, %v371
      %v373 = vadd.f32 %v369, %v372
      %vm374 = vweird.f32 %v333
      %vm375 = vweird.f32 %v369
      %vm376 = vmor %vm374, %vm375
      %v377 = vsel %vm376, %v369, %v373
      %v378 = vand.u32 2147483647, %v333
      %vm379 = vcmp.eq.f32.partialorder %v378, 8.507059e+37
      %v380 = vand.u32 %v333, 2147483648
      %v381 = vor.u32 1.1754944e-38, %v380
      %v382 = vsel %vm379, %v381, %v377
      %v383 = vmul.f32 1.0, %v382
      %v384 = vrcp.pop %v334
      %v385 = vmul.f32 %v334, %v384
      %v386 = vsub.f32 1.0, %v385
      %v387 = vmul.f32 %v384, %v386
      %v388 = vadd.f32 %v384, %v387
      %vm389 = vweird.f32 %v334
      %vm390 = vweird.f32 %v384
      %vm391 = vmor %vm389, %vm390
      %v392 = vsel %vm391, %v384, %v388
      %v393 = vand.u32 2147483647, %v334
      %vm394 = vcmp.eq.f32.partialorder %v393, 8.507059e+37
      %v395 = vand.u32 %v334, 2147483648
      %v396 = vor.u32 1.1754944e-38, %v395
      %v397 = vsel %vm394, %v396, %v392
      %v398 = vmul.f32 1.0, %v397
      %v399 = vrcp.pop %v335
      %v400 = vmul.f32 %v335, %v399
      %v401 = vsub.f32 1.0, %v400
      %v402 = vmul.f32 %v399, %v401
      %v403 = vadd.f32 %v399, %v402
      %vm404 = vweird.f32 %v335
      %vm405 = vweird.f32 %v399
      %vm406 = vmor %vm404, %vm405
      %v407 = vsel %vm406, %v399, %v403
      %v408 = vand.u32 2147483647, %v335
      %vm409 = vcmp.eq.f32.partialorder %v408, 8.507059e+37
      %v410 = vand.u32 %v335, 2147483648
      %v411 = vor.u32 1.1754944e-38, %v410
      %v412 = vsel %vm409, %v411, %v407
      %v413 = vmul.f32 1.0, %v412
      %v414 = vrcp.pop %v336
      %v415 = vmul.f32 %v336, %v414
      %v416 = vsub.f32 1.0, %v415
      %v417 = vmul.f32 %v414, %v416
      %v418 = vadd.f32 %v414, %v417
      %vm419 = vweird.f32 %v336
      %vm420 = vweird.f32 %v414
      %vm421 = vmor %vm419, %vm420
      %v422 = vsel %vm421, %v414, %v418
      %v423 = vand.u32 2147483647, %v336
      %vm424 = vcmp.eq.f32.partialorder %v423, 8.507059e+37
      %v425 = vand.u32 %v336, 2147483648
      %v426 = vor.u32 1.1754944e-38, %v425
      %v427 = vsel %vm424, %v426, %v422
      %v428 = vmul.f32 1.0, %v427
      %v429 = vrcp.pop %v337
      %v430 = vmul.f32 %v337, %v429
      %v431 = vsub.f32 1.0, %v430
      %v432 = vmul.f32 %v429, %v431
      %v433 = vadd.f32 %v429, %v432
      %vm434 = vweird.f32 %v337
      %vm435 = vweird.f32 %v429
      %vm436 = vmor %vm434, %vm435
      %v437 = vsel %vm436, %v429, %v433
      %v438 = vand.u32 2147483647, %v337
      %vm439 = vcmp.eq.f32.partialorder %v438, 8.507059e+37
      %v440 = vand.u32 %v337, 2147483648
      %v441 = vor.u32 1.1754944e-38, %v440
      %v442 = vsel %vm439, %v441, %v437
      %v443 = vmul.f32 1.0, %v442
      %v444 = vrcp.pop %v338
      %v445 = vmul.f32 %v338, %v444
      %v446 = vsub.f32 1.0, %v445
      %v447 = vmul.f32 %v444, %v446
      %v448 = vadd.f32 %v444, %v447
      %vm449 = vweird.f32 %v338
      %vm450 = vweird.f32 %v444
      %vm451 = vmor %vm449, %vm450
      %v452 = vsel %vm451, %v444, %v448
      %v453 = vand.u32 2147483647, %v338
      %vm454 = vcmp.eq.f32.partialorder %v453, 8.507059e+37
      %v455 = vand.u32 %v338, 2147483648
      %v456 = vor.u32 1.1754944e-38, %v455
      %v457 = vsel %vm454, %v456, %v452
      %v458 = vmul.f32 1.0, %v457
      %v459 = vmul.f32 %v288, %v353
      %v460 = vmul.f32 %v290, %v368
      %v461 = vmul.f32 %v293, %v383
      %v462 = vmul.f32 %v295, %v398
      %v463 = vmul.f32 %v298, %v413
      %v464 = vmul.f32 %v300, %v428
      %v465 = vmul.f32 %v303, %v443
      %v466 = vmul.f32 %v305, %v458
      %v467 = vpack.c.bf16 %v459, %v459
      %v468 = vpack.c.bf16 %v460, %v460
      %v469 = vpack.c.bf16 %v461, %v461
      %v470 = vpack.c.bf16 %v462, %v462
      %v471 = vpack.c.bf16 %v463, %v463
      %v472 = vpack.c.bf16 %v464, %v464
      %v473 = vpack.c.bf16 %v465, %v465
      %v474 = vpack.c.bf16 %v466, %v466
      %475 = vst [vmem:[%s208] sm:$0xf] %v467
      %476 = vst [vmem:[%s208 + $0x4] sm:$0xf] %v468
      %477 = vst [vmem:[%s208 + $0x8] sm:$0xf] %v469
      %478 = vst [vmem:[%s208 + $0xc] sm:$0xf] %v470
      %479 = vst [vmem:[%s208 + $0x10] sm:$0xf] %v471
      %480 = vst [vmem:[%s208 + $0x14] sm:$0xf] %v472
      %481 = vst [vmem:[%s208 + $0x18] sm:$0xf] %v473
      %482 = vst [vmem:[%s208 + $0x1c] sm:$0xf] %v474
      %s483 = smul.u32 8, %s19
      %p484 = scmp.lt.s32.totalorder %s18, 1
      %s485 = scalar_select %p484, %s18, 1
      %p486 = scmp.lt.s32.totalorder %s483, 7
      %s487 = scalar_select %p486, %s483, 7
      %s488 = smul.addr %s485, 8
      %s489 = sadd.s32 %s487, %s488
      %s490 = smul.addr %s489, 4
      %s491 = scalar_lea.vmem %s3, %s490
      // Predicated region
      $region33: #{_lambda_.10} parent=31 // pred_check
        %p492 = pneg %p116
      $region34: #{_lambda_.10} parent=31 // pred_check_branch
        %494 = sbr.rel (%p492) target = $region36
      $region35: #{_lambda_.10} parent=31 // pred_region
        %s495 = smul.u32 8, %s19
      $region36: #{_lambda_.10} parent=31 // pred_fallthru
        _
    $region32: #{_lambda_.10} parent=5 // pred_fallthru
      _
    %p496 = scmp.le.s32.totalorder 2, %s9
    // Predicated region
    $region37: #{_lambda_.10} parent=5 // pred_check
      %p497 = pneg %p496
    $region38: #{_lambda_.10} parent=5 // pred_check_branch
      %499 = sbr.rel (%p497) target = $region40
    $region39: #{_lambda_.10} parent=5 // pred_region
      %s500 = ssub.s32 %s9, 2
      // Predicated region
      $region41: #{_lambda_.10} parent=39 // pred_check
        %p501 = pneg %p122
      $region42: #{_lambda_.10} parent=39 // pred_check_branch
        %503 = sbr.rel (%p501) target = $region44
      $region43: #{_lambda_.10} parent=39 // pred_region
        %s504 = smul.u32 8, %s21
        %p505 = scmp.lt.s32.totalorder %s20, 1
        %s506 = scalar_select %p505, %s20, 1
        %p507 = scmp.lt.s32.totalorder %s504, 7
        %s508 = scalar_select %p507, %s504, 7
        %s509 = smul.addr %s506, 8
        %s510 = sadd.s32 %s508, %s509
        %s511 = smul.addr %s510, 4
        %s512 = scalar_lea.vmem %s3, %s511
      $region44: #{_lambda_.10} parent=39 // pred_fallthru
        _
    $region40: #{_lambda_.10} parent=5 // pred_fallthru
      _
  $region6: #{_lambda_.10} parent=0 // loop_footer
    %s13 = sadd.s32 1, %s9
  $region7: #{_lambda_.10} parent=0 // loop_footer_branch
    %8 = sbr.rel target = $region3
  $region8: #{_lambda_.10} parent=0 // loop_exit
    _

// kernel: _lambda_.13
$region0: #{_lambda_.13}
  #allocation0 [shape = 'u32[]', space=smem, size = 0x4, offset = 0x4, fixed_abs, tag = 'smem constant byte address 0x4 - core index']
  #allocation1 [shape = 'u32[72,128]{1,0:T(1,128)}', space=vmem, size = 0x9000, scoped, tag = 'internal scratch']
  %s0 = inlined_call_operand.vmem [shape: bf16[2,64,128], index: 0, kind: input, shape index: {}]
  %s1 = inlined_call_operand.vmem [shape: bf16[128,128], index: 1, kind: input, shape index: {}]
  %s2 = inlined_call_operand.vmem [shape: f32[1,128], index: 2, kind: input, shape index: {}]
  %s3 = inlined_call_operand.vmem [shape: bf16[2,64,128], index: 3, kind: output, shape index: {}]
  %s4 = sld [smem:[#allocation0]]
  $region45: #{_lambda_.13} parent=0
    _
  %s6 = ssub.s32 1, %s4
  %s7 = scalar_select 0, %s6, %s4
  loop: start=0, step=1, limit=4
  $region2: #{_lambda_.13} parent=0 // loop_pre_header
    _
  $region3: #{_lambda_.13} parent=0 // loop_header
    %s9 = sphi 0, %s13
    %p10 = scmp.ge.s32.totalorder %s9, 4
    %s16 = sphi 0, %s28
    %s17 = sphi 0, %s24
    %s18 = sphi 0, %s16
    %s19 = sphi 0, %s17
    %s20 = sphi 0, %s18
    %s21 = sphi 0, %s19
    %s33 = sphi 0, %s35
    %s36 = sphi 0, %s33
    %s37 = sphi 0, %s36
    %s53 = sphi 0, %s37
    %s57 = sphi 0, %s57
    %s59 = sphi 0, %s57
    %s60 = sphi 0, %s59
    %s74 = sphi 0, %s60
    %s78 = sphi 0, %s78
    %s80 = sphi 0, %s78
    %s81 = sphi 0, %s80
    %s95 = sphi 0, %s81
    %s103 = sphi 0, %s105
    %s106 = sphi 0, %s103
    %s107 = sphi 0, %s106
    %s123 = sphi 0, %s107
  $region4: #{_lambda_.13} parent=0 // loop_header_branch
    %12 = sbr.rel (%p10) target = $region8
  $region5: #{_lambda_.13} parent=0 // loop_body
    %s14 = ssub.s32 %s9, 1
    %s15 = ssub.s32 %s9, 2
    %s22 = sadd.s32 1, %s17
    %p23 = scmp.ge.s32.totalorder %s22, 1
    %s24 = scalar_select %p23, 0, %s22
    %s25 = sadd.s32 1, %s16
    %s26 = scalar_select %p23, %s25, %s16
    %p27 = scmp.ge.s32.totalorder %s26, 2
    %s28 = scalar_select %p27, 0, %s26
    %s29 = ssub.s32 %s16, %s28
    %s30 = ssub.s32 %s17, %s24
    %s31 = sor.u32 %s29, %s30
    %p32 = scmp.eq.s32.totalorder %s31, 0
    %s34 = sadd.s32 %s33, 1
    %s35 = scalar_select %p32, %s33, %s34
    %p38 = pneg %p32
    %p39 = scmp.eq.s32.totalorder %s9, 1
    %p40 = por %p38, %p39
    %p41 = scmp.ne.s32.totalorder %s33, %s36
    %p42 = scmp.eq.s32.totalorder %s9, 0
    %p43 = por %p41, %p42
    %p44 = scmp.ne.s32.totalorder %s33, %s36
    %p45 = scmp.eq.s32.totalorder %s14, 1
    %p46 = por %p44, %p45
    %p47 = scmp.ne.s32.totalorder %s36, %s37
    %p48 = scmp.eq.s32.totalorder %s14, 0
    %p49 = por %p47, %p48
    %p50 = scmp.ne.s32.totalorder %s36, %s37
    %p51 = scmp.eq.s32.totalorder %s15, 1
    %p52 = por %p50, %p51
    %p54 = scmp.ne.s32.totalorder %s37, %s53
    %p55 = scmp.eq.s32.totalorder %s15, 0
    %p56 = por %p54, %p55
    %s58 = sadd.s32 %s57, 1
    %p61 = scmp.eq.s32.totalorder %s9, 1
    %p62 = scmp.ne.s32.totalorder %s57, %s59
    %p63 = scmp.eq.s32.totalorder %s9, 0
    %p64 = por %p62, %p63
    %p65 = scmp.ne.s32.totalorder %s57, %s59
    %p66 = scmp.eq.s32.totalorder %s14, 1
    %p67 = por %p65, %p66
    %p68 = scmp.ne.s32.totalorder %s59, %s60
    %p69 = scmp.eq.s32.totalorder %s14, 0
    %p70 = por %p68, %p69
    %p71 = scmp.ne.s32.totalorder %s59, %s60
    %p72 = scmp.eq.s32.totalorder %s15, 1
    %p73 = por %p71, %p72
    %p75 = scmp.ne.s32.totalorder %s60, %s74
    %p76 = scmp.eq.s32.totalorder %s15, 0
    %p77 = por %p75, %p76
    %s79 = sadd.s32 %s78, 1
    %p82 = scmp.eq.s32.totalorder %s9, 1
    %p83 = scmp.ne.s32.totalorder %s78, %s80
    %p84 = scmp.eq.s32.totalorder %s9, 0
    %p85 = por %p83, %p84
    %p86 = scmp.ne.s32.totalorder %s78, %s80
    %p87 = scmp.eq.s32.totalorder %s14, 1
    %p88 = por %p86, %p87
    %p89 = scmp.ne.s32.totalorder %s80, %s81
    %p90 = scmp.eq.s32.totalorder %s14, 0
    %p91 = por %p89, %p90
    %p92 = scmp.ne.s32.totalorder %s80, %s81
    %p93 = scmp.eq.s32.totalorder %s15, 1
    %p94 = por %p92, %p93
    %p96 = scmp.ne.s32.totalorder %s81, %s95
    %p97 = scmp.eq.s32.totalorder %s15, 0
    %p98 = por %p96, %p97
    %s99 = ssub.s32 %s16, %s28
    %s100 = ssub.s32 %s17, %s24
    %s101 = sor.u32 %s99, %s100
    %p102 = scmp.eq.s32.totalorder %s101, 0
    %s104 = sadd.s32 %s103, 1
    %s105 = scalar_select %p102, %s103, %s104
    %p108 = pneg %p102
    %p109 = scmp.eq.s32.totalorder %s9, 1
    %p110 = por %p108, %p109
    %p111 = scmp.ne.s32.totalorder %s103, %s106
    %p112 = scmp.eq.s32.totalorder %s9, 0
    %p113 = por %p111, %p112
    %p114 = scmp.ne.s32.totalorder %s103, %s106
    %p115 = scmp.eq.s32.totalorder %s14, 1
    %p116 = por %p114, %p115
    %p117 = scmp.ne.s32.totalorder %s106, %s107
    %p118 = scmp.eq.s32.totalorder %s14, 0
    %p119 = por %p117, %p118
    %p120 = scmp.ne.s32.totalorder %s106, %s107
    %p121 = scmp.eq.s32.totalorder %s15, 1
    %p122 = por %p120, %p121
    %p124 = scmp.ne.s32.totalorder %s107, %s123
    %p125 = scmp.eq.s32.totalorder %s15, 0
    %p126 = por %p124, %p125
    %p127 = scmp.le.s32.totalorder 1, %s9
    %p128 = scmp.lt.s32.totalorder %s9, 3
    %p129 = pnand %p127, %p128
    %p130 = pneg %p129
    // Predicated region
    $region9: #{_lambda_.13} parent=5 // pred_check
      _
    $region10: #{_lambda_.13} parent=5 // pred_check_branch
      %132 = sbr.rel (%p129) target = $region12
    $region11: #{_lambda_.13} parent=5 // pred_region
      %s133 = ssub.s32 %s9, 1
      // Predicated region
      $region13: #{_lambda_.13} parent=11 // pred_check
        %p134 = pneg %p70
      $region14: #{_lambda_.13} parent=11 // pred_check_branch
        %136 = sbr.rel (%p134) target = $region16
      $region15: #{_lambda_.13} parent=11 // pred_region
        _
      $region16: #{_lambda_.13} parent=11 // pred_fallthru
        _
      // Predicated region
      $region17: #{_lambda_.13} parent=11 // pred_check
        %p137 = pneg %p91
      $region18: #{_lambda_.13} parent=11 // pred_check_branch
        %139 = sbr.rel (%p137) target = $region20
      $region19: #{_lambda_.13} parent=11 // pred_region
        _
      $region20: #{_lambda_.13} parent=11 // pred_fallthru
        _
    $region12: #{_lambda_.13} parent=5 // pred_fallthru
      _
    %p140 = scmp.lt.s32.totalorder %s9, 2
    // Predicated region
    $region21: #{_lambda_.13} parent=5 // pred_check
      %p141 = pneg %p140
    $region22: #{_lambda_.13} parent=5 // pred_check_branch
      %143 = sbr.rel (%p141) target = $region24
    $region23: #{_lambda_.13} parent=5 // pred_region
      // Predicated region
      $region25: #{_lambda_.13} parent=23 // pred_check
        %p144 = pneg %p43
      $region26: #{_lambda_.13} parent=23 // pred_check_branch
        %146 = sbr.rel (%p144) target = $region28
      $region27: #{_lambda_.13} parent=23 // pred_region
        %s147 = smul.u32 8, %s17
        %p148 = scmp.lt.s32.totalorder %s16, 1
        %s149 = scalar_select %p148, %s16, 1
        %p150 = scmp.lt.s32.totalorder %s147, 7
        %s151 = scalar_select %p150, %s147, 7
        %s152 = smul.addr %s149, 8
        %s153 = sadd.s32 %s151, %s152
        %s154 = smul.addr %s153, 4
        %s155 = scalar_lea.vmem %s0, %s154
        %s156 = smul.u32 8, %s17
      $region28: #{_lambda_.13} parent=23 // pred_fallthru
        _
    $region24: #{_lambda_.13} parent=5 // pred_fallthru
      _
    %p157 = scmp.le.s32.totalorder 1, %s9
    %p158 = scmp.lt.s32.totalorder %s9, 3
    %p159 = pnand %p157, %p158
    %p160 = pneg %p159
    // Predicated region
    $region29: #{_lambda_.13} parent=5 // pred_check
      _
    $region30: #{_lambda_.13} parent=5 // pred_check_branch
      %162 = sbr.rel (%p159) target = $region32
    $region31: #{_lambda_.13} parent=5 // pred_region
      %s163 = ssub.s32 %s9, 1
      %s164 = smul.u32 8, %s19
      %p165 = scmp.lt.s32.totalorder %s18, 1
      %s166 = scalar_select %p165, %s18, 1
      %p167 = scmp.lt.s32.totalorder %s164, 7
      %s168 = scalar_select %p167, %s164, 7
      %s169 = smul.addr %s166, 8
      %s170 = sadd.s32 %s168, %s169
      %s171 = smul.addr %s170, 4
      %s172 = scalar_lea.vmem %s0, %s171
      %p173 = pneg %p49
      %p174 = pneg %p46
      %p175 = pneg %p70
      %p176 = pneg %p67
      %p177 = pneg %p91
      %p178 = pneg %p88
      %p179 = pneg %p119
      %p180 = pneg %p116
      %s181 = smul.u32 8, %s19
      %p182 = scmp.lt.s32.totalorder %s18, 1
      %s183 = scalar_select %p182, %s18, 1
      %p184 = scmp.lt.s32.totalorder %s181, 7
      %s185 = scalar_select %p184, %s181, 7
      %s186 = smul.addr %s183, 8
      %s187 = sadd.s32 %s185, %s186
      %s188 = smul.addr %s187, 4
      %s189 = scalar_lea.vmem %s3, %s188
      %s190 = smul.u32 8, %s19
      %p191 = scmp.lt.s32.totalorder %s18, 1
      %s192 = scalar_select %p191, %s18, 1
      %p193 = scmp.lt.s32.totalorder %s190, 7
      %s194 = scalar_select %p193, %s190, 7
      %s195 = smul.addr %s192, 8
      %s196 = sadd.s32 %s194, %s195
      %s197 = smul.addr %s196, 4
      %s198 = scalar_lea.vmem %s0, %s197
      %s199 = smul.u32 8, %s19
      %s200 = smul.u32 8, %s19
      %p201 = scmp.lt.s32.totalorder %s18, 1
      %s202 = scalar_select %p201, %s18, 1
      %p203 = scmp.lt.s32.totalorder %s200, 7
      %s204 = scalar_select %p203, %s200, 7
      %s205 = smul.addr %s202, 8
      %s206 = sadd.s32 %s204, %s205
      %s207 = smul.addr %s206, 4
      %s208 = scalar_lea.vmem %s3, %s207
      %s209 = smul.u32 8, %s19
      %v210 = vld [vmem:[%s198] sm:$0xf]
      %v211 = vld [vmem:[%s198 + $0x4] sm:$0xf]
      %v212 = vld [vmem:[%s198 + $0x8] sm:$0xf]
      %v213 = vld [vmem:[%s198 + $0xc] sm:$0xf]
      %v214 = vld [vmem:[%s198 + $0x10] sm:$0xf]
      %v215 = vld [vmem:[%s198 + $0x14] sm:$0xf]
      %v216 = vld [vmem:[%s198 + $0x18] sm:$0xf]
      %v217 = vld [vmem:[%s198 + $0x1c] sm:$0xf]
      %v218 = vld [vmem:[%s1] sm:$0xf]
      %v219 = vld [vmem:[%s1 + $0x4] sm:$0xf]
      %v220 = vld [vmem:[%s1 + $0x8] sm:$0xf]
      %v221 = vld [vmem:[%s1 + $0xc] sm:$0xf]
      %v222 = vld [vmem:[%s1 + $0x10] sm:$0xf]
      %v223 = vld [vmem:[%s1 + $0x14] sm:$0xf]
      %v224 = vld [vmem:[%s1 + $0x18] sm:$0xf]
      %v225 = vld [vmem:[%s1 + $0x1c] sm:$0xf]
      %v226 = vld [vmem:[%s1 + $0x20] sm:$0xf]
      %v227 = vld [vmem:[%s1 + $0x24] sm:$0xf]
      %v228 = vld [vmem:[%s1 + $0x28] sm:$0xf]
      %v229 = vld [vmem:[%s1 + $0x2c] sm:$0xf]
      %v230 = vld [vmem:[%s1 + $0x30] sm:$0xf]
      %v231 = vld [vmem:[%s1 + $0x34] sm:$0xf]
      %v232 = vld [vmem:[%s1 + $0x38] sm:$0xf]
      %v233 = vld [vmem:[%s1 + $0x3c] sm:$0xf]
      %v234 = vld [vmem:[%s2] sm:$0x1]
      %v236 = vperm.slane %v234, 0
      %v246 = vunpack.c.l.b16 %v210
      %v247 = vunpack.c.l.b16 %v211
      %v248 = vunpack.c.l.b16 %v212
      %v249 = vunpack.c.l.b16 %v213
      %v250 = vunpack.c.l.b16 %v214
      %v251 = vunpack.c.l.b16 %v215
      %v252 = vunpack.c.l.b16 %v216
      %v253 = vunpack.c.l.b16 %v217
      %v254 = vpack.c.b16 %v247, %v246
      %v255 = vpack.c.b16 %v249, %v248
      %v256 = vpack.c.b16 %v251, %v250
      %v257 = vpack.c.b16 %v253, %v252
      %v278 = vunpack.c.l.b16 %v218
      %v279 = vunpack.c.l.b16 %v219
      %v280 = vunpack.c.l.b16 %v220
      %v281 = vunpack.c.l.b16 %v221
      %v282 = vunpack.c.l.b16 %v222
      %v283 = vunpack.c.l.b16 %v223
      %v284 = vunpack.c.l.b16 %v224
      %v285 = vunpack.c.l.b16 %v225
      %v286 = vunpack.c.l.b16 %v226
      %v287 = vunpack.c.l.b16 %v227
      %v288 = vunpack.c.l.b16 %v228
      %v289 = vunpack.c.l.b16 %v229
      %v290 = vunpack.c.l.b16 %v230
      %v291 = vunpack.c.l.b16 %v231
      %v292 = vunpack.c.l.b16 %v232
      %v293 = vunpack.c.l.b16 %v233
      %v294 = vpack.c.b16 %v279, %v278
      %v295 = vpack.c.b16 %v281, %v280
      %v296 = vpack.c.b16 %v283, %v282
      %v297 = vpack.c.b16 %v285, %v284
      %v298 = vpack.c.b16 %v287, %v286
      %v299 = vpack.c.b16 %v289, %v288
      %v300 = vpack.c.b16 %v291, %v290
      %v301 = vpack.c.b16 %v293, %v292
      %310 = vmatpush.bf16.msra.mxu0 %v301
      %311 = vmatpush.bf16.msra.mxu0 %v300
      %312 = vmatpush.bf16.msra.mxu0 %v299
      %313 = vmatpush.bf16.msra.mxu0 %v298
      %314 = vmatpush.bf16.msra.mxu0 %v297
      %315 = vmatpush.bf16.msra.mxu0 %v296
      %316 = vmatpush.bf16.msra.mxu0 %v295
      %317 = vmatpush.bf16.msra.mxu0 %v294
      %318 = vmatmul.bf16.gmra.mxu0 %v254
      %v319 = vpop.f32.mrf.mxu0
      %v320 = vadd.f32 %v236, %v319
      %v321 = vpop.f32.mrf.mxu0
      %v322 = vadd.f32 %v236, %v321
      %323 = vmatmul.bf16.gmra.mxu0 %v255
      %v324 = vpop.f32.mrf.mxu0
      %v325 = vadd.f32 %v236, %v324
      %v326 = vpop.f32.mrf.mxu0
      %v327 = vadd.f32 %v236, %v326
      %328 = vmatmul.bf16.gmra.mxu0 %v256
      %v329 = vpop.f32.mrf.mxu0
      %v330 = vadd.f32 %v236, %v329
      %v331 = vpop.f32.mrf.mxu0
      %v332 = vadd.f32 %v236, %v331
      %333 = vmatmul.bf16.gmra.mxu0 %v257
      %v334 = vpop.f32.mrf.mxu0
      %v335 = vadd.f32 %v236, %v334
      %v336 = vpop.f32.mrf.mxu0
      %v337 = vadd.f32 %v236, %v336
      %338 = vdwg.mxu0
      %v339 = vxor.u32 %v320, 2147483648
      %v340 = vxor.u32 %v322, 2147483648
      %v341 = vxor.u32 %v325, 2147483648
      %v342 = vxor.u32 %v327, 2147483648
      %v343 = vxor.u32 %v330, 2147483648
      %v344 = vxor.u32 %v332, 2147483648
      %v345 = vxor.u32 %v335, 2147483648
      %v346 = vxor.u32 %v337, 2147483648
      %v347 = vmul.f32 %v339, 1.442695
      %v348 = vpow.pop %v347
      %v349 = vmul.f32 %v340, 1.442695
      %v350 = vpow.pop %v349
      %v351 = vmul.f32 %v341, 1.442695
      %v352 = vpow.pop %v351
      %v353 = vmul.f32 %v342, 1.442695
      %v354 = vpow.pop %v353
      %v355 = vmul.f32 %v343, 1.442695
      %v356 = vpow.pop %v355
      %v357 = vmul.f32 %v344, 1.442695
      %v358 = vpow.pop %v357
      %v359 = vmul.f32 %v345, 1.442695
      %v360 = vpow.pop %v359
      %v361 = vmul.f32 %v346, 1.442695
      %v362 = vpow.pop %v361
      %v363 = vadd.f32 %v348, 1.0
      %v364 = vadd.f32 %v350, 1.0
      %v365 = vadd.f32 %v352, 1.0
      %v366 = vadd.f32 %v354, 1.0
      %v367 = vadd.f32 %v356, 1.0
      %v368 = vadd.f32 %v358, 1.0
      %v369 = vadd.f32 %v360, 1.0
      %v370 = vadd.f32 %v362, 1.0
      %v371 = vrcp.pop %v363
      %v372 = vmul.f32 %v363, %v371
      %v373 = vsub.f32 1.0, %v372
      %v374 = vmul.f32 %v371, %v373
      %v375 = vadd.f32 %v371, %v374
      %vm376 = vweird.f32 %v363
      %vm377 = vweird.f32 %v371
      %vm378 = vmor %vm376, %vm377
      %v379 = vsel %vm378, %v371, %v375
      %v380 = vand.u32 2147483647, %v363
      %vm381 = vcmp.eq.f32.partialorder %v380, 8.507059e+37
      %v382 = vand.u32 %v363, 2147483648
      %v383 = vor.u32 1.1754944e-38, %v382
      %v384 = vsel %vm381, %v383, %v379
      %v385 = vmul.f32 1.0, %v384
      %v386 = vrcp.pop %v364
      %v387 = vmul.f32 %v364, %v386
      %v388 = vsub.f32 1.0, %v387
      %v389 = vmul.f32 %v386, %v388
      %v390 = vadd.f32 %v386, %v389
      %vm391 = vweird.f32 %v364
      %vm392 = vweird.f32 %v386
      %vm393 = vmor %vm391, %vm392
      %v394 = vsel %vm393, %v386, %v390
      %v395 = vand.u32 2147483647, %v364
      %vm396 = vcmp.eq.f32.partialorder %v395, 8.507059e+37
      %v397 = vand.u32 %v364, 2147483648
      %v398 = vor.u32 1.1754944e-38, %v397
      %v399 = vsel %vm396, %v398, %v394
      %v400 = vmul.f32 1.0, %v399
      %v401 = vrcp.pop %v365
      %v402 = vmul.f32 %v365, %v401
      %v403 = vsub.f32 1.0, %v402
      %v404 = vmul.f32 %v401, %v403
      %v405 = vadd.f32 %v401, %v404
      %vm406 = vweird.f32 %v365
      %vm407 = vweird.f32 %v401
      %vm408 = vmor %vm406, %vm407
      %v409 = vsel %vm408, %v401, %v405
      %v410 = vand.u32 2147483647, %v365
      %vm411 = vcmp.eq.f32.partialorder %v410, 8.507059e+37
      %v412 = vand.u32 %v365, 2147483648
      %v413 = vor.u32 1.1754944e-38, %v412
      %v414 = vsel %vm411, %v413, %v409
      %v415 = vmul.f32 1.0, %v414
      %v416 = vrcp.pop %v366
      %v417 = vmul.f32 %v366, %v416
      %v418 = vsub.f32 1.0, %v417
      %v419 = vmul.f32 %v416, %v418
      %v420 = vadd.f32 %v416, %v419
      %vm421 = vweird.f32 %v366
      %vm422 = vweird.f32 %v416
      %vm423 = vmor %vm421, %vm422
      %v424 = vsel %vm423, %v416, %v420
      %v425 = vand.u32 2147483647, %v366
      %vm426 = vcmp.eq.f32.partialorder %v425, 8.507059e+37
      %v427 = vand.u32 %v366, 2147483648
      %v428 = vor.u32 1.1754944e-38, %v427
      %v429 = vsel %vm426, %v428, %v424
      %v430 = vmul.f32 1.0, %v429
      %v431 = vrcp.pop %v367
      %v432 = vmul.f32 %v367, %v431
      %v433 = vsub.f32 1.0, %v432
      %v434 = vmul.f32 %v431, %v433
      %v435 = vadd.f32 %v431, %v434
      %vm436 = vweird.f32 %v367
      %vm437 = vweird.f32 %v431
      %vm438 = vmor %vm436, %vm437
      %v439 = vsel %vm438, %v431, %v435
      %v440 = vand.u32 2147483647, %v367
      %vm441 = vcmp.eq.f32.partialorder %v440, 8.507059e+37
      %v442 = vand.u32 %v367, 2147483648
      %v443 = vor.u32 1.1754944e-38, %v442
      %v444 = vsel %vm441, %v443, %v439
      %v445 = vmul.f32 1.0, %v444
      %v446 = vrcp.pop %v368
      %v447 = vmul.f32 %v368, %v446
      %v448 = vsub.f32 1.0, %v447
      %v449 = vmul.f32 %v446, %v448
      %v450 = vadd.f32 %v446, %v449
      %vm451 = vweird.f32 %v368
      %vm452 = vweird.f32 %v446
      %vm453 = vmor %vm451, %vm452
      %v454 = vsel %vm453, %v446, %v450
      %v455 = vand.u32 2147483647, %v368
      %vm456 = vcmp.eq.f32.partialorder %v455, 8.507059e+37
      %v457 = vand.u32 %v368, 2147483648
      %v458 = vor.u32 1.1754944e-38, %v457
      %v459 = vsel %vm456, %v458, %v454
      %v460 = vmul.f32 1.0, %v459
      %v461 = vrcp.pop %v369
      %v462 = vmul.f32 %v369, %v461
      %v463 = vsub.f32 1.0, %v462
      %v464 = vmul.f32 %v461, %v463
      %v465 = vadd.f32 %v461, %v464
      %vm466 = vweird.f32 %v369
      %vm467 = vweird.f32 %v461
      %vm468 = vmor %vm466, %vm467
      %v469 = vsel %vm468, %v461, %v465
      %v470 = vand.u32 2147483647, %v369
      %vm471 = vcmp.eq.f32.partialorder %v470, 8.507059e+37
      %v472 = vand.u32 %v369, 2147483648
      %v473 = vor.u32 1.1754944e-38, %v472
      %v474 = vsel %vm471, %v473, %v469
      %v475 = vmul.f32 1.0, %v474
      %v476 = vrcp.pop %v370
      %v477 = vmul.f32 %v370, %v476
      %v478 = vsub.f32 1.0, %v477
      %v479 = vmul.f32 %v476, %v478
      %v480 = vadd.f32 %v476, %v479
      %vm481 = vweird.f32 %v370
      %vm482 = vweird.f32 %v476
      %vm483 = vmor %vm481, %vm482
      %v484 = vsel %vm483, %v476, %v480
      %v485 = vand.u32 2147483647, %v370
      %vm486 = vcmp.eq.f32.partialorder %v485, 8.507059e+37
      %v487 = vand.u32 %v370, 2147483648
      %v488 = vor.u32 1.1754944e-38, %v487
      %v489 = vsel %vm486, %v488, %v484
      %v490 = vmul.f32 1.0, %v489
      %v491 = vmul.f32 %v320, %v385
      %v492 = vmul.f32 %v322, %v400
      %v493 = vmul.f32 %v325, %v415
      %v494 = vmul.f32 %v327, %v430
      %v495 = vmul.f32 %v330, %v445
      %v496 = vmul.f32 %v332, %v460
      %v497 = vmul.f32 %v335, %v475
      %v498 = vmul.f32 %v337, %v490
      %v499 = vpack.c.bf16 %v491, %v491
      %v500 = vpack.c.bf16 %v492, %v492
      %v501 = vpack.c.bf16 %v493, %v493
      %v502 = vpack.c.bf16 %v494, %v494
      %v503 = vpack.c.bf16 %v495, %v495
      %v504 = vpack.c.bf16 %v496, %v496
      %v505 = vpack.c.bf16 %v497, %v497
      %v506 = vpack.c.bf16 %v498, %v498
      %507 = vst [vmem:[%s208] sm:$0xf] %v499
      %508 = vst [vmem:[%s208 + $0x4] sm:$0xf] %v500
      %509 = vst [vmem:[%s208 + $0x8] sm:$0xf] %v501
      %510 = vst [vmem:[%s208 + $0xc] sm:$0xf] %v502
      %511 = vst [vmem:[%s208 + $0x10] sm:$0xf] %v503
      %512 = vst [vmem:[%s208 + $0x14] sm:$0xf] %v504
      %513 = vst [vmem:[%s208 + $0x18] sm:$0xf] %v505
      %514 = vst [vmem:[%s208 + $0x1c] sm:$0xf] %v506
      %s515 = smul.u32 8, %s19
      %p516 = scmp.lt.s32.totalorder %s18, 1
      %s517 = scalar_select %p516, %s18, 1
      %p518 = scmp.lt.s32.totalorder %s515, 7
      %s519 = scalar_select %p518, %s515, 7
      %s520 = smul.addr %s517, 8
      %s521 = sadd.s32 %s519, %s520
      %s522 = smul.addr %s521, 4
      %s523 = scalar_lea.vmem %s3, %s522
      // Predicated region
      $region33: #{_lambda_.13} parent=31 // pred_check
        %p524 = pneg %p116
      $region34: #{_lambda_.13} parent=31 // pred_check_branch
        %526 = sbr.rel (%p524) target = $region36
      $region35: #{_lambda_.13} parent=31 // pred_region
        %s527 = smul.u32 8, %s19
      $region36: #{_lambda_.13} parent=31 // pred_fallthru
        _
    $region32: #{_lambda_.13} parent=5 // pred_fallthru
      _
    %p528 = scmp.le.s32.totalorder 2, %s9
    // Predicated region
    $region37: #{_lambda_.13} parent=5 // pred_check
      %p529 = pneg %p528
    $region38: #{_lambda_.13} parent=5 // pred_check_branch
      %531 = sbr.rel (%p529) target = $region40
    $region39: #{_lambda_.13} parent=5 // pred_region
      %s532 = ssub.s32 %s9, 2
      // Predicated region
      $region41: #{_lambda_.13} parent=39 // pred_check
        %p533 = pneg %p122
      $region42: #{_lambda_.13} parent=39 // pred_check_branch
        %535 = sbr.rel (%p533) target = $region44
      $region43: #{_lambda_.13} parent=39 // pred_region
        %s536 = smul.u32 8, %s21
        %p537 = scmp.lt.s32.totalorder %s20, 1
        %s538 = scalar_select %p537, %s20, 1
        %p539 = scmp.lt.s32.totalorder %s536, 7
        %s540 = scalar_select %p539, %s536, 7
        %s541 = smul.addr %s538, 8
        %s542 = sadd.s32 %s540, %s541
        %s543 = smul.addr %s542, 4
        %s544 = scalar_lea.vmem %s3, %s543
      $region44: #{_lambda_.13} parent=39 // pred_fallthru
        _
    $region40: #{_lambda_.13} parent=5 // pred_fallthru
      _
  $region6: #{_lambda_.13} parent=0 // loop_footer
    %s13 = sadd.s32 1, %s9
  $region7: #{_lambda_.13} parent=0 // loop_footer_branch
    %8 = sbr.rel target = $region3
  $region8: #{_lambda_.13} parent=0 // loop_exit
    _

// kernel: _lambda_.18
$region0: #{_lambda_.18}
  #allocation0 [shape = 'u32[]', space=smem, size = 0x4, offset = 0x4, fixed_abs, tag = 'smem constant byte address 0x4 - core index']
  #allocation1 [shape = 'u32[72,128]{1,0:T(1,128)}', space=vmem, size = 0x9000, scoped, tag = 'internal scratch']
  %s0 = inlined_call_operand.vmem [shape: bf16[2,64,128], index: 0, kind: input, shape index: {}]
  %s1 = inlined_call_operand.vmem [shape: bf16[128,128], index: 1, kind: input, shape index: {}]
  %s2 = inlined_call_operand.vmem [shape: f32[1,128], index: 2, kind: input, shape index: {}]
  %s3 = inlined_call_operand.vmem [shape: bf16[2,1,128], index: 3, kind: input, shape index: {}]
  %s4 = inlined_call_operand.vmem [shape: bf16[2,64,128], index: 4, kind: input, shape index: {}]
  %s5 = inlined_call_operand.vmem [shape: bf16[2,64,128], index: 5, kind: output, shape index: {}]
  %s6 = sld [smem:[#allocation0]]
  $region53: #{_lambda_.18} parent=0
    _
  %s8 = ssub.s32 1, %s6
  %s9 = scalar_select 0, %s8, %s6
  loop: start=0, step=1, limit=4
  $region2: #{_lambda_.18} parent=0 // loop_pre_header
    _
  $region3: #{_lambda_.18} parent=0 // loop_header
    %s11 = sphi 0, %s15
    %p12 = scmp.ge.s32.totalorder %s11, 4
    %s18 = sphi 0, %s30
    %s19 = sphi 0, %s26
    %s20 = sphi 0, %s18
    %s21 = sphi 0, %s19
    %s22 = sphi 0, %s20
    %s23 = sphi 0, %s21
    %s35 = sphi 0, %s37
    %s38 = sphi 0, %s35
    %s39 = sphi 0, %s38
    %s55 = sphi 0, %s39
    %s59 = sphi 0, %s59
    %s61 = sphi 0, %s59
    %s62 = sphi 0, %s61
    %s76 = sphi 0, %s62
    %s80 = sphi 0, %s80
    %s82 = sphi 0, %s80
    %s83 = sphi 0, %s82
    %s97 = sphi 0, %s83
    %s103 = sphi 0, %s105
    %s106 = sphi 0, %s103
    %s107 = sphi 0, %s106
    %s123 = sphi 0, %s107
    %s131 = sphi 0, %s133
    %s134 = sphi 0, %s131
    %s135 = sphi 0, %s134
    %s151 = sphi 0, %s135
    %s159 = sphi 0, %s161
    %s162 = sphi 0, %s159
    %s163 = sphi 0, %s162
    %s179 = sphi 0, %s163
  $region4: #{_lambda_.18} parent=0 // loop_header_branch
    %14 = sbr.rel (%p12) target = $region8
  $region5: #{_lambda_.18} parent=0 // loop_body
    %s16 = ssub.s32 %s11, 1
    %s17 = ssub.s32 %s11, 2
    %s24 = sadd.s32 1, %s19
    %p25 = scmp.ge.s32.totalorder %s24, 1
    %s26 = scalar_select %p25, 0, %s24
    %s27 = sadd.s32 1, %s18
    %s28 = scalar_select %p25, %s27, %s18
    %p29 = scmp.ge.s32.totalorder %s28, 2
    %s30 = scalar_select %p29, 0, %s28
    %s31 = ssub.s32 %s18, %s30
    %s32 = ssub.s32 %s19, %s26
    %s33 = sor.u32 %s31, %s32
    %p34 = scmp.eq.s32.totalorder %s33, 0
    %s36 = sadd.s32 %s35, 1
    %s37 = scalar_select %p34, %s35, %s36
    %p40 = pneg %p34
    %p41 = scmp.eq.s32.totalorder %s11, 1
    %p42 = por %p40, %p41
    %p43 = scmp.ne.s32.totalorder %s35, %s38
    %p44 = scmp.eq.s32.totalorder %s11, 0
    %p45 = por %p43, %p44
    %p46 = scmp.ne.s32.totalorder %s35, %s38
    %p47 = scmp.eq.s32.totalorder %s16, 1
    %p48 = por %p46, %p47
    %p49 = scmp.ne.s32.totalorder %s38, %s39
    %p50 = scmp.eq.s32.totalorder %s16, 0
    %p51 = por %p49, %p50
    %p52 = scmp.ne.s32.totalorder %s38, %s39
    %p53 = scmp.eq.s32.totalorder %s17, 1
    %p54 = por %p52, %p53
    %p56 = scmp.ne.s32.totalorder %s39, %s55
    %p57 = scmp.eq.s32.totalorder %s17, 0
    %p58 = por %p56, %p57
    %s60 = sadd.s32 %s59, 1
    %p63 = scmp.eq.s32.totalorder %s11, 1
    %p64 = scmp.ne.s32.totalorder %s59, %s61
    %p65 = scmp.eq.s32.totalorder %s11, 0
    %p66 = por %p64, %p65
    %p67 = scmp.ne.s32.totalorder %s59, %s61
    %p68 = scmp.eq.s32.totalorder %s16, 1
    %p69 = por %p67, %p68
    %p70 = scmp.ne.s32.totalorder %s61, %s62
    %p71 = scmp.eq.s32.totalorder %s16, 0
    %p72 = por %p70, %p71
    %p73 = scmp.ne.s32.totalorder %s61, %s62
    %p74 = scmp.eq.s32.totalorder %s17, 1
    %p75 = por %p73, %p74
    %p77 = scmp.ne.s32.totalorder %s62, %s76
    %p78 = scmp.eq.s32.totalorder %s17, 0
    %p79 = por %p77, %p78
    %s81 = sadd.s32 %s80, 1
    %p84 = scmp.eq.s32.totalorder %s11, 1
    %p85 = scmp.ne.s32.totalorder %s80, %s82
    %p86 = scmp.eq.s32.totalorder %s11, 0
    %p87 = por %p85, %p86
    %p88 = scmp.ne.s32.totalorder %s80, %s82
    %p89 = scmp.eq.s32.totalorder %s16, 1
    %p90 = por %p88, %p89
    %p91 = scmp.ne.s32.totalorder %s82, %s83
    %p92 = scmp.eq.s32.totalorder %s16, 0
    %p93 = por %p91, %p92
    %p94 = scmp.ne.s32.totalorder %s82, %s83
    %p95 = scmp.eq.s32.totalorder %s17, 1
    %p96 = por %p94, %p95
    %p98 = scmp.ne.s32.totalorder %s83, %s97
    %p99 = scmp.eq.s32.totalorder %s17, 0
    %p100 = por %p98, %p99
    %s101 = ssub.s32 %s18, %s30
    %p102 = scmp.eq.s32.totalorder %s101, 0
    %s104 = sadd.s32 %s103, 1
    %s105 = scalar_select %p102, %s103, %s104
    %p108 = pneg %p102
    %p109 = scmp.eq.s32.totalorder %s11, 1
    %p110 = por %p108, %p109
    %p111 = scmp.ne.s32.totalorder %s103, %s106
    %p112 = scmp.eq.s32.totalorder %s11, 0
    %p113 = por %p111, %p112
    %p114 = scmp.ne.s32.totalorder %s103, %s106
    %p115 = scmp.eq.s32.totalorder %s16, 1
    %p116 = por %p114, %p115
    %p117 = scmp.ne.s32.totalorder %s106, %s107
    %p118 = scmp.eq.s32.totalorder %s16, 0
    %p119 = por %p117, %p118
    %p120 = scmp.ne.s32.totalorder %s106, %s107
    %p121 = scmp.eq.s32.totalorder %s17, 1
    %p122 = por %p120, %p121
    %p124 = scmp.ne.s32.totalorder %s107, %s123
    %p125 = scmp.eq.s32.totalorder %s17, 0
    %p126 = por %p124, %p125
    %s127 = ssub.s32 %s18, %s30
    %s128 = ssub.s32 %s19, %s26
    %s129 = sor.u32 %s127, %s128
    %p130 = scmp.eq.s32.totalorder %s129, 0
    %s132 = sadd.s32 %s131, 1
    %s133 = scalar_select %p130, %s131, %s132
    %p136 = pneg %p130
    %p137 = scmp.eq.s32.totalorder %s11, 1
    %p138 = por %p136, %p137
    %p139 = scmp.ne.s32.totalorder %s131, %s134
    %p140 = scmp.eq.s32.totalorder %s11, 0
    %p141 = por %p139, %p140
    %p142 = scmp.ne.s32.totalorder %s131, %s134
    %p143 = scmp.eq.s32.totalorder %s16, 1
    %p144 = por %p142, %p143
    %p145 = scmp.ne.s32.totalorder %s134, %s135
    %p146 = scmp.eq.s32.totalorder %s16, 0
    %p147 = por %p145, %p146
    %p148 = scmp.ne.s32.totalorder %s134, %s135
    %p149 = scmp.eq.s32.totalorder %s17, 1
    %p150 = por %p148, %p149
    %p152 = scmp.ne.s32.totalorder %s135, %s151
    %p153 = scmp.eq.s32.totalorder %s17, 0
    %p154 = por %p152, %p153
    %s155 = ssub.s32 %s18, %s30
    %s156 = ssub.s32 %s19, %s26
    %s157 = sor.u32 %s155, %s156
    %p158 = scmp.eq.s32.totalorder %s157, 0
    %s160 = sadd.s32 %s159, 1
    %s161 = scalar_select %p158, %s159, %s160
    %p164 = pneg %p158
    %p165 = scmp.eq.s32.totalorder %s11, 1
    %p166 = por %p164, %p165
    %p167 = scmp.ne.s32.totalorder %s159, %s162
    %p168 = scmp.eq.s32.totalorder %s11, 0
    %p169 = por %p167, %p168
    %p170 = scmp.ne.s32.totalorder %s159, %s162
    %p171 = scmp.eq.s32.totalorder %s16, 1
    %p172 = por %p170, %p171
    %p173 = scmp.ne.s32.totalorder %s162, %s163
    %p174 = scmp.eq.s32.totalorder %s16, 0
    %p175 = por %p173, %p174
    %p176 = scmp.ne.s32.totalorder %s162, %s163
    %p177 = scmp.eq.s32.totalorder %s17, 1
    %p178 = por %p176, %p177
    %p180 = scmp.ne.s32.totalorder %s163, %s179
    %p181 = scmp.eq.s32.totalorder %s17, 0
    %p182 = por %p180, %p181
    %p183 = scmp.le.s32.totalorder 1, %s11
    %p184 = scmp.lt.s32.totalorder %s11, 3
    %p185 = pnand %p183, %p184
    %p186 = pneg %p185
    // Predicated region
    $region9: #{_lambda_.18} parent=5 // pred_check
      _
    $region10: #{_lambda_.18} parent=5 // pred_check_branch
      %188 = sbr.rel (%p185) target = $region12
    $region11: #{_lambda_.18} parent=5 // pred_region
      %s189 = ssub.s32 %s11, 1
      // Predicated region
      $region13: #{_lambda_.18} parent=11 // pred_check
        %p190 = pneg %p72
      $region14: #{_lambda_.18} parent=11 // pred_check_branch
        %192 = sbr.rel (%p190) target = $region16
      $region15: #{_lambda_.18} parent=11 // pred_region
        _
      $region16: #{_lambda_.18} parent=11 // pred_fallthru
        _
      // Predicated region
      $region17: #{_lambda_.18} parent=11 // pred_check
        %p193 = pneg %p93
      $region18: #{_lambda_.18} parent=11 // pred_check_branch
        %195 = sbr.rel (%p193) target = $region20
      $region19: #{_lambda_.18} parent=11 // pred_region
        _
      $region20: #{_lambda_.18} parent=11 // pred_fallthru
        _
    $region12: #{_lambda_.18} parent=5 // pred_fallthru
      _
    %p196 = scmp.lt.s32.totalorder %s11, 2
    // Predicated region
    $region21: #{_lambda_.18} parent=5 // pred_check
      %p197 = pneg %p196
    $region22: #{_lambda_.18} parent=5 // pred_check_branch
      %199 = sbr.rel (%p197) target = $region24
    $region23: #{_lambda_.18} parent=5 // pred_region
      // Predicated region
      $region25: #{_lambda_.18} parent=23 // pred_check
        %p200 = pneg %p45
      $region26: #{_lambda_.18} parent=23 // pred_check_branch
        %202 = sbr.rel (%p200) target = $region28
      $region27: #{_lambda_.18} parent=23 // pred_region
        %s203 = smul.u32 8, %s19
        %p204 = scmp.lt.s32.totalorder %s18, 1
        %s205 = scalar_select %p204, %s18, 1
        %p206 = scmp.lt.s32.totalorder %s203, 7
        %s207 = scalar_select %p206, %s203, 7
        %s208 = smul.addr %s205, 8
        %s209 = sadd.s32 %s207, %s208
        %s210 = smul.addr %s209, 4
        %s211 = scalar_lea.vmem %s0, %s210
        %s212 = smul.u32 8, %s19
      $region28: #{_lambda_.18} parent=23 // pred_fallthru
        _
      // Predicated region
      $region29: #{_lambda_.18} parent=23 // pred_check
        %p213 = pneg %p113
      $region30: #{_lambda_.18} parent=23 // pred_check_branch
        %215 = sbr.rel (%p213) target = $region32
      $region31: #{_lambda_.18} parent=23 // pred_region
        %p216 = scmp.lt.s32.totalorder %s18, 1
        %s217 = scalar_select %p216, %s18, 1
        %s218 = scalar_lea.vmem %s3, %s217
      $region32: #{_lambda_.18} parent=23 // pred_fallthru
        _
      // Predicated region
      $region33: #{_lambda_.18} parent=23 // pred_check
        %p219 = pneg %p141
      $region34: #{_lambda_.18} parent=23 // pred_check_branch
        %221 = sbr.rel (%p219) target = $region36
      $region35: #{_lambda_.18} parent=23 // pred_region
        %s222 = smul.u32 8, %s19
        %p223 = scmp.lt.s32.totalorder %s18, 1
        %s224 = scalar_select %p223, %s18, 1
        %p225 = scmp.lt.s32.totalorder %s222, 7
        %s226 = scalar_select %p225, %s222, 7
        %s227 = smul.addr %s224, 8
        %s228 = sadd.s32 %s226, %s227
        %s229 = smul.addr %s228, 4
        %s230 = scalar_lea.vmem %s4, %s229
        %s231 = smul.u32 8, %s19
      $region36: #{_lambda_.18} parent=23 // pred_fallthru
        _
    $region24: #{_lambda_.18} parent=5 // pred_fallthru
      _
    %p232 = scmp.le.s32.totalorder 1, %s11
    %p233 = scmp.lt.s32.totalorder %s11, 3
    %p234 = pnand %p232, %p233
    %p235 = pneg %p234
    // Predicated region
    $region37: #{_lambda_.18} parent=5 // pred_check
      _
    $region38: #{_lambda_.18} parent=5 // pred_check_branch
      %237 = sbr.rel (%p234) target = $region40
    $region39: #{_lambda_.18} parent=5 // pred_region
      %s238 = ssub.s32 %s11, 1
      %s239 = smul.u32 8, %s21
      %p240 = scmp.lt.s32.totalorder %s20, 1
      %s241 = scalar_select %p240, %s20, 1
      %p242 = scmp.lt.s32.totalorder %s239, 7
      %s243 = scalar_select %p242, %s239, 7
      %s244 = smul.addr %s241, 8
      %s245 = sadd.s32 %s243, %s244
      %s246 = smul.addr %s245, 4
      %s247 = scalar_lea.vmem %s0, %s246
      %p248 = pneg %p51
      %p249 = pneg %p48
      %p250 = pneg %p72
      %p251 = pneg %p69
      %p252 = pneg %p93
      %p253 = pneg %p90
      %p254 = scmp.lt.s32.totalorder %s20, 1
      %s255 = scalar_select %p254, %s20, 1
      %s256 = scalar_lea.vmem %s3, %s255
      %p257 = pneg %p119
      %p258 = pneg %p116
      %s259 = smul.u32 8, %s21
      %p260 = scmp.lt.s32.totalorder %s20, 1
      %s261 = scalar_select %p260, %s20, 1
      %p262 = scmp.lt.s32.totalorder %s259, 7
      %s263 = scalar_select %p262, %s259, 7
      %s264 = smul.addr %s261, 8
      %s265 = sadd.s32 %s263, %s264
      %s266 = smul.addr %s265, 4
      %s267 = scalar_lea.vmem %s4, %s266
      %p268 = pneg %p147
      %p269 = pneg %p144
      %p270 = pneg %p175
      %p271 = pneg %p172
      %s272 = smul.u32 8, %s21
      %p273 = scmp.lt.s32.totalorder %s20, 1
      %s274 = scalar_select %p273, %s20, 1
      %p275 = scmp.lt.s32.totalorder %s272, 7
      %s276 = scalar_select %p275, %s272, 7
      %s277 = smul.addr %s274, 8
      %s278 = sadd.s32 %s276, %s277
      %s279 = smul.addr %s278, 4
      %s280 = scalar_lea.vmem %s5, %s279
      %s281 = smul.u32 8, %s21
      %p282 = scmp.lt.s32.totalorder %s20, 1
      %s283 = scalar_select %p282, %s20, 1
      %p284 = scmp.lt.s32.totalorder %s281, 7
      %s285 = scalar_select %p284, %s281, 7
      %s286 = smul.addr %s283, 8
      %s287 = sadd.s32 %s285, %s286
      %s288 = smul.addr %s287, 4
      %s289 = scalar_lea.vmem %s0, %s288
      %s290 = smul.u32 8, %s21
      %p291 = scmp.lt.s32.totalorder %s20, 1
      %s292 = scalar_select %p291, %s20, 1
      %s293 = scalar_lea.vmem %s3, %s292
      %s294 = smul.u32 8, %s21
      %p295 = scmp.lt.s32.totalorder %s20, 1
      %s296 = scalar_select %p295, %s20, 1
      %p297 = scmp.lt.s32.totalorder %s294, 7
      %s298 = scalar_select %p297, %s294, 7
      %s299 = smul.addr %s296, 8
      %s300 = sadd.s32 %s298, %s299
      %s301 = smul.addr %s300, 4
      %s302 = scalar_lea.vmem %s4, %s301
      %s303 = smul.u32 8, %s21
      %s304 = smul.u32 8, %s21
      %p305 = scmp.lt.s32.totalorder %s20, 1
      %s306 = scalar_select %p305, %s20, 1
      %p307 = scmp.lt.s32.totalorder %s304, 7
      %s308 = scalar_select %p307, %s304, 7
      %s309 = smul.addr %s306, 8
      %s310 = sadd.s32 %s308, %s309
      %s311 = smul.addr %s310, 4
      %s312 = scalar_lea.vmem %s5, %s311
      %s313 = smul.u32 8, %s21
      %v314 = vld [vmem:[%s289] sm:$0xf]
      %v315 = vld [vmem:[%s289 + $0x4] sm:$0xf]
      %v316 = vld [vmem:[%s289 + $0x8] sm:$0xf]
      %v317 = vld [vmem:[%s289 + $0xc] sm:$0xf]
      %v318 = vld [vmem:[%s289 + $0x10] sm:$0xf]
      %v319 = vld [vmem:[%s289 + $0x14] sm:$0xf]
      %v320 = vld [vmem:[%s289 + $0x18] sm:$0xf]
      %v321 = vld [vmem:[%s289 + $0x1c] sm:$0xf]
      %v322 = vld [vmem:[%s293] sm:$0x1]
      %v324 = vpack.i.b16 %v322, %v322
      %v326 = vperm.slane %v324, 0
      %v327 = vunpack.c.l.bf16 %v314
      %v328 = vunpack.c.l.bf16 %v315
      %v329 = vunpack.c.l.bf16 %v316
      %v330 = vunpack.c.l.bf16 %v317
      %v331 = vunpack.c.l.bf16 %v318
      %v332 = vunpack.c.l.bf16 %v319
      %v333 = vunpack.c.l.bf16 %v320
      %v334 = vunpack.c.l.bf16 %v321
      %v335 = vunpack.c.l.bf16 %v326
      %v336 = vmul.f32 %v327, %v335
      %v337 = vmul.f32 %v328, %v335
      %v338 = vmul.f32 %v329, %v335
      %v339 = vmul.f32 %v330, %v335
      %v340 = vmul.f32 %v331, %v335
      %v341 = vmul.f32 %v332, %v335
      %v342 = vmul.f32 %v333, %v335
      %v343 = vmul.f32 %v334, %v335
      %v344 = vpack.c.bf16 %v337, %v336
      %v345 = vpack.c.bf16 %v339, %v338
      %v346 = vpack.c.bf16 %v341, %v340
      %v347 = vpack.c.bf16 %v343, %v342
      %v348 = vld [vmem:[%s1] sm:$0xf]
      %v349 = vld [vmem:[%s1 + $0x4] sm:$0xf]
      %v350 = vld [vmem:[%s1 + $0x8] sm:$0xf]
      %v351 = vld [vmem:[%s1 + $0xc] sm:$0xf]
      %v352 = vld [vmem:[%s1 + $0x10] sm:$0xf]
      %v353 = vld [vmem:[%s1 + $0x14] sm:$0xf]
      %v354 = vld [vmem:[%s1 + $0x18] sm:$0xf]
      %v355 = vld [vmem:[%s1 + $0x1c] sm:$0xf]
      %v356 = vld [vmem:[%s1 + $0x20] sm:$0xf]
      %v357 = vld [vmem:[%s1 + $0x24] sm:$0xf]
      %v358 = vld [vmem:[%s1 + $0x28] sm:$0xf]
      %v359 = vld [vmem:[%s1 + $0x2c] sm:$0xf]
      %v360 = vld [vmem:[%s1 + $0x30] sm:$0xf]
      %v361 = vld [vmem:[%s1 + $0x34] sm:$0xf]
      %v362 = vld [vmem:[%s1 + $0x38] sm:$0xf]
      %v363 = vld [vmem:[%s1 + $0x3c] sm:$0xf]
      %v364 = vld [vmem:[%s2] sm:$0x1]
      %v366 = vperm.slane %v364, 0
      %v384 = vunpack.c.l.b16 %v348
      %v385 = vunpack.c.l.b16 %v349
      %v386 = vunpack.c.l.b16 %v350
      %v387 = vunpack.c.l.b16 %v351
      %v388 = vunpack.c.l.b16 %v352
      %v389 = vunpack.c.l.b16 %v353
      %v390 = vunpack.c.l.b16 %v354
      %v391 = vunpack.c.l.b16 %v355
      %v392 = vunpack.c.l.b16 %v356
      %v393 = vunpack.c.l.b16 %v357
      %v394 = vunpack.c.l.b16 %v358
      %v395 = vunpack.c.l.b16 %v359
      %v396 = vunpack.c.l.b16 %v360
      %v397 = vunpack.c.l.b16 %v361
      %v398 = vunpack.c.l.b16 %v362
      %v399 = vunpack.c.l.b16 %v363
      %v400 = vpack.c.b16 %v385, %v384
      %v401 = vpack.c.b16 %v387, %v386
      %v402 = vpack.c.b16 %v389, %v388
      %v403 = vpack.c.b16 %v391, %v390
      %v404 = vpack.c.b16 %v393, %v392
      %v405 = vpack.c.b16 %v395, %v394
      %v406 = vpack.c.b16 %v397, %v396
      %v407 = vpack.c.b16 %v399, %v398
      %416 = vmatpush.bf16.msra.mxu0 %v407
      %417 = vmatpush.bf16.msra.mxu0 %v406
      %418 = vmatpush.bf16.msra.mxu0 %v405
      %419 = vmatpush.bf16.msra.mxu0 %v404
      %420 = vmatpush.bf16.msra.mxu0 %v403
      %421 = vmatpush.bf16.msra.mxu0 %v402
      %422 = vmatpush.bf16.msra.mxu0 %v401
      %423 = vmatpush.bf16.msra.mxu0 %v400
      %424 = vmatmul.bf16.gmra.mxu0 %v344
      %v425 = vpop.f32.mrf.mxu0
      %v426 = vadd.f32 %v366, %v425
      %v427 = vpop.f32.mrf.mxu0
      %v428 = vadd.f32 %v366, %v427
      %429 = vmatmul.bf16.gmra.mxu0 %v345
      %v430 = vpop.f32.mrf.mxu0
      %v431 = vadd.f32 %v366, %v430
      %v432 = vpop.f32.mrf.mxu0
      %v433 = vadd.f32 %v366, %v432
      %434 = vmatmul.bf16.gmra.mxu0 %v346
      %v435 = vpop.f32.mrf.mxu0
      %v436 = vadd.f32 %v366, %v435
      %v437 = vpop.f32.mrf.mxu0
      %v438 = vadd.f32 %v366, %v437
      %439 = vmatmul.bf16.gmra.mxu0 %v347
      %v440 = vpop.f32.mrf.mxu0
      %v441 = vadd.f32 %v366, %v440
      %v442 = vpop.f32.mrf.mxu0
      %v443 = vadd.f32 %v366, %v442
      %444 = vdwg.mxu0
      %v445 = vld [vmem:[%s302] sm:$0xf]
      %v446 = vld [vmem:[%s302 + $0x4] sm:$0xf]
      %v447 = vld [vmem:[%s302 + $0x8] sm:$0xf]
      %v448 = vld [vmem:[%s302 + $0xc] sm:$0xf]
      %v449 = vld [vmem:[%s302 + $0x10] sm:$0xf]
      %v450 = vld [vmem:[%s302 + $0x14] sm:$0xf]
      %v451 = vld [vmem:[%s302 + $0x18] sm:$0xf]
      %v452 = vld [vmem:[%s302 + $0x1c] sm:$0xf]
      %v453 = vunpack.c.l.bf16 %v445
      %v454 = vunpack.c.l.bf16 %v446
      %v455 = vunpack.c.l.bf16 %v447
      %v456 = vunpack.c.l.bf16 %v448
      %v457 = vunpack.c.l.bf16 %v449
      %v458 = vunpack.c.l.bf16 %v450
      %v459 = vunpack.c.l.bf16 %v451
      %v460 = vunpack.c.l.bf16 %v452
      %v461 = vadd.f32 %v426, %v453
      %v462 = vadd.f32 %v428, %v454
      %v463 = vadd.f32 %v431, %v455
      %v464 = vadd.f32 %v433, %v456
      %v465 = vadd.f32 %v436, %v457
      %v466 = vadd.f32 %v438, %v458
      %v467 = vadd.f32 %v441, %v459
      %v468 = vadd.f32 %v443, %v460
      %v469 = vpack.c.bf16 %v461, %v461
      %v470 = vpack.c.bf16 %v462, %v462
      %v471 = vpack.c.bf16 %v463, %v463
      %v472 = vpack.c.bf16 %v464, %v464
      %v473 = vpack.c.bf16 %v465, %v465
      %v474 = vpack.c.bf16 %v466, %v466
      %v475 = vpack.c.bf16 %v467, %v467
      %v476 = vpack.c.bf16 %v468, %v468
      %477 = vst [vmem:[%s312] sm:$0xf] %v469
      %478 = vst [vmem:[%s312 + $0x4] sm:$0xf] %v470
      %479 = vst [vmem:[%s312 + $0x8] sm:$0xf] %v471
      %480 = vst [vmem:[%s312 + $0xc] sm:$0xf] %v472
      %481 = vst [vmem:[%s312 + $0x10] sm:$0xf] %v473
      %482 = vst [vmem:[%s312 + $0x14] sm:$0xf] %v474
      %483 = vst [vmem:[%s312 + $0x18] sm:$0xf] %v475
      %484 = vst [vmem:[%s312 + $0x1c] sm:$0xf] %v476
      %s485 = smul.u32 8, %s21
      %p486 = scmp.lt.s32.totalorder %s20, 1
      %s487 = scalar_select %p486, %s20, 1
      %p488 = scmp.lt.s32.totalorder %s485, 7
      %s489 = scalar_select %p488, %s485, 7
      %s490 = smul.addr %s487, 8
      %s491 = sadd.s32 %s489, %s490
      %s492 = smul.addr %s491, 4
      %s493 = scalar_lea.vmem %s5, %s492
      // Predicated region
      $region41: #{_lambda_.18} parent=39 // pred_check
        %p494 = pneg %p172
      $region42: #{_lambda_.18} parent=39 // pred_check_branch
        %496 = sbr.rel (%p494) target = $region44
      $region43: #{_lambda_.18} parent=39 // pred_region
        %s497 = smul.u32 8, %s21
      $region44: #{_lambda_.18} parent=39 // pred_fallthru
        _
    $region40: #{_lambda_.18} parent=5 // pred_fallthru
      _
    %p498 = scmp.le.s32.totalorder 2, %s11
    // Predicated region
    $region45: #{_lambda_.18} parent=5 // pred_check
      %p499 = pneg %p498
    $region46: #{_lambda_.18} parent=5 // pred_check_branch
      %501 = sbr.rel (%p499) target = $region48
    $region47: #{_lambda_.18} parent=5 // pred_region
      %s502 = ssub.s32 %s11, 2
      // Predicated region
      $region49: #{_lambda_.18} parent=47 // pred_check
        %p503 = pneg %p178
      $region50: #{_lambda_.18} parent=47 // pred_check_branch
        %505 = sbr.rel (%p503) target = $region52
      $region51: #{_lambda_.18} parent=47 // pred_region
        %s506 = smul.u32 8, %s23
        %p507 = scmp.lt.s32.totalorder %s22, 1
        %s508 = scalar_select %p507, %s22, 1
        %p509 = scmp.lt.s32.totalorder %s506, 7
        %s510 = scalar_select %p509, %s506, 7
        %s511 = smul.addr %s508, 8
        %s512 = sadd.s32 %s510, %s511
        %s513 = smul.addr %s512, 4
        %s514 = scalar_lea.vmem %s5, %s513
      $region52: #{_lambda_.18} parent=47 // pred_fallthru
        _
    $region48: #{_lambda_.18} parent=5 // pred_fallthru
      _
  $region6: #{_lambda_.18} parent=0 // loop_footer
    %s15 = sadd.s32 1, %s11
  $region7: #{_lambda_.18} parent=0 // loop_footer_branch
    %10 = sbr.rel target = $region3
  $region8: #{_lambda_.18} parent=0 // loop_exit
    _

// kernel: _lambda_.11
$region0: #{_lambda_.11}
  #allocation0 [shape = 'u32[]', space=smem, size = 0x4, offset = 0x4, fixed_abs, tag = 'smem constant byte address 0x4 - core index']
  #allocation1 [shape = 'u32[72,128]{1,0:T(1,128)}', space=vmem, size = 0x9000, scoped, tag = 'internal scratch']
  #allocation2 [shape = 'bf16[10,10,128]{2,1,0:T(8,128)(2,1)}', space=vmem, size = 0xa000, scoped, tag = 'scratch operand']
  #allocation3 [shape = 'f32[1,128]{1,0:T(1,128)}', space=vmem, size = 0x200, scoped, tag = 'scratch operand']
  %s0 = inlined_call_operand.vmem [shape: bf16[2,8,8,128], index: 0, kind: input, shape index: {}, may-alias: {0,1,2}]
  %s1 = inlined_call_operand.vmem [shape: bf16[2,8,8,128], index: 1, kind: input, shape index: {}, may-alias: {0,1,2}]
  %s2 = inlined_call_operand.vmem [shape: bf16[2,8,8,128], index: 2, kind: input, shape index: {}, may-alias: {0,1,2}]
  %s3 = inlined_call_operand.vmem [shape: bf16[9,128], index: 3, kind: input, shape index: {}]
  %s4 = inlined_call_operand.vmem [shape: f32[1,128], index: 4, kind: input, shape index: {}]
  %s5 = inlined_call_operand.vmem [shape: bf16[128,128], index: 5, kind: input, shape index: {}]
  %s6 = inlined_call_operand.vmem [shape: f32[1,128], index: 6, kind: input, shape index: {}]
  %s7 = inlined_call_operand.vmem [shape: bf16[128,128], index: 7, kind: input, shape index: {}]
  %s8 = inlined_call_operand.vmem [shape: f32[1,128], index: 8, kind: input, shape index: {}]
  %s9 = inlined_call_operand.vmem [shape: bf16[2,8,8,128], index: 9, kind: output, shape index: {0}]
  %s10 = inlined_call_operand.vmem [shape: bf16[2,1,128], index: 10, kind: output, shape index: {1}]
  %11 = xla_tuple %s9, %s10
  %s12 = sld [smem:[#allocation0]]
  $region93: #{_lambda_.11} parent=0
    _
  %s14 = ssub.s32 1, %s12
  %s15 = scalar_select 0, %s14, %s12
  loop: start=0, step=1, limit=4
  $region2: #{_lambda_.11} parent=0 // loop_pre_header
    _
  $region3: #{_lambda_.11} parent=0 // loop_header
    %s17 = sphi 0, %s21
    %p18 = scmp.ge.s32.totalorder %s17, 4
    %s24 = sphi 0, %s36
    %s25 = sphi 0, %s32
    %s26 = sphi 0, %s24
    %s27 = sphi 0, %s25
    %s28 = sphi 0, %s26
    %s29 = sphi 0, %s27
    %s41 = sphi 0, %s43
    %s44 = sphi 0, %s41
    %s45 = sphi 0, %s44
    %s61 = sphi 0, %s45
    %s77 = sphi 0, %s79
    %s80 = sphi 0, %s77
    %s81 = sphi 0, %s80
    %s97 = sphi 0, %s81
    %s113 = sphi 0, %s115
    %s116 = sphi 0, %s113
    %s117 = sphi 0, %s116
    %s133 = sphi 0, %s117
    %s137 = sphi 0, %s137
    %s139 = sphi 0, %s137
    %s140 = sphi 0, %s139
    %s154 = sphi 0, %s140
    %s158 = sphi 0, %s158
    %s160 = sphi 0, %s158
    %s161 = sphi 0, %s160
    %s175 = sphi 0, %s161
    %s179 = sphi 0, %s179
    %s181 = sphi 0, %s179
    %s182 = sphi 0, %s181
    %s196 = sphi 0, %s182
    %s200 = sphi 0, %s200
    %s202 = sphi 0, %s200
    %s203 = sphi 0, %s202
    %s217 = sphi 0, %s203
    %s221 = sphi 0, %s221
    %s223 = sphi 0, %s221
    %s224 = sphi 0, %s223
    %s238 = sphi 0, %s224
    %s242 = sphi 0, %s242
    %s244 = sphi 0, %s242
    %s245 = sphi 0, %s244
    %s259 = sphi 0, %s245
    %s267 = sphi 0, %s269
    %s270 = sphi 0, %s267
    %s271 = sphi 0, %s270
    %s287 = sphi 0, %s271
    %s293 = sphi 0, %s295
    %s296 = sphi 0, %s293
    %s297 = sphi 0, %s296
    %s313 = sphi 0, %s297
  $region4: #{_lambda_.11} parent=0 // loop_header_branch
    %20 = sbr.rel (%p18) target = $region8
  $region5: #{_lambda_.11} parent=0 // loop_body
    %s22 = ssub.s32 %s17, 1
    %s23 = ssub.s32 %s17, 2
    %s30 = sadd.s32 1, %s25
    %p31 = scmp.ge.s32.totalorder %s30, 1
    %s32 = scalar_select %p31, 0, %s30
    %s33 = sadd.s32 1, %s24
    %s34 = scalar_select %p31, %s33, %s24
    %p35 = scmp.ge.s32.totalorder %s34, 2
    %s36 = scalar_select %p35, 0, %s34
    %s37 = ssub.s32 %s24, %s36
    %s38 = ssub.s32 %s25, %s32
    %s39 = sor.u32 %s37, %s38
    %p40 = scmp.eq.s32.totalorder %s39, 0
    %s42 = sadd.s32 %s41, 1
    %s43 = scalar_select %p40, %s41, %s42
    %p46 = pneg %p40
    %p47 = scmp.eq.s32.totalorder %s17, 1
    %p48 = por %p46, %p47
    %p49 = scmp.ne.s32.totalorder %s41, %s44
    %p50 = scmp.eq.s32.totalorder %s17, 0
    %p51 = por %p49, %p50
    %p52 = scmp.ne.s32.totalorder %s41, %s44
    %p53 = scmp.eq.s32.totalorder %s22, 1
    %p54 = por %p52, %p53
    %p55 = scmp.ne.s32.totalorder %s44, %s45
    %p56 = scmp.eq.s32.totalorder %s22, 0
    %p57 = por %p55, %p56
    %p58 = scmp.ne.s32.totalorder %s44, %s45
    %p59 = scmp.eq.s32.totalorder %s23, 1
    %p60 = por %p58, %p59
    %p62 = scmp.ne.s32.totalorder %s45, %s61
    %p63 = scmp.eq.s32.totalorder %s23, 0
    %p64 = por %p62, %p63
    %s65 = smul.u32 %s25, 8
    %s66 = ssub.s32 %s65, 1
    %p67 = scmp.gt.s32.totalorder %s66, 0
    %s68 = scalar_select %p67, %s66, 0
    %s69 = smul.u32 %s32, 8
    %s70 = ssub.s32 %s69, 1
    %p71 = scmp.gt.s32.totalorder %s70, 0
    %s72 = scalar_select %p71, %s70, 0
    %s73 = ssub.s32 %s24, %s36
    %s74 = ssub.s32 %s68, %s72
    %s75 = sor.u32 %s73, %s74
    %p76 = scmp.eq.s32.totalorder %s75, 0
    %s78 = sadd.s32 %s77, 1
    %s79 = scalar_select %p76, %s77, %s78
    %p82 = pneg %p76
    %p83 = scmp.eq.s32.totalorder %s17, 1
    %p84 = por %p82, %p83
    %p85 = scmp.ne.s32.totalorder %s77, %s80
    %p86 = scmp.eq.s32.totalorder %s17, 0
    %p87 = por %p85, %p86
    %p88 = scmp.ne.s32.totalorder %s77, %s80
    %p89 = scmp.eq.s32.totalorder %s22, 1
    %p90 = por %p88, %p89
    %p91 = scmp.ne.s32.totalorder %s80, %s81
    %p92 = scmp.eq.s32.totalorder %s22, 0
    %p93 = por %p91, %p92
    %p94 = scmp.ne.s32.totalorder %s80, %s81
    %p95 = scmp.eq.s32.totalorder %s23, 1
    %p96 = por %p94, %p95
    %p98 = scmp.ne.s32.totalorder %s81, %s97
    %p99 = scmp.eq.s32.totalorder %s23, 0
    %p100 = por %p98, %p99
    %s101 = sadd.s32 %s25, 1
    %s102 = smul.u32 %s101, 8
    %p103 = scmp.lt.s32.totalorder %s102, 7
    %s104 = scalar_select %p103, %s102, 7
    %s105 = sadd.s32 %s32, 1
    %s106 = smul.u32 %s105, 8
    %p107 = scmp.lt.s32.totalorder %s106, 7
    %s108 = scalar_select %p107, %s106, 7
    %s109 = ssub.s32 %s24, %s36
    %s110 = ssub.s32 %s104, %s108
    %s111 = sor.u32 %s109, %s110
    %p112 = scmp.eq.s32.totalorder %s111, 0
    %s114 = sadd.s32 %s113, 1
    %s115 = scalar_select %p112, %s113, %s114
    %p118 = pneg %p112
    %p119 = scmp.eq.s32.totalorder %s17, 1
    %p120 = por %p118, %p119
    %p121 = scmp.ne.s32.totalorder %s113, %s116
    %p122 = scmp.eq.s32.totalorder %s17, 0
    %p123 = por %p121, %p122
    %p124 = scmp.ne.s32.totalorder %s113, %s116
    %p125 = scmp.eq.s32.totalorder %s22, 1
    %p126 = por %p124, %p125
    %p127 = scmp.ne.s32.totalorder %s116, %s117
    %p128 = scmp.eq.s32.totalorder %s22, 0
    %p129 = por %p127, %p128
    %p130 = scmp.ne.s32.totalorder %s116, %s117
    %p131 = scmp.eq.s32.totalorder %s23, 1
    %p132 = por %p130, %p131
    %p134 = scmp.ne.s32.totalorder %s117, %s133
    %p135 = scmp.eq.s32.totalorder %s23, 0
    %p136 = por %p134, %p135
    %s138 = sadd.s32 %s137, 1
    %p141 = scmp.eq.s32.totalorder %s17, 1
    %p142 = scmp.ne.s32.totalorder %s137, %s139
    %p143 = scmp.eq.s32.totalorder %s17, 0
    %p144 = por %p142, %p143
    %p145 = scmp.ne.s32.totalorder %s137, %s139
    %p146 = scmp.eq.s32.totalorder %s22, 1
    %p147 = por %p145, %p146
    %p148 = scmp.ne.s32.totalorder %s139, %s140
    %p149 = scmp.eq.s32.totalorder %s22, 0
    %p150 = por %p148, %p149
    %p151 = scmp.ne.s32.totalorder %s139, %s140
    %p152 = scmp.eq.s32.totalorder %s23, 1
    %p153 = por %p151, %p152
    %p155 = scmp.ne.s32.totalorder %s140, %s154
    %p156 = scmp.eq.s32.totalorder %s23, 0
    %p157 = por %p155, %p156
    %s159 = sadd.s32 %s158, 1
    %p162 = scmp.eq.s32.totalorder %s17, 1
    %p163 = scmp.ne.s32.totalorder %s158, %s160
    %p164 = scmp.eq.s32.totalorder %s17, 0
    %p165 = por %p163, %p164
    %p166 = scmp.ne.s32.totalorder %s158, %s160
    %p167 = scmp.eq.s32.totalorder %s22, 1
    %p168 = por %p166, %p167
    %p169 = scmp.ne.s32.totalorder %s160, %s161
    %p170 = scmp.eq.s32.totalorder %s22, 0
    %p171 = por %p169, %p170
    %p172 = scmp.ne.s32.totalorder %s160, %s161
    %p173 = scmp.eq.s32.totalorder %s23, 1
    %p174 = por %p172, %p173
    %p176 = scmp.ne.s32.totalorder %s161, %s175
    %p177 = scmp.eq.s32.totalorder %s23, 0
    %p178 = por %p176, %p177
    %s180 = sadd.s32 %s179, 1
    %p183 = scmp.eq.s32.totalorder %s17, 1
    %p184 = scmp.ne.s32.totalorder %s179, %s181
    %p185 = scmp.eq.s32.totalorder %s17, 0
    %p186 = por %p184, %p185
    %p187 = scmp.ne.s32.totalorder %s179, %s181
    %p188 = scmp.eq.s32.totalorder %s22, 1
    %p189 = por %p187, %p188
    %p190 = scmp.ne.s32.totalorder %s181, %s182
    %p191 = scmp.eq.s32.totalorder %s22, 0
    %p192 = por %p190, %p191
    %p193 = scmp.ne.s32.totalorder %s181, %s182
    %p194 = scmp.eq.s32.totalorder %s23, 1
    %p195 = por %p193, %p194
    %p197 = scmp.ne.s32.totalorder %s182, %s196
    %p198 = scmp.eq.s32.totalorder %s23, 0
    %p199 = por %p197, %p198
    %s201 = sadd.s32 %s200, 1
    %p204 = scmp.eq.s32.totalorder %s17, 1
    %p205 = scmp.ne.s32.totalorder %s200, %s202
    %p206 = scmp.eq.s32.totalorder %s17, 0
    %p207 = por %p205, %p206
    %p208 = scmp.ne.s32.totalorder %s200, %s202
    %p209 = scmp.eq.s32.totalorder %s22, 1
    %p210 = por %p208, %p209
    %p211 = scmp.ne.s32.totalorder %s202, %s203
    %p212 = scmp.eq.s32.totalorder %s22, 0
    %p213 = por %p211, %p212
    %p214 = scmp.ne.s32.totalorder %s202, %s203
    %p215 = scmp.eq.s32.totalorder %s23, 1
    %p216 = por %p214, %p215
    %p218 = scmp.ne.s32.totalorder %s203, %s217
    %p219 = scmp.eq.s32.totalorder %s23, 0
    %p220 = por %p218, %p219
    %s222 = sadd.s32 %s221, 1
    %p225 = scmp.eq.s32.totalorder %s17, 1
    %p226 = scmp.ne.s32.totalorder %s221, %s223
    %p227 = scmp.eq.s32.totalorder %s17, 0
    %p228 = por %p226, %p227
    %p229 = scmp.ne.s32.totalorder %s221, %s223
    %p230 = scmp.eq.s32.totalorder %s22, 1
    %p231 = por %p229, %p230
    %p232 = scmp.ne.s32.totalorder %s223, %s224
    %p233 = scmp.eq.s32.totalorder %s22, 0
    %p234 = por %p232, %p233
    %p235 = scmp.ne.s32.totalorder %s223, %s224
    %p236 = scmp.eq.s32.totalorder %s23, 1
    %p237 = por %p235, %p236
    %p239 = scmp.ne.s32.totalorder %s224, %s238
    %p240 = scmp.eq.s32.totalorder %s23, 0
    %p241 = por %p239, %p240
    %s243 = sadd.s32 %s242, 1
    %p246 = scmp.eq.s32.totalorder %s17, 1
    %p247 = scmp.ne.s32.totalorder %s242, %s244
    %p248 = scmp.eq.s32.totalorder %s17, 0
    %p249 = por %p247, %p248
    %p250 = scmp.ne.s32.totalorder %s242, %s244
    %p251 = scmp.eq.s32.totalorder %s22, 1
    %p252 = por %p250, %p251
    %p253 = scmp.ne.s32.totalorder %s244, %s245
    %p254 = scmp.eq.s32.totalorder %s22, 0
    %p255 = por %p253, %p254
    %p256 = scmp.ne.s32.totalorder %s244, %s245
    %p257 = scmp.eq.s32.totalorder %s23, 1
    %p258 = por %p256, %p257
    %p260 = scmp.ne.s32.totalorder %s245, %s259
    %p261 = scmp.eq.s32.totalorder %s23, 0
    %p262 = por %p260, %p261
    %s263 = ssub.s32 %s24, %s36
    %s264 = ssub.s32 %s25, %s32
    %s265 = sor.u32 %s263, %s264
    %p266 = scmp.eq.s32.totalorder %s265, 0
    %s268 = sadd.s32 %s267, 1
    %s269 = scalar_select %p266, %s267, %s268
    %p272 = pneg %p266
    %p273 = scmp.eq.s32.totalorder %s17, 1
    %p274 = por %p272, %p273
    %p275 = scmp.ne.s32.totalorder %s267, %s270
    %p276 = scmp.eq.s32.totalorder %s17, 0
    %p277 = por %p275, %p276
    %p278 = scmp.ne.s32.totalorder %s267, %s270
    %p279 = scmp.eq.s32.totalorder %s22, 1
    %p280 = por %p278, %p279
    %p281 = scmp.ne.s32.totalorder %s270, %s271
    %p282 = scmp.eq.s32.totalorder %s22, 0
    %p283 = por %p281, %p282
    %p284 = scmp.ne.s32.totalorder %s270, %s271
    %p285 = scmp.eq.s32.totalorder %s23, 1
    %p286 = por %p284, %p285
    %p288 = scmp.ne.s32.totalorder %s271, %s287
    %p289 = scmp.eq.s32.totalorder %s23, 0
    %p290 = por %p288, %p289
    %s291 = ssub.s32 %s24, %s36
    %p292 = scmp.eq.s32.totalorder %s291, 0
    %s294 = sadd.s32 %s293, 1
    %s295 = scalar_select %p292, %s293, %s294
    %p298 = pneg %p292
    %p299 = scmp.eq.s32.totalorder %s17, 1
    %p300 = por %p298, %p299
    %p301 = scmp.ne.s32.totalorder %s293, %s296
    %p302 = scmp.eq.s32.totalorder %s17, 0
    %p303 = por %p301, %p302
    %p304 = scmp.ne.s32.totalorder %s293, %s296
    %p305 = scmp.eq.s32.totalorder %s22, 1
    %p306 = por %p304, %p305
    %p307 = scmp.ne.s32.totalorder %s296, %s297
    %p308 = scmp.eq.s32.totalorder %s22, 0
    %p309 = por %p307, %p308
    %p310 = scmp.ne.s32.totalorder %s296, %s297
    %p311 = scmp.eq.s32.totalorder %s23, 1
    %p312 = por %p310, %p311
    %p314 = scmp.ne.s32.totalorder %s297, %s313
    %p315 = scmp.eq.s32.totalorder %s23, 0
    %p316 = por %p314, %p315
    %p317 = scmp.le.s32.totalorder 1, %s17
    %p318 = scmp.lt.s32.totalorder %s17, 3
    %p319 = pnand %p317, %p318
    %p320 = pneg %p319
    // Predicated region
    $region9: #{_lambda_.11} parent=5 // pred_check
      _
    $region10: #{_lambda_.11} parent=5 // pred_check_branch
      %322 = sbr.rel (%p319) target = $region12
    $region11: #{_lambda_.11} parent=5 // pred_region
      %s323 = ssub.s32 %s17, 1
      // Predicated region
      $region13: #{_lambda_.11} parent=11 // pred_check
        %p324 = pneg %p150
      $region14: #{_lambda_.11} parent=11 // pred_check_branch
        %326 = sbr.rel (%p324) target = $region16
      $region15: #{_lambda_.11} parent=11 // pred_region
        _
      $region16: #{_lambda_.11} parent=11 // pred_fallthru
        _
      // Predicated region
      $region17: #{_lambda_.11} parent=11 // pred_check
        %p327 = pneg %p171
      $region18: #{_lambda_.11} parent=11 // pred_check_branch
        %329 = sbr.rel (%p327) target = $region20
      $region19: #{_lambda_.11} parent=11 // pred_region
        _
      $region20: #{_lambda_.11} parent=11 // pred_fallthru
        _
      // Predicated region
      $region21: #{_lambda_.11} parent=11 // pred_check
        %p330 = pneg %p192
      $region22: #{_lambda_.11} parent=11 // pred_check_branch
        %332 = sbr.rel (%p330) target = $region24
      $region23: #{_lambda_.11} parent=11 // pred_region
        _
      $region24: #{_lambda_.11} parent=11 // pred_fallthru
        _
      // Predicated region
      $region25: #{_lambda_.11} parent=11 // pred_check
        %p333 = pneg %p213
      $region26: #{_lambda_.11} parent=11 // pred_check_branch
        %335 = sbr.rel (%p333) target = $region28
      $region27: #{_lambda_.11} parent=11 // pred_region
        _
      $region28: #{_lambda_.11} parent=11 // pred_fallthru
        _
      // Predicated region
      $region29: #{_lambda_.11} parent=11 // pred_check
        %p336 = pneg %p234
      $region30: #{_lambda_.11} parent=11 // pred_check_branch
        %338 = sbr.rel (%p336) target = $region32
      $region31: #{_lambda_.11} parent=11 // pred_region
        _
      $region32: #{_lambda_.11} parent=11 // pred_fallthru
        _
      // Predicated region
      $region33: #{_lambda_.11} parent=11 // pred_check
        %p339 = pneg %p255
      $region34: #{_lambda_.11} parent=11 // pred_check_branch
        %341 = sbr.rel (%p339) target = $region36
      $region35: #{_lambda_.11} parent=11 // pred_region
        _
      $region36: #{_lambda_.11} parent=11 // pred_fallthru
        _
    $region12: #{_lambda_.11} parent=5 // pred_fallthru
      _
    %p342 = scmp.lt.s32.totalorder %s17, 2
    // Predicated region
    $region37: #{_lambda_.11} parent=5 // pred_check
      %p343 = pneg %p342
    $region38: #{_lambda_.11} parent=5 // pred_check_branch
      %345 = sbr.rel (%p343) target = $region40
    $region39: #{_lambda_.11} parent=5 // pred_region
      // Predicated region
      $region41: #{_lambda_.11} parent=39 // pred_check
        %p346 = pneg %p51
      $region42: #{_lambda_.11} parent=39 // pred_check_branch
        %348 = sbr.rel (%p346) target = $region44
      $region43: #{_lambda_.11} parent=39 // pred_region
        %s349 = smul.u32 8, %s25
        %p350 = scmp.lt.s32.totalorder %s24, 1
        %s351 = scalar_select %p350, %s24, 1
        %p352 = scmp.lt.s32.totalorder %s349, 7
        %s353 = scalar_select %p352, %s349, 7
        %s354 = smul.addr %s351, 8
        %s355 = sadd.s32 %s353, %s354
        %s356 = smul.addr %s355, 4
        %s357 = scalar_lea.vmem %s0, %s356
        %s358 = smul.u32 8, %s25
      $region44: #{_lambda_.11} parent=39 // pred_fallthru
        _
      // Predicated region
      $region45: #{_lambda_.11} parent=39 // pred_check
        %p359 = pneg %p87
      $region46: #{_lambda_.11} parent=39 // pred_check_branch
        %361 = sbr.rel (%p359) target = $region48
      $region47: #{_lambda_.11} parent=39 // pred_region
        %s362 = smul.u32 %s25, 8
        %s363 = ssub.s32 %s362, 1
        %p364 = scmp.gt.s32.totalorder %s363, 0
        %s365 = scalar_select %p364, %s363, 0
        %p366 = scmp.lt.s32.totalorder %s24, 1
        %s367 = scalar_select %p366, %s24, 1
        %p368 = scmp.lt.s32.totalorder %s365, 7
        %s369 = scalar_select %p368, %s365, 7
        %s370 = smul.addr %s367, 8
        %s371 = sadd.s32 %s369, %s370
        %s372 = smul.addr %s371, 4
        %s373 = scalar_lea.vmem %s1, %s372
        %s374 = smul.u32 %s25, 8
        %s375 = ssub.s32 %s374, 1
        %p376 = scmp.gt.s32.totalorder %s375, 0
        %s377 = scalar_select %p376, %s375, 0
      $region48: #{_lambda_.11} parent=39 // pred_fallthru
        _
      // Predicated region
      $region49: #{_lambda_.11} parent=39 // pred_check
        %p378 = pneg %p123
      $region50: #{_lambda_.11} parent=39 // pred_check_branch
        %380 = sbr.rel (%p378) target = $region52
      $region51: #{_lambda_.11} parent=39 // pred_region
        %s381 = sadd.s32 %s25, 1
        %s382 = smul.u32 %s381, 8
        %p383 = scmp.lt.s32.totalorder %s382, 7
        %s384 = scalar_select %p383, %s382, 7
        %p385 = scmp.lt.s32.totalorder %s24, 1
        %s386 = scalar_select %p385, %s24, 1
        %p387 = scmp.lt.s32.totalorder %s384, 7
        %s388 = scalar_select %p387, %s384, 7
        %s389 = smul.addr %s386, 8
        %s390 = sadd.s32 %s388, %s389
        %s391 = smul.addr %s390, 4
        %s392 = scalar_lea.vmem %s2, %s391
        %s393 = sadd.s32 %s25, 1
        %s394 = smul.u32 %s393, 8
        %p395 = scmp.lt.s32.totalorder %s394, 7
        %s396 = scalar_select %p395, %s394, 7
      $region52: #{_lambda_.11} parent=39 // pred_fallthru
        _
    $region40: #{_lambda_.11} parent=5 // pred_fallthru
      _
    %p397 = scmp.le.s32.totalorder 1, %s17
    %p398 = scmp.lt.s32.totalorder %s17, 3
    %p399 = pnand %p397, %p398
    %p400 = pneg %p399
    // Predicated region
    $region53: #{_lambda_.11} parent=5 // pred_check
      _
    $region54: #{_lambda_.11} parent=5 // pred_check_branch
      %402 = sbr.rel (%p399) target = $region56
    $region55: #{_lambda_.11} parent=5 // pred_region
      %s403 = ssub.s32 %s17, 1
      %s404 = smul.u32 8, %s27
      %p405 = scmp.lt.s32.totalorder %s26, 1
      %s406 = scalar_select %p405, %s26, 1
      %p407 = scmp.lt.s32.totalorder %s404, 7
      %s408 = scalar_select %p407, %s404, 7
      %s409 = smul.addr %s406, 8
      %s410 = sadd.s32 %s408, %s409
      %s411 = smul.addr %s410, 4
      %s412 = scalar_lea.vmem %s0, %s411
      %p413 = pneg %p57
      %p414 = pneg %p54
      %s415 = smul.u32 %s27, 8
      %s416 = ssub.s32 %s415, 1
      %p417 = scmp.gt.s32.totalorder %s416, 0
      %s418 = scalar_select %p417, %s416, 0
      %p419 = scmp.lt.s32.totalorder %s26, 1
      %s420 = scalar_select %p419, %s26, 1
      %p421 = scmp.lt.s32.totalorder %s418, 7
      %s422 = scalar_select %p421, %s418, 7
      %s423 = smul.addr %s420, 8
      %s424 = sadd.s32 %s422, %s423
      %s425 = smul.addr %s424, 4
      %s426 = scalar_lea.vmem %s1, %s425
      %p427 = pneg %p93
      %p428 = pneg %p90
      %s429 = sadd.s32 %s27, 1
      %s430 = smul.u32 %s429, 8
      %p431 = scmp.lt.s32.totalorder %s430, 7
      %s432 = scalar_select %p431, %s430, 7
      %p433 = scmp.lt.s32.totalorder %s26, 1
      %s434 = scalar_select %p433, %s26, 1
      %p435 = scmp.lt.s32.totalorder %s432, 7
      %s436 = scalar_select %p435, %s432, 7
      %s437 = smul.addr %s434, 8
      %s438 = sadd.s32 %s436, %s437
      %s439 = smul.addr %s438, 4
      %s440 = scalar_lea.vmem %s2, %s439
      %p441 = pneg %p129
      %p442 = pneg %p126
      %p443 = pneg %p150
      %p444 = pneg %p147
      %p445 = pneg %p171
      %p446 = pneg %p168
      %p447 = pneg %p192
      %p448 = pneg %p189
      %p449 = pneg %p213
      %p450 = pneg %p210
      %p451 = pneg %p234
      %p452 = pneg %p231
      %p453 = pneg %p255
      %p454 = pneg %p252
      %p455 = pneg %p283
      %p456 = pneg %p280
      %s457 = smul.u32 8, %s27
      %p458 = scmp.lt.s32.totalorder %s26, 1
      %s459 = scalar_select %p458, %s26, 1
      %p460 = scmp.lt.s32.totalorder %s457, 7
      %s461 = scalar_select %p460, %s457, 7
      %s462 = smul.addr %s459, 8
      %s463 = sadd.s32 %s461, %s462
      %s464 = smul.addr %s463, 4
      %s465 = scalar_lea.vmem %s9, %s464
      %p466 = pneg %p309
      %p467 = pneg %p306
      %p468 = scmp.lt.s32.totalorder %s26, 1
      %s469 = scalar_select %p468, %s26, 1
      %s470 = scalar_lea.vmem %s10, %s469
      %s471 = smul.u32 8, %s27
      %p472 = scmp.lt.s32.totalorder %s26, 1
      %s473 = scalar_select %p472, %s26, 1
      %p474 = scmp.lt.s32.totalorder %s471, 7
      %s475 = scalar_select %p474, %s471, 7
      %s476 = smul.addr %s473, 8
      %s477 = sadd.s32 %s475, %s476
      %s478 = smul.addr %s477, 4
      %s479 = scalar_lea.vmem %s0, %s478
      %s480 = smul.u32 8, %s27
      %s481 = smul.u32 %s27, 8
      %s482 = ssub.s32 %s481, 1
      %p483 = scmp.gt.s32.totalorder %s482, 0
      %s484 = scalar_select %p483, %s482, 0
      %p485 = scmp.lt.s32.totalorder %s26, 1
      %s486 = scalar_select %p485, %s26, 1
      %p487 = scmp.lt.s32.totalorder %s484, 7
      %s488 = scalar_select %p487, %s484, 7
      %s489 = smul.addr %s486, 8
      %s490 = sadd.s32 %s488, %s489
      %s491 = smul.addr %s490, 4
      %s492 = scalar_lea.vmem %s1, %s491
      %s493 = smul.u32 %s27, 8
      %s494 = ssub.s32 %s493, 1
      %p495 = scmp.gt.s32.totalorder %s494, 0
      %s496 = scalar_select %p495, %s494, 0
      %s497 = sadd.s32 %s27, 1
      %s498 = smul.u32 %s497, 8
      %p499 = scmp.lt.s32.totalorder %s498, 7
      %s500 = scalar_select %p499, %s498, 7
      %p501 = scmp.lt.s32.totalorder %s26, 1
      %s502 = scalar_select %p501, %s26, 1
      %p503 = scmp.lt.s32.totalorder %s500, 7
      %s504 = scalar_select %p503, %s500, 7
      %s505 = smul.addr %s502, 8
      %s506 = sadd.s32 %s504, %s505
      %s507 = smul.addr %s506, 4
      %s508 = scalar_lea.vmem %s2, %s507
      %s509 = sadd.s32 %s27, 1
      %s510 = smul.u32 %s509, 8
      %p511 = scmp.lt.s32.totalorder %s510, 7
      %s512 = scalar_select %p511, %s510, 7
      %s513 = smul.u32 8, %s27
      %p514 = scmp.lt.s32.totalorder %s26, 1
      %s515 = scalar_select %p514, %s26, 1
      %p516 = scmp.lt.s32.totalorder %s513, 7
      %s517 = scalar_select %p516, %s513, 7
      %s518 = smul.addr %s515, 8
      %s519 = sadd.s32 %s517, %s518
      %s520 = smul.addr %s519, 4
      %s521 = scalar_lea.vmem %s9, %s520
      %s522 = smul.u32 8, %s27
      %p523 = scmp.lt.s32.totalorder %s26, 1
      %s524 = scalar_select %p523, %s26, 1
      %s525 = scalar_lea.vmem %s10, %s524
      %527 = vst [vmem:[#allocation2] sm:$0xf] 0
      %528 = vst [vmem:[#allocation2 + $0x4] sm:$0x1] 0
      %529 = vst [vmem:[#allocation2 + $0x8] sm:$0xf] 0
      %530 = vst [vmem:[#allocation2 + $0xc] sm:$0x1] 0
      %531 = vst [vmem:[#allocation2 + $0x10] sm:$0xf] 0
      %532 = vst [vmem:[#allocation2 + $0x14] sm:$0x1] 0
      %533 = vst [vmem:[#allocation2 + $0x18] sm:$0xf] 0
      %534 = vst [vmem:[#allocation2 + $0x1c] sm:$0x1] 0
      %535 = vst [vmem:[#allocation2 + $0x20] sm:$0xf] 0
      %536 = vst [vmem:[#allocation2 + $0x24] sm:$0x1] 0
      %537 = vst [vmem:[#allocation2 + $0x28] sm:$0xf] 0
      %538 = vst [vmem:[#allocation2 + $0x2c] sm:$0x1] 0
      %539 = vst [vmem:[#allocation2 + $0x30] sm:$0xf] 0
      %540 = vst [vmem:[#allocation2 + $0x34] sm:$0x1] 0
      %541 = vst [vmem:[#allocation2 + $0x38] sm:$0xf] 0
      %542 = vst [vmem:[#allocation2 + $0x3c] sm:$0x1] 0
      %543 = vst [vmem:[#allocation2 + $0x40] sm:$0xf] 0
      %544 = vst [vmem:[#allocation2 + $0x44] sm:$0x1] 0
      %545 = vst [vmem:[#allocation2 + $0x48] sm:$0xf] 0
      %546 = vst [vmem:[#allocation2 + $0x4c] sm:$0x1] 0
      %v547 = vld [vmem:[%s479] sm:$0xf]
      %v548 = vld [vmem:[%s479 + $0x4] sm:$0xf]
      %v549 = vld [vmem:[%s479 + $0x8] sm:$0xf]
      %v550 = vld [vmem:[%s479 + $0xc] sm:$0xf]
      %v551 = vld [vmem:[%s479 + $0x10] sm:$0xf]
      %v552 = vld [vmem:[%s479 + $0x14] sm:$0xf]
      %v553 = vld [vmem:[%s479 + $0x18] sm:$0xf]
      %v554 = vld [vmem:[%s479 + $0x1c] sm:$0xf]
      %v556 = vshrl.u32 %v547, 16
      %v558 = vrot.slane %v556, 7
      %v559 = vshll.u32 %v547, 16
      %v561 = vor.u32 %v558, %v559
      %v562 = vrot.slane %v558, 4
      %v564 = vshrl.u32 %v548, 16
      %v566 = vrot.slane %v564, 7
      %v567 = vshll.u32 %v548, 16
      %v569 = vor.u32 %v566, %v567
      %v570 = vrot.slane %v566, 4
      %v572 = vshrl.u32 %v549, 16
      %v574 = vrot.slane %v572, 7
      %v575 = vshll.u32 %v549, 16
      %v577 = vor.u32 %v574, %v575
      %v578 = vrot.slane %v574, 4
      %v580 = vshrl.u32 %v550, 16
      %v582 = vrot.slane %v580, 7
      %v583 = vshll.u32 %v550, 16
      %v585 = vor.u32 %v582, %v583
      %v586 = vrot.slane %v582, 4
      %v588 = vshrl.u32 %v551, 16
      %v590 = vrot.slane %v588, 7
      %v591 = vshll.u32 %v551, 16
      %v593 = vor.u32 %v590, %v591
      %v594 = vrot.slane %v590, 4
      %v596 = vshrl.u32 %v552, 16
      %v598 = vrot.slane %v596, 7
      %v599 = vshll.u32 %v552, 16
      %v601 = vor.u32 %v598, %v599
      %v602 = vrot.slane %v598, 4
      %v604 = vshrl.u32 %v553, 16
      %v606 = vrot.slane %v604, 7
      %v607 = vshll.u32 %v553, 16
      %v609 = vor.u32 %v606, %v607
      %v610 = vrot.slane %v606, 4
      %v612 = vshrl.u32 %v554, 16
      %v614 = vrot.slane %v612, 7
      %v615 = vshll.u32 %v554, 16
      %v617 = vor.u32 %v614, %v615
      %v618 = vrot.slane %v614, 4
      %s635 = scalar_lea.vmem [#allocation2], 8
      %vm636 = vcmask 1043456
      %vm637 = vsmask.f32 7938
      %vm638 = vmand %vm636, %vm637
      %v639 = vld [vmem:[%s635] sm:$0xf]
      %v640 = vsel %vm638, %v561, %v639
      %641 = vst [vmem:[%s635] sm:$0xf] %v640
      %vm642 = vcmask 1040384
      %vm643 = vsmask.f32 256
      %vm644 = vmand %vm642, %vm643
      %v645 = vld [vmem:[%s635 + $0x4] sm:$0x1]
      %v646 = vsel %vm644, %v562, %v645
      %647 = vst [vmem:[%s635 + $0x4] sm:$0x1] %v646
      %v648 = vld [vmem:[%s635 + $0x8] sm:$0xf]
      %v649 = vsel %vm638, %v569, %v648
      %650 = vst [vmem:[%s635 + $0x8] sm:$0xf] %v649
      %v651 = vld [vmem:[%s635 + $0xc] sm:$0x1]
      %v652 = vsel %vm644, %v570, %v651
      %653 = vst [vmem:[%s635 + $0xc] sm:$0x1] %v652
      %v654 = vld [vmem:[%s635 + $0x10] sm:$0xf]
      %v655 = vsel %vm638, %v577, %v654
      %656 = vst [vmem:[%s635 + $0x10] sm:$0xf] %v655
      %v657 = vld [vmem:[%s635 + $0x14] sm:$0x1]
      %v658 = vsel %vm644, %v578, %v657
      %659 = vst [vmem:[%s635 + $0x14] sm:$0x1] %v658
      %v660 = vld [vmem:[%s635 + $0x18] sm:$0xf]
      %v661 = vsel %vm638, %v585, %v660
      %662 = vst [vmem:[%s635 + $0x18] sm:$0xf] %v661
      %v663 = vld [vmem:[%s635 + $0x1c] sm:$0x1]
      %v664 = vsel %vm644, %v586, %v663
      %665 = vst [vmem:[%s635 + $0x1c] sm:$0x1] %v664
      %v666 = vld [vmem:[%s635 + $0x20] sm:$0xf]
      %v667 = vsel %vm638, %v593, %v666
      %668 = vst [vmem:[%s635 + $0x20] sm:$0xf] %v667
      %v669 = vld [vmem:[%s635 + $0x24] sm:$0x1]
      %v670 = vsel %vm644, %v594, %v669
      %671 = vst [vmem:[%s635 + $0x24] sm:$0x1] %v670
      %v672 = vld [vmem:[%s635 + $0x28] sm:$0xf]
      %v673 = vsel %vm638, %v601, %v672
      %674 = vst [vmem:[%s635 + $0x28] sm:$0xf] %v673
      %v675 = vld [vmem:[%s635 + $0x2c] sm:$0x1]
      %v676 = vsel %vm644, %v602, %v675
      %677 = vst [vmem:[%s635 + $0x2c] sm:$0x1] %v676
      %v678 = vld [vmem:[%s635 + $0x30] sm:$0xf]
      %v679 = vsel %vm638, %v609, %v678
      %680 = vst [vmem:[%s635 + $0x30] sm:$0xf] %v679
      %v681 = vld [vmem:[%s635 + $0x34] sm:$0x1]
      %v682 = vsel %vm644, %v610, %v681
      %683 = vst [vmem:[%s635 + $0x34] sm:$0x1] %v682
      %v684 = vld [vmem:[%s635 + $0x38] sm:$0xf]
      %v685 = vsel %vm638, %v617, %v684
      %686 = vst [vmem:[%s635 + $0x38] sm:$0xf] %v685
      %v687 = vld [vmem:[%s635 + $0x3c] sm:$0x1]
      %v688 = vsel %vm644, %v618, %v687
      %689 = vst [vmem:[%s635 + $0x3c] sm:$0x1] %v688
      %p690 = scmp.gt.s32.totalorder %s27, 0
      // Predicated region
      $region57: #{_lambda_.11} parent=55 // pred_check
        %p691 = pneg %p690
      $region58: #{_lambda_.11} parent=55 // pred_check_branch
        %693 = sbr.rel (%p691) target = $region60
      $region59: #{_lambda_.11} parent=55 // pred_region
        %v694 = vld [vmem:[%s492] sm:$0xf]
        %v696 = vshrl.u32 %v694, 16
        %v698 = vrot.slane %v696, 7
        %v699 = vshll.u32 %v694, 16
        %v701 = vor.u32 %v698, %v699
        %v702 = vrot.slane %v698, 4
        %v705 = vld [vmem:[#allocation2] sm:$0xf]
        %v706 = vsel %vm638, %v701, %v705
        %707 = vst [vmem:[#allocation2] sm:$0xf] %v706
        %v708 = vld [vmem:[#allocation2 + $0x4] sm:$0x1]
        %v709 = vsel %vm644, %v702, %v708
        %710 = vst [vmem:[#allocation2 + $0x4] sm:$0x1] %v709
      $region60: #{_lambda_.11} parent=55 // pred_fallthru
        _
      %p711 = scmp.lt.s32.totalorder %s27, 0
      // Predicated region
      $region61: #{_lambda_.11} parent=55 // pred_check
        %p712 = pneg %p711
      $region62: #{_lambda_.11} parent=55 // pred_check_branch
        %714 = sbr.rel (%p712) target = $region64
      $region63: #{_lambda_.11} parent=55 // pred_region
        %v715 = vld [vmem:[%s508] sm:$0xf]
        %v717 = vshrl.u32 %v715, 16
        %v719 = vrot.slane %v717, 7
        %v720 = vshll.u32 %v715, 16
        %v722 = vor.u32 %v719, %v720
        %v723 = vrot.slane %v719, 4
        %s726 = scalar_lea.vmem [#allocation2], 72
        %v727 = vld [vmem:[%s726] sm:$0xf]
        %v728 = vsel %vm638, %v722, %v727
        %729 = vst [vmem:[%s726] sm:$0xf] %v728
        %v730 = vld [vmem:[%s726 + $0x4] sm:$0x1]
        %v731 = vsel %vm644, %v723, %v730
        %732 = vst [vmem:[%s726 + $0x4] sm:$0x1] %v731
      $region64: #{_lambda_.11} parent=55 // pred_fallthru
        _
      %v733 = vld [vmem:[%s3] sm:$0xf]
      %v734 = vld [vmem:[%s3 + $0x4] sm:$0x1]
      %v735 = vld [vmem:[#allocation2] sm:$0xf]
      %v736 = vld [vmem:[#allocation2 + $0x8] sm:$0xf]
      %v737 = vld [vmem:[#allocation2 + $0x10] sm:$0xf]
      %v738 = vld [vmem:[#allocation2 + $0x18] sm:$0xf]
      %v739 = vld [vmem:[#allocation2 + $0x20] sm:$0xf]
      %v740 = vld [vmem:[#allocation2 + $0x28] sm:$0xf]
      %v741 = vld [vmem:[#allocation2 + $0x30] sm:$0xf]
      %v742 = vld [vmem:[#allocation2 + $0x38] sm:$0xf]
      %v744 = vpack.i.b16 %v733, %v733
      %v746 = vperm.slane %v744, 0
      %v747 = vunpack.c.l.bf16 %v735
      %v748 = vunpack.c.l.bf16 %v736
      %v749 = vunpack.c.l.bf16 %v737
      %v750 = vunpack.c.l.bf16 %v738
      %v751 = vunpack.c.l.bf16 %v739
      %v752 = vunpack.c.l.bf16 %v740
      %v753 = vunpack.c.l.bf16 %v741
      %v754 = vunpack.c.l.bf16 %v742
      %v755 = vunpack.c.l.bf16 %v746
      %v756 = vmul.f32 %v747, %v755
      %v757 = vmul.f32 %v748, %v755
      %v758 = vmul.f32 %v749, %v755
      %v759 = vmul.f32 %v750, %v755
      %v760 = vmul.f32 %v751, %v755
      %v761 = vmul.f32 %v752, %v755
      %v762 = vmul.f32 %v753, %v755
      %v763 = vmul.f32 %v754, %v755
      %v764 = vpack.c.bf16 %v756, %v756
      %v765 = vpack.c.bf16 %v757, %v757
      %v766 = vpack.c.bf16 %v758, %v758
      %v767 = vpack.c.bf16 %v759, %v759
      %v768 = vpack.c.bf16 %v760, %v760
      %v769 = vpack.c.bf16 %v761, %v761
      %v770 = vpack.c.bf16 %v762, %v762
      %v771 = vpack.c.bf16 %v763, %v763
      %v772 = vunpack.c.l.bf16 %v764
      %v773 = vunpack.c.l.bf16 %v765
      %v774 = vunpack.c.l.bf16 %v766
      %v775 = vunpack.c.l.bf16 %v767
      %v776 = vunpack.c.l.bf16 %v768
      %v777 = vunpack.c.l.bf16 %v769
      %v778 = vunpack.c.l.bf16 %v770
      %v779 = vunpack.c.l.bf16 %v771
      %v780 = vadd.f32 %v772, 0.0
      %v781 = vadd.f32 %v773, 0.0
      %v782 = vadd.f32 %v774, 0.0
      %v783 = vadd.f32 %v775, 0.0
      %v784 = vadd.f32 %v776, 0.0
      %v785 = vadd.f32 %v777, 0.0
      %v786 = vadd.f32 %v778, 0.0
      %v787 = vadd.f32 %v779, 0.0
      %v788 = vld [vmem:[#allocation2 + $0x4] sm:$0x1]
      %v789 = vld [vmem:[#allocation2 + $0xc] sm:$0x1]
      %v790 = vld [vmem:[#allocation2 + $0x14] sm:$0x1]
      %v791 = vld [vmem:[#allocation2 + $0x1c] sm:$0x1]
      %v792 = vld [vmem:[#allocation2 + $0x24] sm:$0x1]
      %v793 = vld [vmem:[#allocation2 + $0x2c] sm:$0x1]
      %v794 = vld [vmem:[#allocation2 + $0x34] sm:$0x1]
      %v795 = vld [vmem:[#allocation2 + $0x3c] sm:$0x1]
      %v796 = vshrl.u32 %v733, 16
      %v797 = vpack.i.b16 %v796, %v796
      %v799 = vperm.slane %v797, 0
      %v800 = vunpack.c.l.bf16 %v788
      %v801 = vunpack.c.l.bf16 %v789
      %v802 = vunpack.c.l.bf16 %v790
      %v803 = vunpack.c.l.bf16 %v791
      %v804 = vunpack.c.l.bf16 %v792
      %v805 = vunpack.c.l.bf16 %v793
      %v806 = vunpack.c.l.bf16 %v794
      %v807 = vunpack.c.l.bf16 %v795
      %v808 = vunpack.c.l.bf16 %v799
      %v809 = vmul.f32 %v747, %v808
      %v810 = vmul.f32 %v800, %v808
      %v811 = vmul.f32 %v748, %v808
      %v812 = vmul.f32 %v801, %v808
      %v813 = vmul.f32 %v749, %v808
      %v814 = vmul.f32 %v802, %v808
      %v815 = vmul.f32 %v750, %v808
      %v816 = vmul.f32 %v803, %v808
      %v817 = vmul.f32 %v751, %v808
      %v818 = vmul.f32 %v804, %v808
      %v819 = vmul.f32 %v752, %v808
      %v820 = vmul.f32 %v805, %v808
      %v821 = vmul.f32 %v753, %v808
      %v822 = vmul.f32 %v806, %v808
      %v823 = vmul.f32 %v754, %v808
      %v824 = vmul.f32 %v807, %v808
      %v825 = vpack.c.bf16 %v809, %v809
      %v826 = vpack.c.bf16 %v810, %v810
      %v827 = vpack.c.bf16 %v811, %v811
      %v828 = vpack.c.bf16 %v812, %v812
      %v829 = vpack.c.bf16 %v813, %v813
      %v830 = vpack.c.bf16 %v814, %v814
      %v831 = vpack.c.bf16 %v815, %v815
      %v832 = vpack.c.bf16 %v816, %v816
      %v833 = vpack.c.bf16 %v817, %v817
      %v834 = vpack.c.bf16 %v818, %v818
      %v835 = vpack.c.bf16 %v819, %v819
      %v836 = vpack.c.bf16 %v820, %v820
      %v837 = vpack.c.bf16 %v821, %v821
      %v838 = vpack.c.bf16 %v822, %v822
      %v839 = vpack.c.bf16 %v823, %v823
      %v840 = vpack.c.bf16 %v824, %v824
      %v841 = vunpack.c.l.bf16 %v825
      %v842 = vunpack.c.l.bf16 %v826
      %v843 = vunpack.c.l.bf16 %v827
      %v844 = vunpack.c.l.bf16 %v828
      %v845 = vunpack.c.l.bf16 %v829
      %v846 = vunpack.c.l.bf16 %v830
      %v847 = vunpack.c.l.bf16 %v831
      %v848 = vunpack.c.l.bf16 %v832
      %v849 = vunpack.c.l.bf16 %v833
      %v850 = vunpack.c.l.bf16 %v834
      %v851 = vunpack.c.l.bf16 %v835
      %v852 = vunpack.c.l.bf16 %v836
      %v853 = vunpack.c.l.bf16 %v837
      %v854 = vunpack.c.l.bf16 %v838
      %v855 = vunpack.c.l.bf16 %v839
      %v856 = vunpack.c.l.bf16 %v840
      %vm873 = vcmask 1046528
      %v874 = vrot.slane %v841, 1
      %v875 = vrot.slane %v842, 1
      %v876 = vsel %vm873, %v874, %v875
      %v877 = vrot.slane %v843, 1
      %v878 = vrot.slane %v844, 1
      %v879 = vsel %vm873, %v877, %v878
      %v880 = vrot.slane %v845, 1
      %v881 = vrot.slane %v846, 1
      %v882 = vsel %vm873, %v880, %v881
      %v883 = vrot.slane %v847, 1
      %v884 = vrot.slane %v848, 1
      %v885 = vsel %vm873, %v883, %v884
      %v886 = vrot.slane %v849, 1
      %v887 = vrot.slane %v850, 1
      %v888 = vsel %vm873, %v886, %v887
      %v889 = vrot.slane %v851, 1
      %v890 = vrot.slane %v852, 1
      %v891 = vsel %vm873, %v889, %v890
      %v892 = vrot.slane %v853, 1
      %v893 = vrot.slane %v854, 1
      %v894 = vsel %vm873, %v892, %v893
      %v895 = vrot.slane %v855, 1
      %v896 = vrot.slane %v856, 1
      %v897 = vsel %vm873, %v895, %v896
      %v906 = vadd.f32 %v780, %v876
      %v907 = vadd.f32 %v781, %v879
      %v908 = vadd.f32 %v782, %v882
      %v909 = vadd.f32 %v783, %v885
      %v910 = vadd.f32 %v784, %v888
      %v911 = vadd.f32 %v785, %v891
      %v912 = vadd.f32 %v786, %v894
      %v913 = vadd.f32 %v787, %v897
      %v914 = vld [vmem:[#allocation2] sm:$0xe]
      %v915 = vld [vmem:[#allocation2 + $0x8] sm:$0xe]
      %v916 = vld [vmem:[#allocation2 + $0x10] sm:$0xe]
      %v917 = vld [vmem:[#allocation2 + $0x18] sm:$0xe]
      %v918 = vld [vmem:[#allocation2 + $0x20] sm:$0xe]
      %v919 = vld [vmem:[#allocation2 + $0x28] sm:$0xe]
      %v920 = vld [vmem:[#allocation2 + $0x30] sm:$0xe]
      %v921 = vld [vmem:[#allocation2 + $0x38] sm:$0xe]
      %v922 = vperm.slane %v744, 1
      %v923 = vunpack.c.l.bf16 %v914
      %v924 = vunpack.c.l.bf16 %v915
      %v925 = vunpack.c.l.bf16 %v916
      %v926 = vunpack.c.l.bf16 %v917
      %v927 = vunpack.c.l.bf16 %v918
      %v928 = vunpack.c.l.bf16 %v919
      %v929 = vunpack.c.l.bf16 %v920
      %v930 = vunpack.c.l.bf16 %v921
      %v931 = vunpack.c.l.bf16 %v922
      %v932 = vmul.f32 %v923, %v931
      %v933 = vmul.f32 %v800, %v931
      %v934 = vmul.f32 %v924, %v931
      %v935 = vmul.f32 %v801, %v931
      %v936 = vmul.f32 %v925, %v931
      %v937 = vmul.f32 %v802, %v931
      %v938 = vmul.f32 %v926, %v931
      %v939 = vmul.f32 %v803, %v931
      %v940 = vmul.f32 %v927, %v931
      %v941 = vmul.f32 %v804, %v931
      %v942 = vmul.f32 %v928, %v931
      %v943 = vmul.f32 %v805, %v931
      %v944 = vmul.f32 %v929, %v931
      %v945 = vmul.f32 %v806, %v931
      %v946 = vmul.f32 %v930, %v931
      %v947 = vmul.f32 %v807, %v931
      %v948 = vpack.c.bf16 %v932, %v932
      %v949 = vpack.c.bf16 %v933, %v933
      %v950 = vpack.c.bf16 %v934, %v934
      %v951 = vpack.c.bf16 %v935, %v935
      %v952 = vpack.c.bf16 %v936, %v936
      %v953 = vpack.c.bf16 %v937, %v937
      %v954 = vpack.c.bf16 %v938, %v938
      %v955 = vpack.c.bf16 %v939, %v939
      %v956 = vpack.c.bf16 %v940, %v940
      %v957 = vpack.c.bf16 %v941, %v941
      %v958 = vpack.c.bf16 %v942, %v942
      %v959 = vpack.c.bf16 %v943, %v943
      %v960 = vpack.c.bf16 %v944, %v944
      %v961 = vpack.c.bf16 %v945, %v945
      %v962 = vpack.c.bf16 %v946, %v946
      %v963 = vpack.c.bf16 %v947, %v947
      %v964 = vunpack.c.l.bf16 %v948
      %v965 = vunpack.c.l.bf16 %v949
      %v966 = vunpack.c.l.bf16 %v950
      %v967 = vunpack.c.l.bf16 %v951
      %v968 = vunpack.c.l.bf16 %v952
      %v969 = vunpack.c.l.bf16 %v953
      %v970 = vunpack.c.l.bf16 %v954
      %v971 = vunpack.c.l.bf16 %v955
      %v972 = vunpack.c.l.bf16 %v956
      %v973 = vunpack.c.l.bf16 %v957
      %v974 = vunpack.c.l.bf16 %v958
      %v975 = vunpack.c.l.bf16 %v959
      %v976 = vunpack.c.l.bf16 %v960
      %v977 = vunpack.c.l.bf16 %v961
      %v978 = vunpack.c.l.bf16 %v962
      %v979 = vunpack.c.l.bf16 %v963
      %vm996 = vcmask 1045504
      %v997 = vrot.slane %v964, 2
      %v998 = vrot.slane %v965, 2
      %v999 = vsel %vm996, %v997, %v998
      %v1000 = vrot.slane %v966, 2
      %v1001 = vrot.slane %v967, 2
      %v1002 = vsel %vm996, %v1000, %v1001
      %v1003 = vrot.slane %v968, 2
      %v1004 = vrot.slane %v969, 2
      %v1005 = vsel %vm996, %v1003, %v1004
      %v1006 = vrot.slane %v970, 2
      %v1007 = vrot.slane %v971, 2
      %v1008 = vsel %vm996, %v1006, %v1007
      %v1009 = vrot.slane %v972, 2
      %v1010 = vrot.slane %v973, 2
      %v1011 = vsel %vm996, %v1009, %v1010
      %v1012 = vrot.slane %v974, 2
      %v1013 = vrot.slane %v975, 2
      %v1014 = vsel %vm996, %v1012, %v1013
      %v1015 = vrot.slane %v976, 2
      %v1016 = vrot.slane %v977, 2
      %v1017 = vsel %vm996, %v1015, %v1016
      %v1018 = vrot.slane %v978, 2
      %v1019 = vrot.slane %v979, 2
      %v1020 = vsel %vm996, %v1018, %v1019
      %v1029 = vadd.f32 %v906, %v999
      %v1030 = vadd.f32 %v907, %v1002
      %v1031 = vadd.f32 %v908, %v1005
      %v1032 = vadd.f32 %v909, %v1008
      %v1033 = vadd.f32 %v910, %v1011
      %v1034 = vadd.f32 %v911, %v1014
      %v1035 = vadd.f32 %v912, %v1017
      %v1036 = vadd.f32 %v913, %v1020
      %v1037 = vld [vmem:[%s635] sm:$0xf]
      %v1038 = vld [vmem:[%s635 + $0x8] sm:$0xf]
      %v1039 = vld [vmem:[%s635 + $0x10] sm:$0xf]
      %v1040 = vld [vmem:[%s635 + $0x18] sm:$0xf]
      %v1041 = vld [vmem:[%s635 + $0x20] sm:$0xf]
      %v1042 = vld [vmem:[%s635 + $0x28] sm:$0xf]
      %v1043 = vld [vmem:[%s635 + $0x30] sm:$0xf]
      %v1044 = vld [vmem:[%s635 + $0x38] sm:$0xf]
      %v1045 = vperm.slane %v797, 1
      %v1046 = vunpack.c.l.bf16 %v1037
      %v1047 = vunpack.c.l.bf16 %v1038
      %v1048 = vunpack.c.l.bf16 %v1039
      %v1049 = vunpack.c.l.bf16 %v1040
      %v1050 = vunpack.c.l.bf16 %v1041
      %v1051 = vunpack.c.l.bf16 %v1042
      %v1052 = vunpack.c.l.bf16 %v1043
      %v1053 = vunpack.c.l.bf16 %v1044
      %v1054 = vunpack.c.l.bf16 %v1045
      %v1055 = vmul.f32 %v1046, %v1054
      %v1056 = vmul.f32 %v1047, %v1054
      %v1057 = vmul.f32 %v1048, %v1054
      %v1058 = vmul.f32 %v1049, %v1054
      %v1059 = vmul.f32 %v1050, %v1054
      %v1060 = vmul.f32 %v1051, %v1054
      %v1061 = vmul.f32 %v1052, %v1054
      %v1062 = vmul.f32 %v1053, %v1054
      %v1063 = vpack.c.bf16 %v1055, %v1055
      %v1064 = vpack.c.bf16 %v1056, %v1056
      %v1065 = vpack.c.bf16 %v1057, %v1057
      %v1066 = vpack.c.bf16 %v1058, %v1058
      %v1067 = vpack.c.bf16 %v1059, %v1059
      %v1068 = vpack.c.bf16 %v1060, %v1060
      %v1069 = vpack.c.bf16 %v1061, %v1061
      %v1070 = vpack.c.bf16 %v1062, %v1062
      %v1071 = vunpack.c.l.bf16 %v1063
      %v1072 = vunpack.c.l.bf16 %v1064
      %v1073 = vunpack.c.l.bf16 %v1065
      %v1074 = vunpack.c.l.bf16 %v1066
      %v1075 = vunpack.c.l.bf16 %v1067
      %v1076 = vunpack.c.l.bf16 %v1068
      %v1077 = vunpack.c.l.bf16 %v1069
      %v1078 = vunpack.c.l.bf16 %v1070
      %v1079 = vadd.f32 %v1029, %v1071
      %v1080 = vadd.f32 %v1030, %v1072
      %v1081 = vadd.f32 %v1031, %v1073
      %v1082 = vadd.f32 %v1032, %v1074
      %v1083 = vadd.f32 %v1033, %v1075
      %v1084 = vadd.f32 %v1034, %v1076
      %v1085 = vadd.f32 %v1035, %v1077
      %v1086 = vadd.f32 %v1036, %v1078
      %v1087 = vld [vmem:[%s635 + $0x4] sm:$0x1]
      %v1088 = vld [vmem:[%s635 + $0xc] sm:$0x1]
      %v1089 = vld [vmem:[%s635 + $0x14] sm:$0x1]
      %v1090 = vld [vmem:[%s635 + $0x1c] sm:$0x1]
      %v1091 = vld [vmem:[%s635 + $0x24] sm:$0x1]
      %v1092 = vld [vmem:[%s635 + $0x2c] sm:$0x1]
      %v1093 = vld [vmem:[%s635 + $0x34] sm:$0x1]
      %v1094 = vld [vmem:[%s635 + $0x3c] sm:$0x1]
      %v1095 = vperm.slane %v744, 2
      %v1096 = vunpack.c.l.bf16 %v1087
      %v1097 = vunpack.c.l.bf16 %v1088
      %v1098 = vunpack.c.l.bf16 %v1089
      %v1099 = vunpack.c.l.bf16 %v1090
      %v1100 = vunpack.c.l.bf16 %v1091
      %v1101 = vunpack.c.l.bf16 %v1092
      %v1102 = vunpack.c.l.bf16 %v1093
      %v1103 = vunpack.c.l.bf16 %v1094
      %v1104 = vunpack.c.l.bf16 %v1095
      %v1105 = vmul.f32 %v1046, %v1104
      %v1106 = vmul.f32 %v1096, %v1104
      %v1107 = vmul.f32 %v1047, %v1104
      %v1108 = vmul.f32 %v1097, %v1104
      %v1109 = vmul.f32 %v1048, %v1104
      %v1110 = vmul.f32 %v1098, %v1104
      %v1111 = vmul.f32 %v1049, %v1104
      %v1112 = vmul.f32 %v1099, %v1104
      %v1113 = vmul.f32 %v1050, %v1104
      %v1114 = vmul.f32 %v1100, %v1104
      %v1115 = vmul.f32 %v1051, %v1104
      %v1116 = vmul.f32 %v1101, %v1104
      %v1117 = vmul.f32 %v1052, %v1104
      %v1118 = vmul.f32 %v1102, %v1104
      %v1119 = vmul.f32 %v1053, %v1104
      %v1120 = vmul.f32 %v1103, %v1104
      %v1121 = vpack.c.bf16 %v1105, %v1105
      %v1122 = vpack.c.bf16 %v1106, %v1106
      %v1123 = vpack.c.bf16 %v1107, %v1107
      %v1124 = vpack.c.bf16 %v1108, %v1108
      %v1125 = vpack.c.bf16 %v1109, %v1109
      %v1126 = vpack.c.bf16 %v1110, %v1110
      %v1127 = vpack.c.bf16 %v1111, %v1111
      %v1128 = vpack.c.bf16 %v1112, %v1112
      %v1129 = vpack.c.bf16 %v1113, %v1113
      %v1130 = vpack.c.bf16 %v1114, %v1114
      %v1131 = vpack.c.bf16 %v1115, %v1115
      %v1132 = vpack.c.bf16 %v1116, %v1116
      %v1133 = vpack.c.bf16 %v1117, %v1117
      %v1134 = vpack.c.bf16 %v1118, %v1118
      %v1135 = vpack.c.bf16 %v1119, %v1119
      %v1136 = vpack.c.bf16 %v1120, %v1120
      %v1137 = vunpack.c.l.bf16 %v1121
      %v1138 = vunpack.c.l.bf16 %v1122
      %v1139 = vunpack.c.l.bf16 %v1123
      %v1140 = vunpack.c.l.bf16 %v1124
      %v1141 = vunpack.c.l.bf16 %v1125
      %v1142 = vunpack.c.l.bf16 %v1126
      %v1143 = vunpack.c.l.bf16 %v1127
      %v1144 = vunpack.c.l.bf16 %v1128
      %v1145 = vunpack.c.l.bf16 %v1129
      %v1146 = vunpack.c.l.bf16 %v1130
      %v1147 = vunpack.c.l.bf16 %v1131
      %v1148 = vunpack.c.l.bf16 %v1132
      %v1149 = vunpack.c.l.bf16 %v1133
      %v1150 = vunpack.c.l.bf16 %v1134
      %v1151 = vunpack.c.l.bf16 %v1135
      %v1152 = vunpack.c.l.bf16 %v1136
      %v1169 = vrot.slane %v1137, 1
      %v1170 = vrot.slane %v1138, 1
      %v1171 = vsel %vm873, %v1169, %v1170
      %v1172 = vrot.slane %v1139, 1
      %v1173 = vrot.slane %v1140, 1
      %v1174 = vsel %vm873, %v1172, %v1173
      %v1175 = vrot.slane %v1141, 1
      %v1176 = vrot.slane %v1142, 1
      %v1177 = vsel %vm873, %v1175, %v1176
      %v1178 = vrot.slane %v1143, 1
      %v1179 = vrot.slane %v1144, 1
      %v1180 = vsel %vm873, %v1178, %v1179
      %v1181 = vrot.slane %v1145, 1
      %v1182 = vrot.slane %v1146, 1
      %v1183 = vsel %vm873, %v1181, %v1182
      %v1184 = vrot.slane %v1147, 1
      %v1185 = vrot.slane %v1148, 1
      %v1186 = vsel %vm873, %v1184, %v1185
      %v1187 = vrot.slane %v1149, 1
      %v1188 = vrot.slane %v1150, 1
      %v1189 = vsel %vm873, %v1187, %v1188
      %v1190 = vrot.slane %v1151, 1
      %v1191 = vrot.slane %v1152, 1
      %v1192 = vsel %vm873, %v1190, %v1191
      %v1201 = vadd.f32 %v1079, %v1171
      %v1202 = vadd.f32 %v1080, %v1174
      %v1203 = vadd.f32 %v1081, %v1177
      %v1204 = vadd.f32 %v1082, %v1180
      %v1205 = vadd.f32 %v1083, %v1183
      %v1206 = vadd.f32 %v1084, %v1186
      %v1207 = vadd.f32 %v1085, %v1189
      %v1208 = vadd.f32 %v1086, %v1192
      %v1209 = vld [vmem:[%s635] sm:$0xe]
      %v1210 = vld [vmem:[%s635 + $0x8] sm:$0xe]
      %v1211 = vld [vmem:[%s635 + $0x10] sm:$0xe]
      %v1212 = vld [vmem:[%s635 + $0x18] sm:$0xe]
      %v1213 = vld [vmem:[%s635 + $0x20] sm:$0xe]
      %v1214 = vld [vmem:[%s635 + $0x28] sm:$0xe]
      %v1215 = vld [vmem:[%s635 + $0x30] sm:$0xe]
      %v1216 = vld [vmem:[%s635 + $0x38] sm:$0xe]
      %v1217 = vperm.slane %v797, 2
      %v1218 = vunpack.c.l.bf16 %v1209
      %v1219 = vunpack.c.l.bf16 %v1210
      %v1220 = vunpack.c.l.bf16 %v1211
      %v1221 = vunpack.c.l.bf16 %v1212
      %v1222 = vunpack.c.l.bf16 %v1213
      %v1223 = vunpack.c.l.bf16 %v1214
      %v1224 = vunpack.c.l.bf16 %v1215
      %v1225 = vunpack.c.l.bf16 %v1216
      %v1226 = vunpack.c.l.bf16 %v1217
      %v1227 = vmul.f32 %v1218, %v1226
      %v1228 = vmul.f32 %v1096, %v1226
      %v1229 = vmul.f32 %v1219, %v1226
      %v1230 = vmul.f32 %v1097, %v1226
      %v1231 = vmul.f32 %v1220, %v1226
      %v1232 = vmul.f32 %v1098, %v1226
      %v1233 = vmul.f32 %v1221, %v1226
      %v1234 = vmul.f32 %v1099, %v1226
      %v1235 = vmul.f32 %v1222, %v1226
      %v1236 = vmul.f32 %v1100, %v1226
      %v1237 = vmul.f32 %v1223, %v1226
      %v1238 = vmul.f32 %v1101, %v1226
      %v1239 = vmul.f32 %v1224, %v1226
      %v1240 = vmul.f32 %v1102, %v1226
      %v1241 = vmul.f32 %v1225, %v1226
      %v1242 = vmul.f32 %v1103, %v1226
      %v1243 = vpack.c.bf16 %v1227, %v1227
      %v1244 = vpack.c.bf16 %v1228, %v1228
      %v1245 = vpack.c.bf16 %v1229, %v1229
      %v1246 = vpack.c.bf16 %v1230, %v1230
      %v1247 = vpack.c.bf16 %v1231, %v1231
      %v1248 = vpack.c.bf16 %v1232, %v1232
      %v1249 = vpack.c.bf16 %v1233, %v1233
      %v1250 = vpack.c.bf16 %v1234, %v1234
      %v1251 = vpack.c.bf16 %v1235, %v1235
      %v1252 = vpack.c.bf16 %v1236, %v1236
      %v1253 = vpack.c.bf16 %v1237, %v1237
      %v1254 = vpack.c.bf16 %v1238, %v1238
      %v1255 = vpack.c.bf16 %v1239, %v1239
      %v1256 = vpack.c.bf16 %v1240, %v1240
      %v1257 = vpack.c.bf16 %v1241, %v1241
      %v1258 = vpack.c.bf16 %v1242, %v1242
      %v1259 = vunpack.c.l.bf16 %v1243
      %v1260 = vunpack.c.l.bf16 %v1244
      %v1261 = vunpack.c.l.bf16 %v1245
      %v1262 = vunpack.c.l.bf16 %v1246
      %v1263 = vunpack.c.l.bf16 %v1247
      %v1264 = vunpack.c.l.bf16 %v1248
      %v1265 = vunpack.c.l.bf16 %v1249
      %v1266 = vunpack.c.l.bf16 %v1250
      %v1267 = vunpack.c.l.bf16 %v1251
      %v1268 = vunpack.c.l.bf16 %v1252
      %v1269 = vunpack.c.l.bf16 %v1253
      %v1270 = vunpack.c.l.bf16 %v1254
      %v1271 = vunpack.c.l.bf16 %v1255
      %v1272 = vunpack.c.l.bf16 %v1256
      %v1273 = vunpack.c.l.bf16 %v1257
      %v1274 = vunpack.c.l.bf16 %v1258
      %v1291 = vrot.slane %v1259, 2
      %v1292 = vrot.slane %v1260, 2
      %v1293 = vsel %vm996, %v1291, %v1292
      %v1294 = vrot.slane %v1261, 2
      %v1295 = vrot.slane %v1262, 2
      %v1296 = vsel %vm996, %v1294, %v1295
      %v1297 = vrot.slane %v1263, 2
      %v1298 = vrot.slane %v1264, 2
      %v1299 = vsel %vm996, %v1297, %v1298
      %v1300 = vrot.slane %v1265, 2
      %v1301 = vrot.slane %v1266, 2
      %v1302 = vsel %vm996, %v1300, %v1301
      %v1303 = vrot.slane %v1267, 2
      %v1304 = vrot.slane %v1268, 2
      %v1305 = vsel %vm996, %v1303, %v1304
      %v1306 = vrot.slane %v1269, 2
      %v1307 = vrot.slane %v1270, 2
      %v1308 = vsel %vm996, %v1306, %v1307
      %v1309 = vrot.slane %v1271, 2
      %v1310 = vrot.slane %v1272, 2
      %v1311 = vsel %vm996, %v1309, %v1310
      %v1312 = vrot.slane %v1273, 2
      %v1313 = vrot.slane %v1274, 2
      %v1314 = vsel %vm996, %v1312, %v1313
      %v1323 = vadd.f32 %v1201, %v1293
      %v1324 = vadd.f32 %v1202, %v1296
      %v1325 = vadd.f32 %v1203, %v1299
      %v1326 = vadd.f32 %v1204, %v1302
      %v1327 = vadd.f32 %v1205, %v1305
      %v1328 = vadd.f32 %v1206, %v1308
      %v1329 = vadd.f32 %v1207, %v1311
      %v1330 = vadd.f32 %v1208, %v1314
      %s1331 = scalar_lea.vmem [#allocation2], 16
      %v1332 = vld [vmem:[%s1331] sm:$0xf]
      %v1333 = vld [vmem:[%s1331 + $0x8] sm:$0xf]
      %v1334 = vld [vmem:[%s1331 + $0x10] sm:$0xf]
      %v1335 = vld [vmem:[%s1331 + $0x18] sm:$0xf]
      %v1336 = vld [vmem:[%s1331 + $0x20] sm:$0xf]
      %v1337 = vld [vmem:[%s1331 + $0x28] sm:$0xf]
      %v1338 = vld [vmem:[%s1331 + $0x30] sm:$0xf]
      %v1339 = vld [vmem:[%s1331 + $0x38] sm:$0xf]
      %v1340 = vperm.slane %v744, 3
      %v1341 = vunpack.c.l.bf16 %v1332
      %v1342 = vunpack.c.l.bf16 %v1333
      %v1343 = vunpack.c.l.bf16 %v1334
      %v1344 = vunpack.c.l.bf16 %v1335
      %v1345 = vunpack.c.l.bf16 %v1336
      %v1346 = vunpack.c.l.bf16 %v1337
      %v1347 = vunpack.c.l.bf16 %v1338
      %v1348 = vunpack.c.l.bf16 %v1339
      %v1349 = vunpack.c.l.bf16 %v1340
      %v1350 = vmul.f32 %v1341, %v1349
      %v1351 = vmul.f32 %v1342, %v1349
      %v1352 = vmul.f32 %v1343, %v1349
      %v1353 = vmul.f32 %v1344, %v1349
      %v1354 = vmul.f32 %v1345, %v1349
      %v1355 = vmul.f32 %v1346, %v1349
      %v1356 = vmul.f32 %v1347, %v1349
      %v1357 = vmul.f32 %v1348, %v1349
      %v1358 = vpack.c.bf16 %v1350, %v1350
      %v1359 = vpack.c.bf16 %v1351, %v1351
      %v1360 = vpack.c.bf16 %v1352, %v1352
      %v1361 = vpack.c.bf16 %v1353, %v1353
      %v1362 = vpack.c.bf16 %v1354, %v1354
      %v1363 = vpack.c.bf16 %v1355, %v1355
      %v1364 = vpack.c.bf16 %v1356, %v1356
      %v1365 = vpack.c.bf16 %v1357, %v1357
      %v1366 = vunpack.c.l.bf16 %v1358
      %v1367 = vunpack.c.l.bf16 %v1359
      %v1368 = vunpack.c.l.bf16 %v1360
      %v1369 = vunpack.c.l.bf16 %v1361
      %v1370 = vunpack.c.l.bf16 %v1362
      %v1371 = vunpack.c.l.bf16 %v1363
      %v1372 = vunpack.c.l.bf16 %v1364
      %v1373 = vunpack.c.l.bf16 %v1365
      %v1374 = vadd.f32 %v1323, %v1366
      %v1375 = vadd.f32 %v1324, %v1367
      %v1376 = vadd.f32 %v1325, %v1368
      %v1377 = vadd.f32 %v1326, %v1369
      %v1378 = vadd.f32 %v1327, %v1370
      %v1379 = vadd.f32 %v1328, %v1371
      %v1380 = vadd.f32 %v1329, %v1372
      %v1381 = vadd.f32 %v1330, %v1373
      %v1382 = vld [vmem:[%s1331 + $0x4] sm:$0x1]
      %v1383 = vld [vmem:[%s1331 + $0xc] sm:$0x1]
      %v1384 = vld [vmem:[%s1331 + $0x14] sm:$0x1]
      %v1385 = vld [vmem:[%s1331 + $0x1c] sm:$0x1]
      %v1386 = vld [vmem:[%s1331 + $0x24] sm:$0x1]
      %v1387 = vld [vmem:[%s1331 + $0x2c] sm:$0x1]
      %v1388 = vld [vmem:[%s1331 + $0x34] sm:$0x1]
      %v1389 = vld [vmem:[%s1331 + $0x3c] sm:$0x1]
      %v1390 = vperm.slane %v797, 3
      %v1391 = vunpack.c.l.bf16 %v1382
      %v1392 = vunpack.c.l.bf16 %v1383
      %v1393 = vunpack.c.l.bf16 %v1384
      %v1394 = vunpack.c.l.bf16 %v1385
      %v1395 = vunpack.c.l.bf16 %v1386
      %v1396 = vunpack.c.l.bf16 %v1387
      %v1397 = vunpack.c.l.bf16 %v1388
      %v1398 = vunpack.c.l.bf16 %v1389
      %v1399 = vunpack.c.l.bf16 %v1390
      %v1400 = vmul.f32 %v1341, %v1399
      %v1401 = vmul.f32 %v1391, %v1399
      %v1402 = vmul.f32 %v1342, %v1399
      %v1403 = vmul.f32 %v1392, %v1399
      %v1404 = vmul.f32 %v1343, %v1399
      %v1405 = vmul.f32 %v1393, %v1399
      %v1406 = vmul.f32 %v1344, %v1399
      %v1407 = vmul.f32 %v1394, %v1399
      %v1408 = vmul.f32 %v1345, %v1399
      %v1409 = vmul.f32 %v1395, %v1399
      %v1410 = vmul.f32 %v1346, %v1399
      %v1411 = vmul.f32 %v1396, %v1399
      %v1412 = vmul.f32 %v1347, %v1399
      %v1413 = vmul.f32 %v1397, %v1399
      %v1414 = vmul.f32 %v1348, %v1399
      %v1415 = vmul.f32 %v1398, %v1399
      %v1416 = vpack.c.bf16 %v1400, %v1400
      %v1417 = vpack.c.bf16 %v1401, %v1401
      %v1418 = vpack.c.bf16 %v1402, %v1402
      %v1419 = vpack.c.bf16 %v1403, %v1403
      %v1420 = vpack.c.bf16 %v1404, %v1404
      %v1421 = vpack.c.bf16 %v1405, %v1405
      %v1422 = vpack.c.bf16 %v1406, %v1406
      %v1423 = vpack.c.bf16 %v1407, %v1407
      %v1424 = vpack.c.bf16 %v1408, %v1408
      %v1425 = vpack.c.bf16 %v1409, %v1409
      %v1426 = vpack.c.bf16 %v1410, %v1410
      %v1427 = vpack.c.bf16 %v1411, %v1411
      %v1428 = vpack.c.bf16 %v1412, %v1412
      %v1429 = vpack.c.bf16 %v1413, %v1413
      %v1430 = vpack.c.bf16 %v1414, %v1414
      %v1431 = vpack.c.bf16 %v1415, %v1415
      %v1432 = vunpack.c.l.bf16 %v1416
      %v1433 = vunpack.c.l.bf16 %v1417
      %v1434 = vunpack.c.l.bf16 %v1418
      %v1435 = vunpack.c.l.bf16 %v1419
      %v1436 = vunpack.c.l.bf16 %v1420
      %v1437 = vunpack.c.l.bf16 %v1421
      %v1438 = vunpack.c.l.bf16 %v1422
      %v1439 = vunpack.c.l.bf16 %v1423
      %v1440 = vunpack.c.l.bf16 %v1424
      %v1441 = vunpack.c.l.bf16 %v1425
      %v1442 = vunpack.c.l.bf16 %v1426
      %v1443 = vunpack.c.l.bf16 %v1427
      %v1444 = vunpack.c.l.bf16 %v1428
      %v1445 = vunpack.c.l.bf16 %v1429
      %v1446 = vunpack.c.l.bf16 %v1430
      %v1447 = vunpack.c.l.bf16 %v1431
      %v1464 = vrot.slane %v1432, 1
      %v1465 = vrot.slane %v1433, 1
      %v1466 = vsel %vm873, %v1464, %v1465
      %v1467 = vrot.slane %v1434, 1
      %v1468 = vrot.slane %v1435, 1
      %v1469 = vsel %vm873, %v1467, %v1468
      %v1470 = vrot.slane %v1436, 1
      %v1471 = vrot.slane %v1437, 1
      %v1472 = vsel %vm873, %v1470, %v1471
      %v1473 = vrot.slane %v1438, 1
      %v1474 = vrot.slane %v1439, 1
      %v1475 = vsel %vm873, %v1473, %v1474
      %v1476 = vrot.slane %v1440, 1
      %v1477 = vrot.slane %v1441, 1
      %v1478 = vsel %vm873, %v1476, %v1477
      %v1479 = vrot.slane %v1442, 1
      %v1480 = vrot.slane %v1443, 1
      %v1481 = vsel %vm873, %v1479, %v1480
      %v1482 = vrot.slane %v1444, 1
      %v1483 = vrot.slane %v1445, 1
      %v1484 = vsel %vm873, %v1482, %v1483
      %v1485 = vrot.slane %v1446, 1
      %v1486 = vrot.slane %v1447, 1
      %v1487 = vsel %vm873, %v1485, %v1486
      %v1496 = vadd.f32 %v1374, %v1466
      %v1497 = vadd.f32 %v1375, %v1469
      %v1498 = vadd.f32 %v1376, %v1472
      %v1499 = vadd.f32 %v1377, %v1475
      %v1500 = vadd.f32 %v1378, %v1478
      %v1501 = vadd.f32 %v1379, %v1481
      %v1502 = vadd.f32 %v1380, %v1484
      %v1503 = vadd.f32 %v1381, %v1487
      %v1504 = vld [vmem:[%s1331] sm:$0xe]
      %v1505 = vld [vmem:[%s1331 + $0x8] sm:$0xe]
      %v1506 = vld [vmem:[%s1331 + $0x10] sm:$0xe]
      %v1507 = vld [vmem:[%s1331 + $0x18] sm:$0xe]
      %v1508 = vld [vmem:[%s1331 + $0x20] sm:$0xe]
      %v1509 = vld [vmem:[%s1331 + $0x28] sm:$0xe]
      %v1510 = vld [vmem:[%s1331 + $0x30] sm:$0xe]
      %v1511 = vld [vmem:[%s1331 + $0x38] sm:$0xe]
      %v1513 = vpack.i.b16 %v734, %v734
      %v1515 = vperm.slane %v1513, 0
      %v1516 = vunpack.c.l.bf16 %v1504
      %v1517 = vunpack.c.l.bf16 %v1505
      %v1518 = vunpack.c.l.bf16 %v1506
      %v1519 = vunpack.c.l.bf16 %v1507
      %v1520 = vunpack.c.l.bf16 %v1508
      %v1521 = vunpack.c.l.bf16 %v1509
      %v1522 = vunpack.c.l.bf16 %v1510
      %v1523 = vunpack.c.l.bf16 %v1511
      %v1524 = vunpack.c.l.bf16 %v1515
      %v1525 = vmul.f32 %v1516, %v1524
      %v1526 = vmul.f32 %v1391, %v1524
      %v1527 = vmul.f32 %v1517, %v1524
      %v1528 = vmul.f32 %v1392, %v1524
      %v1529 = vmul.f32 %v1518, %v1524
      %v1530 = vmul.f32 %v1393, %v1524
      %v1531 = vmul.f32 %v1519, %v1524
      %v1532 = vmul.f32 %v1394, %v1524
      %v1533 = vmul.f32 %v1520, %v1524
      %v1534 = vmul.f32 %v1395, %v1524
      %v1535 = vmul.f32 %v1521, %v1524
      %v1536 = vmul.f32 %v1396, %v1524
      %v1537 = vmul.f32 %v1522, %v1524
      %v1538 = vmul.f32 %v1397, %v1524
      %v1539 = vmul.f32 %v1523, %v1524
      %v1540 = vmul.f32 %v1398, %v1524
      %v1541 = vpack.c.bf16 %v1525, %v1525
      %v1542 = vpack.c.bf16 %v1526, %v1526
      %v1543 = vpack.c.bf16 %v1527, %v1527
      %v1544 = vpack.c.bf16 %v1528, %v1528
      %v1545 = vpack.c.bf16 %v1529, %v1529
      %v1546 = vpack.c.bf16 %v1530, %v1530
      %v1547 = vpack.c.bf16 %v1531, %v1531
      %v1548 = vpack.c.bf16 %v1532, %v1532
      %v1549 = vpack.c.bf16 %v1533, %v1533
      %v1550 = vpack.c.bf16 %v1534, %v1534
      %v1551 = vpack.c.bf16 %v1535, %v1535
      %v1552 = vpack.c.bf16 %v1536, %v1536
      %v1553 = vpack.c.bf16 %v1537, %v1537
      %v1554 = vpack.c.bf16 %v1538, %v1538
      %v1555 = vpack.c.bf16 %v1539, %v1539
      %v1556 = vpack.c.bf16 %v1540, %v1540
      %v1557 = vunpack.c.l.bf16 %v1541
      %v1558 = vunpack.c.l.bf16 %v1542
      %v1559 = vunpack.c.l.bf16 %v1543
      %v1560 = vunpack.c.l.bf16 %v1544
      %v1561 = vunpack.c.l.bf16 %v1545
      %v1562 = vunpack.c.l.bf16 %v1546
      %v1563 = vunpack.c.l.bf16 %v1547
      %v1564 = vunpack.c.l.bf16 %v1548
      %v1565 = vunpack.c.l.bf16 %v1549
      %v1566 = vunpack.c.l.bf16 %v1550
      %v1567 = vunpack.c.l.bf16 %v1551
      %v1568 = vunpack.c.l.bf16 %v1552
      %v1569 = vunpack.c.l.bf16 %v1553
      %v1570 = vunpack.c.l.bf16 %v1554
      %v1571 = vunpack.c.l.bf16 %v1555
      %v1572 = vunpack.c.l.bf16 %v1556
      %v1589 = vrot.slane %v1557, 2
      %v1590 = vrot.slane %v1558, 2
      %v1591 = vsel %vm996, %v1589, %v1590
      %v1592 = vrot.slane %v1559, 2
      %v1593 = vrot.slane %v1560, 2
      %v1594 = vsel %vm996, %v1592, %v1593
      %v1595 = vrot.slane %v1561, 2
      %v1596 = vrot.slane %v1562, 2
      %v1597 = vsel %vm996, %v1595, %v1596
      %v1598 = vrot.slane %v1563, 2
      %v1599 = vrot.slane %v1564, 2
      %v1600 = vsel %vm996, %v1598, %v1599
      %v1601 = vrot.slane %v1565, 2
      %v1602 = vrot.slane %v1566, 2
      %v1603 = vsel %vm996, %v1601, %v1602
      %v1604 = vrot.slane %v1567, 2
      %v1605 = vrot.slane %v1568, 2
      %v1606 = vsel %vm996, %v1604, %v1605
      %v1607 = vrot.slane %v1569, 2
      %v1608 = vrot.slane %v1570, 2
      %v1609 = vsel %vm996, %v1607, %v1608
      %v1610 = vrot.slane %v1571, 2
      %v1611 = vrot.slane %v1572, 2
      %v1612 = vsel %vm996, %v1610, %v1611
      %v1621 = vadd.f32 %v1496, %v1591
      %v1622 = vadd.f32 %v1497, %v1594
      %v1623 = vadd.f32 %v1498, %v1597
      %v1624 = vadd.f32 %v1499, %v1600
      %v1625 = vadd.f32 %v1500, %v1603
      %v1626 = vadd.f32 %v1501, %v1606
      %v1627 = vadd.f32 %v1502, %v1609
      %v1628 = vadd.f32 %v1503, %v1612
      %v1629 = vld [vmem:[%s4] sm:$0x1]
      %v1631 = vperm.slane %v1629, 0
      %v1633 = vadd.f32 %v1621, %v1631
      %v1634 = vadd.f32 %v1622, %v1631
      %v1635 = vadd.f32 %v1623, %v1631
      %v1636 = vadd.f32 %v1624, %v1631
      %v1637 = vadd.f32 %v1625, %v1631
      %v1638 = vadd.f32 %v1626, %v1631
      %v1639 = vadd.f32 %v1627, %v1631
      %v1640 = vadd.f32 %v1628, %v1631
      %v1641 = vxor.u32 %v1633, 2147483648
      %v1642 = vxor.u32 %v1634, 2147483648
      %v1643 = vxor.u32 %v1635, 2147483648
      %v1644 = vxor.u32 %v1636, 2147483648
      %v1645 = vxor.u32 %v1637, 2147483648
      %v1646 = vxor.u32 %v1638, 2147483648
      %v1647 = vxor.u32 %v1639, 2147483648
      %v1648 = vxor.u32 %v1640, 2147483648
      %v1649 = vmul.f32 %v1641, 1.442695
      %v1650 = vpow.pop %v1649
      %v1651 = vmul.f32 %v1642, 1.442695
      %v1652 = vpow.pop %v1651
      %v1653 = vmul.f32 %v1643, 1.442695
      %v1654 = vpow.pop %v1653
      %v1655 = vmul.f32 %v1644, 1.442695
      %v1656 = vpow.pop %v1655
      %v1657 = vmul.f32 %v1645, 1.442695
      %v1658 = vpow.pop %v1657
      %v1659 = vmul.f32 %v1646, 1.442695
      %v1660 = vpow.pop %v1659
      %v1661 = vmul.f32 %v1647, 1.442695
      %v1662 = vpow.pop %v1661
      %v1663 = vmul.f32 %v1648, 1.442695
      %v1664 = vpow.pop %v1663
      %v1665 = vadd.f32 %v1650, 1.0
      %v1666 = vadd.f32 %v1652, 1.0
      %v1667 = vadd.f32 %v1654, 1.0
      %v1668 = vadd.f32 %v1656, 1.0
      %v1669 = vadd.f32 %v1658, 1.0
      %v1670 = vadd.f32 %v1660, 1.0
      %v1671 = vadd.f32 %v1662, 1.0
      %v1672 = vadd.f32 %v1664, 1.0
      %v1673 = vrcp.pop %v1665
      %v1674 = vmul.f32 %v1665, %v1673
      %v1675 = vsub.f32 1.0, %v1674
      %v1676 = vmul.f32 %v1673, %v1675
      %v1677 = vadd.f32 %v1673, %v1676
      %vm1678 = vweird.f32 %v1665
      %vm1679 = vweird.f32 %v1673
      %vm1680 = vmor %vm1678, %vm1679
      %v1681 = vsel %vm1680, %v1673, %v1677
      %v1682 = vand.u32 2147483647, %v1665
      %vm1683 = vcmp.eq.f32.partialorder %v1682, 8.507059e+37
      %v1684 = vand.u32 %v1665, 2147483648
      %v1685 = vor.u32 1.1754944e-38, %v1684
      %v1686 = vsel %vm1683, %v1685, %v1681
      %v1687 = vmul.f32 1.0, %v1686
      %v1688 = vrcp.pop %v1666
      %v1689 = vmul.f32 %v1666, %v1688
      %v1690 = vsub.f32 1.0, %v1689
      %v1691 = vmul.f32 %v1688, %v1690
      %v1692 = vadd.f32 %v1688, %v1691
      %vm1693 = vweird.f32 %v1666
      %vm1694 = vweird.f32 %v1688
      %vm1695 = vmor %vm1693, %vm1694
      %v1696 = vsel %vm1695, %v1688, %v1692
      %v1697 = vand.u32 2147483647, %v1666
      %vm1698 = vcmp.eq.f32.partialorder %v1697, 8.507059e+37
      %v1699 = vand.u32 %v1666, 2147483648
      %v1700 = vor.u32 1.1754944e-38, %v1699
      %v1701 = vsel %vm1698, %v1700, %v1696
      %v1702 = vmul.f32 1.0, %v1701
      %v1703 = vrcp.pop %v1667
      %v1704 = vmul.f32 %v1667, %v1703
      %v1705 = vsub.f32 1.0, %v1704
      %v1706 = vmul.f32 %v1703, %v1705
      %v1707 = vadd.f32 %v1703, %v1706
      %vm1708 = vweird.f32 %v1667
      %vm1709 = vweird.f32 %v1703
      %vm1710 = vmor %vm1708, %vm1709
      %v1711 = vsel %vm1710, %v1703, %v1707
      %v1712 = vand.u32 2147483647, %v1667
      %vm1713 = vcmp.eq.f32.partialorder %v1712, 8.507059e+37
      %v1714 = vand.u32 %v1667, 2147483648
      %v1715 = vor.u32 1.1754944e-38, %v1714
      %v1716 = vsel %vm1713, %v1715, %v1711
      %v1717 = vmul.f32 1.0, %v1716
      %v1718 = vrcp.pop %v1668
      %v1719 = vmul.f32 %v1668, %v1718
      %v1720 = vsub.f32 1.0, %v1719
      %v1721 = vmul.f32 %v1718, %v1720
      %v1722 = vadd.f32 %v1718, %v1721
      %vm1723 = vweird.f32 %v1668
      %vm1724 = vweird.f32 %v1718
      %vm1725 = vmor %vm1723, %vm1724
      %v1726 = vsel %vm1725, %v1718, %v1722
      %v1727 = vand.u32 2147483647, %v1668
      %vm1728 = vcmp.eq.f32.partialorder %v1727, 8.507059e+37
      %v1729 = vand.u32 %v1668, 2147483648
      %v1730 = vor.u32 1.1754944e-38, %v1729
      %v1731 = vsel %vm1728, %v1730, %v1726
      %v1732 = vmul.f32 1.0, %v1731
      %v1733 = vrcp.pop %v1669
      %v1734 = vmul.f32 %v1669, %v1733
      %v1735 = vsub.f32 1.0, %v1734
      %v1736 = vmul.f32 %v1733, %v1735
      %v1737 = vadd.f32 %v1733, %v1736
      %vm1738 = vweird.f32 %v1669
      %vm1739 = vweird.f32 %v1733
      %vm1740 = vmor %vm1738, %vm1739
      %v1741 = vsel %vm1740, %v1733, %v1737
      %v1742 = vand.u32 2147483647, %v1669
      %vm1743 = vcmp.eq.f32.partialorder %v1742, 8.507059e+37
      %v1744 = vand.u32 %v1669, 2147483648
      %v1745 = vor.u32 1.1754944e-38, %v1744
      %v1746 = vsel %vm1743, %v1745, %v1741
      %v1747 = vmul.f32 1.0, %v1746
      %v1748 = vrcp.pop %v1670
      %v1749 = vmul.f32 %v1670, %v1748
      %v1750 = vsub.f32 1.0, %v1749
      %v1751 = vmul.f32 %v1748, %v1750
      %v1752 = vadd.f32 %v1748, %v1751
      %vm1753 = vweird.f32 %v1670
      %vm1754 = vweird.f32 %v1748
      %vm1755 = vmor %vm1753, %vm1754
      %v1756 = vsel %vm1755, %v1748, %v1752
      %v1757 = vand.u32 2147483647, %v1670
      %vm1758 = vcmp.eq.f32.partialorder %v1757, 8.507059e+37
      %v1759 = vand.u32 %v1670, 2147483648
      %v1760 = vor.u32 1.1754944e-38, %v1759
      %v1761 = vsel %vm1758, %v1760, %v1756
      %v1762 = vmul.f32 1.0, %v1761
      %v1763 = vrcp.pop %v1671
      %v1764 = vmul.f32 %v1671, %v1763
      %v1765 = vsub.f32 1.0, %v1764
      %v1766 = vmul.f32 %v1763, %v1765
      %v1767 = vadd.f32 %v1763, %v1766
      %vm1768 = vweird.f32 %v1671
      %vm1769 = vweird.f32 %v1763
      %vm1770 = vmor %vm1768, %vm1769
      %v1771 = vsel %vm1770, %v1763, %v1767
      %v1772 = vand.u32 2147483647, %v1671
      %vm1773 = vcmp.eq.f32.partialorder %v1772, 8.507059e+37
      %v1774 = vand.u32 %v1671, 2147483648
      %v1775 = vor.u32 1.1754944e-38, %v1774
      %v1776 = vsel %vm1773, %v1775, %v1771
      %v1777 = vmul.f32 1.0, %v1776
      %v1778 = vrcp.pop %v1672
      %v1779 = vmul.f32 %v1672, %v1778
      %v1780 = vsub.f32 1.0, %v1779
      %v1781 = vmul.f32 %v1778, %v1780
      %v1782 = vadd.f32 %v1778, %v1781
      %vm1783 = vweird.f32 %v1672
      %vm1784 = vweird.f32 %v1778
      %vm1785 = vmor %vm1783, %vm1784
      %v1786 = vsel %vm1785, %v1778, %v1782
      %v1787 = vand.u32 2147483647, %v1672
      %vm1788 = vcmp.eq.f32.partialorder %v1787, 8.507059e+37
      %v1789 = vand.u32 %v1672, 2147483648
      %v1790 = vor.u32 1.1754944e-38, %v1789
      %v1791 = vsel %vm1788, %v1790, %v1786
      %v1792 = vmul.f32 1.0, %v1791
      %v1793 = vmul.f32 %v1633, %v1687
      %v1794 = vmul.f32 %v1634, %v1702
      %v1795 = vmul.f32 %v1635, %v1717
      %v1796 = vmul.f32 %v1636, %v1732
      %v1797 = vmul.f32 %v1637, %v1747
      %v1798 = vmul.f32 %v1638, %v1762
      %v1799 = vmul.f32 %v1639, %v1777
      %v1800 = vmul.f32 %v1640, %v1792
      %v1801 = vpack.c.bf16 %v1793, %v1793
      %v1802 = vpack.c.bf16 %v1794, %v1794
      %v1803 = vpack.c.bf16 %v1795, %v1795
      %v1804 = vpack.c.bf16 %v1796, %v1796
      %v1805 = vpack.c.bf16 %v1797, %v1797
      %v1806 = vpack.c.bf16 %v1798, %v1798
      %v1807 = vpack.c.bf16 %v1799, %v1799
      %v1808 = vpack.c.bf16 %v1800, %v1800
      %1809 = vst [vmem:[%s521] sm:$0xf] %v1801
      %1810 = vst [vmem:[%s521 + $0x4] sm:$0xf] %v1802
      %1811 = vst [vmem:[%s521 + $0x8] sm:$0xf] %v1803
      %1812 = vst [vmem:[%s521 + $0xc] sm:$0xf] %v1804
      %1813 = vst [vmem:[%s521 + $0x10] sm:$0xf] %v1805
      %1814 = vst [vmem:[%s521 + $0x14] sm:$0xf] %v1806
      %1815 = vst [vmem:[%s521 + $0x18] sm:$0xf] %v1807
      %1816 = vst [vmem:[%s521 + $0x1c] sm:$0xf] %v1808
      %p1817 = scmp.eq.s32.totalorder %s27, 0
      // Predicated region
      $region65: #{_lambda_.11} parent=55 // pred_check
        %p1818 = pneg %p1817
      $region66: #{_lambda_.11} parent=55 // pred_check_branch
        %1820 = sbr.rel (%p1818) target = $region68
      $region67: #{_lambda_.11} parent=55 // pred_region
        %1821 = vst [vmem:[#allocation3] sm:$0x1] 0.0
      $region68: #{_lambda_.11} parent=55 // pred_fallthru
        _
      %v1822 = vadd.f32 %v1793, %v1794
      %v1823 = vadd.f32 %v1822, %v1795
      %v1824 = vadd.f32 %v1823, %v1796
      %v1825 = vadd.f32 %v1824, %v1797
      %v1826 = vadd.f32 %v1825, %v1798
      %v1827 = vadd.f32 %v1826, %v1799
      %v1828 = vadd.f32 %v1827, %v1800
      %v1829 = vld [vmem:[#allocation3] sm:$0x1]
      %v1830 = vrot.slane %v1828, 4
      %v1831 = vadd.f32 %v1828, %v1830
      %v1832 = vrot.slane %v1831, 2
      %v1833 = vadd.f32 %v1831, %v1832
      %v1834 = vrot.slane %v1833, 1
      %v1835 = vadd.f32 %v1833, %v1834
      %v1836 = vadd.f32 %v1829, %v1835
      %1837 = vst [vmem:[#allocation3] sm:$0x1] %v1836
      // Predicated region
      $region69: #{_lambda_.11} parent=55 // pred_check
        %p1838 = pneg %p1817
      $region70: #{_lambda_.11} parent=55 // pred_check_branch
        %1840 = sbr.rel (%p1838) target = $region72
      $region71: #{_lambda_.11} parent=55 // pred_region
        %v1841 = vld [vmem:[#allocation3] sm:$0x1]
        %v1842 = vmul.f32 %v1841, 0.015625
        %v1843 = vld [vmem:[%s5] sm:$0xf]
        %v1844 = vld [vmem:[%s5 + $0x4] sm:$0xf]
        %v1845 = vld [vmem:[%s5 + $0x8] sm:$0xf]
        %v1846 = vld [vmem:[%s5 + $0xc] sm:$0xf]
        %v1847 = vld [vmem:[%s5 + $0x10] sm:$0xf]
        %v1848 = vld [vmem:[%s5 + $0x14] sm:$0xf]
        %v1849 = vld [vmem:[%s5 + $0x18] sm:$0xf]
        %v1850 = vld [vmem:[%s5 + $0x1c] sm:$0xf]
        %v1851 = vld [vmem:[%s5 + $0x20] sm:$0xf]
        %v1852 = vld [vmem:[%s5 + $0x24] sm:$0xf]
        %v1853 = vld [vmem:[%s5 + $0x28] sm:$0xf]
        %v1854 = vld [vmem:[%s5 + $0x2c] sm:$0xf]
        %v1855 = vld [vmem:[%s5 + $0x30] sm:$0xf]
        %v1856 = vld [vmem:[%s5 + $0x34] sm:$0xf]
        %v1857 = vld [vmem:[%s5 + $0x38] sm:$0xf]
        %v1858 = vld [vmem:[%s5 + $0x3c] sm:$0xf]
        %v1859 = vpack.c.bf16 %v1842, %v1842
        %v1861 = vpack.i.b16 %v1859, %v1859
        %v1863 = vperm.slane %v1861, 0
        %v1880 = vunpack.c.l.b16 %v1843
        %v1881 = vunpack.c.l.b16 %v1844
        %v1882 = vunpack.c.l.b16 %v1845
        %v1883 = vunpack.c.l.b16 %v1846
        %v1884 = vunpack.c.l.b16 %v1847
        %v1885 = vunpack.c.l.b16 %v1848
        %v1886 = vunpack.c.l.b16 %v1849
        %v1887 = vunpack.c.l.b16 %v1850
        %v1888 = vunpack.c.l.b16 %v1851
        %v1889 = vunpack.c.l.b16 %v1852
        %v1890 = vunpack.c.l.b16 %v1853
        %v1891 = vunpack.c.l.b16 %v1854
        %v1892 = vunpack.c.l.b16 %v1855
        %v1893 = vunpack.c.l.b16 %v1856
        %v1894 = vunpack.c.l.b16 %v1857
        %v1895 = vunpack.c.l.b16 %v1858
        %v1896 = vpack.c.b16 %v1881, %v1880
        %v1897 = vpack.c.b16 %v1883, %v1882
        %v1898 = vpack.c.b16 %v1885, %v1884
        %v1899 = vpack.c.b16 %v1887, %v1886
        %v1900 = vpack.c.b16 %v1889, %v1888
        %v1901 = vpack.c.b16 %v1891, %v1890
        %v1902 = vpack.c.b16 %v1893, %v1892
        %v1903 = vpack.c.b16 %v1895, %v1894
        %1912 = vmatpush.bf16.msra.mxu0 %v1903
        %1913 = vmatpush.bf16.msra.mxu0 %v1902
        %1914 = vmatpush.bf16.msra.mxu0 %v1901
        %1915 = vmatpush.bf16.msra.mxu0 %v1900
        %1916 = vmatpush.bf16.msra.mxu0 %v1899
        %1917 = vmatpush.bf16.msra.mxu0 %v1898
        %1918 = vmatpush.bf16.msra.mxu0 %v1897
        %1919 = vmatpush.bf16.msra.mxu0 %v1896
        %1920 = vmatmul.bf16.gmra.mxu0 %v1863
        %v1921 = vpop.f32.mrf.mxu0
        %v1922 = vadd.f32 0.0, %v1921
        %v1923 = vpop.f32.mrf.mxu0
        %1924 = vdwg.mxu0
        %v1925 = vld [vmem:[%s6] sm:$0x1]
        %v1926 = vadd.f32 %v1922, %v1925
        %v1927 = vxor.u32 %v1926, 2147483648
        %v1928 = vmul.f32 %v1927, 1.442695
        %v1929 = vpow.pop %v1928
        %v1930 = vadd.f32 %v1929, 1.0
        %v1931 = vrcp.pop %v1930
        %v1932 = vmul.f32 %v1930, %v1931
        %v1933 = vsub.f32 1.0, %v1932
        %v1934 = vmul.f32 %v1931, %v1933
        %v1935 = vadd.f32 %v1931, %v1934
        %vm1936 = vweird.f32 %v1930
        %vm1937 = vweird.f32 %v1931
        %vm1938 = vmor %vm1936, %vm1937
        %v1939 = vsel %vm1938, %v1931, %v1935
        %v1940 = vand.u32 2147483647, %v1930
        %vm1941 = vcmp.eq.f32.partialorder %v1940, 8.507059e+37
        %v1942 = vand.u32 %v1930, 2147483648
        %v1943 = vor.u32 1.1754944e-38, %v1942
        %v1944 = vsel %vm1941, %v1943, %v1939
        %v1945 = vmul.f32 1.0, %v1944
        %v1946 = vmul.f32 %v1926, %v1945
        %v1947 = vld [vmem:[%s7] sm:$0xf]
        %v1948 = vld [vmem:[%s7 + $0x4] sm:$0xf]
        %v1949 = vld [vmem:[%s7 + $0x8] sm:$0xf]
        %v1950 = vld [vmem:[%s7 + $0xc] sm:$0xf]
        %v1951 = vld [vmem:[%s7 + $0x10] sm:$0xf]
        %v1952 = vld [vmem:[%s7 + $0x14] sm:$0xf]
        %v1953 = vld [vmem:[%s7 + $0x18] sm:$0xf]
        %v1954 = vld [vmem:[%s7 + $0x1c] sm:$0xf]
        %v1955 = vld [vmem:[%s7 + $0x20] sm:$0xf]
        %v1956 = vld [vmem:[%s7 + $0x24] sm:$0xf]
        %v1957 = vld [vmem:[%s7 + $0x28] sm:$0xf]
        %v1958 = vld [vmem:[%s7 + $0x2c] sm:$0xf]
        %v1959 = vld [vmem:[%s7 + $0x30] sm:$0xf]
        %v1960 = vld [vmem:[%s7 + $0x34] sm:$0xf]
        %v1961 = vld [vmem:[%s7 + $0x38] sm:$0xf]
        %v1962 = vld [vmem:[%s7 + $0x3c] sm:$0xf]
        %v1963 = vpack.c.bf16 %v1946, %v1946
        %v1965 = vpack.i.b16 %v1963, %v1963
        %v1967 = vperm.slane %v1965, 0
        %v1984 = vunpack.c.l.b16 %v1947
        %v1985 = vunpack.c.l.b16 %v1948
        %v1986 = vunpack.c.l.b16 %v1949
        %v1987 = vunpack.c.l.b16 %v1950
        %v1988 = vunpack.c.l.b16 %v1951
        %v1989 = vunpack.c.l.b16 %v1952
        %v1990 = vunpack.c.l.b16 %v1953
        %v1991 = vunpack.c.l.b16 %v1954
        %v1992 = vunpack.c.l.b16 %v1955
        %v1993 = vunpack.c.l.b16 %v1956
        %v1994 = vunpack.c.l.b16 %v1957
        %v1995 = vunpack.c.l.b16 %v1958
        %v1996 = vunpack.c.l.b16 %v1959
        %v1997 = vunpack.c.l.b16 %v1960
        %v1998 = vunpack.c.l.b16 %v1961
        %v1999 = vunpack.c.l.b16 %v1962
        %v2000 = vpack.c.b16 %v1985, %v1984
        %v2001 = vpack.c.b16 %v1987, %v1986
        %v2002 = vpack.c.b16 %v1989, %v1988
        %v2003 = vpack.c.b16 %v1991, %v1990
        %v2004 = vpack.c.b16 %v1993, %v1992
        %v2005 = vpack.c.b16 %v1995, %v1994
        %v2006 = vpack.c.b16 %v1997, %v1996
        %v2007 = vpack.c.b16 %v1999, %v1998
        %2016 = vmatpush.bf16.msra.mxu0 %v2007
        %2017 = vmatpush.bf16.msra.mxu0 %v2006
        %2018 = vmatpush.bf16.msra.mxu0 %v2005
        %2019 = vmatpush.bf16.msra.mxu0 %v2004
        %2020 = vmatpush.bf16.msra.mxu0 %v2003
        %2021 = vmatpush.bf16.msra.mxu0 %v2002
        %2022 = vmatpush.bf16.msra.mxu0 %v2001
        %2023 = vmatpush.bf16.msra.mxu0 %v2000
        %2024 = vmatmul.bf16.gmra.mxu0 %v1967
        %v2025 = vpop.f32.mrf.mxu0
        %v2026 = vadd.f32 0.0, %v2025
        %v2027 = vpop.f32.mrf.mxu0
        %2028 = vdwg.mxu0
        %v2029 = vld [vmem:[%s8] sm:$0x1]
        %v2030 = vadd.f32 %v2026, %v2029
        %v2031 = vxor.u32 %v2030, 2147483648
        %v2032 = vmul.f32 %v2031, 1.442695
        %v2033 = vpow.pop %v2032
        %v2034 = vadd.f32 %v2033, 1.0
        %v2035 = vrcp.pop %v2034
        %v2036 = vmul.f32 %v2034, %v2035
        %v2037 = vsub.f32 1.0, %v2036
        %v2038 = vmul.f32 %v2035, %v2037
        %v2039 = vadd.f32 %v2035, %v2038
        %vm2040 = vweird.f32 %v2034
        %vm2041 = vweird.f32 %v2035
        %vm2042 = vmor %vm2040, %vm2041
        %v2043 = vsel %vm2042, %v2035, %v2039
        %v2044 = vand.u32 2147483647, %v2034
        %vm2045 = vcmp.eq.f32.partialorder %v2044, 8.507059e+37
        %v2046 = vand.u32 %v2034, 2147483648
        %v2047 = vor.u32 1.1754944e-38, %v2046
        %v2048 = vsel %vm2045, %v2047, %v2043
        %v2049 = vmul.f32 1.0, %v2048
        %v2050 = vpack.c.bf16 %v2049, %v2049
        %v2051 = vld [vmem:[%s525] sm:$0x1]
        %v2052 = vsel %vm644, %v2050, %v2051
        %2053 = vst [vmem:[%s525] sm:$0x1] %v2052
      $region72: #{_lambda_.11} parent=55 // pred_fallthru
        _
      %s2054 = smul.u32 8, %s27
      %p2055 = scmp.lt.s32.totalorder %s26, 1
      %s2056 = scalar_select %p2055, %s26, 1
      %p2057 = scmp.lt.s32.totalorder %s2054, 7
      %s2058 = scalar_select %p2057, %s2054, 7
      %s2059 = smul.addr %s2056, 8
      %s2060 = sadd.s32 %s2058, %s2059
      %s2061 = smul.addr %s2060, 4
      %s2062 = scalar_lea.vmem %s9, %s2061
      %p2063 = scmp.lt.s32.totalorder %s26, 1
      %s2064 = scalar_select %p2063, %s26, 1
      %s2065 = scalar_lea.vmem %s10, %s2064
      // Predicated region
      $region73: #{_lambda_.11} parent=55 // pred_check
        %p2066 = pneg %p280
      $region74: #{_lambda_.11} parent=55 // pred_check_branch
        %2068 = sbr.rel (%p2066) target = $region76
      $region75: #{_lambda_.11} parent=55 // pred_region
        %s2069 = smul.u32 8, %s27
      $region76: #{_lambda_.11} parent=55 // pred_fallthru
        _
      // Predicated region
      $region77: #{_lambda_.11} parent=55 // pred_check
        %p2070 = pneg %p306
      $region78: #{_lambda_.11} parent=55 // pred_check_branch
        %2072 = sbr.rel (%p2070) target = $region80
      $region79: #{_lambda_.11} parent=55 // pred_region
        _
      $region80: #{_lambda_.11} parent=55 // pred_fallthru
        _
    $region56: #{_lambda_.11} parent=5 // pred_fallthru
      _
    %p2073 = scmp.le.s32.totalorder 2, %s17
    // Predicated region
    $region81: #{_lambda_.11} parent=5 // pred_check
      %p2074 = pneg %p2073
    $region82: #{_lambda_.11} parent=5 // pred_check_branch
      %2076 = sbr.rel (%p2074) target = $region84
    $region83: #{_lambda_.11} parent=5 // pred_region
      %s2077 = ssub.s32 %s17, 2
      // Predicated region
      $region85: #{_lambda_.11} parent=83 // pred_check
        %p2078 = pneg %p286
      $region86: #{_lambda_.11} parent=83 // pred_check_branch
        %2080 = sbr.rel (%p2078) target = $region88
      $region87: #{_lambda_.11} parent=83 // pred_region
        %s2081 = smul.u32 8, %s29
        %p2082 = scmp.lt.s32.totalorder %s28, 1
        %s2083 = scalar_select %p2082, %s28, 1
        %p2084 = scmp.lt.s32.totalorder %s2081, 7
        %s2085 = scalar_select %p2084, %s2081, 7
        %s2086 = smul.addr %s2083, 8
        %s2087 = sadd.s32 %s2085, %s2086
        %s2088 = smul.addr %s2087, 4
        %s2089 = scalar_lea.vmem %s9, %s2088
      $region88: #{_lambda_.11} parent=83 // pred_fallthru
        _
      // Predicated region
      $region89: #{_lambda_.11} parent=83 // pred_check
        %p2090 = pneg %p312
      $region90: #{_lambda_.11} parent=83 // pred_check_branch
        %2092 = sbr.rel (%p2090) target = $region92
      $region91: #{_lambda_.11} parent=83 // pred_region
        %p2093 = scmp.lt.s32.totalorder %s28, 1
        %s2094 = scalar_select %p2093, %s28, 1
        %s2095 = scalar_lea.vmem %s10, %s2094
      $region92: #{_lambda_.11} parent=83 // pred_fallthru
        _
    $region84: #{_lambda_.11} parent=5 // pred_fallthru
      _
  $region6: #{_lambda_.11} parent=0 // loop_footer
    %s21 = sadd.s32 1, %s17
  $region7: #{_lambda_.11} parent=0 // loop_footer_branch
    %16 = sbr.rel target = $region3
  $region8: #{_lambda_.11} parent=0 // loop_exit
    _

// kernel: _lambda_.19
$region0: #{_lambda_.19}
  #allocation0 [shape = 'u32[]', space=smem, size = 0x4, offset = 0x4, fixed_abs, tag = 'smem constant byte address 0x4 - core index']
  #allocation1 [shape = 'u32[72,128]{1,0:T(1,128)}', space=vmem, size = 0x9000, scoped, tag = 'internal scratch']
  #allocation2 [shape = 'f32[1,640]{1,0:T(1,128)}', space=vmem, size = 0xa00, scoped, tag = 'scratch operand']
  %s0 = inlined_call_operand.vmem [shape: bf16[2,64,128], index: 0, kind: input, shape index: {}]
  %s1 = inlined_call_operand.vmem [shape: bf16[128,640], index: 1, kind: input, shape index: {}]
  %s2 = inlined_call_operand.vmem [shape: f32[1,640], index: 2, kind: input, shape index: {}]
  %s3 = inlined_call_operand.vmem [shape: bf16[640,128], index: 3, kind: input, shape index: {}]
  %s4 = inlined_call_operand.vmem [shape: f32[1,128], index: 4, kind: input, shape index: {}]
  %s5 = inlined_call_operand.hbm [shape: f32[2,1,128], index: 5, kind: output, shape index: {}]
  %s6 = sld [smem:[#allocation0]]
  $region61: #{_lambda_.19} parent=0
    _
  %s8 = ssub.s32 1, %s6
  %s9 = scalar_select 0, %s8, %s6
  $region1: #{_lambda_.19} parent=0
    #allocation3 [shape = 'u8[1024]{0}', space=vmem, size = 0x400, scoped, tag = 'output window, operand 0']
    #allocation4 [shape = 's32[2]{0}', space=sflag, size = 0x8, scoped, tag = 'scoped memory for _lambda_.19']
    %10 = vsyncpa [#allocation4], 0
    %s11 = scalar_lea.sflag [#allocation4], 1
    %12 = vsyncpa %s11, 0
    loop: start=0, step=1, limit=4
    $region2: #{_lambda_.19} parent=1 // loop_pre_header
      _
    $region3: #{_lambda_.19} parent=1 // loop_header
      %s14 = sphi 0, %s18
      %p15 = scmp.ge.s32.totalorder %s14, 4
      %s21 = sphi 0, %s33
      %s22 = sphi 0, %s29
      %s23 = sphi 0, %s21
      %s24 = sphi 0, %s22
      %s25 = sphi 0, %s23
      %s26 = sphi 0, %s24
      %s38 = sphi 0, %s40
      %s41 = sphi 0, %s38
      %s42 = sphi 0, %s41
      %s58 = sphi 0, %s42
      %s62 = sphi 0, %s62
      %s64 = sphi 0, %s62
      %s65 = sphi 0, %s64
      %s79 = sphi 0, %s65
      %s83 = sphi 0, %s83
      %s85 = sphi 0, %s83
      %s86 = sphi 0, %s85
      %s100 = sphi 0, %s86
      %s104 = sphi 0, %s104
      %s106 = sphi 0, %s104
      %s107 = sphi 0, %s106
      %s121 = sphi 0, %s107
      %s125 = sphi 0, %s125
      %s127 = sphi 0, %s125
      %s128 = sphi 0, %s127
      %s142 = sphi 0, %s128
      %s148 = sphi 0, %s150
      %s151 = sphi 0, %s148
      %s152 = sphi 0, %s151
      %s168 = sphi 0, %s152
    $region4: #{_lambda_.19} parent=1 // loop_header_branch
      %17 = sbr.rel (%p15) target = $region8
    $region5: #{_lambda_.19} parent=1 // loop_body
      %s19 = ssub.s32 %s14, 1
      %s20 = ssub.s32 %s14, 2
      %s27 = sadd.s32 1, %s22
      %p28 = scmp.ge.s32.totalorder %s27, 1
      %s29 = scalar_select %p28, 0, %s27
      %s30 = sadd.s32 1, %s21
      %s31 = scalar_select %p28, %s30, %s21
      %p32 = scmp.ge.s32.totalorder %s31, 2
      %s33 = scalar_select %p32, 0, %s31
      %s34 = ssub.s32 %s21, %s33
      %s35 = ssub.s32 %s22, %s29
      %s36 = sor.u32 %s34, %s35
      %p37 = scmp.eq.s32.totalorder %s36, 0
      %s39 = sadd.s32 %s38, 1
      %s40 = scalar_select %p37, %s38, %s39
      %p43 = pneg %p37
      %p44 = scmp.eq.s32.totalorder %s14, 1
      %p45 = por %p43, %p44
      %p46 = scmp.ne.s32.totalorder %s38, %s41
      %p47 = scmp.eq.s32.totalorder %s14, 0
      %p48 = por %p46, %p47
      %p49 = scmp.ne.s32.totalorder %s38, %s41
      %p50 = scmp.eq.s32.totalorder %s19, 1
      %p51 = por %p49, %p50
      %p52 = scmp.ne.s32.totalorder %s41, %s42
      %p53 = scmp.eq.s32.totalorder %s19, 0
      %p54 = por %p52, %p53
      %p55 = scmp.ne.s32.totalorder %s41, %s42
      %p56 = scmp.eq.s32.totalorder %s20, 1
      %p57 = por %p55, %p56
      %p59 = scmp.ne.s32.totalorder %s42, %s58
      %p60 = scmp.eq.s32.totalorder %s20, 0
      %p61 = por %p59, %p60
      %s63 = sadd.s32 %s62, 1
      %p66 = scmp.eq.s32.totalorder %s14, 1
      %p67 = scmp.ne.s32.totalorder %s62, %s64
      %p68 = scmp.eq.s32.totalorder %s14, 0
      %p69 = por %p67, %p68
      %p70 = scmp.ne.s32.totalorder %s62, %s64
      %p71 = scmp.eq.s32.totalorder %s19, 1
      %p72 = por %p70, %p71
      %p73 = scmp.ne.s32.totalorder %s64, %s65
      %p74 = scmp.eq.s32.totalorder %s19, 0
      %p75 = por %p73, %p74
      %p76 = scmp.ne.s32.totalorder %s64, %s65
      %p77 = scmp.eq.s32.totalorder %s20, 1
      %p78 = por %p76, %p77
      %p80 = scmp.ne.s32.totalorder %s65, %s79
      %p81 = scmp.eq.s32.totalorder %s20, 0
      %p82 = por %p80, %p81
      %s84 = sadd.s32 %s83, 1
      %p87 = scmp.eq.s32.totalorder %s14, 1
      %p88 = scmp.ne.s32.totalorder %s83, %s85
      %p89 = scmp.eq.s32.totalorder %s14, 0
      %p90 = por %p88, %p89
      %p91 = scmp.ne.s32.totalorder %s83, %s85
      %p92 = scmp.eq.s32.totalorder %s19, 1
      %p93 = por %p91, %p92
      %p94 = scmp.ne.s32.totalorder %s85, %s86
      %p95 = scmp.eq.s32.totalorder %s19, 0
      %p96 = por %p94, %p95
      %p97 = scmp.ne.s32.totalorder %s85, %s86
      %p98 = scmp.eq.s32.totalorder %s20, 1
      %p99 = por %p97, %p98
      %p101 = scmp.ne.s32.totalorder %s86, %s100
      %p102 = scmp.eq.s32.totalorder %s20, 0
      %p103 = por %p101, %p102
      %s105 = sadd.s32 %s104, 1
      %p108 = scmp.eq.s32.totalorder %s14, 1
      %p109 = scmp.ne.s32.totalorder %s104, %s106
      %p110 = scmp.eq.s32.totalorder %s14, 0
      %p111 = por %p109, %p110
      %p112 = scmp.ne.s32.totalorder %s104, %s106
      %p113 = scmp.eq.s32.totalorder %s19, 1
      %p114 = por %p112, %p113
      %p115 = scmp.ne.s32.totalorder %s106, %s107
      %p116 = scmp.eq.s32.totalorder %s19, 0
      %p117 = por %p115, %p116
      %p118 = scmp.ne.s32.totalorder %s106, %s107
      %p119 = scmp.eq.s32.totalorder %s20, 1
      %p120 = por %p118, %p119
      %p122 = scmp.ne.s32.totalorder %s107, %s121
      %p123 = scmp.eq.s32.totalorder %s20, 0
      %p124 = por %p122, %p123
      %s126 = sadd.s32 %s125, 1
      %p129 = scmp.eq.s32.totalorder %s14, 1
      %p130 = scmp.ne.s32.totalorder %s125, %s127
      %p131 = scmp.eq.s32.totalorder %s14, 0
      %p132 = por %p130, %p131
      %p133 = scmp.ne.s32.totalorder %s125, %s127
      %p134 = scmp.eq.s32.totalorder %s19, 1
      %p135 = por %p133, %p134
      %p136 = scmp.ne.s32.totalorder %s127, %s128
      %p137 = scmp.eq.s32.totalorder %s19, 0
      %p138 = por %p136, %p137
      %p139 = scmp.ne.s32.totalorder %s127, %s128
      %p140 = scmp.eq.s32.totalorder %s20, 1
      %p141 = por %p139, %p140
      %p143 = scmp.ne.s32.totalorder %s128, %s142
      %p144 = scmp.eq.s32.totalorder %s20, 0
      %p145 = por %p143, %p144
      %s146 = ssub.s32 %s21, %s33
      %p147 = scmp.eq.s32.totalorder %s146, 0
      %s149 = sadd.s32 %s148, 1
      %s150 = scalar_select %p147, %s148, %s149
      %p153 = pneg %p147
      %p154 = scmp.eq.s32.totalorder %s14, 1
      %p155 = por %p153, %p154
      %p156 = scmp.ne.s32.totalorder %s148, %s151
      %p157 = scmp.eq.s32.totalorder %s14, 0
      %p158 = por %p156, %p157
      %p159 = scmp.ne.s32.totalorder %s148, %s151
      %p160 = scmp.eq.s32.totalorder %s19, 1
      %p161 = por %p159, %p160
      %p162 = scmp.ne.s32.totalorder %s151, %s152
      %p163 = scmp.eq.s32.totalorder %s19, 0
      %p164 = por %p162, %p163
      %p165 = scmp.ne.s32.totalorder %s151, %s152
      %p166 = scmp.eq.s32.totalorder %s20, 1
      %p167 = por %p165, %p166
      %p169 = scmp.ne.s32.totalorder %s152, %s168
      %p170 = scmp.eq.s32.totalorder %s20, 0
      %p171 = por %p169, %p170
      %p172 = scmp.le.s32.totalorder 1, %s14
      %p173 = scmp.lt.s32.totalorder %s14, 3
      %p174 = pnand %p172, %p173
      %p175 = pneg %p174
      // Predicated region
      $region9: #{_lambda_.19} parent=5 // pred_check
        _
      $region10: #{_lambda_.19} parent=5 // pred_check_branch
        %177 = sbr.rel (%p174) target = $region12
      $region11: #{_lambda_.19} parent=5 // pred_region
        %s178 = ssub.s32 %s14, 1
        // Predicated region
        $region13: #{_lambda_.19} parent=11 // pred_check
          %p179 = pneg %p75
        $region14: #{_lambda_.19} parent=11 // pred_check_branch
          %181 = sbr.rel (%p179) target = $region16
        $region15: #{_lambda_.19} parent=11 // pred_region
          _
        $region16: #{_lambda_.19} parent=11 // pred_fallthru
          _
        // Predicated region
        $region17: #{_lambda_.19} parent=11 // pred_check
          %p182 = pneg %p96
        $region18: #{_lambda_.19} parent=11 // pred_check_branch
          %184 = sbr.rel (%p182) target = $region20
        $region19: #{_lambda_.19} parent=11 // pred_region
          _
        $region20: #{_lambda_.19} parent=11 // pred_fallthru
          _
        // Predicated region
        $region21: #{_lambda_.19} parent=11 // pred_check
          %p185 = pneg %p117
        $region22: #{_lambda_.19} parent=11 // pred_check_branch
          %187 = sbr.rel (%p185) target = $region24
        $region23: #{_lambda_.19} parent=11 // pred_region
          _
        $region24: #{_lambda_.19} parent=11 // pred_fallthru
          _
        // Predicated region
        $region25: #{_lambda_.19} parent=11 // pred_check
          %p188 = pneg %p138
        $region26: #{_lambda_.19} parent=11 // pred_check_branch
          %190 = sbr.rel (%p188) target = $region28
        $region27: #{_lambda_.19} parent=11 // pred_region
          _
        $region28: #{_lambda_.19} parent=11 // pred_fallthru
          _
      $region12: #{_lambda_.19} parent=5 // pred_fallthru
        _
      %p191 = scmp.lt.s32.totalorder %s14, 2
      // Predicated region
      $region29: #{_lambda_.19} parent=5 // pred_check
        %p192 = pneg %p191
      $region30: #{_lambda_.19} parent=5 // pred_check_branch
        %194 = sbr.rel (%p192) target = $region32
      $region31: #{_lambda_.19} parent=5 // pred_region
        // Predicated region
        $region33: #{_lambda_.19} parent=31 // pred_check
          %p195 = pneg %p48
        $region34: #{_lambda_.19} parent=31 // pred_check_branch
          %197 = sbr.rel (%p195) target = $region36
        $region35: #{_lambda_.19} parent=31 // pred_region
          %s198 = smul.u32 8, %s22
          %p199 = scmp.lt.s32.totalorder %s21, 1
          %s200 = scalar_select %p199, %s21, 1
          %p201 = scmp.lt.s32.totalorder %s198, 7
          %s202 = scalar_select %p201, %s198, 7
          %s203 = smul.addr %s200, 8
          %s204 = sadd.s32 %s202, %s203
          %s205 = smul.addr %s204, 4
          %s206 = scalar_lea.vmem %s0, %s205
          %s207 = smul.u32 8, %s22
        $region36: #{_lambda_.19} parent=31 // pred_fallthru
          _
      $region32: #{_lambda_.19} parent=5 // pred_fallthru
        _
      %p208 = scmp.le.s32.totalorder 1, %s14
      %p209 = scmp.lt.s32.totalorder %s14, 3
      %p210 = pnand %p208, %p209
      %p211 = pneg %p210
      // Predicated region
      $region37: #{_lambda_.19} parent=5 // pred_check
        _
      $region38: #{_lambda_.19} parent=5 // pred_check_branch
        %213 = sbr.rel (%p210) target = $region40
      $region39: #{_lambda_.19} parent=5 // pred_region
        %s214 = ssub.s32 %s14, 1
        %s215 = smul.u32 8, %s24
        %p216 = scmp.lt.s32.totalorder %s23, 1
        %s217 = scalar_select %p216, %s23, 1
        %p218 = scmp.lt.s32.totalorder %s215, 7
        %s219 = scalar_select %p218, %s215, 7
        %s220 = smul.addr %s217, 8
        %s221 = sadd.s32 %s219, %s220
        %s222 = smul.addr %s221, 4
        %s223 = scalar_lea.vmem %s0, %s222
        %p224 = pneg %p54
        %p225 = pneg %p51
        %p226 = pneg %p75
        %p227 = pneg %p72
        %p228 = pneg %p96
        %p229 = pneg %p93
        %p230 = pneg %p117
        %p231 = pneg %p114
        %p232 = pneg %p138
        %p233 = pneg %p135
        %p234 = pneg %p164
        %p235 = pneg %p161
        %s236 = sand.u32 %s151, 1
        %s237 = scalar_lea.sflag [#allocation4], %s236
        %s238 = sand.u32 %s151, 1
        %s239 = scalar_lea.vmem [#allocation3], %s238
        %s240 = smul.u32 8, %s24
        %p241 = scmp.lt.s32.totalorder %s23, 1
        %s242 = scalar_select %p241, %s23, 1
        %p243 = scmp.lt.s32.totalorder %s240, 7
        %s244 = scalar_select %p243, %s240, 7
        %s245 = smul.addr %s242, 8
        %s246 = sadd.s32 %s244, %s245
        %s247 = smul.addr %s246, 4
        %s248 = scalar_lea.vmem %s0, %s247
        %s249 = smul.u32 8, %s24
        %p250 = scmp.eq.s32.totalorder %s24, 0
        // Predicated region
        $region41: #{_lambda_.19} parent=39 // pred_check
          %p251 = pneg %p250
        $region42: #{_lambda_.19} parent=39 // pred_check_branch
          %253 = sbr.rel (%p251) target = $region44
        $region43: #{_lambda_.19} parent=39 // pred_region
          %v254 = vlaneseq
          %vm255 = vcmp.ge.s32.totalorder %v254, 0
          %vm256 = vcmp.lt.s32.totalorder %v254, 640
          %vm257 = vmand %vm255, %vm256
          %258 = vst.msk [vmem:[#allocation2] sm:$0x1f] %vm257, 0.0
        $region44: #{_lambda_.19} parent=39 // pred_fallthru
          _
        %v259 = vld [vmem:[%s248] sm:$0xf]
        %v260 = vld [vmem:[%s248 + $0x4] sm:$0xf]
        %v261 = vld [vmem:[%s248 + $0x8] sm:$0xf]
        %v262 = vld [vmem:[%s248 + $0xc] sm:$0xf]
        %v263 = vld [vmem:[%s248 + $0x10] sm:$0xf]
        %v264 = vld [vmem:[%s248 + $0x14] sm:$0xf]
        %v265 = vld [vmem:[%s248 + $0x18] sm:$0xf]
        %v266 = vld [vmem:[%s248 + $0x1c] sm:$0xf]
        %v267 = vld [vmem:[%s1] sm:$0xff]
        %v268 = vld [vmem:[%s1 + $0x8] sm:$0xff]
        %v269 = vld [vmem:[%s1 + $0x10] sm:$0xf]
        %v270 = vld [vmem:[%s1 + $0x14] sm:$0xff]
        %v271 = vld [vmem:[%s1 + $0x1c] sm:$0xff]
        %v272 = vld [vmem:[%s1 + $0x24] sm:$0xf]
        %v273 = vld [vmem:[%s1 + $0x28] sm:$0xff]
        %v274 = vld [vmem:[%s1 + $0x30] sm:$0xff]
        %v275 = vld [vmem:[%s1 + $0x38] sm:$0xf]
        %v276 = vld [vmem:[%s1 + $0x3c] sm:$0xff]
        %v277 = vld [vmem:[%s1 + $0x44] sm:$0xff]
        %v278 = vld [vmem:[%s1 + $0x4c] sm:$0xf]
        %v279 = vld [vmem:[%s1 + $0x50] sm:$0xff]
        %v280 = vld [vmem:[%s1 + $0x58] sm:$0xff]
        %v281 = vld [vmem:[%s1 + $0x60] sm:$0xf]
        %v282 = vld [vmem:[%s1 + $0x64] sm:$0xff]
        %v283 = vld [vmem:[%s1 + $0x6c] sm:$0xff]
        %v284 = vld [vmem:[%s1 + $0x74] sm:$0xf]
        %v285 = vld [vmem:[%s1 + $0x78] sm:$0xff]
        %v286 = vld [vmem:[%s1 + $0x80] sm:$0xff]
        %v287 = vld [vmem:[%s1 + $0x88] sm:$0xf]
        %v288 = vld [vmem:[%s1 + $0x8c] sm:$0xff]
        %v289 = vld [vmem:[%s1 + $0x94] sm:$0xff]
        %v290 = vld [vmem:[%s1 + $0x9c] sm:$0xf]
        %v291 = vld [vmem:[%s1 + $0xa0] sm:$0xff]
        %v292 = vld [vmem:[%s1 + $0xa8] sm:$0xff]
        %v293 = vld [vmem:[%s1 + $0xb0] sm:$0xf]
        %v294 = vld [vmem:[%s1 + $0xb4] sm:$0xff]
        %v295 = vld [vmem:[%s1 + $0xbc] sm:$0xff]
        %v296 = vld [vmem:[%s1 + $0xc4] sm:$0xf]
        %v297 = vld [vmem:[%s1 + $0xc8] sm:$0xff]
        %v298 = vld [vmem:[%s1 + $0xd0] sm:$0xff]
        %v299 = vld [vmem:[%s1 + $0xd8] sm:$0xf]
        %v300 = vld [vmem:[%s1 + $0xdc] sm:$0xff]
        %v301 = vld [vmem:[%s1 + $0xe4] sm:$0xff]
        %v302 = vld [vmem:[%s1 + $0xec] sm:$0xf]
        %v303 = vld [vmem:[%s1 + $0xf0] sm:$0xff]
        %v304 = vld [vmem:[%s1 + $0xf8] sm:$0xff]
        %v305 = vld [vmem:[%s1 + $0x100] sm:$0xf]
        %v306 = vld [vmem:[%s1 + $0x104] sm:$0xff]
        %v307 = vld [vmem:[%s1 + $0x10c] sm:$0xff]
        %v308 = vld [vmem:[%s1 + $0x114] sm:$0xf]
        %v309 = vld [vmem:[%s1 + $0x118] sm:$0xff]
        %v310 = vld [vmem:[%s1 + $0x120] sm:$0xff]
        %v311 = vld [vmem:[%s1 + $0x128] sm:$0xf]
        %v312 = vld [vmem:[%s1 + $0x12c] sm:$0xff]
        %v313 = vld [vmem:[%s1 + $0x134] sm:$0xff]
        %v314 = vld [vmem:[%s1 + $0x13c] sm:$0xf]
        %v315 = vld [vmem:[%s2] sm:$0x1f]
        %v317 = vperm.slane %v315, 0
        %v318 = vperm.slane %v315, 1
        %v319 = vperm.slane %v315, 2
        %v320 = vperm.slane %v315, 3
        %v321 = vperm.slane %v315, 4
        %v335 = vunpack.c.l.b16 %v259
        %v336 = vunpack.c.l.b16 %v260
        %v337 = vunpack.c.l.b16 %v261
        %v338 = vunpack.c.l.b16 %v262
        %v339 = vunpack.c.l.b16 %v263
        %v340 = vunpack.c.l.b16 %v264
        %v341 = vunpack.c.l.b16 %v265
        %v342 = vunpack.c.l.b16 %v266
        %v343 = vpack.c.b16 %v336, %v335
        %v344 = vpack.c.b16 %v338, %v337
        %v345 = vpack.c.b16 %v340, %v339
        %v346 = vpack.c.b16 %v342, %v341
        %v399 = vunpack.c.l.b16 %v267
        %v400 = vunpack.c.h.b16 %v267
        %v401 = vunpack.c.l.b16 %v268
        %v402 = vunpack.c.h.b16 %v268
        %v403 = vunpack.c.l.b16 %v269
        %v404 = vunpack.c.l.b16 %v270
        %v405 = vunpack.c.h.b16 %v270
        %v406 = vunpack.c.l.b16 %v271
        %v407 = vunpack.c.h.b16 %v271
        %v408 = vunpack.c.l.b16 %v272
        %v409 = vunpack.c.l.b16 %v273
        %v410 = vunpack.c.h.b16 %v273
        %v411 = vunpack.c.l.b16 %v274
        %v412 = vunpack.c.h.b16 %v274
        %v413 = vunpack.c.l.b16 %v275
        %v414 = vunpack.c.l.b16 %v276
        %v415 = vunpack.c.h.b16 %v276
        %v416 = vunpack.c.l.b16 %v277
        %v417 = vunpack.c.h.b16 %v277
        %v418 = vunpack.c.l.b16 %v278
        %v419 = vunpack.c.l.b16 %v279
        %v420 = vunpack.c.h.b16 %v279
        %v421 = vunpack.c.l.b16 %v280
        %v422 = vunpack.c.h.b16 %v280
        %v423 = vunpack.c.l.b16 %v281
        %v424 = vunpack.c.l.b16 %v282
        %v425 = vunpack.c.h.b16 %v282
        %v426 = vunpack.c.l.b16 %v283
        %v427 = vunpack.c.h.b16 %v283
        %v428 = vunpack.c.l.b16 %v284
        %v429 = vunpack.c.l.b16 %v285
        %v430 = vunpack.c.h.b16 %v285
        %v431 = vunpack.c.l.b16 %v286
        %v432 = vunpack.c.h.b16 %v286
        %v433 = vunpack.c.l.b16 %v287
        %v434 = vunpack.c.l.b16 %v288
        %v435 = vunpack.c.h.b16 %v288
        %v436 = vunpack.c.l.b16 %v289
        %v437 = vunpack.c.h.b16 %v289
        %v438 = vunpack.c.l.b16 %v290
        %v439 = vunpack.c.l.b16 %v291
        %v440 = vunpack.c.h.b16 %v291
        %v441 = vunpack.c.l.b16 %v292
        %v442 = vunpack.c.h.b16 %v292
        %v443 = vunpack.c.l.b16 %v293
        %v444 = vunpack.c.l.b16 %v294
        %v445 = vunpack.c.h.b16 %v294
        %v446 = vunpack.c.l.b16 %v295
        %v447 = vunpack.c.h.b16 %v295
        %v448 = vunpack.c.l.b16 %v296
        %v449 = vunpack.c.l.b16 %v297
        %v450 = vunpack.c.h.b16 %v297
        %v451 = vunpack.c.l.b16 %v298
        %v452 = vunpack.c.h.b16 %v298
        %v453 = vunpack.c.l.b16 %v299
        %v454 = vunpack.c.l.b16 %v300
        %v455 = vunpack.c.h.b16 %v300
        %v456 = vunpack.c.l.b16 %v301
        %v457 = vunpack.c.h.b16 %v301
        %v458 = vunpack.c.l.b16 %v302
        %v459 = vunpack.c.l.b16 %v303
        %v460 = vunpack.c.h.b16 %v303
        %v461 = vunpack.c.l.b16 %v304
        %v462 = vunpack.c.h.b16 %v304
        %v463 = vunpack.c.l.b16 %v305
        %v464 = vunpack.c.l.b16 %v306
        %v465 = vunpack.c.h.b16 %v306
        %v466 = vunpack.c.l.b16 %v307
        %v467 = vunpack.c.h.b16 %v307
        %v468 = vunpack.c.l.b16 %v308
        %v469 = vunpack.c.l.b16 %v309
        %v470 = vunpack.c.h.b16 %v309
        %v471 = vunpack.c.l.b16 %v310
        %v472 = vunpack.c.h.b16 %v310
        %v473 = vunpack.c.l.b16 %v311
        %v474 = vunpack.c.l.b16 %v312
        %v475 = vunpack.c.h.b16 %v312
        %v476 = vunpack.c.l.b16 %v313
        %v477 = vunpack.c.h.b16 %v313
        %v478 = vunpack.c.l.b16 %v314
        %v479 = vpack.c.b16 %v404, %v399
        %v480 = vpack.c.b16 %v405, %v400
        %v481 = vpack.c.b16 %v406, %v401
        %v482 = vpack.c.b16 %v407, %v402
        %v483 = vpack.c.b16 %v408, %v403
        %v484 = vpack.c.b16 %v414, %v409
        %v485 = vpack.c.b16 %v415, %v410
        %v486 = vpack.c.b16 %v416, %v411
        %v487 = vpack.c.b16 %v417, %v412
        %v488 = vpack.c.b16 %v418, %v413
        %v489 = vpack.c.b16 %v424, %v419
        %v490 = vpack.c.b16 %v425, %v420
        %v491 = vpack.c.b16 %v426, %v421
        %v492 = vpack.c.b16 %v427, %v422
        %v493 = vpack.c.b16 %v428, %v423
        %v494 = vpack.c.b16 %v434, %v429
        %v495 = vpack.c.b16 %v435, %v430
        %v496 = vpack.c.b16 %v436, %v431
        %v497 = vpack.c.b16 %v437, %v432
        %v498 = vpack.c.b16 %v438, %v433
        %v499 = vpack.c.b16 %v444, %v439
        %v500 = vpack.c.b16 %v445, %v440
        %v501 = vpack.c.b16 %v446, %v441
        %v502 = vpack.c.b16 %v447, %v442
        %v503 = vpack.c.b16 %v448, %v443
        %v504 = vpack.c.b16 %v454, %v449
        %v505 = vpack.c.b16 %v455, %v450
        %v506 = vpack.c.b16 %v456, %v451
        %v507 = vpack.c.b16 %v457, %v452
        %v508 = vpack.c.b16 %v458, %v453
        %v509 = vpack.c.b16 %v464, %v459
        %v510 = vpack.c.b16 %v465, %v460
        %v511 = vpack.c.b16 %v466, %v461
        %v512 = vpack.c.b16 %v467, %v462
        %v513 = vpack.c.b16 %v468, %v463
        %v514 = vpack.c.b16 %v474, %v469
        %v515 = vpack.c.b16 %v475, %v470
        %v516 = vpack.c.b16 %v476, %v471
        %v517 = vpack.c.b16 %v477, %v472
        %v518 = vpack.c.b16 %v478, %v473
        %559 = vmatpush.bf16.msra.mxu0 %v514
        %560 = vmatpush.bf16.msra.mxu0 %v509
        %561 = vmatpush.bf16.msra.mxu0 %v504
        %562 = vmatpush.bf16.msra.mxu0 %v499
        %563 = vmatpush.bf16.msra.mxu0 %v494
        %564 = vmatpush.bf16.msra.mxu0 %v489
        %565 = vmatpush.bf16.msra.mxu0 %v484
        %566 = vmatpush.bf16.msra.mxu0 %v479
        %567 = vmatmul.bf16.gmra.mxu0 %v343
        %v568 = vpop.f32.mrf.mxu0
        %v569 = vadd.f32 %v317, %v568
        %v570 = vpop.f32.mrf.mxu0
        %v571 = vadd.f32 %v317, %v570
        %572 = vmatmul.bf16.gmra.mxu0 %v344
        %v573 = vpop.f32.mrf.mxu0
        %v574 = vadd.f32 %v317, %v573
        %v575 = vpop.f32.mrf.mxu0
        %v576 = vadd.f32 %v317, %v575
        %577 = vmatmul.bf16.gmra.mxu0 %v345
        %v578 = vpop.f32.mrf.mxu0
        %v579 = vadd.f32 %v317, %v578
        %v580 = vpop.f32.mrf.mxu0
        %v581 = vadd.f32 %v317, %v580
        %582 = vmatmul.bf16.gmra.mxu0 %v346
        %v583 = vpop.f32.mrf.mxu0
        %v584 = vadd.f32 %v317, %v583
        %v585 = vpop.f32.mrf.mxu0
        %v586 = vadd.f32 %v317, %v585
        %587 = vdwg.mxu0
        %588 = vmatpush.bf16.msra.mxu0 %v515
        %589 = vmatpush.bf16.msra.mxu0 %v510
        %590 = vmatpush.bf16.msra.mxu0 %v505
        %591 = vmatpush.bf16.msra.mxu0 %v500
        %592 = vmatpush.bf16.msra.mxu0 %v495
        %593 = vmatpush.bf16.msra.mxu0 %v490
        %594 = vmatpush.bf16.msra.mxu0 %v485
        %595 = vmatpush.bf16.msra.mxu0 %v480
        %596 = vmatmul.bf16.gmra.mxu0 %v343
        %v597 = vpop.f32.mrf.mxu0
        %v598 = vadd.f32 %v318, %v597
        %v599 = vpop.f32.mrf.mxu0
        %v600 = vadd.f32 %v318, %v599
        %601 = vmatmul.bf16.gmra.mxu0 %v344
        %v602 = vpop.f32.mrf.mxu0
        %v603 = vadd.f32 %v318, %v602
        %v604 = vpop.f32.mrf.mxu0
        %v605 = vadd.f32 %v318, %v604
        %606 = vmatmul.bf16.gmra.mxu0 %v345
        %v607 = vpop.f32.mrf.mxu0
        %v608 = vadd.f32 %v318, %v607
        %v609 = vpop.f32.mrf.mxu0
        %v610 = vadd.f32 %v318, %v609
        %611 = vmatmul.bf16.gmra.mxu0 %v346
        %v612 = vpop.f32.mrf.mxu0
        %v613 = vadd.f32 %v318, %v612
        %v614 = vpop.f32.mrf.mxu0
        %v615 = vadd.f32 %v318, %v614
        %616 = vdwg.mxu0
        %617 = vmatpush.bf16.msra.mxu0 %v516
        %618 = vmatpush.bf16.msra.mxu0 %v511
        %619 = vmatpush.bf16.msra.mxu0 %v506
        %620 = vmatpush.bf16.msra.mxu0 %v501
        %621 = vmatpush.bf16.msra.mxu0 %v496
        %622 = vmatpush.bf16.msra.mxu0 %v491
        %623 = vmatpush.bf16.msra.mxu0 %v486
        %624 = vmatpush.bf16.msra.mxu0 %v481
        %625 = vmatmul.bf16.gmra.mxu0 %v343
        %v626 = vpop.f32.mrf.mxu0
        %v627 = vadd.f32 %v319, %v626
        %v628 = vpop.f32.mrf.mxu0
        %v629 = vadd.f32 %v319, %v628
        %630 = vmatmul.bf16.gmra.mxu0 %v344
        %v631 = vpop.f32.mrf.mxu0
        %v632 = vadd.f32 %v319, %v631
        %v633 = vpop.f32.mrf.mxu0
        %v634 = vadd.f32 %v319, %v633
        %635 = vmatmul.bf16.gmra.mxu0 %v345
        %v636 = vpop.f32.mrf.mxu0
        %v637 = vadd.f32 %v319, %v636
        %v638 = vpop.f32.mrf.mxu0
        %v639 = vadd.f32 %v319, %v638
        %640 = vmatmul.bf16.gmra.mxu0 %v346
        %v641 = vpop.f32.mrf.mxu0
        %v642 = vadd.f32 %v319, %v641
        %v643 = vpop.f32.mrf.mxu0
        %v644 = vadd.f32 %v319, %v643
        %645 = vdwg.mxu0
        %646 = vmatpush.bf16.msra.mxu0 %v517
        %647 = vmatpush.bf16.msra.mxu0 %v512
        %648 = vmatpush.bf16.msra.mxu0 %v507
        %649 = vmatpush.bf16.msra.mxu0 %v502
        %650 = vmatpush.bf16.msra.mxu0 %v497
        %651 = vmatpush.bf16.msra.mxu0 %v492
        %652 = vmatpush.bf16.msra.mxu0 %v487
        %653 = vmatpush.bf16.msra.mxu0 %v482
        %654 = vmatmul.bf16.gmra.mxu0 %v343
        %v655 = vpop.f32.mrf.mxu0
        %v656 = vadd.f32 %v320, %v655
        %v657 = vpop.f32.mrf.mxu0
        %v658 = vadd.f32 %v320, %v657
        %659 = vmatmul.bf16.gmra.mxu0 %v344
        %v660 = vpop.f32.mrf.mxu0
        %v661 = vadd.f32 %v320, %v660
        %v662 = vpop.f32.mrf.mxu0
        %v663 = vadd.f32 %v320, %v662
        %664 = vmatmul.bf16.gmra.mxu0 %v345
        %v665 = vpop.f32.mrf.mxu0
        %v666 = vadd.f32 %v320, %v665
        %v667 = vpop.f32.mrf.mxu0
        %v668 = vadd.f32 %v320, %v667
        %669 = vmatmul.bf16.gmra.mxu0 %v346
        %v670 = vpop.f32.mrf.mxu0
        %v671 = vadd.f32 %v320, %v670
        %v672 = vpop.f32.mrf.mxu0
        %v673 = vadd.f32 %v320, %v672
        %674 = vdwg.mxu0
        %675 = vmatpush.bf16.msra.mxu0 %v518
        %676 = vmatpush.bf16.msra.mxu0 %v513
        %677 = vmatpush.bf16.msra.mxu0 %v508
        %678 = vmatpush.bf16.msra.mxu0 %v503
        %679 = vmatpush.bf16.msra.mxu0 %v498
        %680 = vmatpush.bf16.msra.mxu0 %v493
        %681 = vmatpush.bf16.msra.mxu0 %v488
        %682 = vmatpush.bf16.msra.mxu0 %v483
        %683 = vmatmul.bf16.gmra.mxu0 %v343
        %v684 = vpop.f32.mrf.mxu0
        %v685 = vadd.f32 %v321, %v684
        %v686 = vpop.f32.mrf.mxu0
        %v687 = vadd.f32 %v321, %v686
        %688 = vmatmul.bf16.gmra.mxu0 %v344
        %v689 = vpop.f32.mrf.mxu0
        %v690 = vadd.f32 %v321, %v689
        %v691 = vpop.f32.mrf.mxu0
        %v692 = vadd.f32 %v321, %v691
        %693 = vmatmul.bf16.gmra.mxu0 %v345
        %v694 = vpop.f32.mrf.mxu0
        %v695 = vadd.f32 %v321, %v694
        %v696 = vpop.f32.mrf.mxu0
        %v697 = vadd.f32 %v321, %v696
        %698 = vmatmul.bf16.gmra.mxu0 %v346
        %v699 = vpop.f32.mrf.mxu0
        %v700 = vadd.f32 %v321, %v699
        %v701 = vpop.f32.mrf.mxu0
        %v702 = vadd.f32 %v321, %v701
        %703 = vdwg.mxu0
        %v704 = vxor.u32 %v569, 2147483648
        %v705 = vxor.u32 %v598, 2147483648
        %v706 = vxor.u32 %v627, 2147483648
        %v707 = vxor.u32 %v656, 2147483648
        %v708 = vxor.u32 %v685, 2147483648
        %v709 = vxor.u32 %v571, 2147483648
        %v710 = vxor.u32 %v600, 2147483648
        %v711 = vxor.u32 %v629, 2147483648
        %v712 = vxor.u32 %v658, 2147483648
        %v713 = vxor.u32 %v687, 2147483648
        %v714 = vxor.u32 %v574, 2147483648
        %v715 = vxor.u32 %v603, 2147483648
        %v716 = vxor.u32 %v632, 2147483648
        %v717 = vxor.u32 %v661, 2147483648
        %v718 = vxor.u32 %v690, 2147483648
        %v719 = vxor.u32 %v576, 2147483648
        %v720 = vxor.u32 %v605, 2147483648
        %v721 = vxor.u32 %v634, 2147483648
        %v722 = vxor.u32 %v663, 2147483648
        %v723 = vxor.u32 %v692, 2147483648
        %v724 = vxor.u32 %v579, 2147483648
        %v725 = vxor.u32 %v608, 2147483648
        %v726 = vxor.u32 %v637, 2147483648
        %v727 = vxor.u32 %v666, 2147483648
        %v728 = vxor.u32 %v695, 2147483648
        %v729 = vxor.u32 %v581, 2147483648
        %v730 = vxor.u32 %v610, 2147483648
        %v731 = vxor.u32 %v639, 2147483648
        %v732 = vxor.u32 %v668, 2147483648
        %v733 = vxor.u32 %v697, 2147483648
        %v734 = vxor.u32 %v584, 2147483648
        %v735 = vxor.u32 %v613, 2147483648
        %v736 = vxor.u32 %v642, 2147483648
        %v737 = vxor.u32 %v671, 2147483648
        %v738 = vxor.u32 %v700, 2147483648
        %v739 = vxor.u32 %v586, 2147483648
        %v740 = vxor.u32 %v615, 2147483648
        %v741 = vxor.u32 %v644, 2147483648
        %v742 = vxor.u32 %v673, 2147483648
        %v743 = vxor.u32 %v702, 2147483648
        %v744 = vmul.f32 %v704, 1.442695
        %v745 = vpow.pop %v744
        %v746 = vmul.f32 %v705, 1.442695
        %v747 = vpow.pop %v746
        %v748 = vmul.f32 %v706, 1.442695
        %v749 = vpow.pop %v748
        %v750 = vmul.f32 %v707, 1.442695
        %v751 = vpow.pop %v750
        %v752 = vmul.f32 %v708, 1.442695
        %v753 = vpow.pop %v752
        %v754 = vmul.f32 %v709, 1.442695
        %v755 = vpow.pop %v754
        %v756 = vmul.f32 %v710, 1.442695
        %v757 = vpow.pop %v756
        %v758 = vmul.f32 %v711, 1.442695
        %v759 = vpow.pop %v758
        %v760 = vmul.f32 %v712, 1.442695
        %v761 = vpow.pop %v760
        %v762 = vmul.f32 %v713, 1.442695
        %v763 = vpow.pop %v762
        %v764 = vmul.f32 %v714, 1.442695
        %v765 = vpow.pop %v764
        %v766 = vmul.f32 %v715, 1.442695
        %v767 = vpow.pop %v766
        %v768 = vmul.f32 %v716, 1.442695
        %v769 = vpow.pop %v768
        %v770 = vmul.f32 %v717, 1.442695
        %v771 = vpow.pop %v770
        %v772 = vmul.f32 %v718, 1.442695
        %v773 = vpow.pop %v772
        %v774 = vmul.f32 %v719, 1.442695
        %v775 = vpow.pop %v774
        %v776 = vmul.f32 %v720, 1.442695
        %v777 = vpow.pop %v776
        %v778 = vmul.f32 %v721, 1.442695
        %v779 = vpow.pop %v778
        %v780 = vmul.f32 %v722, 1.442695
        %v781 = vpow.pop %v780
        %v782 = vmul.f32 %v723, 1.442695
        %v783 = vpow.pop %v782
        %v784 = vmul.f32 %v724, 1.442695
        %v785 = vpow.pop %v784
        %v786 = vmul.f32 %v725, 1.442695
        %v787 = vpow.pop %v786
        %v788 = vmul.f32 %v726, 1.442695
        %v789 = vpow.pop %v788
        %v790 = vmul.f32 %v727, 1.442695
        %v791 = vpow.pop %v790
        %v792 = vmul.f32 %v728, 1.442695
        %v793 = vpow.pop %v792
        %v794 = vmul.f32 %v729, 1.442695
        %v795 = vpow.pop %v794
        %v796 = vmul.f32 %v730, 1.442695
        %v797 = vpow.pop %v796
        %v798 = vmul.f32 %v731, 1.442695
        %v799 = vpow.pop %v798
        %v800 = vmul.f32 %v732, 1.442695
        %v801 = vpow.pop %v800
        %v802 = vmul.f32 %v733, 1.442695
        %v803 = vpow.pop %v802
        %v804 = vmul.f32 %v734, 1.442695
        %v805 = vpow.pop %v804
        %v806 = vmul.f32 %v735, 1.442695
        %v807 = vpow.pop %v806
        %v808 = vmul.f32 %v736, 1.442695
        %v809 = vpow.pop %v808
        %v810 = vmul.f32 %v737, 1.442695
        %v811 = vpow.pop %v810
        %v812 = vmul.f32 %v738, 1.442695
        %v813 = vpow.pop %v812
        %v814 = vmul.f32 %v739, 1.442695
        %v815 = vpow.pop %v814
        %v816 = vmul.f32 %v740, 1.442695
        %v817 = vpow.pop %v816
        %v818 = vmul.f32 %v741, 1.442695
        %v819 = vpow.pop %v818
        %v820 = vmul.f32 %v742, 1.442695
        %v821 = vpow.pop %v820
        %v822 = vmul.f32 %v743, 1.442695
        %v823 = vpow.pop %v822
        %v824 = vadd.f32 %v745, 1.0
        %v825 = vadd.f32 %v747, 1.0
        %v826 = vadd.f32 %v749, 1.0
        %v827 = vadd.f32 %v751, 1.0
        %v828 = vadd.f32 %v753, 1.0
        %v829 = vadd.f32 %v755, 1.0
        %v830 = vadd.f32 %v757, 1.0
        %v831 = vadd.f32 %v759, 1.0
        %v832 = vadd.f32 %v761, 1.0
        %v833 = vadd.f32 %v763, 1.0
        %v834 = vadd.f32 %v765, 1.0
        %v835 = vadd.f32 %v767, 1.0
        %v836 = vadd.f32 %v769, 1.0
        %v837 = vadd.f32 %v771, 1.0
        %v838 = vadd.f32 %v773, 1.0
        %v839 = vadd.f32 %v775, 1.0
        %v840 = vadd.f32 %v777, 1.0
        %v841 = vadd.f32 %v779, 1.0
        %v842 = vadd.f32 %v781, 1.0
        %v843 = vadd.f32 %v783, 1.0
        %v844 = vadd.f32 %v785, 1.0
        %v845 = vadd.f32 %v787, 1.0
        %v846 = vadd.f32 %v789, 1.0
        %v847 = vadd.f32 %v791, 1.0
        %v848 = vadd.f32 %v793, 1.0
        %v849 = vadd.f32 %v795, 1.0
        %v850 = vadd.f32 %v797, 1.0
        %v851 = vadd.f32 %v799, 1.0
        %v852 = vadd.f32 %v801, 1.0
        %v853 = vadd.f32 %v803, 1.0
        %v854 = vadd.f32 %v805, 1.0
        %v855 = vadd.f32 %v807, 1.0
        %v856 = vadd.f32 %v809, 1.0
        %v857 = vadd.f32 %v811, 1.0
        %v858 = vadd.f32 %v813, 1.0
        %v859 = vadd.f32 %v815, 1.0
        %v860 = vadd.f32 %v817, 1.0
        %v861 = vadd.f32 %v819, 1.0
        %v862 = vadd.f32 %v821, 1.0
        %v863 = vadd.f32 %v823, 1.0
        %v864 = vrcp.pop %v824
        %v865 = vmul.f32 %v824, %v864
        %v866 = vsub.f32 1.0, %v865
        %v867 = vmul.f32 %v864, %v866
        %v868 = vadd.f32 %v864, %v867
        %vm869 = vweird.f32 %v824
        %vm870 = vweird.f32 %v864
        %vm871 = vmor %vm869, %vm870
        %v872 = vsel %vm871, %v864, %v868
        %v873 = vand.u32 2147483647, %v824
        %vm874 = vcmp.eq.f32.partialorder %v873, 8.507059e+37
        %v875 = vand.u32 %v824, 2147483648
        %v876 = vor.u32 1.1754944e-38, %v875
        %v877 = vsel %vm874, %v876, %v872
        %v878 = vmul.f32 1.0, %v877
        %v879 = vrcp.pop %v825
        %v880 = vmul.f32 %v825, %v879
        %v881 = vsub.f32 1.0, %v880
        %v882 = vmul.f32 %v879, %v881
        %v883 = vadd.f32 %v879, %v882
        %vm884 = vweird.f32 %v825
        %vm885 = vweird.f32 %v879
        %vm886 = vmor %vm884, %vm885
        %v887 = vsel %vm886, %v879, %v883
        %v888 = vand.u32 2147483647, %v825
        %vm889 = vcmp.eq.f32.partialorder %v888, 8.507059e+37
        %v890 = vand.u32 %v825, 2147483648
        %v891 = vor.u32 1.1754944e-38, %v890
        %v892 = vsel %vm889, %v891, %v887
        %v893 = vmul.f32 1.0, %v892
        %v894 = vrcp.pop %v826
        %v895 = vmul.f32 %v826, %v894
        %v896 = vsub.f32 1.0, %v895
        %v897 = vmul.f32 %v894, %v896
        %v898 = vadd.f32 %v894, %v897
        %vm899 = vweird.f32 %v826
        %vm900 = vweird.f32 %v894
        %vm901 = vmor %vm899, %vm900
        %v902 = vsel %vm901, %v894, %v898
        %v903 = vand.u32 2147483647, %v826
        %vm904 = vcmp.eq.f32.partialorder %v903, 8.507059e+37
        %v905 = vand.u32 %v826, 2147483648
        %v906 = vor.u32 1.1754944e-38, %v905
        %v907 = vsel %vm904, %v906, %v902
        %v908 = vmul.f32 1.0, %v907
        %v909 = vrcp.pop %v827
        %v910 = vmul.f32 %v827, %v909
        %v911 = vsub.f32 1.0, %v910
        %v912 = vmul.f32 %v909, %v911
        %v913 = vadd.f32 %v909, %v912
        %vm914 = vweird.f32 %v827
        %vm915 = vweird.f32 %v909
        %vm916 = vmor %vm914, %vm915
        %v917 = vsel %vm916, %v909, %v913
        %v918 = vand.u32 2147483647, %v827
        %vm919 = vcmp.eq.f32.partialorder %v918, 8.507059e+37
        %v920 = vand.u32 %v827, 2147483648
        %v921 = vor.u32 1.1754944e-38, %v920
        %v922 = vsel %vm919, %v921, %v917
        %v923 = vmul.f32 1.0, %v922
        %v924 = vrcp.pop %v828
        %v925 = vmul.f32 %v828, %v924
        %v926 = vsub.f32 1.0, %v925
        %v927 = vmul.f32 %v924, %v926
        %v928 = vadd.f32 %v924, %v927
        %vm929 = vweird.f32 %v828
        %vm930 = vweird.f32 %v924
        %vm931 = vmor %vm929, %vm930
        %v932 = vsel %vm931, %v924, %v928
        %v933 = vand.u32 2147483647, %v828
        %vm934 = vcmp.eq.f32.partialorder %v933, 8.507059e+37
        %v935 = vand.u32 %v828, 2147483648
        %v936 = vor.u32 1.1754944e-38, %v935
        %v937 = vsel %vm934, %v936, %v932
        %v938 = vmul.f32 1.0, %v937
        %v939 = vrcp.pop %v829
        %v940 = vmul.f32 %v829, %v939
        %v941 = vsub.f32 1.0, %v940
        %v942 = vmul.f32 %v939, %v941
        %v943 = vadd.f32 %v939, %v942
        %vm944 = vweird.f32 %v829
        %vm945 = vweird.f32 %v939
        %vm946 = vmor %vm944, %vm945
        %v947 = vsel %vm946, %v939, %v943
        %v948 = vand.u32 2147483647, %v829
        %vm949 = vcmp.eq.f32.partialorder %v948, 8.507059e+37
        %v950 = vand.u32 %v829, 2147483648
        %v951 = vor.u32 1.1754944e-38, %v950
        %v952 = vsel %vm949, %v951, %v947
        %v953 = vmul.f32 1.0, %v952
        %v954 = vrcp.pop %v830
        %v955 = vmul.f32 %v830, %v954
        %v956 = vsub.f32 1.0, %v955
        %v957 = vmul.f32 %v954, %v956
        %v958 = vadd.f32 %v954, %v957
        %vm959 = vweird.f32 %v830
        %vm960 = vweird.f32 %v954
        %vm961 = vmor %vm959, %vm960
        %v962 = vsel %vm961, %v954, %v958
        %v963 = vand.u32 2147483647, %v830
        %vm964 = vcmp.eq.f32.partialorder %v963, 8.507059e+37
        %v965 = vand.u32 %v830, 2147483648
        %v966 = vor.u32 1.1754944e-38, %v965
        %v967 = vsel %vm964, %v966, %v962
        %v968 = vmul.f32 1.0, %v967
        %v969 = vrcp.pop %v831
        %v970 = vmul.f32 %v831, %v969
        %v971 = vsub.f32 1.0, %v970
        %v972 = vmul.f32 %v969, %v971
        %v973 = vadd.f32 %v969, %v972
        %vm974 = vweird.f32 %v831
        %vm975 = vweird.f32 %v969
        %vm976 = vmor %vm974, %vm975
        %v977 = vsel %vm976, %v969, %v973
        %v978 = vand.u32 2147483647, %v831
        %vm979 = vcmp.eq.f32.partialorder %v978, 8.507059e+37
        %v980 = vand.u32 %v831, 2147483648
        %v981 = vor.u32 1.1754944e-38, %v980
        %v982 = vsel %vm979, %v981, %v977
        %v983 = vmul.f32 1.0, %v982
        %v984 = vrcp.pop %v832
        %v985 = vmul.f32 %v832, %v984
        %v986 = vsub.f32 1.0, %v985
        %v987 = vmul.f32 %v984, %v986
        %v988 = vadd.f32 %v984, %v987
        %vm989 = vweird.f32 %v832
        %vm990 = vweird.f32 %v984
        %vm991 = vmor %vm989, %vm990
        %v992 = vsel %vm991, %v984, %v988
        %v993 = vand.u32 2147483647, %v832
        %vm994 = vcmp.eq.f32.partialorder %v993, 8.507059e+37
        %v995 = vand.u32 %v832, 2147483648
        %v996 = vor.u32 1.1754944e-38, %v995
        %v997 = vsel %vm994, %v996, %v992
        %v998 = vmul.f32 1.0, %v997
        %v999 = vrcp.pop %v833
        %v1000 = vmul.f32 %v833, %v999
        %v1001 = vsub.f32 1.0, %v1000
        %v1002 = vmul.f32 %v999, %v1001
        %v1003 = vadd.f32 %v999, %v1002
        %vm1004 = vweird.f32 %v833
        %vm1005 = vweird.f32 %v999
        %vm1006 = vmor %vm1004, %vm1005
        %v1007 = vsel %vm1006, %v999, %v1003
        %v1008 = vand.u32 2147483647, %v833
        %vm1009 = vcmp.eq.f32.partialorder %v1008, 8.507059e+37
        %v1010 = vand.u32 %v833, 2147483648
        %v1011 = vor.u32 1.1754944e-38, %v1010
        %v1012 = vsel %vm1009, %v1011, %v1007
        %v1013 = vmul.f32 1.0, %v1012
        %v1014 = vrcp.pop %v834
        %v1015 = vmul.f32 %v834, %v1014
        %v1016 = vsub.f32 1.0, %v1015
        %v1017 = vmul.f32 %v1014, %v1016
        %v1018 = vadd.f32 %v1014, %v1017
        %vm1019 = vweird.f32 %v834
        %vm1020 = vweird.f32 %v1014
        %vm1021 = vmor %vm1019, %vm1020
        %v1022 = vsel %vm1021, %v1014, %v1018
        %v1023 = vand.u32 2147483647, %v834
        %vm1024 = vcmp.eq.f32.partialorder %v1023, 8.507059e+37
        %v1025 = vand.u32 %v834, 2147483648
        %v1026 = vor.u32 1.1754944e-38, %v1025
        %v1027 = vsel %vm1024, %v1026, %v1022
        %v1028 = vmul.f32 1.0, %v1027
        %v1029 = vrcp.pop %v835
        %v1030 = vmul.f32 %v835, %v1029
        %v1031 = vsub.f32 1.0, %v1030
        %v1032 = vmul.f32 %v1029, %v1031
        %v1033 = vadd.f32 %v1029, %v1032
        %vm1034 = vweird.f32 %v835
        %vm1035 = vweird.f32 %v1029
        %vm1036 = vmor %vm1034, %vm1035
        %v1037 = vsel %vm1036, %v1029, %v1033
        %v1038 = vand.u32 2147483647, %v835
        %vm1039 = vcmp.eq.f32.partialorder %v1038, 8.507059e+37
        %v1040 = vand.u32 %v835, 2147483648
        %v1041 = vor.u32 1.1754944e-38, %v1040
        %v1042 = vsel %vm1039, %v1041, %v1037
        %v1043 = vmul.f32 1.0, %v1042
        %v1044 = vrcp.pop %v836
        %v1045 = vmul.f32 %v836, %v1044
        %v1046 = vsub.f32 1.0, %v1045
        %v1047 = vmul.f32 %v1044, %v1046
        %v1048 = vadd.f32 %v1044, %v1047
        %vm1049 = vweird.f32 %v836
        %vm1050 = vweird.f32 %v1044
        %vm1051 = vmor %vm1049, %vm1050
        %v1052 = vsel %vm1051, %v1044, %v1048
        %v1053 = vand.u32 2147483647, %v836
        %vm1054 = vcmp.eq.f32.partialorder %v1053, 8.507059e+37
        %v1055 = vand.u32 %v836, 2147483648
        %v1056 = vor.u32 1.1754944e-38, %v1055
        %v1057 = vsel %vm1054, %v1056, %v1052
        %v1058 = vmul.f32 1.0, %v1057
        %v1059 = vrcp.pop %v837
        %v1060 = vmul.f32 %v837, %v1059
        %v1061 = vsub.f32 1.0, %v1060
        %v1062 = vmul.f32 %v1059, %v1061
        %v1063 = vadd.f32 %v1059, %v1062
        %vm1064 = vweird.f32 %v837
        %vm1065 = vweird.f32 %v1059
        %vm1066 = vmor %vm1064, %vm1065
        %v1067 = vsel %vm1066, %v1059, %v1063
        %v1068 = vand.u32 2147483647, %v837
        %vm1069 = vcmp.eq.f32.partialorder %v1068, 8.507059e+37
        %v1070 = vand.u32 %v837, 2147483648
        %v1071 = vor.u32 1.1754944e-38, %v1070
        %v1072 = vsel %vm1069, %v1071, %v1067
        %v1073 = vmul.f32 1.0, %v1072
        %v1074 = vrcp.pop %v838
        %v1075 = vmul.f32 %v838, %v1074
        %v1076 = vsub.f32 1.0, %v1075
        %v1077 = vmul.f32 %v1074, %v1076
        %v1078 = vadd.f32 %v1074, %v1077
        %vm1079 = vweird.f32 %v838
        %vm1080 = vweird.f32 %v1074
        %vm1081 = vmor %vm1079, %vm1080
        %v1082 = vsel %vm1081, %v1074, %v1078
        %v1083 = vand.u32 2147483647, %v838
        %vm1084 = vcmp.eq.f32.partialorder %v1083, 8.507059e+37
        %v1085 = vand.u32 %v838, 2147483648
        %v1086 = vor.u32 1.1754944e-38, %v1085
        %v1087 = vsel %vm1084, %v1086, %v1082
        %v1088 = vmul.f32 1.0, %v1087
        %v1089 = vrcp.pop %v839
        %v1090 = vmul.f32 %v839, %v1089
        %v1091 = vsub.f32 1.0, %v1090
        %v1092 = vmul.f32 %v1089, %v1091
        %v1093 = vadd.f32 %v1089, %v1092
        %vm1094 = vweird.f32 %v839
        %vm1095 = vweird.f32 %v1089
        %vm1096 = vmor %vm1094, %vm1095
        %v1097 = vsel %vm1096, %v1089, %v1093
        %v1098 = vand.u32 2147483647, %v839
        %vm1099 = vcmp.eq.f32.partialorder %v1098, 8.507059e+37
        %v1100 = vand.u32 %v839, 2147483648
        %v1101 = vor.u32 1.1754944e-38, %v1100
        %v1102 = vsel %vm1099, %v1101, %v1097
        %v1103 = vmul.f32 1.0, %v1102
        %v1104 = vrcp.pop %v840
        %v1105 = vmul.f32 %v840, %v1104
        %v1106 = vsub.f32 1.0, %v1105
        %v1107 = vmul.f32 %v1104, %v1106
        %v1108 = vadd.f32 %v1104, %v1107
        %vm1109 = vweird.f32 %v840
        %vm1110 = vweird.f32 %v1104
        %vm1111 = vmor %vm1109, %vm1110
        %v1112 = vsel %vm1111, %v1104, %v1108
        %v1113 = vand.u32 2147483647, %v840
        %vm1114 = vcmp.eq.f32.partialorder %v1113, 8.507059e+37
        %v1115 = vand.u32 %v840, 2147483648
        %v1116 = vor.u32 1.1754944e-38, %v1115
        %v1117 = vsel %vm1114, %v1116, %v1112
        %v1118 = vmul.f32 1.0, %v1117
        %v1119 = vrcp.pop %v841
        %v1120 = vmul.f32 %v841, %v1119
        %v1121 = vsub.f32 1.0, %v1120
        %v1122 = vmul.f32 %v1119, %v1121
        %v1123 = vadd.f32 %v1119, %v1122
        %vm1124 = vweird.f32 %v841
        %vm1125 = vweird.f32 %v1119
        %vm1126 = vmor %vm1124, %vm1125
        %v1127 = vsel %vm1126, %v1119, %v1123
        %v1128 = vand.u32 2147483647, %v841
        %vm1129 = vcmp.eq.f32.partialorder %v1128, 8.507059e+37
        %v1130 = vand.u32 %v841, 2147483648
        %v1131 = vor.u32 1.1754944e-38, %v1130
        %v1132 = vsel %vm1129, %v1131, %v1127
        %v1133 = vmul.f32 1.0, %v1132
        %v1134 = vrcp.pop %v842
        %v1135 = vmul.f32 %v842, %v1134
        %v1136 = vsub.f32 1.0, %v1135
        %v1137 = vmul.f32 %v1134, %v1136
        %v1138 = vadd.f32 %v1134, %v1137
        %vm1139 = vweird.f32 %v842
        %vm1140 = vweird.f32 %v1134
        %vm1141 = vmor %vm1139, %vm1140
        %v1142 = vsel %vm1141, %v1134, %v1138
        %v1143 = vand.u32 2147483647, %v842
        %vm1144 = vcmp.eq.f32.partialorder %v1143, 8.507059e+37
        %v1145 = vand.u32 %v842, 2147483648
        %v1146 = vor.u32 1.1754944e-38, %v1145
        %v1147 = vsel %vm1144, %v1146, %v1142
        %v1148 = vmul.f32 1.0, %v1147
        %v1149 = vrcp.pop %v843
        %v1150 = vmul.f32 %v843, %v1149
        %v1151 = vsub.f32 1.0, %v1150
        %v1152 = vmul.f32 %v1149, %v1151
        %v1153 = vadd.f32 %v1149, %v1152
        %vm1154 = vweird.f32 %v843
        %vm1155 = vweird.f32 %v1149
        %vm1156 = vmor %vm1154, %vm1155
        %v1157 = vsel %vm1156, %v1149, %v1153
        %v1158 = vand.u32 2147483647, %v843
        %vm1159 = vcmp.eq.f32.partialorder %v1158, 8.507059e+37
        %v1160 = vand.u32 %v843, 2147483648
        %v1161 = vor.u32 1.1754944e-38, %v1160
        %v1162 = vsel %vm1159, %v1161, %v1157
        %v1163 = vmul.f32 1.0, %v1162
        %v1164 = vrcp.pop %v844
        %v1165 = vmul.f32 %v844, %v1164
        %v1166 = vsub.f32 1.0, %v1165
        %v1167 = vmul.f32 %v1164, %v1166
        %v1168 = vadd.f32 %v1164, %v1167
        %vm1169 = vweird.f32 %v844
        %vm1170 = vweird.f32 %v1164
        %vm1171 = vmor %vm1169, %vm1170
        %v1172 = vsel %vm1171, %v1164, %v1168
        %v1173 = vand.u32 2147483647, %v844
        %vm1174 = vcmp.eq.f32.partialorder %v1173, 8.507059e+37
        %v1175 = vand.u32 %v844, 2147483648
        %v1176 = vor.u32 1.1754944e-38, %v1175
        %v1177 = vsel %vm1174, %v1176, %v1172
        %v1178 = vmul.f32 1.0, %v1177
        %v1179 = vrcp.pop %v845
        %v1180 = vmul.f32 %v845, %v1179
        %v1181 = vsub.f32 1.0, %v1180
        %v1182 = vmul.f32 %v1179, %v1181
        %v1183 = vadd.f32 %v1179, %v1182
        %vm1184 = vweird.f32 %v845
        %vm1185 = vweird.f32 %v1179
        %vm1186 = vmor %vm1184, %vm1185
        %v1187 = vsel %vm1186, %v1179, %v1183
        %v1188 = vand.u32 2147483647, %v845
        %vm1189 = vcmp.eq.f32.partialorder %v1188, 8.507059e+37
        %v1190 = vand.u32 %v845, 2147483648
        %v1191 = vor.u32 1.1754944e-38, %v1190
        %v1192 = vsel %vm1189, %v1191, %v1187
        %v1193 = vmul.f32 1.0, %v1192
        %v1194 = vrcp.pop %v846
        %v1195 = vmul.f32 %v846, %v1194
        %v1196 = vsub.f32 1.0, %v1195
        %v1197 = vmul.f32 %v1194, %v1196
        %v1198 = vadd.f32 %v1194, %v1197
        %vm1199 = vweird.f32 %v846
        %vm1200 = vweird.f32 %v1194
        %vm1201 = vmor %vm1199, %vm1200
        %v1202 = vsel %vm1201, %v1194, %v1198
        %v1203 = vand.u32 2147483647, %v846
        %vm1204 = vcmp.eq.f32.partialorder %v1203, 8.507059e+37
        %v1205 = vand.u32 %v846, 2147483648
        %v1206 = vor.u32 1.1754944e-38, %v1205
        %v1207 = vsel %vm1204, %v1206, %v1202
        %v1208 = vmul.f32 1.0, %v1207
        %v1209 = vrcp.pop %v847
        %v1210 = vmul.f32 %v847, %v1209
        %v1211 = vsub.f32 1.0, %v1210
        %v1212 = vmul.f32 %v1209, %v1211
        %v1213 = vadd.f32 %v1209, %v1212
        %vm1214 = vweird.f32 %v847
        %vm1215 = vweird.f32 %v1209
        %vm1216 = vmor %vm1214, %vm1215
        %v1217 = vsel %vm1216, %v1209, %v1213
        %v1218 = vand.u32 2147483647, %v847
        %vm1219 = vcmp.eq.f32.partialorder %v1218, 8.507059e+37
        %v1220 = vand.u32 %v847, 2147483648
        %v1221 = vor.u32 1.1754944e-38, %v1220
        %v1222 = vsel %vm1219, %v1221, %v1217
        %v1223 = vmul.f32 1.0, %v1222
        %v1224 = vrcp.pop %v848
        %v1225 = vmul.f32 %v848, %v1224
        %v1226 = vsub.f32 1.0, %v1225
        %v1227 = vmul.f32 %v1224, %v1226
        %v1228 = vadd.f32 %v1224, %v1227
        %vm1229 = vweird.f32 %v848
        %vm1230 = vweird.f32 %v1224
        %vm1231 = vmor %vm1229, %vm1230
        %v1232 = vsel %vm1231, %v1224, %v1228
        %v1233 = vand.u32 2147483647, %v848
        %vm1234 = vcmp.eq.f32.partialorder %v1233, 8.507059e+37
        %v1235 = vand.u32 %v848, 2147483648
        %v1236 = vor.u32 1.1754944e-38, %v1235
        %v1237 = vsel %vm1234, %v1236, %v1232
        %v1238 = vmul.f32 1.0, %v1237
        %v1239 = vrcp.pop %v849
        %v1240 = vmul.f32 %v849, %v1239
        %v1241 = vsub.f32 1.0, %v1240
        %v1242 = vmul.f32 %v1239, %v1241
        %v1243 = vadd.f32 %v1239, %v1242
        %vm1244 = vweird.f32 %v849
        %vm1245 = vweird.f32 %v1239
        %vm1246 = vmor %vm1244, %vm1245
        %v1247 = vsel %vm1246, %v1239, %v1243
        %v1248 = vand.u32 2147483647, %v849
        %vm1249 = vcmp.eq.f32.partialorder %v1248, 8.507059e+37
        %v1250 = vand.u32 %v849, 2147483648
        %v1251 = vor.u32 1.1754944e-38, %v1250
        %v1252 = vsel %vm1249, %v1251, %v1247
        %v1253 = vmul.f32 1.0, %v1252
        %v1254 = vrcp.pop %v850
        %v1255 = vmul.f32 %v850, %v1254
        %v1256 = vsub.f32 1.0, %v1255
        %v1257 = vmul.f32 %v1254, %v1256
        %v1258 = vadd.f32 %v1254, %v1257
        %vm1259 = vweird.f32 %v850
        %vm1260 = vweird.f32 %v1254
        %vm1261 = vmor %vm1259, %vm1260
        %v1262 = vsel %vm1261, %v1254, %v1258
        %v1263 = vand.u32 2147483647, %v850
        %vm1264 = vcmp.eq.f32.partialorder %v1263, 8.507059e+37
        %v1265 = vand.u32 %v850, 2147483648
        %v1266 = vor.u32 1.1754944e-38, %v1265
        %v1267 = vsel %vm1264, %v1266, %v1262
        %v1268 = vmul.f32 1.0, %v1267
        %v1269 = vrcp.pop %v851
        %v1270 = vmul.f32 %v851, %v1269
        %v1271 = vsub.f32 1.0, %v1270
        %v1272 = vmul.f32 %v1269, %v1271
        %v1273 = vadd.f32 %v1269, %v1272
        %vm1274 = vweird.f32 %v851
        %vm1275 = vweird.f32 %v1269
        %vm1276 = vmor %vm1274, %vm1275
        %v1277 = vsel %vm1276, %v1269, %v1273
        %v1278 = vand.u32 2147483647, %v851
        %vm1279 = vcmp.eq.f32.partialorder %v1278, 8.507059e+37
        %v1280 = vand.u32 %v851, 2147483648
        %v1281 = vor.u32 1.1754944e-38, %v1280
        %v1282 = vsel %vm1279, %v1281, %v1277
        %v1283 = vmul.f32 1.0, %v1282
        %v1284 = vrcp.pop %v852
        %v1285 = vmul.f32 %v852, %v1284
        %v1286 = vsub.f32 1.0, %v1285
        %v1287 = vmul.f32 %v1284, %v1286
        %v1288 = vadd.f32 %v1284, %v1287
        %vm1289 = vweird.f32 %v852
        %vm1290 = vweird.f32 %v1284
        %vm1291 = vmor %vm1289, %vm1290
        %v1292 = vsel %vm1291, %v1284, %v1288
        %v1293 = vand.u32 2147483647, %v852
        %vm1294 = vcmp.eq.f32.partialorder %v1293, 8.507059e+37
        %v1295 = vand.u32 %v852, 2147483648
        %v1296 = vor.u32 1.1754944e-38, %v1295
        %v1297 = vsel %vm1294, %v1296, %v1292
        %v1298 = vmul.f32 1.0, %v1297
        %v1299 = vrcp.pop %v853
        %v1300 = vmul.f32 %v853, %v1299
        %v1301 = vsub.f32 1.0, %v1300
        %v1302 = vmul.f32 %v1299, %v1301
        %v1303 = vadd.f32 %v1299, %v1302
        %vm1304 = vweird.f32 %v853
        %vm1305 = vweird.f32 %v1299
        %vm1306 = vmor %vm1304, %vm1305
        %v1307 = vsel %vm1306, %v1299, %v1303
        %v1308 = vand.u32 2147483647, %v853
        %vm1309 = vcmp.eq.f32.partialorder %v1308, 8.507059e+37
        %v1310 = vand.u32 %v853, 2147483648
        %v1311 = vor.u32 1.1754944e-38, %v1310
        %v1312 = vsel %vm1309, %v1311, %v1307
        %v1313 = vmul.f32 1.0, %v1312
        %v1314 = vrcp.pop %v854
        %v1315 = vmul.f32 %v854, %v1314
        %v1316 = vsub.f32 1.0, %v1315
        %v1317 = vmul.f32 %v1314, %v1316
        %v1318 = vadd.f32 %v1314, %v1317
        %vm1319 = vweird.f32 %v854
        %vm1320 = vweird.f32 %v1314
        %vm1321 = vmor %vm1319, %vm1320
        %v1322 = vsel %vm1321, %v1314, %v1318
        %v1323 = vand.u32 2147483647, %v854
        %vm1324 = vcmp.eq.f32.partialorder %v1323, 8.507059e+37
        %v1325 = vand.u32 %v854, 2147483648
        %v1326 = vor.u32 1.1754944e-38, %v1325
        %v1327 = vsel %vm1324, %v1326, %v1322
        %v1328 = vmul.f32 1.0, %v1327
        %v1329 = vrcp.pop %v855
        %v1330 = vmul.f32 %v855, %v1329
        %v1331 = vsub.f32 1.0, %v1330
        %v1332 = vmul.f32 %v1329, %v1331
        %v1333 = vadd.f32 %v1329, %v1332
        %vm1334 = vweird.f32 %v855
        %vm1335 = vweird.f32 %v1329
        %vm1336 = vmor %vm1334, %vm1335
        %v1337 = vsel %vm1336, %v1329, %v1333
        %v1338 = vand.u32 2147483647, %v855
        %vm1339 = vcmp.eq.f32.partialorder %v1338, 8.507059e+37
        %v1340 = vand.u32 %v855, 2147483648
        %v1341 = vor.u32 1.1754944e-38, %v1340
        %v1342 = vsel %vm1339, %v1341, %v1337
        %v1343 = vmul.f32 1.0, %v1342
        %v1344 = vrcp.pop %v856
        %v1345 = vmul.f32 %v856, %v1344
        %v1346 = vsub.f32 1.0, %v1345
        %v1347 = vmul.f32 %v1344, %v1346
        %v1348 = vadd.f32 %v1344, %v1347
        %vm1349 = vweird.f32 %v856
        %vm1350 = vweird.f32 %v1344
        %vm1351 = vmor %vm1349, %vm1350
        %v1352 = vsel %vm1351, %v1344, %v1348
        %v1353 = vand.u32 2147483647, %v856
        %vm1354 = vcmp.eq.f32.partialorder %v1353, 8.507059e+37
        %v1355 = vand.u32 %v856, 2147483648
        %v1356 = vor.u32 1.1754944e-38, %v1355
        %v1357 = vsel %vm1354, %v1356, %v1352
        %v1358 = vmul.f32 1.0, %v1357
        %v1359 = vrcp.pop %v857
        %v1360 = vmul.f32 %v857, %v1359
        %v1361 = vsub.f32 1.0, %v1360
        %v1362 = vmul.f32 %v1359, %v1361
        %v1363 = vadd.f32 %v1359, %v1362
        %vm1364 = vweird.f32 %v857
        %vm1365 = vweird.f32 %v1359
        %vm1366 = vmor %vm1364, %vm1365
        %v1367 = vsel %vm1366, %v1359, %v1363
        %v1368 = vand.u32 2147483647, %v857
        %vm1369 = vcmp.eq.f32.partialorder %v1368, 8.507059e+37
        %v1370 = vand.u32 %v857, 2147483648
        %v1371 = vor.u32 1.1754944e-38, %v1370
        %v1372 = vsel %vm1369, %v1371, %v1367
        %v1373 = vmul.f32 1.0, %v1372
        %v1374 = vrcp.pop %v858
        %v1375 = vmul.f32 %v858, %v1374
        %v1376 = vsub.f32 1.0, %v1375
        %v1377 = vmul.f32 %v1374, %v1376
        %v1378 = vadd.f32 %v1374, %v1377
        %vm1379 = vweird.f32 %v858
        %vm1380 = vweird.f32 %v1374
        %vm1381 = vmor %vm1379, %vm1380
        %v1382 = vsel %vm1381, %v1374, %v1378
        %v1383 = vand.u32 2147483647, %v858
        %vm1384 = vcmp.eq.f32.partialorder %v1383, 8.507059e+37
        %v1385 = vand.u32 %v858, 2147483648
        %v1386 = vor.u32 1.1754944e-38, %v1385
        %v1387 = vsel %vm1384, %v1386, %v1382
        %v1388 = vmul.f32 1.0, %v1387
        %v1389 = vrcp.pop %v859
        %v1390 = vmul.f32 %v859, %v1389
        %v1391 = vsub.f32 1.0, %v1390
        %v1392 = vmul.f32 %v1389, %v1391
        %v1393 = vadd.f32 %v1389, %v1392
        %vm1394 = vweird.f32 %v859
        %vm1395 = vweird.f32 %v1389
        %vm1396 = vmor %vm1394, %vm1395
        %v1397 = vsel %vm1396, %v1389, %v1393
        %v1398 = vand.u32 2147483647, %v859
        %vm1399 = vcmp.eq.f32.partialorder %v1398, 8.507059e+37
        %v1400 = vand.u32 %v859, 2147483648
        %v1401 = vor.u32 1.1754944e-38, %v1400
        %v1402 = vsel %vm1399, %v1401, %v1397
        %v1403 = vmul.f32 1.0, %v1402
        %v1404 = vrcp.pop %v860
        %v1405 = vmul.f32 %v860, %v1404
        %v1406 = vsub.f32 1.0, %v1405
        %v1407 = vmul.f32 %v1404, %v1406
        %v1408 = vadd.f32 %v1404, %v1407
        %vm1409 = vweird.f32 %v860
        %vm1410 = vweird.f32 %v1404
        %vm1411 = vmor %vm1409, %vm1410
        %v1412 = vsel %vm1411, %v1404, %v1408
        %v1413 = vand.u32 2147483647, %v860
        %vm1414 = vcmp.eq.f32.partialorder %v1413, 8.507059e+37
        %v1415 = vand.u32 %v860, 2147483648
        %v1416 = vor.u32 1.1754944e-38, %v1415
        %v1417 = vsel %vm1414, %v1416, %v1412
        %v1418 = vmul.f32 1.0, %v1417
        %v1419 = vrcp.pop %v861
        %v1420 = vmul.f32 %v861, %v1419
        %v1421 = vsub.f32 1.0, %v1420
        %v1422 = vmul.f32 %v1419, %v1421
        %v1423 = vadd.f32 %v1419, %v1422
        %vm1424 = vweird.f32 %v861
        %vm1425 = vweird.f32 %v1419
        %vm1426 = vmor %vm1424, %vm1425
        %v1427 = vsel %vm1426, %v1419, %v1423
        %v1428 = vand.u32 2147483647, %v861
        %vm1429 = vcmp.eq.f32.partialorder %v1428, 8.507059e+37
        %v1430 = vand.u32 %v861, 2147483648
        %v1431 = vor.u32 1.1754944e-38, %v1430
        %v1432 = vsel %vm1429, %v1431, %v1427
        %v1433 = vmul.f32 1.0, %v1432
        %v1434 = vrcp.pop %v862
        %v1435 = vmul.f32 %v862, %v1434
        %v1436 = vsub.f32 1.0, %v1435
        %v1437 = vmul.f32 %v1434, %v1436
        %v1438 = vadd.f32 %v1434, %v1437
        %vm1439 = vweird.f32 %v862
        %vm1440 = vweird.f32 %v1434
        %vm1441 = vmor %vm1439, %vm1440
        %v1442 = vsel %vm1441, %v1434, %v1438
        %v1443 = vand.u32 2147483647, %v862
        %vm1444 = vcmp.eq.f32.partialorder %v1443, 8.507059e+37
        %v1445 = vand.u32 %v862, 2147483648
        %v1446 = vor.u32 1.1754944e-38, %v1445
        %v1447 = vsel %vm1444, %v1446, %v1442
        %v1448 = vmul.f32 1.0, %v1447
        %v1449 = vrcp.pop %v863
        %v1450 = vmul.f32 %v863, %v1449
        %v1451 = vsub.f32 1.0, %v1450
        %v1452 = vmul.f32 %v1449, %v1451
        %v1453 = vadd.f32 %v1449, %v1452
        %vm1454 = vweird.f32 %v863
        %vm1455 = vweird.f32 %v1449
        %vm1456 = vmor %vm1454, %vm1455
        %v1457 = vsel %vm1456, %v1449, %v1453
        %v1458 = vand.u32 2147483647, %v863
        %vm1459 = vcmp.eq.f32.partialorder %v1458, 8.507059e+37
        %v1460 = vand.u32 %v863, 2147483648
        %v1461 = vor.u32 1.1754944e-38, %v1460
        %v1462 = vsel %vm1459, %v1461, %v1457
        %v1463 = vmul.f32 1.0, %v1462
        %v1464 = vmul.f32 %v569, %v878
        %v1465 = vmul.f32 %v598, %v893
        %v1466 = vmul.f32 %v627, %v908
        %v1467 = vmul.f32 %v656, %v923
        %v1468 = vmul.f32 %v685, %v938
        %v1469 = vmul.f32 %v571, %v953
        %v1470 = vmul.f32 %v600, %v968
        %v1471 = vmul.f32 %v629, %v983
        %v1472 = vmul.f32 %v658, %v998
        %v1473 = vmul.f32 %v687, %v1013
        %v1474 = vmul.f32 %v574, %v1028
        %v1475 = vmul.f32 %v603, %v1043
        %v1476 = vmul.f32 %v632, %v1058
        %v1477 = vmul.f32 %v661, %v1073
        %v1478 = vmul.f32 %v690, %v1088
        %v1479 = vmul.f32 %v576, %v1103
        %v1480 = vmul.f32 %v605, %v1118
        %v1481 = vmul.f32 %v634, %v1133
        %v1482 = vmul.f32 %v663, %v1148
        %v1483 = vmul.f32 %v692, %v1163
        %v1484 = vmul.f32 %v579, %v1178
        %v1485 = vmul.f32 %v608, %v1193
        %v1486 = vmul.f32 %v637, %v1208
        %v1487 = vmul.f32 %v666, %v1223
        %v1488 = vmul.f32 %v695, %v1238
        %v1489 = vmul.f32 %v581, %v1253
        %v1490 = vmul.f32 %v610, %v1268
        %v1491 = vmul.f32 %v639, %v1283
        %v1492 = vmul.f32 %v668, %v1298
        %v1493 = vmul.f32 %v697, %v1313
        %v1494 = vmul.f32 %v584, %v1328
        %v1495 = vmul.f32 %v613, %v1343
        %v1496 = vmul.f32 %v642, %v1358
        %v1497 = vmul.f32 %v671, %v1373
        %v1498 = vmul.f32 %v700, %v1388
        %v1499 = vmul.f32 %v586, %v1403
        %v1500 = vmul.f32 %v615, %v1418
        %v1501 = vmul.f32 %v644, %v1433
        %v1502 = vmul.f32 %v673, %v1448
        %v1503 = vmul.f32 %v702, %v1463
        %v1504 = vld [vmem:[#allocation2] sm:$0x1f]
        %v1505 = vadd.f32 %v1464, %v1469
        %v1506 = vadd.f32 %v1505, %v1474
        %v1507 = vadd.f32 %v1506, %v1479
        %v1508 = vadd.f32 %v1507, %v1484
        %v1509 = vadd.f32 %v1508, %v1489
        %v1510 = vadd.f32 %v1509, %v1494
        %v1511 = vadd.f32 %v1510, %v1499
        %v1512 = vrot.slane %v1511, 4
        %v1513 = vadd.f32 %v1511, %v1512
        %v1514 = vrot.slane %v1513, 2
        %v1515 = vadd.f32 %v1513, %v1514
        %v1516 = vrot.slane %v1515, 1
        %v1517 = vadd.f32 %v1515, %v1516
        %v1518 = vadd.f32 %v1465, %v1470
        %v1519 = vadd.f32 %v1518, %v1475
        %v1520 = vadd.f32 %v1519, %v1480
        %v1521 = vadd.f32 %v1520, %v1485
        %v1522 = vadd.f32 %v1521, %v1490
        %v1523 = vadd.f32 %v1522, %v1495
        %v1524 = vadd.f32 %v1523, %v1500
        %v1525 = vrot.slane %v1524, 4
        %v1526 = vadd.f32 %v1524, %v1525
        %v1527 = vrot.slane %v1526, 2
        %v1528 = vadd.f32 %v1526, %v1527
        %v1529 = vrot.slane %v1528, 1
        %v1530 = vadd.f32 %v1528, %v1529
        %v1531 = vadd.f32 %v1466, %v1471
        %v1532 = vadd.f32 %v1531, %v1476
        %v1533 = vadd.f32 %v1532, %v1481
        %v1534 = vadd.f32 %v1533, %v1486
        %v1535 = vadd.f32 %v1534, %v1491
        %v1536 = vadd.f32 %v1535, %v1496
        %v1537 = vadd.f32 %v1536, %v1501
        %v1538 = vrot.slane %v1537, 4
        %v1539 = vadd.f32 %v1537, %v1538
        %v1540 = vrot.slane %v1539, 2
        %v1541 = vadd.f32 %v1539, %v1540
        %v1542 = vrot.slane %v1541, 1
        %v1543 = vadd.f32 %v1541, %v1542
        %v1544 = vadd.f32 %v1467, %v1472
        %v1545 = vadd.f32 %v1544, %v1477
        %v1546 = vadd.f32 %v1545, %v1482
        %v1547 = vadd.f32 %v1546, %v1487
        %v1548 = vadd.f32 %v1547, %v1492
        %v1549 = vadd.f32 %v1548, %v1497
        %v1550 = vadd.f32 %v1549, %v1502
        %v1551 = vrot.slane %v1550, 4
        %v1552 = vadd.f32 %v1550, %v1551
        %v1553 = vrot.slane %v1552, 2
        %v1554 = vadd.f32 %v1552, %v1553
        %v1555 = vrot.slane %v1554, 1
        %v1556 = vadd.f32 %v1554, %v1555
        %v1557 = vadd.f32 %v1468, %v1473
        %v1558 = vadd.f32 %v1557, %v1478
        %v1559 = vadd.f32 %v1558, %v1483
        %v1560 = vadd.f32 %v1559, %v1488
        %v1561 = vadd.f32 %v1560, %v1493
        %v1562 = vadd.f32 %v1561, %v1498
        %v1563 = vadd.f32 %v1562, %v1503
        %v1564 = vrot.slane %v1563, 4
        %v1565 = vadd.f32 %v1563, %v1564
        %v1566 = vrot.slane %v1565, 2
        %v1567 = vadd.f32 %v1565, %v1566
        %v1568 = vrot.slane %v1567, 1
        %v1569 = vadd.f32 %v1567, %v1568
        %v1575 = vrot.slane %v1530, 7
        %v1576 = vrot.slane %v1543, 6
        %v1577 = vrot.slane %v1556, 5
        %v1578 = vrot.slane %v1569, 4
        %vm1579 = vcmask 1040384
        %v1580 = vsel %vm1579, %v1517, %v1575
        %vm1581 = vcmask 1041408
        %v1582 = vsel %vm1581, %v1580, %v1576
        %vm1583 = vcmask 1043459
        %v1584 = vsel %vm1583, %v1577, %v1578
        %vm1585 = vcmask 1042432
        %v1586 = vsel %vm1585, %v1582, %v1584
        %v1588 = vadd.f32 %v1504, %v1586
        %v1589 = vlaneseq
        %vm1590 = vcmp.ge.s32.totalorder %v1589, 0
        %vm1591 = vcmp.lt.s32.totalorder %v1589, 640
        %vm1592 = vmand %vm1590, %vm1591
        %1593 = vst.msk [vmem:[#allocation2] sm:$0x1f] %vm1592, %v1588
        // Predicated region
        $region45: #{_lambda_.19} parent=39 // pred_check
          %p1594 = pneg %p250
        $region46: #{_lambda_.19} parent=39 // pred_check_branch
          %1596 = sbr.rel (%p1594) target = $region48
        $region47: #{_lambda_.19} parent=39 // pred_region
          %v1597 = vld [vmem:[#allocation2] sm:$0x1f]
          %v1598 = vmul.f32 %v1597, 0.015625
          %v1599 = vld [vmem:[%s3] sm:$0xf]
          %v1600 = vld [vmem:[%s3 + $0x4] sm:$0xf]
          %v1601 = vld [vmem:[%s3 + $0x8] sm:$0xf]
          %v1602 = vld [vmem:[%s3 + $0xc] sm:$0xf]
          %v1603 = vld [vmem:[%s3 + $0x10] sm:$0xf]
          %v1604 = vld [vmem:[%s3 + $0x14] sm:$0xf]
          %v1605 = vld [vmem:[%s3 + $0x18] sm:$0xf]
          %v1606 = vld [vmem:[%s3 + $0x1c] sm:$0xf]
          %v1607 = vld [vmem:[%s3 + $0x20] sm:$0xf]
          %v1608 = vld [vmem:[%s3 + $0x24] sm:$0xf]
          %v1609 = vld [vmem:[%s3 + $0x28] sm:$0xf]
          %v1610 = vld [vmem:[%s3 + $0x2c] sm:$0xf]
          %v1611 = vld [vmem:[%s3 + $0x30] sm:$0xf]
          %v1612 = vld [vmem:[%s3 + $0x34] sm:$0xf]
          %v1613 = vld [vmem:[%s3 + $0x38] sm:$0xf]
          %v1614 = vld [vmem:[%s3 + $0x3c] sm:$0xf]
          %v1615 = vld [vmem:[%s3 + $0x40] sm:$0xf]
          %v1616 = vld [vmem:[%s3 + $0x44] sm:$0xf]
          %v1617 = vld [vmem:[%s3 + $0x48] sm:$0xf]
          %v1618 = vld [vmem:[%s3 + $0x4c] sm:$0xf]
          %v1619 = vld [vmem:[%s3 + $0x50] sm:$0xf]
          %v1620 = vld [vmem:[%s3 + $0x54] sm:$0xf]
          %v1621 = vld [vmem:[%s3 + $0x58] sm:$0xf]
          %v1622 = vld [vmem:[%s3 + $0x5c] sm:$0xf]
          %v1623 = vld [vmem:[%s3 + $0x60] sm:$0xf]
          %v1624 = vld [vmem:[%s3 + $0x64] sm:$0xf]
          %v1625 = vld [vmem:[%s3 + $0x68] sm:$0xf]
          %v1626 = vld [vmem:[%s3 + $0x6c] sm:$0xf]
          %v1627 = vld [vmem:[%s3 + $0x70] sm:$0xf]
          %v1628 = vld [vmem:[%s3 + $0x74] sm:$0xf]
          %v1629 = vld [vmem:[%s3 + $0x78] sm:$0xf]
          %v1630 = vld [vmem:[%s3 + $0x7c] sm:$0xf]
          %v1631 = vld [vmem:[%s3 + $0x80] sm:$0xf]
          %v1632 = vld [vmem:[%s3 + $0x84] sm:$0xf]
          %v1633 = vld [vmem:[%s3 + $0x88] sm:$0xf]
          %v1634 = vld [vmem:[%s3 + $0x8c] sm:$0xf]
          %v1635 = vld [vmem:[%s3 + $0x90] sm:$0xf]
          %v1636 = vld [vmem:[%s3 + $0x94] sm:$0xf]
          %v1637 = vld [vmem:[%s3 + $0x98] sm:$0xf]
          %v1638 = vld [vmem:[%s3 + $0x9c] sm:$0xf]
          %v1639 = vld [vmem:[%s3 + $0xa0] sm:$0xf]
          %v1640 = vld [vmem:[%s3 + $0xa4] sm:$0xf]
          %v1641 = vld [vmem:[%s3 + $0xa8] sm:$0xf]
          %v1642 = vld [vmem:[%s3 + $0xac] sm:$0xf]
          %v1643 = vld [vmem:[%s3 + $0xb0] sm:$0xf]
          %v1644 = vld [vmem:[%s3 + $0xb4] sm:$0xf]
          %v1645 = vld [vmem:[%s3 + $0xb8] sm:$0xf]
          %v1646 = vld [vmem:[%s3 + $0xbc] sm:$0xf]
          %v1647 = vld [vmem:[%s3 + $0xc0] sm:$0xf]
          %v1648 = vld [vmem:[%s3 + $0xc4] sm:$0xf]
          %v1649 = vld [vmem:[%s3 + $0xc8] sm:$0xf]
          %v1650 = vld [vmem:[%s3 + $0xcc] sm:$0xf]
          %v1651 = vld [vmem:[%s3 + $0xd0] sm:$0xf]
          %v1652 = vld [vmem:[%s3 + $0xd4] sm:$0xf]
          %v1653 = vld [vmem:[%s3 + $0xd8] sm:$0xf]
          %v1654 = vld [vmem:[%s3 + $0xdc] sm:$0xf]
          %v1655 = vld [vmem:[%s3 + $0xe0] sm:$0xf]
          %v1656 = vld [vmem:[%s3 + $0xe4] sm:$0xf]
          %v1657 = vld [vmem:[%s3 + $0xe8] sm:$0xf]
          %v1658 = vld [vmem:[%s3 + $0xec] sm:$0xf]
          %v1659 = vld [vmem:[%s3 + $0xf0] sm:$0xf]
          %v1660 = vld [vmem:[%s3 + $0xf4] sm:$0xf]
          %v1661 = vld [vmem:[%s3 + $0xf8] sm:$0xf]
          %v1662 = vld [vmem:[%s3 + $0xfc] sm:$0xf]
          %v1663 = vld [vmem:[%s3 + $0x100] sm:$0xf]
          %v1664 = vld [vmem:[%s3 + $0x104] sm:$0xf]
          %v1665 = vld [vmem:[%s3 + $0x108] sm:$0xf]
          %v1666 = vld [vmem:[%s3 + $0x10c] sm:$0xf]
          %v1667 = vld [vmem:[%s3 + $0x110] sm:$0xf]
          %v1668 = vld [vmem:[%s3 + $0x114] sm:$0xf]
          %v1669 = vld [vmem:[%s3 + $0x118] sm:$0xf]
          %v1670 = vld [vmem:[%s3 + $0x11c] sm:$0xf]
          %v1671 = vld [vmem:[%s3 + $0x120] sm:$0xf]
          %v1672 = vld [vmem:[%s3 + $0x124] sm:$0xf]
          %v1673 = vld [vmem:[%s3 + $0x128] sm:$0xf]
          %v1674 = vld [vmem:[%s3 + $0x12c] sm:$0xf]
          %v1675 = vld [vmem:[%s3 + $0x130] sm:$0xf]
          %v1676 = vld [vmem:[%s3 + $0x134] sm:$0xf]
          %v1677 = vld [vmem:[%s3 + $0x138] sm:$0xf]
          %v1678 = vld [vmem:[%s3 + $0x13c] sm:$0xf]
          %v1680 = vperm.slane %v1598, 0
          %v1681 = vperm.slane %v1598, 1
          %v1682 = vperm.slane %v1598, 2
          %v1683 = vperm.slane %v1598, 3
          %v1684 = vperm.slane %v1598, 4
          %v1690 = vpack.c.bf16 %v1681, %v1680
          %v1691 = vpack.c.bf16 %v1683, %v1682
          %v1692 = vpack.c.bf16 %v1684, %v1684
          %v1696 = vunpack.c.l.b16 %v1690
          %v1697 = vunpack.c.h.b16 %v1690
          %v1698 = vunpack.c.l.b16 %v1691
          %v1699 = vunpack.c.h.b16 %v1691
          %v1700 = vunpack.c.l.b16 %v1692
          %v1701 = vpack.c.b16 %v1696, %v1696
          %v1702 = vpack.c.b16 %v1697, %v1697
          %v1703 = vpack.c.b16 %v1698, %v1698
          %v1704 = vpack.c.b16 %v1699, %v1699
          %v1705 = vpack.c.b16 %v1700, %v1700
          %v1707 = vpack.i.b16 %v1701, %v1701
          %v1709 = vperm.slane %v1707, 0
          %v1711 = vpack.i.b16 %v1702, %v1702
          %v1713 = vperm.slane %v1711, 0
          %v1715 = vpack.i.b16 %v1703, %v1703
          %v1717 = vperm.slane %v1715, 0
          %v1719 = vpack.i.b16 %v1704, %v1704
          %v1721 = vperm.slane %v1719, 0
          %v1723 = vpack.i.b16 %v1705, %v1705
          %v1725 = vperm.slane %v1723, 0
          %v1806 = vunpack.c.l.b16 %v1599
          %v1807 = vunpack.c.l.b16 %v1600
          %v1808 = vunpack.c.l.b16 %v1601
          %v1809 = vunpack.c.l.b16 %v1602
          %v1810 = vunpack.c.l.b16 %v1603
          %v1811 = vunpack.c.l.b16 %v1604
          %v1812 = vunpack.c.l.b16 %v1605
          %v1813 = vunpack.c.l.b16 %v1606
          %v1814 = vunpack.c.l.b16 %v1607
          %v1815 = vunpack.c.l.b16 %v1608
          %v1816 = vunpack.c.l.b16 %v1609
          %v1817 = vunpack.c.l.b16 %v1610
          %v1818 = vunpack.c.l.b16 %v1611
          %v1819 = vunpack.c.l.b16 %v1612
          %v1820 = vunpack.c.l.b16 %v1613
          %v1821 = vunpack.c.l.b16 %v1614
          %v1822 = vunpack.c.l.b16 %v1615
          %v1823 = vunpack.c.l.b16 %v1616
          %v1824 = vunpack.c.l.b16 %v1617
          %v1825 = vunpack.c.l.b16 %v1618
          %v1826 = vunpack.c.l.b16 %v1619
          %v1827 = vunpack.c.l.b16 %v1620
          %v1828 = vunpack.c.l.b16 %v1621
          %v1829 = vunpack.c.l.b16 %v1622
          %v1830 = vunpack.c.l.b16 %v1623
          %v1831 = vunpack.c.l.b16 %v1624
          %v1832 = vunpack.c.l.b16 %v1625
          %v1833 = vunpack.c.l.b16 %v1626
          %v1834 = vunpack.c.l.b16 %v1627
          %v1835 = vunpack.c.l.b16 %v1628
          %v1836 = vunpack.c.l.b16 %v1629
          %v1837 = vunpack.c.l.b16 %v1630
          %v1838 = vunpack.c.l.b16 %v1631
          %v1839 = vunpack.c.l.b16 %v1632
          %v1840 = vunpack.c.l.b16 %v1633
          %v1841 = vunpack.c.l.b16 %v1634
          %v1842 = vunpack.c.l.b16 %v1635
          %v1843 = vunpack.c.l.b16 %v1636
          %v1844 = vunpack.c.l.b16 %v1637
          %v1845 = vunpack.c.l.b16 %v1638
          %v1846 = vunpack.c.l.b16 %v1639
          %v1847 = vunpack.c.l.b16 %v1640
          %v1848 = vunpack.c.l.b16 %v1641
          %v1849 = vunpack.c.l.b16 %v1642
          %v1850 = vunpack.c.l.b16 %v1643
          %v1851 = vunpack.c.l.b16 %v1644
          %v1852 = vunpack.c.l.b16 %v1645
          %v1853 = vunpack.c.l.b16 %v1646
          %v1854 = vunpack.c.l.b16 %v1647
          %v1855 = vunpack.c.l.b16 %v1648
          %v1856 = vunpack.c.l.b16 %v1649
          %v1857 = vunpack.c.l.b16 %v1650
          %v1858 = vunpack.c.l.b16 %v1651
          %v1859 = vunpack.c.l.b16 %v1652
          %v1860 = vunpack.c.l.b16 %v1653
          %v1861 = vunpack.c.l.b16 %v1654
          %v1862 = vunpack.c.l.b16 %v1655
          %v1863 = vunpack.c.l.b16 %v1656
          %v1864 = vunpack.c.l.b16 %v1657
          %v1865 = vunpack.c.l.b16 %v1658
          %v1866 = vunpack.c.l.b16 %v1659
          %v1867 = vunpack.c.l.b16 %v1660
          %v1868 = vunpack.c.l.b16 %v1661
          %v1869 = vunpack.c.l.b16 %v1662
          %v1870 = vunpack.c.l.b16 %v1663
          %v1871 = vunpack.c.l.b16 %v1664
          %v1872 = vunpack.c.l.b16 %v1665
          %v1873 = vunpack.c.l.b16 %v1666
          %v1874 = vunpack.c.l.b16 %v1667
          %v1875 = vunpack.c.l.b16 %v1668
          %v1876 = vunpack.c.l.b16 %v1669
          %v1877 = vunpack.c.l.b16 %v1670
          %v1878 = vunpack.c.l.b16 %v1671
          %v1879 = vunpack.c.l.b16 %v1672
          %v1880 = vunpack.c.l.b16 %v1673
          %v1881 = vunpack.c.l.b16 %v1674
          %v1882 = vunpack.c.l.b16 %v1675
          %v1883 = vunpack.c.l.b16 %v1676
          %v1884 = vunpack.c.l.b16 %v1677
          %v1885 = vunpack.c.l.b16 %v1678
          %v1886 = vpack.c.b16 %v1807, %v1806
          %v1887 = vpack.c.b16 %v1809, %v1808
          %v1888 = vpack.c.b16 %v1811, %v1810
          %v1889 = vpack.c.b16 %v1813, %v1812
          %v1890 = vpack.c.b16 %v1815, %v1814
          %v1891 = vpack.c.b16 %v1817, %v1816
          %v1892 = vpack.c.b16 %v1819, %v1818
          %v1893 = vpack.c.b16 %v1821, %v1820
          %v1894 = vpack.c.b16 %v1823, %v1822
          %v1895 = vpack.c.b16 %v1825, %v1824
          %v1896 = vpack.c.b16 %v1827, %v1826
          %v1897 = vpack.c.b16 %v1829, %v1828
          %v1898 = vpack.c.b16 %v1831, %v1830
          %v1899 = vpack.c.b16 %v1833, %v1832
          %v1900 = vpack.c.b16 %v1835, %v1834
          %v1901 = vpack.c.b16 %v1837, %v1836
          %v1902 = vpack.c.b16 %v1839, %v1838
          %v1903 = vpack.c.b16 %v1841, %v1840
          %v1904 = vpack.c.b16 %v1843, %v1842
          %v1905 = vpack.c.b16 %v1845, %v1844
          %v1906 = vpack.c.b16 %v1847, %v1846
          %v1907 = vpack.c.b16 %v1849, %v1848
          %v1908 = vpack.c.b16 %v1851, %v1850
          %v1909 = vpack.c.b16 %v1853, %v1852
          %v1910 = vpack.c.b16 %v1855, %v1854
          %v1911 = vpack.c.b16 %v1857, %v1856
          %v1912 = vpack.c.b16 %v1859, %v1858
          %v1913 = vpack.c.b16 %v1861, %v1860
          %v1914 = vpack.c.b16 %v1863, %v1862
          %v1915 = vpack.c.b16 %v1865, %v1864
          %v1916 = vpack.c.b16 %v1867, %v1866
          %v1917 = vpack.c.b16 %v1869, %v1868
          %v1918 = vpack.c.b16 %v1871, %v1870
          %v1919 = vpack.c.b16 %v1873, %v1872
          %v1920 = vpack.c.b16 %v1875, %v1874
          %v1921 = vpack.c.b16 %v1877, %v1876
          %v1922 = vpack.c.b16 %v1879, %v1878
          %v1923 = vpack.c.b16 %v1881, %v1880
          %v1924 = vpack.c.b16 %v1883, %v1882
          %v1925 = vpack.c.b16 %v1885, %v1884
          %1966 = vmatpush.bf16.msra.mxu0 %v1893
          %1967 = vmatpush.bf16.msra.mxu0 %v1892
          %1968 = vmatpush.bf16.msra.mxu0 %v1891
          %1969 = vmatpush.bf16.msra.mxu0 %v1890
          %1970 = vmatpush.bf16.msra.mxu0 %v1889
          %1971 = vmatpush.bf16.msra.mxu0 %v1888
          %1972 = vmatpush.bf16.msra.mxu0 %v1887
          %1973 = vmatpush.bf16.msra.mxu0 %v1886
          %1974 = vmatmul.bf16.gmra.mxu0 %v1709
          %v1975 = vpop.f32.mrf.mxu0
          %v1976 = vadd.f32 0.0, %v1975
          %v1977 = vpop.f32.mrf.mxu0
          %1978 = vdwg.mxu0
          %1979 = vmatpush.bf16.msra.mxu0 %v1901
          %1980 = vmatpush.bf16.msra.mxu0 %v1900
          %1981 = vmatpush.bf16.msra.mxu0 %v1899
          %1982 = vmatpush.bf16.msra.mxu0 %v1898
          %1983 = vmatpush.bf16.msra.mxu0 %v1897
          %1984 = vmatpush.bf16.msra.mxu0 %v1896
          %1985 = vmatpush.bf16.msra.mxu0 %v1895
          %1986 = vmatpush.bf16.msra.mxu0 %v1894
          %1987 = vmatmul.bf16.gmra.mxu0 %v1713
          %v1988 = vpop.f32.mrf.mxu0
          %v1989 = vadd.f32 %v1976, %v1988
          %v1990 = vpop.f32.mrf.mxu0
          %1991 = vdwg.mxu0
          %1992 = vmatpush.bf16.msra.mxu0 %v1909
          %1993 = vmatpush.bf16.msra.mxu0 %v1908
          %1994 = vmatpush.bf16.msra.mxu0 %v1907
          %1995 = vmatpush.bf16.msra.mxu0 %v1906
          %1996 = vmatpush.bf16.msra.mxu0 %v1905
          %1997 = vmatpush.bf16.msra.mxu0 %v1904
          %1998 = vmatpush.bf16.msra.mxu0 %v1903
          %1999 = vmatpush.bf16.msra.mxu0 %v1902
          %2000 = vmatmul.bf16.gmra.mxu0 %v1717
          %v2001 = vpop.f32.mrf.mxu0
          %v2002 = vadd.f32 %v1989, %v2001
          %v2003 = vpop.f32.mrf.mxu0
          %2004 = vdwg.mxu0
          %2005 = vmatpush.bf16.msra.mxu0 %v1917
          %2006 = vmatpush.bf16.msra.mxu0 %v1916
          %2007 = vmatpush.bf16.msra.mxu0 %v1915
          %2008 = vmatpush.bf16.msra.mxu0 %v1914
          %2009 = vmatpush.bf16.msra.mxu0 %v1913
          %2010 = vmatpush.bf16.msra.mxu0 %v1912
          %2011 = vmatpush.bf16.msra.mxu0 %v1911
          %2012 = vmatpush.bf16.msra.mxu0 %v1910
          %2013 = vmatmul.bf16.gmra.mxu0 %v1721
          %v2014 = vpop.f32.mrf.mxu0
          %v2015 = vadd.f32 %v2002, %v2014
          %v2016 = vpop.f32.mrf.mxu0
          %2017 = vdwg.mxu0
          %2018 = vmatpush.bf16.msra.mxu0 %v1925
          %2019 = vmatpush.bf16.msra.mxu0 %v1924
          %2020 = vmatpush.bf16.msra.mxu0 %v1923
          %2021 = vmatpush.bf16.msra.mxu0 %v1922
          %2022 = vmatpush.bf16.msra.mxu0 %v1921
          %2023 = vmatpush.bf16.msra.mxu0 %v1920
          %2024 = vmatpush.bf16.msra.mxu0 %v1919
          %2025 = vmatpush.bf16.msra.mxu0 %v1918
          %2026 = vmatmul.bf16.gmra.mxu0 %v1725
          %v2027 = vpop.f32.mrf.mxu0
          %v2028 = vadd.f32 %v2015, %v2027
          %v2029 = vpop.f32.mrf.mxu0
          %2030 = vdwg.mxu0
          %v2031 = vld [vmem:[%s4] sm:$0x1]
          %v2032 = vadd.f32 %v2028, %v2031
          %2033 = vst [vmem:[%s239] sm:$0x1] %v2032
        $region48: #{_lambda_.19} parent=39 // pred_fallthru
          _
        %s2034 = sand.u32 %s151, 1
        %s2035 = scalar_lea.sflag [#allocation4], %s2034
        %s2036 = sand.u32 %s151, 1
        %s2037 = scalar_lea.vmem [#allocation3], %s2036
        // Predicated region
        $region49: #{_lambda_.19} parent=39 // pred_check
          %p2038 = pneg %p161
        $region50: #{_lambda_.19} parent=39 // pred_check_branch
          %2040 = sbr.rel (%p2038) target = $region52
        $region51: #{_lambda_.19} parent=39 // pred_region
          %2042 = vsyncadd %s2035, 0
          %s2043 = scalar_lea.hbm %s5, %s23
          %s2045 = sshll.u32 %s2037, 4
          %s2046 = int_to_ptr.vmem [resolvable:$true] %s2045
          %s2047 = sshll.u32 %s2043, 4
          %s2048 = int_to_ptr.hbm [resolvable:$true] %s2047
          %2050 = dma.vmem_to_hbm [thread:$0]  %s2046, 16, %s2048, %s2035
        $region52: #{_lambda_.19} parent=39 // pred_fallthru
          _
      $region40: #{_lambda_.19} parent=5 // pred_fallthru
        _
      %p2051 = scmp.le.s32.totalorder 2, %s14
      // Predicated region
      $region53: #{_lambda_.19} parent=5 // pred_check
        %p2052 = pneg %p2051
      $region54: #{_lambda_.19} parent=5 // pred_check_branch
        %2054 = sbr.rel (%p2052) target = $region56
      $region55: #{_lambda_.19} parent=5 // pred_region
        %s2055 = ssub.s32 %s14, 2
        // Predicated region
        $region57: #{_lambda_.19} parent=55 // pred_check
          %p2056 = pneg %p167
        $region58: #{_lambda_.19} parent=55 // pred_check_branch
          %2058 = sbr.rel (%p2056) target = $region60
        $region59: #{_lambda_.19} parent=55 // pred_region
          %s2059 = sand.u32 %s152, 1
          %s2060 = scalar_lea.sflag [#allocation4], %s2059
          %s2061 = sand.u32 %s152, 1
          %s2062 = scalar_lea.vmem [#allocation3], %s2061
          %2064 = dma.done %s2060, 16
        $region60: #{_lambda_.19} parent=55 // pred_fallthru
          _
      $region56: #{_lambda_.19} parent=5 // pred_fallthru
        _
    $region6: #{_lambda_.19} parent=1 // loop_footer
      %s18 = sadd.s32 1, %s14
    $region7: #{_lambda_.19} parent=1 // loop_footer_branch
      %13 = sbr.rel target = $region3
    $region8: #{_lambda_.19} parent=1 // loop_exit
      _
    %2065 = vsyncpa [#allocation4], 1
    %s2066 = scalar_lea.sflag [#allocation4], 1
    %2067 = vsyncpa %s2066, 1

</llo_original>
